<compile_context>
chip_gen: v6e
topology: v6e:2x2x1
jax: 0.10.0
libtpu: 0.0.40
codegen_flags: <defaults>
</compile_context>

<pallas_src>
import functools

import jax
import jax.numpy as jnp
from jax.experimental import pallas as pl
from jax.experimental.pallas import tpu as pltpu


# ------------------------------ fused model kernel ------------------------------

def _lstm1_kernel(*refs, n_layers, hidden, seq_len, batch, unroll):
    """All LSTM layers + sigmoid + FC in one kernel.

    refs = [x2d,
            (w_ih, w_hh, b) * n_layers,      # (4,D_l,H), (4,H,H), (4,1,H)
            fc_w, fc_b,                      # (H,C), (1,C)
            out2d,                           # (T*Bp, C)
            act_sc,                          # (T*Bp, H)  current layer's h sequence
            gi_sc, gf_sc, gg_sc, go_sc]      # (T*Bp, H)  precomputed gate inputs
    Row layout is time-major: row = t * Bp + b (Bp = padded batch, multiple of 8).
    """
    H, T, Bp = hidden, seq_len, batch
    x_ref = refs[0]
    layer_refs = refs[1:1 + 3 * n_layers]
    fc_w_ref = refs[1 + 3 * n_layers]
    fc_b_ref = refs[2 + 3 * n_layers]
    out_ref = refs[3 + 3 * n_layers]
    act_sc = refs[4 + 3 * n_layers]
    gate_sc = refs[5 + 3 * n_layers: 9 + 3 * n_layers]        # 4 refs, order (i, f, g, o)

    for l in range(n_layers):                                  # static, unrolled
        w_ih_ref = layer_refs[3 * l + 0]                       # (4, D_l, H)
        w_hh_ref = layer_refs[3 * l + 1]                       # (4, H, H)
        b_ref = layer_refs[3 * l + 2]                          # (4, 1, H)

        # ---- batched input projection for ALL timesteps (off the serial path) ----
        x2d = x_ref[...] if l == 0 else act_sc[...]            # (T*Bp, D_l)
        for k in range(4):
            gate_sc[k][...] = (
                jnp.dot(x2d, w_ih_ref[k], preferred_element_type=jnp.float32)
                + b_ref[k])                                    # (T*Bp, H), bias bcast once

        # ---- recurrence: only h @ W_hh per gate on the serial path -------------
        def step(t, carry, w_hh_ref=w_hh_ref):
            h, c = carry
            row = pl.multiple_of(t * Bp, Bp)                   # Bp % 8 == 0 -> aligned

            def gate(k):
                return gate_sc[k][pl.ds(row, Bp), :] + jnp.dot(
                    h, w_hh_ref[k], preferred_element_type=jnp.float32)

            i_g = jax.nn.sigmoid(gate(0))
            f_g = jax.nn.sigmoid(gate(1))
            g_g = jnp.tanh(gate(2))
            o_g = jax.nn.sigmoid(gate(3))
            c_new = f_g * c + i_g * g_g
            h_new = o_g * jnp.tanh(c_new)
            act_sc[pl.ds(row, Bp), :] = h_new                  # next layer's input / FC input
            return (h_new, c_new)

        zeros = jnp.zeros((Bp, H), jnp.float32)                # h0 = c0 = 0 (matches torch)
        jax.lax.fori_loop(0, T, step, (zeros, zeros), unroll=unroll)

    # ---- deferred FC epilogue: one matmul + one lane-dense-ish store -------------
    h_all = jax.nn.sigmoid(act_sc[...])                        # (T*Bp, H)
    out = jnp.dot(h_all, fc_w_ref[...],
                  preferred_element_type=jnp.float32) + fc_b_ref[...]
    out_ref[...] = out.astype(out_ref.dtype)


# --------------------------------- wrapper ---------------------------------------

def lstm1_forward(kparams, x):
    """Equivalent of LSTM1.forward: x (B, T, F) -> (B*T, n_classes)."""
    B, T, F = x.shape
    layers = kparams["layers"]                  # [(w_ih (4,D,H), w_hh (4,H,H), b (4,1,H))]
    fc_w, fc_b = kparams["fc"]                  # (H, C), (1, C)
    n_layers = len(layers)
    H = layers[0][1].shape[-1]
    C = fc_w.shape[1]

    # Pad batch to a sublane multiple so per-step row windows are tile-aligned.
    Bp = ((B + 7) // 8) * 8
    x_tm = jnp.transpose(x, (1, 0, 2)).astype(jnp.float32)          # (T, B, F)
    x_tm = jnp.pad(x_tm, ((0, 0), (0, Bp - B), (0, 0)))             # (T, Bp, F)
    x2d = x_tm.reshape(T * Bp, F)                                   # row = t*Bp + b

    flat_args = [x2d]
    in_specs = [pl.BlockSpec((T * Bp, F), lambda: (0, 0))]
    for (w_ih, w_hh, b) in layers:
        flat_args += [w_ih, w_hh, b]
        in_specs += [pl.BlockSpec(w_ih.shape, lambda: (0, 0, 0)),
                     pl.BlockSpec(w_hh.shape, lambda: (0, 0, 0)),
                     pl.BlockSpec(b.shape, lambda: (0, 0, 0))]
    flat_args += [fc_w, fc_b]
    in_specs += [pl.BlockSpec(fc_w.shape, lambda: (0, 0)),
                 pl.BlockSpec(fc_b.shape, lambda: (0, 0))]

    # Tunable time-loop unroll: full unroll only for short sequences.
    unroll = True if T <= 8 else 8

    kernel = functools.partial(_lstm1_kernel, n_layers=n_layers, hidden=H,
                               seq_len=T, batch=Bp, unroll=unroll)

    # Rough VMEM budget (everything is VMEM-resident): raise the scoped limit explicitly
    # (v5e default is 16 MiB); cap at 64 MiB (v7x physical). At larger sizes, chunk T.
    f32 = 4
    need = (x2d.size + sum(w.size + wh.size + bb.size for (w, wh, bb) in layers)
            + fc_w.size + fc_b.size + T * Bp * C + 5 * T * Bp * H) * f32
    vmem_limit = int(min(max(2 * need, 32 * 1024 * 1024), 64 * 1024 * 1024))

    out2d = pl.pallas_call(
        kernel,
        out_shape=jax.ShapeDtypeStruct((T * Bp, C), jnp.float32),
        in_specs=in_specs,
        out_specs=pl.BlockSpec((T * Bp, C), lambda: (0, 0)),
        scratch_shapes=[pltpu.VMEM((T * Bp, H), jnp.float32)] * 5,   # act + 4 gate buffers
        compiler_params=pltpu.CompilerParams(vmem_limit_bytes=vmem_limit),
    )(*flat_args)

    # (T*Bp, C) time-major -> drop padded rows -> (B, T, C) -> (B*T, C),
    # matching out.contiguous().view(-1, H) flattening of the PyTorch reference.
    out = out2d.reshape(T, Bp, C)[:, :B, :]
    return jnp.transpose(out, (1, 0, 2)).reshape(B * T, C)


# ----------------------------- params (PyTorch convention) -----------------------

def init_params(key, input_feature_size, hidden_size, n_classes, n_layers):
    """U(-1/sqrt(H), 1/sqrt(H)) init, PyTorch layout: W_ih (4H, D), gate order (i,f,g,o)."""
    k = 1.0 / jnp.sqrt(hidden_size)
    params = {"lstm": [], "fc": None}
    for layer in range(n_layers):
        d_in = input_feature_size if layer == 0 else hidden_size
        key, k1, k2, k3, k4 = jax.random.split(key, 5)
        w_ih = jax.random.uniform(k1, (4 * hidden_size, d_in), jnp.float32, -k, k)
        w_hh = jax.random.uniform(k2, (4 * hidden_size, hidden_size), jnp.float32, -k, k)
        b_ih = jax.random.uniform(k3, (4 * hidden_size,), jnp.float32, -k, k)
        b_hh = jax.random.uniform(k4, (4 * hidden_size,), jnp.float32, -k, k)
        params["lstm"].append((w_ih, w_hh, b_ih, b_hh))
    key, k5, k6 = jax.random.split(key, 3)
    w_fc = jax.random.uniform(k5, (n_classes, hidden_size), jnp.float32, -k, k)
    b_fc = jax.random.uniform(k6, (n_classes,), jnp.float32, -k, k)
    params["fc"] = (w_fc, b_fc)
    return params


def prepare_params(params, hidden_size):
    """PyTorch layout -> kernel layout: per-gate column blocks (lane-aligned gates).

    w_ih (4H, D) -> (4, D, H) transposed blocks in order (i, f, g, o); same for w_hh;
    b = b_ih + b_hh folded into the (once-per-layer) input projection; FC transposed.
    """
    H = hidden_size
    layers = []
    for (w_ih, w_hh, b_ih, b_hh) in params["lstm"]:
        w_ih_k = jnp.stack([w_ih[k * H:(k + 1) * H].T for k in range(4)])   # (4, D, H)
        w_hh_k = jnp.stack([w_hh[k * H:(k + 1) * H].T for k in range(4)])   # (4, H, H)
        b_k = (b_ih + b_hh).reshape(4, 1, H)                                # (4, 1, H)
        layers.append((w_ih_k, w_hh_k, b_k))
    w_fc, b_fc = params["fc"]
    return {"layers": layers, "fc": (w_fc.T, b_fc.reshape(1, -1))}


# ----------------------------- pure-JAX reference --------------------------------

def lstm1_reference(params, x, hidden_size, n_layers):
    B, T, _ = x.shape
    H = hidden_size
    prec = jax.lax.Precision.HIGHEST
    h = [jnp.zeros((B, H), jnp.float32) for _ in range(n_layers)]
    c = [jnp.zeros((B, H), jnp.float32) for _ in range(n_layers)]
    outs = []
    for t in range(T):
        inp = x[:, t, :]
        for l, (w_ih, w_hh, b_ih, b_hh) in enumerate(params["lstm"]):
            gates = (jnp.dot(inp, w_ih.T, precision=prec) + b_ih
                     + jnp.dot(h[l], w_hh.T, precision=prec) + b_hh)
            i = jax.nn.sigmoid(gates[:, 0:H])
            f = jax.nn.sigmoid(gates[:, H:2 * H])
            g = jnp.tanh(gates[:, 2 * H:3 * H])
            o = jax.nn.sigmoid(gates[:, 3 * H:4 * H])
            c[l] = f * c[l] + i * g
            h[l] = o * jnp.tanh(c[l])
            inp = h[l]
        outs.append(inp)
    out_seq = jnp.stack(outs, axis=1)                 # (B, T, H)
    flat = out_seq.reshape(-1, H)
    w_fc, b_fc = params["fc"]
    return jnp.dot(jax.nn.sigmoid(flat), w_fc.T, precision=prec) + b_fc


# ----------------------------------- main -----------------------------------------

if __name__ == "__main__":
    input_feature_size = 16
    hidden_size = 32
    n_classes = 4
    n_layers = 2
    B, T = 2, 8

    key = jax.random.PRNGKey(0)
    key, xkey = jax.random.split(key)
    x = jax.random.normal(xkey, (B, T, input_feature_size), dtype=jnp.float32)

    params = init_params(key, input_feature_size, hidden_size, n_classes, n_layers)
    kparams = prepare_params(params, hidden_size)

    out = jax.jit(lstm1_forward)(kparams, x)
    jax.block_until_ready(out)
    assert out.shape == (B * T, n_classes), out.shape

    ref = lstm1_reference(params, x, hidden_size, n_layers)
    assert jnp.allclose(out, ref, atol=2e-2, rtol=2e-2), float(jnp.max(jnp.abs(out - ref)))

    print("KERNEL_OK")
</pallas_src>

<mosaic_0001>
module attributes {stable_mosaic.version = 11 : i64} {
  func.func @_lstm1_kernel(%arg0: memref<64x16xf32, #tpu.memory_space<vmem>>, %arg1: memref<4x16x32xf32, #tpu.memory_space<vmem>>, %arg2: memref<4x32x32xf32, #tpu.memory_space<vmem>>, %arg3: memref<4x1x32xf32, #tpu.memory_space<vmem>>, %arg4: memref<4x32x32xf32, #tpu.memory_space<vmem>>, %arg5: memref<4x32x32xf32, #tpu.memory_space<vmem>>, %arg6: memref<4x1x32xf32, #tpu.memory_space<vmem>>, %arg7: memref<32x4xf32, #tpu.memory_space<vmem>>, %arg8: memref<1x4xf32, #tpu.memory_space<vmem>>, %arg9: memref<64x4xf32, #tpu.memory_space<vmem>>, %arg10: memref<64x32xf32, #tpu.memory_space<vmem>>, %arg11: memref<64x32xf32, #tpu.memory_space<vmem>>, %arg12: memref<64x32xf32, #tpu.memory_space<vmem>>, %arg13: memref<64x32xf32, #tpu.memory_space<vmem>>, %arg14: memref<64x32xf32, #tpu.memory_space<vmem>>) attributes {dimension_semantics = [], scalar_prefetch = 0 : i64, scratch_operands = 5 : i64, tpu.core_type = #tpu.core_type<tc>} {
    %c0 = arith.constant 0 : index
    %c0_0 = arith.constant 0 : index
    %0 = vector.load %arg0[%c0, %c0_0] : memref<64x16xf32, #tpu.memory_space<vmem>>, vector<64x16xf32>
    %c0_1 = arith.constant 0 : index
    %c0_2 = arith.constant 0 : index
    %c0_3 = arith.constant 0 : index
    %1 = vector.load %arg1[%c0_1, %c0_2, %c0_3] : memref<4x16x32xf32, #tpu.memory_space<vmem>>, vector<1x16x32xf32>
    %2 = vector.shape_cast %1 : vector<1x16x32xf32> to vector<16x32xf32>
    %cst = arith.constant dense<0.000000e+00> : vector<64x32xf32>
    %3 = tpu.matmul %0, %2, %cst {dimension_numbers = #tpu.dot_dimension_numbers<[1], [0], [0], [1], [0, 0, 1, 1], [], []>} : vector<64x16xf32>, vector<16x32xf32>, vector<64x32xf32> -> vector<64x32xf32>
    %c0_4 = arith.constant 0 : index
    %c0_5 = arith.constant 0 : index
    %c0_6 = arith.constant 0 : index
    %4 = vector.load %arg3[%c0_4, %c0_5, %c0_6] : memref<4x1x32xf32, #tpu.memory_space<vmem>>, vector<1x1x32xf32>
    %5 = vector.shape_cast %4 : vector<1x1x32xf32> to vector<1x32xf32>
    %6 = vector.broadcast %5 : vector<1x32xf32> to vector<64x32xf32>
    %7 = arith.addf %3, %6 : vector<64x32xf32>
    %c0_7 = arith.constant 0 : index
    %c0_8 = arith.constant 0 : index
    %8 = vector.load %arg11[%c0_7, %c0_8] : memref<64x32xf32, #tpu.memory_space<vmem>>, vector<64x32xf32>
    tpu.vector_store %arg11[%c0_7, %c0_8], %7 {strides = array<i32>} : memref<64x32xf32, #tpu.memory_space<vmem>>, vector<64x32xf32>,
    %c1 = arith.constant 1 : index
    %c0_9 = arith.constant 0 : index
    %c0_10 = arith.constant 0 : index
    %9 = vector.load %arg1[%c1, %c0_9, %c0_10] : memref<4x16x32xf32, #tpu.memory_space<vmem>>, vector<1x16x32xf32>
    %10 = vector.shape_cast %9 : vector<1x16x32xf32> to vector<16x32xf32>
    %cst_11 = arith.constant dense<0.000000e+00> : vector<64x32xf32>
    %11 = tpu.matmul %0, %10, %cst_11 {dimension_numbers = #tpu.dot_dimension_numbers<[1], [0], [0], [1], [0, 0, 1, 1], [], []>} : vector<64x16xf32>, vector<16x32xf32>, vector<64x32xf32> -> vector<64x32xf32>
    %c1_12 = arith.constant 1 : index
    %c0_13 = arith.constant 0 : index
    %c0_14 = arith.constant 0 : index
    %12 = vector.load %arg3[%c1_12, %c0_13, %c0_14] : memref<4x1x32xf32, #tpu.memory_space<vmem>>, vector<1x1x32xf32>
    %13 = vector.shape_cast %12 : vector<1x1x32xf32> to vector<1x32xf32>
    %14 = vector.broadcast %13 : vector<1x32xf32> to vector<64x32xf32>
    %15 = arith.addf %11, %14 : vector<64x32xf32>
    %c0_15 = arith.constant 0 : index
    %c0_16 = arith.constant 0 : index
    %16 = vector.load %arg12[%c0_15, %c0_16] : memref<64x32xf32, #tpu.memory_space<vmem>>, vector<64x32xf32>
    tpu.vector_store %arg12[%c0_15, %c0_16], %15 {strides = array<i32>} : memref<64x32xf32, #tpu.memory_space<vmem>>, vector<64x32xf32>,
    %c2 = arith.constant 2 : index
    %c0_17 = arith.constant 0 : index
    %c0_18 = arith.constant 0 : index
    %17 = vector.load %arg1[%c2, %c0_17, %c0_18] : memref<4x16x32xf32, #tpu.memory_space<vmem>>, vector<1x16x32xf32>
    %18 = vector.shape_cast %17 : vector<1x16x32xf32> to vector<16x32xf32>
    %cst_19 = arith.constant dense<0.000000e+00> : vector<64x32xf32>
    %19 = tpu.matmul %0, %18, %cst_19 {dimension_numbers = #tpu.dot_dimension_numbers<[1], [0], [0], [1], [0, 0, 1, 1], [], []>} : vector<64x16xf32>, vector<16x32xf32>, vector<64x32xf32> -> vector<64x32xf32>
    %c2_20 = arith.constant 2 : index
    %c0_21 = arith.constant 0 : index
    %c0_22 = arith.constant 0 : index
    %20 = vector.load %arg3[%c2_20, %c0_21, %c0_22] : memref<4x1x32xf32, #tpu.memory_space<vmem>>, vector<1x1x32xf32>
    %21 = vector.shape_cast %20 : vector<1x1x32xf32> to vector<1x32xf32>
    %22 = vector.broadcast %21 : vector<1x32xf32> to vector<64x32xf32>
    %23 = arith.addf %19, %22 : vector<64x32xf32>
    %c0_23 = arith.constant 0 : index
    %c0_24 = arith.constant 0 : index
    %24 = vector.load %arg13[%c0_23, %c0_24] : memref<64x32xf32, #tpu.memory_space<vmem>>, vector<64x32xf32>
    tpu.vector_store %arg13[%c0_23, %c0_24], %23 {strides = array<i32>} : memref<64x32xf32, #tpu.memory_space<vmem>>, vector<64x32xf32>,
    %c3 = arith.constant 3 : index
    %c0_25 = arith.constant 0 : index
    %c0_26 = arith.constant 0 : index
    %25 = vector.load %arg1[%c3, %c0_25, %c0_26] : memref<4x16x32xf32, #tpu.memory_space<vmem>>, vector<1x16x32xf32>
    %26 = vector.shape_cast %25 : vector<1x16x32xf32> to vector<16x32xf32>
    %cst_27 = arith.constant dense<0.000000e+00> : vector<64x32xf32>
    %27 = tpu.matmul %0, %26, %cst_27 {dimension_numbers = #tpu.dot_dimension_numbers<[1], [0], [0], [1], [0, 0, 1, 1], [], []>} : vector<64x16xf32>, vector<16x32xf32>, vector<64x32xf32> -> vector<64x32xf32>
    %c3_28 = arith.constant 3 : index
    %c0_29 = arith.constant 0 : index
    %c0_30 = arith.constant 0 : index
    %28 = vector.load %arg3[%c3_28, %c0_29, %c0_30] : memref<4x1x32xf32, #tpu.memory_space<vmem>>, vector<1x1x32xf32>
    %29 = vector.shape_cast %28 : vector<1x1x32xf32> to vector<1x32xf32>
    %30 = vector.broadcast %29 : vector<1x32xf32> to vector<64x32xf32>
    %31 = arith.addf %27, %30 : vector<64x32xf32>
    %c0_31 = arith.constant 0 : index
    %c0_32 = arith.constant 0 : index
    %32 = vector.load %arg14[%c0_31, %c0_32] : memref<64x32xf32, #tpu.memory_space<vmem>>, vector<64x32xf32>
    tpu.vector_store %arg14[%c0_31, %c0_32], %31 {strides = array<i32>} : memref<64x32xf32, #tpu.memory_space<vmem>>, vector<64x32xf32>,
    %cst_33 = arith.constant 0.000000e+00 : f32
    %33 = vector.broadcast %cst_33 : f32 to vector<8x32xf32>
    %c0_i32 = arith.constant 0 : i32
    %c8_i32 = arith.constant 8 : i32
    %34 = arith.muli %c0_i32, %c8_i32 : i32
    %35 = tpu.assume_multiple %34, 8 : i32
    %36 = arith.index_cast %35 : i32 to index
    %c0_34 = arith.constant 0 : index
    %37 = vector.load %arg11[%36, %c0_34] : memref<64x32xf32, #tpu.memory_space<vmem>>, vector<8x32xf32>
    %c0_35 = arith.constant 0 : index
    %c0_36 = arith.constant 0 : index
    %c0_37 = arith.constant 0 : index
    %38 = vector.load %arg2[%c0_35, %c0_36, %c0_37] : memref<4x32x32xf32, #tpu.memory_space<vmem>>, vector<1x32x32xf32>
    %39 = vector.shape_cast %38 : vector<1x32x32xf32> to vector<32x32xf32>
    %cst_38 = arith.constant dense<0.000000e+00> : vector<8x32xf32>
    %40 = tpu.matmul %33, %39, %cst_38 {dimension_numbers = #tpu.dot_dimension_numbers<[1], [0], [0], [1], [0, 0, 1, 1], [], []>} : vector<8x32xf32>, vector<32x32xf32>, vector<8x32xf32> -> vector<8x32xf32>
    %41 = arith.addf %37, %40 : vector<8x32xf32>
    %42 = arith.negf %41 : vector<8x32xf32>
    %43 = math.exp %42 : vector<8x32xf32>
    %cst_39 = arith.constant 1.000000e+00 : f32
    %44 = vector.broadcast %cst_39 : f32 to vector<8x32xf32>
    %45 = arith.addf %44, %43 : vector<8x32xf32>
    %46 = arith.divf %44, %45 : vector<8x32xf32>
    %47 = arith.index_cast %35 : i32 to index
    %c0_40 = arith.constant 0 : index
    %48 = vector.load %arg12[%47, %c0_40] : memref<64x32xf32, #tpu.memory_space<vmem>>, vector<8x32xf32>
    %c1_41 = arith.constant 1 : index
    %c0_42 = arith.constant 0 : index
    %c0_43 = arith.constant 0 : index
    %49 = vector.load %arg2[%c1_41, %c0_42, %c0_43] : memref<4x32x32xf32, #tpu.memory_space<vmem>>, vector<1x32x32xf32>
    %50 = vector.shape_cast %49 : vector<1x32x32xf32> to vector<32x32xf32>
    %cst_44 = arith.constant dense<0.000000e+00> : vector<8x32xf32>
    %51 = tpu.matmul %33, %50, %cst_44 {dimension_numbers = #tpu.dot_dimension_numbers<[1], [0], [0], [1], [0, 0, 1, 1], [], []>} : vector<8x32xf32>, vector<32x32xf32>, vector<8x32xf32> -> vector<8x32xf32>
    %52 = arith.addf %48, %51 : vector<8x32xf32>
    %53 = arith.negf %52 : vector<8x32xf32>
    %54 = math.exp %53 : vector<8x32xf32>
    %cst_45 = arith.constant 1.000000e+00 : f32
    %55 = vector.broadcast %cst_45 : f32 to vector<8x32xf32>
    %56 = arith.addf %55, %54 : vector<8x32xf32>
    %57 = arith.divf %55, %56 : vector<8x32xf32>
    %58 = arith.index_cast %35 : i32 to index
    %c0_46 = arith.constant 0 : index
    %59 = vector.load %arg13[%58, %c0_46] : memref<64x32xf32, #tpu.memory_space<vmem>>, vector<8x32xf32>
    %c2_47 = arith.constant 2 : index
    %c0_48 = arith.constant 0 : index
    %c0_49 = arith.constant 0 : index
    %60 = vector.load %arg2[%c2_47, %c0_48, %c0_49] : memref<4x32x32xf32, #tpu.memory_space<vmem>>, vector<1x32x32xf32>
    %61 = vector.shape_cast %60 : vector<1x32x32xf32> to vector<32x32xf32>
    %cst_50 = arith.constant dense<0.000000e+00> : vector<8x32xf32>
    %62 = tpu.matmul %33, %61, %cst_50 {dimension_numbers = #tpu.dot_dimension_numbers<[1], [0], [0], [1], [0, 0, 1, 1], [], []>} : vector<8x32xf32>, vector<32x32xf32>, vector<8x32xf32> -> vector<8x32xf32>
    %63 = arith.addf %59, %62 : vector<8x32xf32>
    %64 = math.tanh %63 : vector<8x32xf32>
    %65 = arith.index_cast %35 : i32 to index
    %c0_51 = arith.constant 0 : index
    %66 = vector.load %arg14[%65, %c0_51] : memref<64x32xf32, #tpu.memory_space<vmem>>, vector<8x32xf32>
    %c3_52 = arith.constant 3 : index
    %c0_53 = arith.constant 0 : index
    %c0_54 = arith.constant 0 : index
    %67 = vector.load %arg2[%c3_52, %c0_53, %c0_54] : memref<4x32x32xf32, #tpu.memory_space<vmem>>, vector<1x32x32xf32>
    %68 = vector.shape_cast %67 : vector<1x32x32xf32> to vector<32x32xf32>
    %cst_55 = arith.constant dense<0.000000e+00> : vector<8x32xf32>
    %69 = tpu.matmul %33, %68, %cst_55 {dimension_numbers = #tpu.dot_dimension_numbers<[1], [0], [0], [1], [0, 0, 1, 1], [], []>} : vector<8x32xf32>, vector<32x32xf32>, vector<8x32xf32> -> vector<8x32xf32>
    %70 = arith.addf %66, %69 : vector<8x32xf32>
    %71 = arith.negf %70 : vector<8x32xf32>
    %72 = math.exp %71 : vector<8x32xf32>
    %cst_56 = arith.constant 1.000000e+00 : f32
    %73 = vector.broadcast %cst_56 : f32 to vector<8x32xf32>
    %74 = arith.addf %73, %72 : vector<8x32xf32>
    %75 = arith.divf %73, %74 : vector<8x32xf32>
    %76 = arith.mulf %57, %33 : vector<8x32xf32>
    %77 = arith.mulf %46, %64 : vector<8x32xf32>
    %78 = arith.addf %76, %77 : vector<8x32xf32>
    %79 = math.tanh %78 : vector<8x32xf32>
    %80 = arith.mulf %75, %79 : vector<8x32xf32>
    %81 = arith.index_cast %35 : i32 to index
    %c0_57 = arith.constant 0 : index
    %82 = vector.load %arg10[%81, %c0_57] : memref<64x32xf32, #tpu.memory_space<vmem>>, vector<8x32xf32>
    tpu.vector_store %arg10[%81, %c0_57], %80 {strides = array<i32>} : memref<64x32xf32, #tpu.memory_space<vmem>>, vector<8x32xf32>,
    %c1_i32 = arith.constant 1 : i32
    %c8_i32_58 = arith.constant 8 : i32
    %83 = arith.muli %c1_i32, %c8_i32_58 : i32
    %84 = tpu.assume_multiple %83, 8 : i32
    %85 = arith.index_cast %84 : i32 to index
    %c0_59 = arith.constant 0 : index
    %86 = vector.load %arg11[%85, %c0_59] : memref<64x32xf32, #tpu.memory_space<vmem>>, vector<8x32xf32>
    %c0_60 = arith.constant 0 : index
    %c0_61 = arith.constant 0 : index
    %c0_62 = arith.constant 0 : index
    %87 = vector.load %arg2[%c0_60, %c0_61, %c0_62] : memref<4x32x32xf32, #tpu.memory_space<vmem>>, vector<1x32x32xf32>
    %88 = vector.shape_cast %87 : vector<1x32x32xf32> to vector<32x32xf32>
    %cst_63 = arith.constant dense<0.000000e+00> : vector<8x32xf32>
    %89 = tpu.matmul %80, %88, %cst_63 {dimension_numbers = #tpu.dot_dimension_numbers<[1], [0], [0], [1], [0, 0, 1, 1], [], []>} : vector<8x32xf32>, vector<32x32xf32>, vector<8x32xf32> -> vector<8x32xf32>
    %90 = arith.addf %86, %89 : vector<8x32xf32>
    %91 = arith.negf %90 : vector<8x32xf32>
    %92 = math.exp %91 : vector<8x32xf32>
    %cst_64 = arith.constant 1.000000e+00 : f32
    %93 = vector.broadcast %cst_64 : f32 to vector<8x32xf32>
    %94 = arith.addf %93, %92 : vector<8x32xf32>
    %95 = arith.divf %93, %94 : vector<8x32xf32>
    %96 = arith.index_cast %84 : i32 to index
    %c0_65 = arith.constant 0 : index
    %97 = vector.load %arg12[%96, %c0_65] : memref<64x32xf32, #tpu.memory_space<vmem>>, vector<8x32xf32>
    %c1_66 = arith.constant 1 : index
    %c0_67 = arith.constant 0 : index
    %c0_68 = arith.constant 0 : index
    %98 = vector.load %arg2[%c1_66, %c0_67, %c0_68] : memref<4x32x32xf32, #tpu.memory_space<vmem>>, vector<1x32x32xf32>
    %99 = vector.shape_cast %98 : vector<1x32x32xf32> to vector<32x32xf32>
    %cst_69 = arith.constant dense<0.000000e+00> : vector<8x32xf32>
    %100 = tpu.matmul %80, %99, %cst_69 {dimension_numbers = #tpu.dot_dimension_numbers<[1], [0], [0], [1], [0, 0, 1, 1], [], []>} : vector<8x32xf32>, vector<32x32xf32>, vector<8x32xf32> -> vector<8x32xf32>
    %101 = arith.addf %97, %100 : vector<8x32xf32>
    %102 = arith.negf %101 : vector<8x32xf32>
    %103 = math.exp %102 : vector<8x32xf32>
    %cst_70 = arith.constant 1.000000e+00 : f32
    %104 = vector.broadcast %cst_70 : f32 to vector<8x32xf32>
    %105 = arith.addf %104, %103 : vector<8x32xf32>
    %106 = arith.divf %104, %105 : vector<8x32xf32>
    %107 = arith.index_cast %84 : i32 to index
    %c0_71 = arith.constant 0 : index
    %108 = vector.load %arg13[%107, %c0_71] : memref<64x32xf32, #tpu.memory_space<vmem>>, vector<8x32xf32>
    %c2_72 = arith.constant 2 : index
    %c0_73 = arith.constant 0 : index
    %c0_74 = arith.constant 0 : index
    %109 = vector.load %arg2[%c2_72, %c0_73, %c0_74] : memref<4x32x32xf32, #tpu.memory_space<vmem>>, vector<1x32x32xf32>
    %110 = vector.shape_cast %109 : vector<1x32x32xf32> to vector<32x32xf32>
    %cst_75 = arith.constant dense<0.000000e+00> : vector<8x32xf32>
    %111 = tpu.matmul %80, %110, %cst_75 {dimension_numbers = #tpu.dot_dimension_numbers<[1], [0], [0], [1], [0, 0, 1, 1], [], []>} : vector<8x32xf32>, vector<32x32xf32>, vector<8x32xf32> -> vector<8x32xf32>
    %112 = arith.addf %108, %111 : vector<8x32xf32>
    %113 = math.tanh %112 : vector<8x32xf32>
    %114 = arith.index_cast %84 : i32 to index
    %c0_76 = arith.constant 0 : index
    %115 = vector.load %arg14[%114, %c0_76] : memref<64x32xf32, #tpu.memory_space<vmem>>, vector<8x32xf32>
    %c3_77 = arith.constant 3 : index
    %c0_78 = arith.constant 0 : index
    %c0_79 = arith.constant 0 : index
    %116 = vector.load %arg2[%c3_77, %c0_78, %c0_79] : memref<4x32x32xf32, #tpu.memory_space<vmem>>, vector<1x32x32xf32>
    %117 = vector.shape_cast %116 : vector<1x32x32xf32> to vector<32x32xf32>
    %cst_80 = arith.constant dense<0.000000e+00> : vector<8x32xf32>
    %118 = tpu.matmul %80, %117, %cst_80 {dimension_numbers = #tpu.dot_dimension_numbers<[1], [0], [0], [1], [0, 0, 1, 1], [], []>} : vector<8x32xf32>, vector<32x32xf32>, vector<8x32xf32> -> vector<8x32xf32>
    %119 = arith.addf %115, %118 : vector<8x32xf32>
    %120 = arith.negf %119 : vector<8x32xf32>
    %121 = math.exp %120 : vector<8x32xf32>
    %cst_81 = arith.constant 1.000000e+00 : f32
    %122 = vector.broadcast %cst_81 : f32 to vector<8x32xf32>
    %123 = arith.addf %122, %121 : vector<8x32xf32>
    %124 = arith.divf %122, %123 : vector<8x32xf32>
    %125 = arith.mulf %106, %78 : vector<8x32xf32>
    %126 = arith.mulf %95, %113 : vector<8x32xf32>
    %127 = arith.addf %125, %126 : vector<8x32xf32>
    %128 = math.tanh %127 : vector<8x32xf32>
    %129 = arith.mulf %124, %128 : vector<8x32xf32>
    %130 = arith.index_cast %84 : i32 to index
    %c0_82 = arith.constant 0 : index
    %131 = vector.load %arg10[%130, %c0_82] : memref<64x32xf32, #tpu.memory_space<vmem>>, vector<8x32xf32>
    tpu.vector_store %arg10[%130, %c0_82], %129 {strides = array<i32>} : memref<64x32xf32, #tpu.memory_space<vmem>>, vector<8x32xf32>,
    %c2_i32 = arith.constant 2 : i32
    %c8_i32_83 = arith.constant 8 : i32
    %132 = arith.muli %c2_i32, %c8_i32_83 : i32
    %133 = tpu.assume_multiple %132, 8 : i32
    %134 = arith.index_cast %133 : i32 to index
    %c0_84 = arith.constant 0 : index
    %135 = vector.load %arg11[%134, %c0_84] : memref<64x32xf32, #tpu.memory_space<vmem>>, vector<8x32xf32>
    %c0_85 = arith.constant 0 : index
    %c0_86 = arith.constant 0 : index
    %c0_87 = arith.constant 0 : index
    %136 = vector.load %arg2[%c0_85, %c0_86, %c0_87] : memref<4x32x32xf32, #tpu.memory_space<vmem>>, vector<1x32x32xf32>
    %137 = vector.shape_cast %136 : vector<1x32x32xf32> to vector<32x32xf32>
    %cst_88 = arith.constant dense<0.000000e+00> : vector<8x32xf32>
    %138 = tpu.matmul %129, %137, %cst_88 {dimension_numbers = #tpu.dot_dimension_numbers<[1], [0], [0], [1], [0, 0, 1, 1], [], []>} : vector<8x32xf32>, vector<32x32xf32>, vector<8x32xf32> -> vector<8x32xf32>
    %139 = arith.addf %135, %138 : vector<8x32xf32>
    %140 = arith.negf %139 : vector<8x32xf32>
    %141 = math.exp %140 : vector<8x32xf32>
    %cst_89 = arith.constant 1.000000e+00 : f32
    %142 = vector.broadcast %cst_89 : f32 to vector<8x32xf32>
    %143 = arith.addf %142, %141 : vector<8x32xf32>
    %144 = arith.divf %142, %143 : vector<8x32xf32>
    %145 = arith.index_cast %133 : i32 to index
    %c0_90 = arith.constant 0 : index
    %146 = vector.load %arg12[%145, %c0_90] : memref<64x32xf32, #tpu.memory_space<vmem>>, vector<8x32xf32>
    %c1_91 = arith.constant 1 : index
    %c0_92 = arith.constant 0 : index
    %c0_93 = arith.constant 0 : index
    %147 = vector.load %arg2[%c1_91, %c0_92, %c0_93] : memref<4x32x32xf32, #tpu.memory_space<vmem>>, vector<1x32x32xf32>
    %148 = vector.shape_cast %147 : vector<1x32x32xf32> to vector<32x32xf32>
    %cst_94 = arith.constant dense<0.000000e+00> : vector<8x32xf32>
    %149 = tpu.matmul %129, %148, %cst_94 {dimension_numbers = #tpu.dot_dimension_numbers<[1], [0], [0], [1], [0, 0, 1, 1], [], []>} : vector<8x32xf32>, vector<32x32xf32>, vector<8x32xf32> -> vector<8x32xf32>
    %150 = arith.addf %146, %149 : vector<8x32xf32>
    %151 = arith.negf %150 : vector<8x32xf32>
    %152 = math.exp %151 : vector<8x32xf32>
    %cst_95 = arith.constant 1.000000e+00 : f32
    %153 = vector.broadcast %cst_95 : f32 to vector<8x32xf32>
    %154 = arith.addf %153, %152 : vector<8x32xf32>
    %155 = arith.divf %153, %154 : vector<8x32xf32>
    %156 = arith.index_cast %133 : i32 to index
    %c0_96 = arith.constant 0 : index
    %157 = vector.load %arg13[%156, %c0_96] : memref<64x32xf32, #tpu.memory_space<vmem>>, vector<8x32xf32>
    %c2_97 = arith.constant 2 : index
    %c0_98 = arith.constant 0 : index
    %c0_99 = arith.constant 0 : index
    %158 = vector.load %arg2[%c2_97, %c0_98, %c0_99] : memref<4x32x32xf32, #tpu.memory_space<vmem>>, vector<1x32x32xf32>
    %159 = vector.shape_cast %158 : vector<1x32x32xf32> to vector<32x32xf32>
    %cst_100 = arith.constant dense<0.000000e+00> : vector<8x32xf32>
    %160 = tpu.matmul %129, %159, %cst_100 {dimension_numbers = #tpu.dot_dimension_numbers<[1], [0], [0], [1], [0, 0, 1, 1], [], []>} : vector<8x32xf32>, vector<32x32xf32>, vector<8x32xf32> -> vector<8x32xf32>
    %161 = arith.addf %157, %160 : vector<8x32xf32>
    %162 = math.tanh %161 : vector<8x32xf32>
    %163 = arith.index_cast %133 : i32 to index
    %c0_101 = arith.constant 0 : index
    %164 = vector.load %arg14[%163, %c0_101] : memref<64x32xf32, #tpu.memory_space<vmem>>, vector<8x32xf32>
    %c3_102 = arith.constant 3 : index
    %c0_103 = arith.constant 0 : index
    %c0_104 = arith.constant 0 : index
    %165 = vector.load %arg2[%c3_102, %c0_103, %c0_104] : memref<4x32x32xf32, #tpu.memory_space<vmem>>, vector<1x32x32xf32>
    %166 = vector.shape_cast %165 : vector<1x32x32xf32> to vector<32x32xf32>
    %cst_105 = arith.constant dense<0.000000e+00> : vector<8x32xf32>
    %167 = tpu.matmul %129, %166, %cst_105 {dimension_numbers = #tpu.dot_dimension_numbers<[1], [0], [0], [1], [0, 0, 1, 1], [], []>} : vector<8x32xf32>, vector<32x32xf32>, vector<8x32xf32> -> vector<8x32xf32>
    %168 = arith.addf %164, %167 : vector<8x32xf32>
    %169 = arith.negf %168 : vector<8x32xf32>
    %170 = math.exp %169 : vector<8x32xf32>
    %cst_106 = arith.constant 1.000000e+00 : f32
    %171 = vector.broadcast %cst_106 : f32 to vector<8x32xf32>
    %172 = arith.addf %171, %170 : vector<8x32xf32>
    %173 = arith.divf %171, %172 : vector<8x32xf32>
    %174 = arith.mulf %155, %127 : vector<8x32xf32>
    %175 = arith.mulf %144, %162 : vector<8x32xf32>
    %176 = arith.addf %174, %175 : vector<8x32xf32>
    %177 = math.tanh %176 : vector<8x32xf32>
    %178 = arith.mulf %173, %177 : vector<8x32xf32>
    %179 = arith.index_cast %133 : i32 to index
    %c0_107 = arith.constant 0 : index
    %180 = vector.load %arg10[%179, %c0_107] : memref<64x32xf32, #tpu.memory_space<vmem>>, vector<8x32xf32>
    tpu.vector_store %arg10[%179, %c0_107], %178 {strides = array<i32>} : memref<64x32xf32, #tpu.memory_space<vmem>>, vector<8x32xf32>,
    %c3_i32 = arith.constant 3 : i32
    %c8_i32_108 = arith.constant 8 : i32
    %181 = arith.muli %c3_i32, %c8_i32_108 : i32
    %182 = tpu.assume_multiple %181, 8 : i32
    %183 = arith.index_cast %182 : i32 to index
    %c0_109 = arith.constant 0 : index
    %184 = vector.load %arg11[%183, %c0_109] : memref<64x32xf32, #tpu.memory_space<vmem>>, vector<8x32xf32>
    %c0_110 = arith.constant 0 : index
    %c0_111 = arith.constant 0 : index
    %c0_112 = arith.constant 0 : index
    %185 = vector.load %arg2[%c0_110, %c0_111, %c0_112] : memref<4x32x32xf32, #tpu.memory_space<vmem>>, vector<1x32x32xf32>
    %186 = vector.shape_cast %185 : vector<1x32x32xf32> to vector<32x32xf32>
    %cst_113 = arith.constant dense<0.000000e+00> : vector<8x32xf32>
    %187 = tpu.matmul %178, %186, %cst_113 {dimension_numbers = #tpu.dot_dimension_numbers<[1], [0], [0], [1], [0, 0, 1, 1], [], []>} : vector<8x32xf32>, vector<32x32xf32>, vector<8x32xf32> -> vector<8x32xf32>
    %188 = arith.addf %184, %187 : vector<8x32xf32>
    %189 = arith.negf %188 : vector<8x32xf32>
    %190 = math.exp %189 : vector<8x32xf32>
    %cst_114 = arith.constant 1.000000e+00 : f32
    %191 = vector.broadcast %cst_114 : f32 to vector<8x32xf32>
    %192 = arith.addf %191, %190 : vector<8x32xf32>
    %193 = arith.divf %191, %192 : vector<8x32xf32>
    %194 = arith.index_cast %182 : i32 to index
    %c0_115 = arith.constant 0 : index
    %195 = vector.load %arg12[%194, %c0_115] : memref<64x32xf32, #tpu.memory_space<vmem>>, vector<8x32xf32>
    %c1_116 = arith.constant 1 : index
    %c0_117 = arith.constant 0 : index
    %c0_118 = arith.constant 0 : index
    %196 = vector.load %arg2[%c1_116, %c0_117, %c0_118] : memref<4x32x32xf32, #tpu.memory_space<vmem>>, vector<1x32x32xf32>
    %197 = vector.shape_cast %196 : vector<1x32x32xf32> to vector<32x32xf32>
    %cst_119 = arith.constant dense<0.000000e+00> : vector<8x32xf32>
    %198 = tpu.matmul %178, %197, %cst_119 {dimension_numbers = #tpu.dot_dimension_numbers<[1], [0], [0], [1], [0, 0, 1, 1], [], []>} : vector<8x32xf32>, vector<32x32xf32>, vector<8x32xf32> -> vector<8x32xf32>
    %199 = arith.addf %195, %198 : vector<8x32xf32>
    %200 = arith.negf %199 : vector<8x32xf32>
    %201 = math.exp %200 : vector<8x32xf32>
    %cst_120 = arith.constant 1.000000e+00 : f32
    %202 = vector.broadcast %cst_120 : f32 to vector<8x32xf32>
    %203 = arith.addf %202, %201 : vector<8x32xf32>
    %204 = arith.divf %202, %203 : vector<8x32xf32>
    %205 = arith.index_cast %182 : i32 to index
    %c0_121 = arith.constant 0 : index
    %206 = vector.load %arg13[%205, %c0_121] : memref<64x32xf32, #tpu.memory_space<vmem>>, vector<8x32xf32>
    %c2_122 = arith.constant 2 : index
    %c0_123 = arith.constant 0 : index
    %c0_124 = arith.constant 0 : index
    %207 = vector.load %arg2[%c2_122, %c0_123, %c0_124] : memref<4x32x32xf32, #tpu.memory_space<vmem>>, vector<1x32x32xf32>
    %208 = vector.shape_cast %207 : vector<1x32x32xf32> to vector<32x32xf32>
    %cst_125 = arith.constant dense<0.000000e+00> : vector<8x32xf32>
    %209 = tpu.matmul %178, %208, %cst_125 {dimension_numbers = #tpu.dot_dimension_numbers<[1], [0], [0], [1], [0, 0, 1, 1], [], []>} : vector<8x32xf32>, vector<32x32xf32>, vector<8x32xf32> -> vector<8x32xf32>
    %210 = arith.addf %206, %209 : vector<8x32xf32>
    %211 = math.tanh %210 : vector<8x32xf32>
    %212 = arith.index_cast %182 : i32 to index
    %c0_126 = arith.constant 0 : index
    %213 = vector.load %arg14[%212, %c0_126] : memref<64x32xf32, #tpu.memory_space<vmem>>, vector<8x32xf32>
    %c3_127 = arith.constant 3 : index
    %c0_128 = arith.constant 0 : index
    %c0_129 = arith.constant 0 : index
    %214 = vector.load %arg2[%c3_127, %c0_128, %c0_129] : memref<4x32x32xf32, #tpu.memory_space<vmem>>, vector<1x32x32xf32>
    %215 = vector.shape_cast %214 : vector<1x32x32xf32> to vector<32x32xf32>
    %cst_130 = arith.constant dense<0.000000e+00> : vector<8x32xf32>
    %216 = tpu.matmul %178, %215, %cst_130 {dimension_numbers = #tpu.dot_dimension_numbers<[1], [0], [0], [1], [0, 0, 1, 1], [], []>} : vector<8x32xf32>, vector<32x32xf32>, vector<8x32xf32> -> vector<8x32xf32>
    %217 = arith.addf %213, %216 : vector<8x32xf32>
    %218 = arith.negf %217 : vector<8x32xf32>
    %219 = math.exp %218 : vector<8x32xf32>
    %cst_131 = arith.constant 1.000000e+00 : f32
    %220 = vector.broadcast %cst_131 : f32 to vector<8x32xf32>
    %221 = arith.addf %220, %219 : vector<8x32xf32>
    %222 = arith.divf %220, %221 : vector<8x32xf32>
    %223 = arith.mulf %204, %176 : vector<8x32xf32>
    %224 = arith.mulf %193, %211 : vector<8x32xf32>
    %225 = arith.addf %223, %224 : vector<8x32xf32>
    %226 = math.tanh %225 : vector<8x32xf32>
    %227 = arith.mulf %222, %226 : vector<8x32xf32>
    %228 = arith.index_cast %182 : i32 to index
    %c0_132 = arith.constant 0 : index
    %229 = vector.load %arg10[%228, %c0_132] : memref<64x32xf32, #tpu.memory_space<vmem>>, vector<8x32xf32>
    tpu.vector_store %arg10[%228, %c0_132], %227 {strides = array<i32>} : memref<64x32xf32, #tpu.memory_space<vmem>>, vector<8x32xf32>,
    %c4_i32 = arith.constant 4 : i32
    %c8_i32_133 = arith.constant 8 : i32
    %230 = arith.muli %c4_i32, %c8_i32_133 : i32
    %231 = tpu.assume_multiple %230, 8 : i32
    %232 = arith.index_cast %231 : i32 to index
    %c0_134 = arith.constant 0 : index
    %233 = vector.load %arg11[%232, %c0_134] : memref<64x32xf32, #tpu.memory_space<vmem>>, vector<8x32xf32>
    %c0_135 = arith.constant 0 : index
    %c0_136 = arith.constant 0 : index
    %c0_137 = arith.constant 0 : index
    %234 = vector.load %arg2[%c0_135, %c0_136, %c0_137] : memref<4x32x32xf32, #tpu.memory_space<vmem>>, vector<1x32x32xf32>
    %235 = vector.shape_cast %234 : vector<1x32x32xf32> to vector<32x32xf32>
    %cst_138 = arith.constant dense<0.000000e+00> : vector<8x32xf32>
    %236 = tpu.matmul %227, %235, %cst_138 {dimension_numbers = #tpu.dot_dimension_numbers<[1], [0], [0], [1], [0, 0, 1, 1], [], []>} : vector<8x32xf32>, vector<32x32xf32>, vector<8x32xf32> -> vector<8x32xf32>
    %237 = arith.addf %233, %236 : vector<8x32xf32>
    %238 = arith.negf %237 : vector<8x32xf32>
    %239 = math.exp %238 : vector<8x32xf32>
    %cst_139 = arith.constant 1.000000e+00 : f32
    %240 = vector.broadcast %cst_139 : f32 to vector<8x32xf32>
    %241 = arith.addf %240, %239 : vector<8x32xf32>
    %242 = arith.divf %240, %241 : vector<8x32xf32>
    %243 = arith.index_cast %231 : i32 to index
    %c0_140 = arith.constant 0 : index
    %244 = vector.load %arg12[%243, %c0_140] : memref<64x32xf32, #tpu.memory_space<vmem>>, vector<8x32xf32>
    %c1_141 = arith.constant 1 : index
    %c0_142 = arith.constant 0 : index
    %c0_143 = arith.constant 0 : index
    %245 = vector.load %arg2[%c1_141, %c0_142, %c0_143] : memref<4x32x32xf32, #tpu.memory_space<vmem>>, vector<1x32x32xf32>
    %246 = vector.shape_cast %245 : vector<1x32x32xf32> to vector<32x32xf32>
    %cst_144 = arith.constant dense<0.000000e+00> : vector<8x32xf32>
    %247 = tpu.matmul %227, %246, %cst_144 {dimension_numbers = #tpu.dot_dimension_numbers<[1], [0], [0], [1], [0, 0, 1, 1], [], []>} : vector<8x32xf32>, vector<32x32xf32>, vector<8x32xf32> -> vector<8x32xf32>
    %248 = arith.addf %244, %247 : vector<8x32xf32>
    %249 = arith.negf %248 : vector<8x32xf32>
    %250 = math.exp %249 : vector<8x32xf32>
    %cst_145 = arith.constant 1.000000e+00 : f32
    %251 = vector.broadcast %cst_145 : f32 to vector<8x32xf32>
    %252 = arith.addf %251, %250 : vector<8x32xf32>
    %253 = arith.divf %251, %252 : vector<8x32xf32>
    %254 = arith.index_cast %231 : i32 to index
    %c0_146 = arith.constant 0 : index
    %255 = vector.load %arg13[%254, %c0_146] : memref<64x32xf32, #tpu.memory_space<vmem>>, vector<8x32xf32>
    %c2_147 = arith.constant 2 : index
    %c0_148 = arith.constant 0 : index
    %c0_149 = arith.constant 0 : index
    %256 = vector.load %arg2[%c2_147, %c0_148, %c0_149] : memref<4x32x32xf32, #tpu.memory_space<vmem>>, vector<1x32x32xf32>
    %257 = vector.shape_cast %256 : vector<1x32x32xf32> to vector<32x32xf32>
    %cst_150 = arith.constant dense<0.000000e+00> : vector<8x32xf32>
    %258 = tpu.matmul %227, %257, %cst_150 {dimension_numbers = #tpu.dot_dimension_numbers<[1], [0], [0], [1], [0, 0, 1, 1], [], []>} : vector<8x32xf32>, vector<32x32xf32>, vector<8x32xf32> -> vector<8x32xf32>
    %259 = arith.addf %255, %258 : vector<8x32xf32>
    %260 = math.tanh %259 : vector<8x32xf32>
    %261 = arith.index_cast %231 : i32 to index
    %c0_151 = arith.constant 0 : index
    %262 = vector.load %arg14[%261, %c0_151] : memref<64x32xf32, #tpu.memory_space<vmem>>, vector<8x32xf32>
    %c3_152 = arith.constant 3 : index
    %c0_153 = arith.constant 0 : index
    %c0_154 = arith.constant 0 : index
    %263 = vector.load %arg2[%c3_152, %c0_153, %c0_154] : memref<4x32x32xf32, #tpu.memory_space<vmem>>, vector<1x32x32xf32>
    %264 = vector.shape_cast %263 : vector<1x32x32xf32> to vector<32x32xf32>
    %cst_155 = arith.constant dense<0.000000e+00> : vector<8x32xf32>
    %265 = tpu.matmul %227, %264, %cst_155 {dimension_numbers = #tpu.dot_dimension_numbers<[1], [0], [0], [1], [0, 0, 1, 1], [], []>} : vector<8x32xf32>, vector<32x32xf32>, vector<8x32xf32> -> vector<8x32xf32>
    %266 = arith.addf %262, %265 : vector<8x32xf32>
    %267 = arith.negf %266 : vector<8x32xf32>
    %268 = math.exp %267 : vector<8x32xf32>
    %cst_156 = arith.constant 1.000000e+00 : f32
    %269 = vector.broadcast %cst_156 : f32 to vector<8x32xf32>
    %270 = arith.addf %269, %268 : vector<8x32xf32>
    %271 = arith.divf %269, %270 : vector<8x32xf32>
    %272 = arith.mulf %253, %225 : vector<8x32xf32>
    %273 = arith.mulf %242, %260 : vector<8x32xf32>
    %274 = arith.addf %272, %273 : vector<8x32xf32>
    %275 = math.tanh %274 : vector<8x32xf32>
    %276 = arith.mulf %271, %275 : vector<8x32xf32>
    %277 = arith.index_cast %231 : i32 to index
    %c0_157 = arith.constant 0 : index
    %278 = vector.load %arg10[%277, %c0_157] : memref<64x32xf32, #tpu.memory_space<vmem>>, vector<8x32xf32>
    tpu.vector_store %arg10[%277, %c0_157], %276 {strides = array<i32>} : memref<64x32xf32, #tpu.memory_space<vmem>>, vector<8x32xf32>,
    %c5_i32 = arith.constant 5 : i32
    %c8_i32_158 = arith.constant 8 : i32
    %279 = arith.muli %c5_i32, %c8_i32_158 : i32
    %280 = tpu.assume_multiple %279, 8 : i32
    %281 = arith.index_cast %280 : i32 to index
    %c0_159 = arith.constant 0 : index
    %282 = vector.load %arg11[%281, %c0_159] : memref<64x32xf32, #tpu.memory_space<vmem>>, vector<8x32xf32>
    %c0_160 = arith.constant 0 : index
    %c0_161 = arith.constant 0 : index
    %c0_162 = arith.constant 0 : index
    %283 = vector.load %arg2[%c0_160, %c0_161, %c0_162] : memref<4x32x32xf32, #tpu.memory_space<vmem>>, vector<1x32x32xf32>
    %284 = vector.shape_cast %283 : vector<1x32x32xf32> to vector<32x32xf32>
    %cst_163 = arith.constant dense<0.000000e+00> : vector<8x32xf32>
    %285 = tpu.matmul %276, %284, %cst_163 {dimension_numbers = #tpu.dot_dimension_numbers<[1], [0], [0], [1], [0, 0, 1, 1], [], []>} : vector<8x32xf32>, vector<32x32xf32>, vector<8x32xf32> -> vector<8x32xf32>
    %286 = arith.addf %282, %285 : vector<8x32xf32>
    %287 = arith.negf %286 : vector<8x32xf32>
    %288 = math.exp %287 : vector<8x32xf32>
    %cst_164 = arith.constant 1.000000e+00 : f32
    %289 = vector.broadcast %cst_164 : f32 to vector<8x32xf32>
    %290 = arith.addf %289, %288 : vector<8x32xf32>
    %291 = arith.divf %289, %290 : vector<8x32xf32>
    %292 = arith.index_cast %280 : i32 to index
    %c0_165 = arith.constant 0 : index
    %293 = vector.load %arg12[%292, %c0_165] : memref<64x32xf32, #tpu.memory_space<vmem>>, vector<8x32xf32>
    %c1_166 = arith.constant 1 : index
    %c0_167 = arith.constant 0 : index
    %c0_168 = arith.constant 0 : index
    %294 = vector.load %arg2[%c1_166, %c0_167, %c0_168] : memref<4x32x32xf32, #tpu.memory_space<vmem>>, vector<1x32x32xf32>
    %295 = vector.shape_cast %294 : vector<1x32x32xf32> to vector<32x32xf32>
    %cst_169 = arith.constant dense<0.000000e+00> : vector<8x32xf32>
    %296 = tpu.matmul %276, %295, %cst_169 {dimension_numbers = #tpu.dot_dimension_numbers<[1], [0], [0], [1], [0, 0, 1, 1], [], []>} : vector<8x32xf32>, vector<32x32xf32>, vector<8x32xf32> -> vector<8x32xf32>
    %297 = arith.addf %293, %296 : vector<8x32xf32>
    %298 = arith.negf %297 : vector<8x32xf32>
    %299 = math.exp %298 : vector<8x32xf32>
    %cst_170 = arith.constant 1.000000e+00 : f32
    %300 = vector.broadcast %cst_170 : f32 to vector<8x32xf32>
    %301 = arith.addf %300, %299 : vector<8x32xf32>
    %302 = arith.divf %300, %301 : vector<8x32xf32>
    %303 = arith.index_cast %280 : i32 to index
    %c0_171 = arith.constant 0 : index
    %304 = vector.load %arg13[%303, %c0_171] : memref<64x32xf32, #tpu.memory_space<vmem>>, vector<8x32xf32>
    %c2_172 = arith.constant 2 : index
    %c0_173 = arith.constant 0 : index
    %c0_174 = arith.constant 0 : index
    %305 = vector.load %arg2[%c2_172, %c0_173, %c0_174] : memref<4x32x32xf32, #tpu.memory_space<vmem>>, vector<1x32x32xf32>
    %306 = vector.shape_cast %305 : vector<1x32x32xf32> to vector<32x32xf32>
    %cst_175 = arith.constant dense<0.000000e+00> : vector<8x32xf32>
    %307 = tpu.matmul %276, %306, %cst_175 {dimension_numbers = #tpu.dot_dimension_numbers<[1], [0], [0], [1], [0, 0, 1, 1], [], []>} : vector<8x32xf32>, vector<32x32xf32>, vector<8x32xf32> -> vector<8x32xf32>
    %308 = arith.addf %304, %307 : vector<8x32xf32>
    %309 = math.tanh %308 : vector<8x32xf32>
    %310 = arith.index_cast %280 : i32 to index
    %c0_176 = arith.constant 0 : index
    %311 = vector.load %arg14[%310, %c0_176] : memref<64x32xf32, #tpu.memory_space<vmem>>, vector<8x32xf32>
    %c3_177 = arith.constant 3 : index
    %c0_178 = arith.constant 0 : index
    %c0_179 = arith.constant 0 : index
    %312 = vector.load %arg2[%c3_177, %c0_178, %c0_179] : memref<4x32x32xf32, #tpu.memory_space<vmem>>, vector<1x32x32xf32>
    %313 = vector.shape_cast %312 : vector<1x32x32xf32> to vector<32x32xf32>
    %cst_180 = arith.constant dense<0.000000e+00> : vector<8x32xf32>
    %314 = tpu.matmul %276, %313, %cst_180 {dimension_numbers = #tpu.dot_dimension_numbers<[1], [0], [0], [1], [0, 0, 1, 1], [], []>} : vector<8x32xf32>, vector<32x32xf32>, vector<8x32xf32> -> vector<8x32xf32>
    %315 = arith.addf %311, %314 : vector<8x32xf32>
    %316 = arith.negf %315 : vector<8x32xf32>
    %317 = math.exp %316 : vector<8x32xf32>
    %cst_181 = arith.constant 1.000000e+00 : f32
    %318 = vector.broadcast %cst_181 : f32 to vector<8x32xf32>
    %319 = arith.addf %318, %317 : vector<8x32xf32>
    %320 = arith.divf %318, %319 : vector<8x32xf32>
    %321 = arith.mulf %302, %274 : vector<8x32xf32>
    %322 = arith.mulf %291, %309 : vector<8x32xf32>
    %323 = arith.addf %321, %322 : vector<8x32xf32>
    %324 = math.tanh %323 : vector<8x32xf32>
    %325 = arith.mulf %320, %324 : vector<8x32xf32>
    %326 = arith.index_cast %280 : i32 to index
    %c0_182 = arith.constant 0 : index
    %327 = vector.load %arg10[%326, %c0_182] : memref<64x32xf32, #tpu.memory_space<vmem>>, vector<8x32xf32>
    tpu.vector_store %arg10[%326, %c0_182], %325 {strides = array<i32>} : memref<64x32xf32, #tpu.memory_space<vmem>>, vector<8x32xf32>,
    %c6_i32 = arith.constant 6 : i32
    %c8_i32_183 = arith.constant 8 : i32
    %328 = arith.muli %c6_i32, %c8_i32_183 : i32
    %329 = tpu.assume_multiple %328, 8 : i32
    %330 = arith.index_cast %329 : i32 to index
    %c0_184 = arith.constant 0 : index
    %331 = vector.load %arg11[%330, %c0_184] : memref<64x32xf32, #tpu.memory_space<vmem>>, vector<8x32xf32>
    %c0_185 = arith.constant 0 : index
    %c0_186 = arith.constant 0 : index
    %c0_187 = arith.constant 0 : index
    %332 = vector.load %arg2[%c0_185, %c0_186, %c0_187] : memref<4x32x32xf32, #tpu.memory_space<vmem>>, vector<1x32x32xf32>
    %333 = vector.shape_cast %332 : vector<1x32x32xf32> to vector<32x32xf32>
    %cst_188 = arith.constant dense<0.000000e+00> : vector<8x32xf32>
    %334 = tpu.matmul %325, %333, %cst_188 {dimension_numbers = #tpu.dot_dimension_numbers<[1], [0], [0], [1], [0, 0, 1, 1], [], []>} : vector<8x32xf32>, vector<32x32xf32>, vector<8x32xf32> -> vector<8x32xf32>
    %335 = arith.addf %331, %334 : vector<8x32xf32>
    %336 = arith.negf %335 : vector<8x32xf32>
    %337 = math.exp %336 : vector<8x32xf32>
    %cst_189 = arith.constant 1.000000e+00 : f32
    %338 = vector.broadcast %cst_189 : f32 to vector<8x32xf32>
    %339 = arith.addf %338, %337 : vector<8x32xf32>
    %340 = arith.divf %338, %339 : vector<8x32xf32>
    %341 = arith.index_cast %329 : i32 to index
    %c0_190 = arith.constant 0 : index
    %342 = vector.load %arg12[%341, %c0_190] : memref<64x32xf32, #tpu.memory_space<vmem>>, vector<8x32xf32>
    %c1_191 = arith.constant 1 : index
    %c0_192 = arith.constant 0 : index
    %c0_193 = arith.constant 0 : index
    %343 = vector.load %arg2[%c1_191, %c0_192, %c0_193] : memref<4x32x32xf32, #tpu.memory_space<vmem>>, vector<1x32x32xf32>
    %344 = vector.shape_cast %343 : vector<1x32x32xf32> to vector<32x32xf32>
    %cst_194 = arith.constant dense<0.000000e+00> : vector<8x32xf32>
    %345 = tpu.matmul %325, %344, %cst_194 {dimension_numbers = #tpu.dot_dimension_numbers<[1], [0], [0], [1], [0, 0, 1, 1], [], []>} : vector<8x32xf32>, vector<32x32xf32>, vector<8x32xf32> -> vector<8x32xf32>
    %346 = arith.addf %342, %345 : vector<8x32xf32>
    %347 = arith.negf %346 : vector<8x32xf32>
    %348 = math.exp %347 : vector<8x32xf32>
    %cst_195 = arith.constant 1.000000e+00 : f32
    %349 = vector.broadcast %cst_195 : f32 to vector<8x32xf32>
    %350 = arith.addf %349, %348 : vector<8x32xf32>
    %351 = arith.divf %349, %350 : vector<8x32xf32>
    %352 = arith.index_cast %329 : i32 to index
    %c0_196 = arith.constant 0 : index
    %353 = vector.load %arg13[%352, %c0_196] : memref<64x32xf32, #tpu.memory_space<vmem>>, vector<8x32xf32>
    %c2_197 = arith.constant 2 : index
    %c0_198 = arith.constant 0 : index
    %c0_199 = arith.constant 0 : index
    %354 = vector.load %arg2[%c2_197, %c0_198, %c0_199] : memref<4x32x32xf32, #tpu.memory_space<vmem>>, vector<1x32x32xf32>
    %355 = vector.shape_cast %354 : vector<1x32x32xf32> to vector<32x32xf32>
    %cst_200 = arith.constant dense<0.000000e+00> : vector<8x32xf32>
    %356 = tpu.matmul %325, %355, %cst_200 {dimension_numbers = #tpu.dot_dimension_numbers<[1], [0], [0], [1], [0, 0, 1, 1], [], []>} : vector<8x32xf32>, vector<32x32xf32>, vector<8x32xf32> -> vector<8x32xf32>
    %357 = arith.addf %353, %356 : vector<8x32xf32>
    %358 = math.tanh %357 : vector<8x32xf32>
    %359 = arith.index_cast %329 : i32 to index
    %c0_201 = arith.constant 0 : index
    %360 = vector.load %arg14[%359, %c0_201] : memref<64x32xf32, #tpu.memory_space<vmem>>, vector<8x32xf32>
    %c3_202 = arith.constant 3 : index
    %c0_203 = arith.constant 0 : index
    %c0_204 = arith.constant 0 : index
    %361 = vector.load %arg2[%c3_202, %c0_203, %c0_204] : memref<4x32x32xf32, #tpu.memory_space<vmem>>, vector<1x32x32xf32>
    %362 = vector.shape_cast %361 : vector<1x32x32xf32> to vector<32x32xf32>
    %cst_205 = arith.constant dense<0.000000e+00> : vector<8x32xf32>
    %363 = tpu.matmul %325, %362, %cst_205 {dimension_numbers = #tpu.dot_dimension_numbers<[1], [0], [0], [1], [0, 0, 1, 1], [], []>} : vector<8x32xf32>, vector<32x32xf32>, vector<8x32xf32> -> vector<8x32xf32>
    %364 = arith.addf %360, %363 : vector<8x32xf32>
    %365 = arith.negf %364 : vector<8x32xf32>
    %366 = math.exp %365 : vector<8x32xf32>
    %cst_206 = arith.constant 1.000000e+00 : f32
    %367 = vector.broadcast %cst_206 : f32 to vector<8x32xf32>
    %368 = arith.addf %367, %366 : vector<8x32xf32>
    %369 = arith.divf %367, %368 : vector<8x32xf32>
    %370 = arith.mulf %351, %323 : vector<8x32xf32>
    %371 = arith.mulf %340, %358 : vector<8x32xf32>
    %372 = arith.addf %370, %371 : vector<8x32xf32>
    %373 = math.tanh %372 : vector<8x32xf32>
    %374 = arith.mulf %369, %373 : vector<8x32xf32>
    %375 = arith.index_cast %329 : i32 to index
    %c0_207 = arith.constant 0 : index
    %376 = vector.load %arg10[%375, %c0_207] : memref<64x32xf32, #tpu.memory_space<vmem>>, vector<8x32xf32>
    tpu.vector_store %arg10[%375, %c0_207], %374 {strides = array<i32>} : memref<64x32xf32, #tpu.memory_space<vmem>>, vector<8x32xf32>,
    %c7_i32 = arith.constant 7 : i32
    %c8_i32_208 = arith.constant 8 : i32
    %377 = arith.muli %c7_i32, %c8_i32_208 : i32
    %378 = tpu.assume_multiple %377, 8 : i32
    %379 = arith.index_cast %378 : i32 to index
    %c0_209 = arith.constant 0 : index
    %380 = vector.load %arg11[%379, %c0_209] : memref<64x32xf32, #tpu.memory_space<vmem>>, vector<8x32xf32>
    %c0_210 = arith.constant 0 : index
    %c0_211 = arith.constant 0 : index
    %c0_212 = arith.constant 0 : index
    %381 = vector.load %arg2[%c0_210, %c0_211, %c0_212] : memref<4x32x32xf32, #tpu.memory_space<vmem>>, vector<1x32x32xf32>
    %382 = vector.shape_cast %381 : vector<1x32x32xf32> to vector<32x32xf32>
    %cst_213 = arith.constant dense<0.000000e+00> : vector<8x32xf32>
    %383 = tpu.matmul %374, %382, %cst_213 {dimension_numbers = #tpu.dot_dimension_numbers<[1], [0], [0], [1], [0, 0, 1, 1], [], []>} : vector<8x32xf32>, vector<32x32xf32>, vector<8x32xf32> -> vector<8x32xf32>
    %384 = arith.addf %380, %383 : vector<8x32xf32>
    %385 = arith.negf %384 : vector<8x32xf32>
    %386 = math.exp %385 : vector<8x32xf32>
    %cst_214 = arith.constant 1.000000e+00 : f32
    %387 = vector.broadcast %cst_214 : f32 to vector<8x32xf32>
    %388 = arith.addf %387, %386 : vector<8x32xf32>
    %389 = arith.divf %387, %388 : vector<8x32xf32>
    %390 = arith.index_cast %378 : i32 to index
    %c0_215 = arith.constant 0 : index
    %391 = vector.load %arg12[%390, %c0_215] : memref<64x32xf32, #tpu.memory_space<vmem>>, vector<8x32xf32>
    %c1_216 = arith.constant 1 : index
    %c0_217 = arith.constant 0 : index
    %c0_218 = arith.constant 0 : index
    %392 = vector.load %arg2[%c1_216, %c0_217, %c0_218] : memref<4x32x32xf32, #tpu.memory_space<vmem>>, vector<1x32x32xf32>
    %393 = vector.shape_cast %392 : vector<1x32x32xf32> to vector<32x32xf32>
    %cst_219 = arith.constant dense<0.000000e+00> : vector<8x32xf32>
    %394 = tpu.matmul %374, %393, %cst_219 {dimension_numbers = #tpu.dot_dimension_numbers<[1], [0], [0], [1], [0, 0, 1, 1], [], []>} : vector<8x32xf32>, vector<32x32xf32>, vector<8x32xf32> -> vector<8x32xf32>
    %395 = arith.addf %391, %394 : vector<8x32xf32>
    %396 = arith.negf %395 : vector<8x32xf32>
    %397 = math.exp %396 : vector<8x32xf32>
    %cst_220 = arith.constant 1.000000e+00 : f32
    %398 = vector.broadcast %cst_220 : f32 to vector<8x32xf32>
    %399 = arith.addf %398, %397 : vector<8x32xf32>
    %400 = arith.divf %398, %399 : vector<8x32xf32>
    %401 = arith.index_cast %378 : i32 to index
    %c0_221 = arith.constant 0 : index
    %402 = vector.load %arg13[%401, %c0_221] : memref<64x32xf32, #tpu.memory_space<vmem>>, vector<8x32xf32>
    %c2_222 = arith.constant 2 : index
    %c0_223 = arith.constant 0 : index
    %c0_224 = arith.constant 0 : index
    %403 = vector.load %arg2[%c2_222, %c0_223, %c0_224] : memref<4x32x32xf32, #tpu.memory_space<vmem>>, vector<1x32x32xf32>
    %404 = vector.shape_cast %403 : vector<1x32x32xf32> to vector<32x32xf32>
    %cst_225 = arith.constant dense<0.000000e+00> : vector<8x32xf32>
    %405 = tpu.matmul %374, %404, %cst_225 {dimension_numbers = #tpu.dot_dimension_numbers<[1], [0], [0], [1], [0, 0, 1, 1], [], []>} : vector<8x32xf32>, vector<32x32xf32>, vector<8x32xf32> -> vector<8x32xf32>
    %406 = arith.addf %402, %405 : vector<8x32xf32>
    %407 = math.tanh %406 : vector<8x32xf32>
    %408 = arith.index_cast %378 : i32 to index
    %c0_226 = arith.constant 0 : index
    %409 = vector.load %arg14[%408, %c0_226] : memref<64x32xf32, #tpu.memory_space<vmem>>, vector<8x32xf32>
    %c3_227 = arith.constant 3 : index
    %c0_228 = arith.constant 0 : index
    %c0_229 = arith.constant 0 : index
    %410 = vector.load %arg2[%c3_227, %c0_228, %c0_229] : memref<4x32x32xf32, #tpu.memory_space<vmem>>, vector<1x32x32xf32>
    %411 = vector.shape_cast %410 : vector<1x32x32xf32> to vector<32x32xf32>
    %cst_230 = arith.constant dense<0.000000e+00> : vector<8x32xf32>
    %412 = tpu.matmul %374, %411, %cst_230 {dimension_numbers = #tpu.dot_dimension_numbers<[1], [0], [0], [1], [0, 0, 1, 1], [], []>} : vector<8x32xf32>, vector<32x32xf32>, vector<8x32xf32> -> vector<8x32xf32>
    %413 = arith.addf %409, %412 : vector<8x32xf32>
    %414 = arith.negf %413 : vector<8x32xf32>
    %415 = math.exp %414 : vector<8x32xf32>
    %cst_231 = arith.constant 1.000000e+00 : f32
    %416 = vector.broadcast %cst_231 : f32 to vector<8x32xf32>
    %417 = arith.addf %416, %415 : vector<8x32xf32>
    %418 = arith.divf %416, %417 : vector<8x32xf32>
    %419 = arith.mulf %400, %372 : vector<8x32xf32>
    %420 = arith.mulf %389, %407 : vector<8x32xf32>
    %421 = arith.addf %419, %420 : vector<8x32xf32>
    %422 = math.tanh %421 : vector<8x32xf32>
    %423 = arith.mulf %418, %422 : vector<8x32xf32>
    %424 = arith.index_cast %378 : i32 to index
    %c0_232 = arith.constant 0 : index
    %425 = vector.load %arg10[%424, %c0_232] : memref<64x32xf32, #tpu.memory_space<vmem>>, vector<8x32xf32>
    tpu.vector_store %arg10[%424, %c0_232], %423 {strides = array<i32>} : memref<64x32xf32, #tpu.memory_space<vmem>>, vector<8x32xf32>,
    %c8_i32_233 = arith.constant 8 : i32
    %c0_234 = arith.constant 0 : index
    %c0_235 = arith.constant 0 : index
    %426 = vector.load %arg10[%c0_234, %c0_235] : memref<64x32xf32, #tpu.memory_space<vmem>>, vector<64x32xf32>
    %c0_236 = arith.constant 0 : index
    %c0_237 = arith.constant 0 : index
    %c0_238 = arith.constant 0 : index
    %427 = vector.load %arg4[%c0_236, %c0_237, %c0_238] : memref<4x32x32xf32, #tpu.memory_space<vmem>>, vector<1x32x32xf32>
    %428 = vector.shape_cast %427 : vector<1x32x32xf32> to vector<32x32xf32>
    %cst_239 = arith.constant dense<0.000000e+00> : vector<64x32xf32>
    %429 = tpu.matmul %426, %428, %cst_239 {dimension_numbers = #tpu.dot_dimension_numbers<[1], [0], [0], [1], [0, 0, 1, 1], [], []>} : vector<64x32xf32>, vector<32x32xf32>, vector<64x32xf32> -> vector<64x32xf32>
    %c0_240 = arith.constant 0 : index
    %c0_241 = arith.constant 0 : index
    %c0_242 = arith.constant 0 : index
    %430 = vector.load %arg6[%c0_240, %c0_241, %c0_242] : memref<4x1x32xf32, #tpu.memory_space<vmem>>, vector<1x1x32xf32>
    %431 = vector.shape_cast %430 : vector<1x1x32xf32> to vector<1x32xf32>
    %432 = vector.broadcast %431 : vector<1x32xf32> to vector<64x32xf32>
    %433 = arith.addf %429, %432 : vector<64x32xf32>
    %c0_243 = arith.constant 0 : index
    %c0_244 = arith.constant 0 : index
    %434 = vector.load %arg11[%c0_243, %c0_244] : memref<64x32xf32, #tpu.memory_space<vmem>>, vector<64x32xf32>
    tpu.vector_store %arg11[%c0_243, %c0_244], %433 {strides = array<i32>} : memref<64x32xf32, #tpu.memory_space<vmem>>, vector<64x32xf32>,
    %c1_245 = arith.constant 1 : index
    %c0_246 = arith.constant 0 : index
    %c0_247 = arith.constant 0 : index
    %435 = vector.load %arg4[%c1_245, %c0_246, %c0_247] : memref<4x32x32xf32, #tpu.memory_space<vmem>>, vector<1x32x32xf32>
    %436 = vector.shape_cast %435 : vector<1x32x32xf32> to vector<32x32xf32>
    %cst_248 = arith.constant dense<0.000000e+00> : vector<64x32xf32>
    %437 = tpu.matmul %426, %436, %cst_248 {dimension_numbers = #tpu.dot_dimension_numbers<[1], [0], [0], [1], [0, 0, 1, 1], [], []>} : vector<64x32xf32>, vector<32x32xf32>, vector<64x32xf32> -> vector<64x32xf32>
    %c1_249 = arith.constant 1 : index
    %c0_250 = arith.constant 0 : index
    %c0_251 = arith.constant 0 : index
    %438 = vector.load %arg6[%c1_249, %c0_250, %c0_251] : memref<4x1x32xf32, #tpu.memory_space<vmem>>, vector<1x1x32xf32>
    %439 = vector.shape_cast %438 : vector<1x1x32xf32> to vector<1x32xf32>
    %440 = vector.broadcast %439 : vector<1x32xf32> to vector<64x32xf32>
    %441 = arith.addf %437, %440 : vector<64x32xf32>
    %c0_252 = arith.constant 0 : index
    %c0_253 = arith.constant 0 : index
    %442 = vector.load %arg12[%c0_252, %c0_253] : memref<64x32xf32, #tpu.memory_space<vmem>>, vector<64x32xf32>
    tpu.vector_store %arg12[%c0_252, %c0_253], %441 {strides = array<i32>} : memref<64x32xf32, #tpu.memory_space<vmem>>, vector<64x32xf32>,
    %c2_254 = arith.constant 2 : index
    %c0_255 = arith.constant 0 : index
    %c0_256 = arith.constant 0 : index
    %443 = vector.load %arg4[%c2_254, %c0_255, %c0_256] : memref<4x32x32xf32, #tpu.memory_space<vmem>>, vector<1x32x32xf32>
    %444 = vector.shape_cast %443 : vector<1x32x32xf32> to vector<32x32xf32>
    %cst_257 = arith.constant dense<0.000000e+00> : vector<64x32xf32>
    %445 = tpu.matmul %426, %444, %cst_257 {dimension_numbers = #tpu.dot_dimension_numbers<[1], [0], [0], [1], [0, 0, 1, 1], [], []>} : vector<64x32xf32>, vector<32x32xf32>, vector<64x32xf32> -> vector<64x32xf32>
    %c2_258 = arith.constant 2 : index
    %c0_259 = arith.constant 0 : index
    %c0_260 = arith.constant 0 : index
    %446 = vector.load %arg6[%c2_258, %c0_259, %c0_260] : memref<4x1x32xf32, #tpu.memory_space<vmem>>, vector<1x1x32xf32>
    %447 = vector.shape_cast %446 : vector<1x1x32xf32> to vector<1x32xf32>
    %448 = vector.broadcast %447 : vector<1x32xf32> to vector<64x32xf32>
    %449 = arith.addf %445, %448 : vector<64x32xf32>
    %c0_261 = arith.constant 0 : index
    %c0_262 = arith.constant 0 : index
    %450 = vector.load %arg13[%c0_261, %c0_262] : memref<64x32xf32, #tpu.memory_space<vmem>>, vector<64x32xf32>
    tpu.vector_store %arg13[%c0_261, %c0_262], %449 {strides = array<i32>} : memref<64x32xf32, #tpu.memory_space<vmem>>, vector<64x32xf32>,
    %c3_263 = arith.constant 3 : index
    %c0_264 = arith.constant 0 : index
    %c0_265 = arith.constant 0 : index
    %451 = vector.load %arg4[%c3_263, %c0_264, %c0_265] : memref<4x32x32xf32, #tpu.memory_space<vmem>>, vector<1x32x32xf32>
    %452 = vector.shape_cast %451 : vector<1x32x32xf32> to vector<32x32xf32>
    %cst_266 = arith.constant dense<0.000000e+00> : vector<64x32xf32>
    %453 = tpu.matmul %426, %452, %cst_266 {dimension_numbers = #tpu.dot_dimension_numbers<[1], [0], [0], [1], [0, 0, 1, 1], [], []>} : vector<64x32xf32>, vector<32x32xf32>, vector<64x32xf32> -> vector<64x32xf32>
    %c3_267 = arith.constant 3 : index
    %c0_268 = arith.constant 0 : index
    %c0_269 = arith.constant 0 : index
    %454 = vector.load %arg6[%c3_267, %c0_268, %c0_269] : memref<4x1x32xf32, #tpu.memory_space<vmem>>, vector<1x1x32xf32>
    %455 = vector.shape_cast %454 : vector<1x1x32xf32> to vector<1x32xf32>
    %456 = vector.broadcast %455 : vector<1x32xf32> to vector<64x32xf32>
    %457 = arith.addf %453, %456 : vector<64x32xf32>
    %c0_270 = arith.constant 0 : index
    %c0_271 = arith.constant 0 : index
    %458 = vector.load %arg14[%c0_270, %c0_271] : memref<64x32xf32, #tpu.memory_space<vmem>>, vector<64x32xf32>
    tpu.vector_store %arg14[%c0_270, %c0_271], %457 {strides = array<i32>} : memref<64x32xf32, #tpu.memory_space<vmem>>, vector<64x32xf32>,
    %cst_272 = arith.constant 0.000000e+00 : f32
    %459 = vector.broadcast %cst_272 : f32 to vector<8x32xf32>
    %c0_i32_273 = arith.constant 0 : i32
    %c8_i32_274 = arith.constant 8 : i32
    %460 = arith.muli %c0_i32_273, %c8_i32_274 : i32
    %461 = tpu.assume_multiple %460, 8 : i32
    %462 = arith.index_cast %461 : i32 to index
    %c0_275 = arith.constant 0 : index
    %463 = vector.load %arg11[%462, %c0_275] : memref<64x32xf32, #tpu.memory_space<vmem>>, vector<8x32xf32>
    %c0_276 = arith.constant 0 : index
    %c0_277 = arith.constant 0 : index
    %c0_278 = arith.constant 0 : index
    %464 = vector.load %arg5[%c0_276, %c0_277, %c0_278] : memref<4x32x32xf32, #tpu.memory_space<vmem>>, vector<1x32x32xf32>
    %465 = vector.shape_cast %464 : vector<1x32x32xf32> to vector<32x32xf32>
    %cst_279 = arith.constant dense<0.000000e+00> : vector<8x32xf32>
    %466 = tpu.matmul %459, %465, %cst_279 {dimension_numbers = #tpu.dot_dimension_numbers<[1], [0], [0], [1], [0, 0, 1, 1], [], []>} : vector<8x32xf32>, vector<32x32xf32>, vector<8x32xf32> -> vector<8x32xf32>
    %467 = arith.addf %463, %466 : vector<8x32xf32>
    %468 = arith.negf %467 : vector<8x32xf32>
    %469 = math.exp %468 : vector<8x32xf32>
    %cst_280 = arith.constant 1.000000e+00 : f32
    %470 = vector.broadcast %cst_280 : f32 to vector<8x32xf32>
    %471 = arith.addf %470, %469 : vector<8x32xf32>
    %472 = arith.divf %470, %471 : vector<8x32xf32>
    %473 = arith.index_cast %461 : i32 to index
    %c0_281 = arith.constant 0 : index
    %474 = vector.load %arg12[%473, %c0_281] : memref<64x32xf32, #tpu.memory_space<vmem>>, vector<8x32xf32>
    %c1_282 = arith.constant 1 : index
    %c0_283 = arith.constant 0 : index
    %c0_284 = arith.constant 0 : index
    %475 = vector.load %arg5[%c1_282, %c0_283, %c0_284] : memref<4x32x32xf32, #tpu.memory_space<vmem>>, vector<1x32x32xf32>
    %476 = vector.shape_cast %475 : vector<1x32x32xf32> to vector<32x32xf32>
    %cst_285 = arith.constant dense<0.000000e+00> : vector<8x32xf32>
    %477 = tpu.matmul %459, %476, %cst_285 {dimension_numbers = #tpu.dot_dimension_numbers<[1], [0], [0], [1], [0, 0, 1, 1], [], []>} : vector<8x32xf32>, vector<32x32xf32>, vector<8x32xf32> -> vector<8x32xf32>
    %478 = arith.addf %474, %477 : vector<8x32xf32>
    %479 = arith.negf %478 : vector<8x32xf32>
    %480 = math.exp %479 : vector<8x32xf32>
    %cst_286 = arith.constant 1.000000e+00 : f32
    %481 = vector.broadcast %cst_286 : f32 to vector<8x32xf32>
    %482 = arith.addf %481, %480 : vector<8x32xf32>
    %483 = arith.divf %481, %482 : vector<8x32xf32>
    %484 = arith.index_cast %461 : i32 to index
    %c0_287 = arith.constant 0 : index
    %485 = vector.load %arg13[%484, %c0_287] : memref<64x32xf32, #tpu.memory_space<vmem>>, vector<8x32xf32>
    %c2_288 = arith.constant 2 : index
    %c0_289 = arith.constant 0 : index
    %c0_290 = arith.constant 0 : index
    %486 = vector.load %arg5[%c2_288, %c0_289, %c0_290] : memref<4x32x32xf32, #tpu.memory_space<vmem>>, vector<1x32x32xf32>
    %487 = vector.shape_cast %486 : vector<1x32x32xf32> to vector<32x32xf32>
    %cst_291 = arith.constant dense<0.000000e+00> : vector<8x32xf32>
    %488 = tpu.matmul %459, %487, %cst_291 {dimension_numbers = #tpu.dot_dimension_numbers<[1], [0], [0], [1], [0, 0, 1, 1], [], []>} : vector<8x32xf32>, vector<32x32xf32>, vector<8x32xf32> -> vector<8x32xf32>
    %489 = arith.addf %485, %488 : vector<8x32xf32>
    %490 = math.tanh %489 : vector<8x32xf32>
    %491 = arith.index_cast %461 : i32 to index
    %c0_292 = arith.constant 0 : index
    %492 = vector.load %arg14[%491, %c0_292] : memref<64x32xf32, #tpu.memory_space<vmem>>, vector<8x32xf32>
    %c3_293 = arith.constant 3 : index
    %c0_294 = arith.constant 0 : index
    %c0_295 = arith.constant 0 : index
    %493 = vector.load %arg5[%c3_293, %c0_294, %c0_295] : memref<4x32x32xf32, #tpu.memory_space<vmem>>, vector<1x32x32xf32>
    %494 = vector.shape_cast %493 : vector<1x32x32xf32> to vector<32x32xf32>
    %cst_296 = arith.constant dense<0.000000e+00> : vector<8x32xf32>
    %495 = tpu.matmul %459, %494, %cst_296 {dimension_numbers = #tpu.dot_dimension_numbers<[1], [0], [0], [1], [0, 0, 1, 1], [], []>} : vector<8x32xf32>, vector<32x32xf32>, vector<8x32xf32> -> vector<8x32xf32>
    %496 = arith.addf %492, %495 : vector<8x32xf32>
    %497 = arith.negf %496 : vector<8x32xf32>
    %498 = math.exp %497 : vector<8x32xf32>
    %cst_297 = arith.constant 1.000000e+00 : f32
    %499 = vector.broadcast %cst_297 : f32 to vector<8x32xf32>
    %500 = arith.addf %499, %498 : vector<8x32xf32>
    %501 = arith.divf %499, %500 : vector<8x32xf32>
    %502 = arith.mulf %483, %459 : vector<8x32xf32>
    %503 = arith.mulf %472, %490 : vector<8x32xf32>
    %504 = arith.addf %502, %503 : vector<8x32xf32>
    %505 = math.tanh %504 : vector<8x32xf32>
    %506 = arith.mulf %501, %505 : vector<8x32xf32>
    %507 = arith.index_cast %461 : i32 to index
    %c0_298 = arith.constant 0 : index
    %508 = vector.load %arg10[%507, %c0_298] : memref<64x32xf32, #tpu.memory_space<vmem>>, vector<8x32xf32>
    tpu.vector_store %arg10[%507, %c0_298], %506 {strides = array<i32>} : memref<64x32xf32, #tpu.memory_space<vmem>>, vector<8x32xf32>,
    %c1_i32_299 = arith.constant 1 : i32
    %c8_i32_300 = arith.constant 8 : i32
    %509 = arith.muli %c1_i32_299, %c8_i32_300 : i32
    %510 = tpu.assume_multiple %509, 8 : i32
    %511 = arith.index_cast %510 : i32 to index
    %c0_301 = arith.constant 0 : index
    %512 = vector.load %arg11[%511, %c0_301] : memref<64x32xf32, #tpu.memory_space<vmem>>, vector<8x32xf32>
    %c0_302 = arith.constant 0 : index
    %c0_303 = arith.constant 0 : index
    %c0_304 = arith.constant 0 : index
    %513 = vector.load %arg5[%c0_302, %c0_303, %c0_304] : memref<4x32x32xf32, #tpu.memory_space<vmem>>, vector<1x32x32xf32>
    %514 = vector.shape_cast %513 : vector<1x32x32xf32> to vector<32x32xf32>
    %cst_305 = arith.constant dense<0.000000e+00> : vector<8x32xf32>
    %515 = tpu.matmul %506, %514, %cst_305 {dimension_numbers = #tpu.dot_dimension_numbers<[1], [0], [0], [1], [0, 0, 1, 1], [], []>} : vector<8x32xf32>, vector<32x32xf32>, vector<8x32xf32> -> vector<8x32xf32>
    %516 = arith.addf %512, %515 : vector<8x32xf32>
    %517 = arith.negf %516 : vector<8x32xf32>
    %518 = math.exp %517 : vector<8x32xf32>
    %cst_306 = arith.constant 1.000000e+00 : f32
    %519 = vector.broadcast %cst_306 : f32 to vector<8x32xf32>
    %520 = arith.addf %519, %518 : vector<8x32xf32>
    %521 = arith.divf %519, %520 : vector<8x32xf32>
    %522 = arith.index_cast %510 : i32 to index
    %c0_307 = arith.constant 0 : index
    %523 = vector.load %arg12[%522, %c0_307] : memref<64x32xf32, #tpu.memory_space<vmem>>, vector<8x32xf32>
    %c1_308 = arith.constant 1 : index
    %c0_309 = arith.constant 0 : index
    %c0_310 = arith.constant 0 : index
    %524 = vector.load %arg5[%c1_308, %c0_309, %c0_310] : memref<4x32x32xf32, #tpu.memory_space<vmem>>, vector<1x32x32xf32>
    %525 = vector.shape_cast %524 : vector<1x32x32xf32> to vector<32x32xf32>
    %cst_311 = arith.constant dense<0.000000e+00> : vector<8x32xf32>
    %526 = tpu.matmul %506, %525, %cst_311 {dimension_numbers = #tpu.dot_dimension_numbers<[1], [0], [0], [1], [0, 0, 1, 1], [], []>} : vector<8x32xf32>, vector<32x32xf32>, vector<8x32xf32> -> vector<8x32xf32>
    %527 = arith.addf %523, %526 : vector<8x32xf32>
    %528 = arith.negf %527 : vector<8x32xf32>
    %529 = math.exp %528 : vector<8x32xf32>
    %cst_312 = arith.constant 1.000000e+00 : f32
    %530 = vector.broadcast %cst_312 : f32 to vector<8x32xf32>
    %531 = arith.addf %530, %529 : vector<8x32xf32>
    %532 = arith.divf %530, %531 : vector<8x32xf32>
    %533 = arith.index_cast %510 : i32 to index
    %c0_313 = arith.constant 0 : index
    %534 = vector.load %arg13[%533, %c0_313] : memref<64x32xf32, #tpu.memory_space<vmem>>, vector<8x32xf32>
    %c2_314 = arith.constant 2 : index
    %c0_315 = arith.constant 0 : index
    %c0_316 = arith.constant 0 : index
    %535 = vector.load %arg5[%c2_314, %c0_315, %c0_316] : memref<4x32x32xf32, #tpu.memory_space<vmem>>, vector<1x32x32xf32>
    %536 = vector.shape_cast %535 : vector<1x32x32xf32> to vector<32x32xf32>
    %cst_317 = arith.constant dense<0.000000e+00> : vector<8x32xf32>
    %537 = tpu.matmul %506, %536, %cst_317 {dimension_numbers = #tpu.dot_dimension_numbers<[1], [0], [0], [1], [0, 0, 1, 1], [], []>} : vector<8x32xf32>, vector<32x32xf32>, vector<8x32xf32> -> vector<8x32xf32>
    %538 = arith.addf %534, %537 : vector<8x32xf32>
    %539 = math.tanh %538 : vector<8x32xf32>
    %540 = arith.index_cast %510 : i32 to index
    %c0_318 = arith.constant 0 : index
    %541 = vector.load %arg14[%540, %c0_318] : memref<64x32xf32, #tpu.memory_space<vmem>>, vector<8x32xf32>
    %c3_319 = arith.constant 3 : index
    %c0_320 = arith.constant 0 : index
    %c0_321 = arith.constant 0 : index
    %542 = vector.load %arg5[%c3_319, %c0_320, %c0_321] : memref<4x32x32xf32, #tpu.memory_space<vmem>>, vector<1x32x32xf32>
    %543 = vector.shape_cast %542 : vector<1x32x32xf32> to vector<32x32xf32>
    %cst_322 = arith.constant dense<0.000000e+00> : vector<8x32xf32>
    %544 = tpu.matmul %506, %543, %cst_322 {dimension_numbers = #tpu.dot_dimension_numbers<[1], [0], [0], [1], [0, 0, 1, 1], [], []>} : vector<8x32xf32>, vector<32x32xf32>, vector<8x32xf32> -> vector<8x32xf32>
    %545 = arith.addf %541, %544 : vector<8x32xf32>
    %546 = arith.negf %545 : vector<8x32xf32>
    %547 = math.exp %546 : vector<8x32xf32>
    %cst_323 = arith.constant 1.000000e+00 : f32
    %548 = vector.broadcast %cst_323 : f32 to vector<8x32xf32>
    %549 = arith.addf %548, %547 : vector<8x32xf32>
    %550 = arith.divf %548, %549 : vector<8x32xf32>
    %551 = arith.mulf %532, %504 : vector<8x32xf32>
    %552 = arith.mulf %521, %539 : vector<8x32xf32>
    %553 = arith.addf %551, %552 : vector<8x32xf32>
    %554 = math.tanh %553 : vector<8x32xf32>
    %555 = arith.mulf %550, %554 : vector<8x32xf32>
    %556 = arith.index_cast %510 : i32 to index
    %c0_324 = arith.constant 0 : index
    %557 = vector.load %arg10[%556, %c0_324] : memref<64x32xf32, #tpu.memory_space<vmem>>, vector<8x32xf32>
    tpu.vector_store %arg10[%556, %c0_324], %555 {strides = array<i32>} : memref<64x32xf32, #tpu.memory_space<vmem>>, vector<8x32xf32>,
    %c2_i32_325 = arith.constant 2 : i32
    %c8_i32_326 = arith.constant 8 : i32
    %558 = arith.muli %c2_i32_325, %c8_i32_326 : i32
    %559 = tpu.assume_multiple %558, 8 : i32
    %560 = arith.index_cast %559 : i32 to index
    %c0_327 = arith.constant 0 : index
    %561 = vector.load %arg11[%560, %c0_327] : memref<64x32xf32, #tpu.memory_space<vmem>>, vector<8x32xf32>
    %c0_328 = arith.constant 0 : index
    %c0_329 = arith.constant 0 : index
    %c0_330 = arith.constant 0 : index
    %562 = vector.load %arg5[%c0_328, %c0_329, %c0_330] : memref<4x32x32xf32, #tpu.memory_space<vmem>>, vector<1x32x32xf32>
    %563 = vector.shape_cast %562 : vector<1x32x32xf32> to vector<32x32xf32>
    %cst_331 = arith.constant dense<0.000000e+00> : vector<8x32xf32>
    %564 = tpu.matmul %555, %563, %cst_331 {dimension_numbers = #tpu.dot_dimension_numbers<[1], [0], [0], [1], [0, 0, 1, 1], [], []>} : vector<8x32xf32>, vector<32x32xf32>, vector<8x32xf32> -> vector<8x32xf32>
    %565 = arith.addf %561, %564 : vector<8x32xf32>
    %566 = arith.negf %565 : vector<8x32xf32>
    %567 = math.exp %566 : vector<8x32xf32>
    %cst_332 = arith.constant 1.000000e+00 : f32
    %568 = vector.broadcast %cst_332 : f32 to vector<8x32xf32>
    %569 = arith.addf %568, %567 : vector<8x32xf32>
    %570 = arith.divf %568, %569 : vector<8x32xf32>
    %571 = arith.index_cast %559 : i32 to index
    %c0_333 = arith.constant 0 : index
    %572 = vector.load %arg12[%571, %c0_333] : memref<64x32xf32, #tpu.memory_space<vmem>>, vector<8x32xf32>
    %c1_334 = arith.constant 1 : index
    %c0_335 = arith.constant 0 : index
    %c0_336 = arith.constant 0 : index
    %573 = vector.load %arg5[%c1_334, %c0_335, %c0_336] : memref<4x32x32xf32, #tpu.memory_space<vmem>>, vector<1x32x32xf32>
    %574 = vector.shape_cast %573 : vector<1x32x32xf32> to vector<32x32xf32>
    %cst_337 = arith.constant dense<0.000000e+00> : vector<8x32xf32>
    %575 = tpu.matmul %555, %574, %cst_337 {dimension_numbers = #tpu.dot_dimension_numbers<[1], [0], [0], [1], [0, 0, 1, 1], [], []>} : vector<8x32xf32>, vector<32x32xf32>, vector<8x32xf32> -> vector<8x32xf32>
    %576 = arith.addf %572, %575 : vector<8x32xf32>
    %577 = arith.negf %576 : vector<8x32xf32>
    %578 = math.exp %577 : vector<8x32xf32>
    %cst_338 = arith.constant 1.000000e+00 : f32
    %579 = vector.broadcast %cst_338 : f32 to vector<8x32xf32>
    %580 = arith.addf %579, %578 : vector<8x32xf32>
    %581 = arith.divf %579, %580 : vector<8x32xf32>
    %582 = arith.index_cast %559 : i32 to index
    %c0_339 = arith.constant 0 : index
    %583 = vector.load %arg13[%582, %c0_339] : memref<64x32xf32, #tpu.memory_space<vmem>>, vector<8x32xf32>
    %c2_340 = arith.constant 2 : index
    %c0_341 = arith.constant 0 : index
    %c0_342 = arith.constant 0 : index
    %584 = vector.load %arg5[%c2_340, %c0_341, %c0_342] : memref<4x32x32xf32, #tpu.memory_space<vmem>>, vector<1x32x32xf32>
    %585 = vector.shape_cast %584 : vector<1x32x32xf32> to vector<32x32xf32>
    %cst_343 = arith.constant dense<0.000000e+00> : vector<8x32xf32>
    %586 = tpu.matmul %555, %585, %cst_343 {dimension_numbers = #tpu.dot_dimension_numbers<[1], [0], [0], [1], [0, 0, 1, 1], [], []>} : vector<8x32xf32>, vector<32x32xf32>, vector<8x32xf32> -> vector<8x32xf32>
    %587 = arith.addf %583, %586 : vector<8x32xf32>
    %588 = math.tanh %587 : vector<8x32xf32>
    %589 = arith.index_cast %559 : i32 to index
    %c0_344 = arith.constant 0 : index
    %590 = vector.load %arg14[%589, %c0_344] : memref<64x32xf32, #tpu.memory_space<vmem>>, vector<8x32xf32>
    %c3_345 = arith.constant 3 : index
    %c0_346 = arith.constant 0 : index
    %c0_347 = arith.constant 0 : index
    %591 = vector.load %arg5[%c3_345, %c0_346, %c0_347] : memref<4x32x32xf32, #tpu.memory_space<vmem>>, vector<1x32x32xf32>
    %592 = vector.shape_cast %591 : vector<1x32x32xf32> to vector<32x32xf32>
    %cst_348 = arith.constant dense<0.000000e+00> : vector<8x32xf32>
    %593 = tpu.matmul %555, %592, %cst_348 {dimension_numbers = #tpu.dot_dimension_numbers<[1], [0], [0], [1], [0, 0, 1, 1], [], []>} : vector<8x32xf32>, vector<32x32xf32>, vector<8x32xf32> -> vector<8x32xf32>
    %594 = arith.addf %590, %593 : vector<8x32xf32>
    %595 = arith.negf %594 : vector<8x32xf32>
    %596 = math.exp %595 : vector<8x32xf32>
    %cst_349 = arith.constant 1.000000e+00 : f32
    %597 = vector.broadcast %cst_349 : f32 to vector<8x32xf32>
    %598 = arith.addf %597, %596 : vector<8x32xf32>
    %599 = arith.divf %597, %598 : vector<8x32xf32>
    %600 = arith.mulf %581, %553 : vector<8x32xf32>
    %601 = arith.mulf %570, %588 : vector<8x32xf32>
    %602 = arith.addf %600, %601 : vector<8x32xf32>
    %603 = math.tanh %602 : vector<8x32xf32>
    %604 = arith.mulf %599, %603 : vector<8x32xf32>
    %605 = arith.index_cast %559 : i32 to index
    %c0_350 = arith.constant 0 : index
    %606 = vector.load %arg10[%605, %c0_350] : memref<64x32xf32, #tpu.memory_space<vmem>>, vector<8x32xf32>
    tpu.vector_store %arg10[%605, %c0_350], %604 {strides = array<i32>} : memref<64x32xf32, #tpu.memory_space<vmem>>, vector<8x32xf32>,
    %c3_i32_351 = arith.constant 3 : i32
    %c8_i32_352 = arith.constant 8 : i32
    %607 = arith.muli %c3_i32_351, %c8_i32_352 : i32
    %608 = tpu.assume_multiple %607, 8 : i32
    %609 = arith.index_cast %608 : i32 to index
    %c0_353 = arith.constant 0 : index
    %610 = vector.load %arg11[%609, %c0_353] : memref<64x32xf32, #tpu.memory_space<vmem>>, vector<8x32xf32>
    %c0_354 = arith.constant 0 : index
    %c0_355 = arith.constant 0 : index
    %c0_356 = arith.constant 0 : index
    %611 = vector.load %arg5[%c0_354, %c0_355, %c0_356] : memref<4x32x32xf32, #tpu.memory_space<vmem>>, vector<1x32x32xf32>
    %612 = vector.shape_cast %611 : vector<1x32x32xf32> to vector<32x32xf32>
    %cst_357 = arith.constant dense<0.000000e+00> : vector<8x32xf32>
    %613 = tpu.matmul %604, %612, %cst_357 {dimension_numbers = #tpu.dot_dimension_numbers<[1], [0], [0], [1], [0, 0, 1, 1], [], []>} : vector<8x32xf32>, vector<32x32xf32>, vector<8x32xf32> -> vector<8x32xf32>
    %614 = arith.addf %610, %613 : vector<8x32xf32>
    %615 = arith.negf %614 : vector<8x32xf32>
    %616 = math.exp %615 : vector<8x32xf32>
    %cst_358 = arith.constant 1.000000e+00 : f32
    %617 = vector.broadcast %cst_358 : f32 to vector<8x32xf32>
    %618 = arith.addf %617, %616 : vector<8x32xf32>
    %619 = arith.divf %617, %618 : vector<8x32xf32>
    %620 = arith.index_cast %608 : i32 to index
    %c0_359 = arith.constant 0 : index
    %621 = vector.load %arg12[%620, %c0_359] : memref<64x32xf32, #tpu.memory_space<vmem>>, vector<8x32xf32>
    %c1_360 = arith.constant 1 : index
    %c0_361 = arith.constant 0 : index
    %c0_362 = arith.constant 0 : index
    %622 = vector.load %arg5[%c1_360, %c0_361, %c0_362] : memref<4x32x32xf32, #tpu.memory_space<vmem>>, vector<1x32x32xf32>
    %623 = vector.shape_cast %622 : vector<1x32x32xf32> to vector<32x32xf32>
    %cst_363 = arith.constant dense<0.000000e+00> : vector<8x32xf32>
    %624 = tpu.matmul %604, %623, %cst_363 {dimension_numbers = #tpu.dot_dimension_numbers<[1], [0], [0], [1], [0, 0, 1, 1], [], []>} : vector<8x32xf32>, vector<32x32xf32>, vector<8x32xf32> -> vector<8x32xf32>
    %625 = arith.addf %621, %624 : vector<8x32xf32>
    %626 = arith.negf %625 : vector<8x32xf32>
    %627 = math.exp %626 : vector<8x32xf32>
    %cst_364 = arith.constant 1.000000e+00 : f32
    %628 = vector.broadcast %cst_364 : f32 to vector<8x32xf32>
    %629 = arith.addf %628, %627 : vector<8x32xf32>
    %630 = arith.divf %628, %629 : vector<8x32xf32>
    %631 = arith.index_cast %608 : i32 to index
    %c0_365 = arith.constant 0 : index
    %632 = vector.load %arg13[%631, %c0_365] : memref<64x32xf32, #tpu.memory_space<vmem>>, vector<8x32xf32>
    %c2_366 = arith.constant 2 : index
    %c0_367 = arith.constant 0 : index
    %c0_368 = arith.constant 0 : index
    %633 = vector.load %arg5[%c2_366, %c0_367, %c0_368] : memref<4x32x32xf32, #tpu.memory_space<vmem>>, vector<1x32x32xf32>
    %634 = vector.shape_cast %633 : vector<1x32x32xf32> to vector<32x32xf32>
    %cst_369 = arith.constant dense<0.000000e+00> : vector<8x32xf32>
    %635 = tpu.matmul %604, %634, %cst_369 {dimension_numbers = #tpu.dot_dimension_numbers<[1], [0], [0], [1], [0, 0, 1, 1], [], []>} : vector<8x32xf32>, vector<32x32xf32>, vector<8x32xf32> -> vector<8x32xf32>
    %636 = arith.addf %632, %635 : vector<8x32xf32>
    %637 = math.tanh %636 : vector<8x32xf32>
    %638 = arith.index_cast %608 : i32 to index
    %c0_370 = arith.constant 0 : index
    %639 = vector.load %arg14[%638, %c0_370] : memref<64x32xf32, #tpu.memory_space<vmem>>, vector<8x32xf32>
    %c3_371 = arith.constant 3 : index
    %c0_372 = arith.constant 0 : index
    %c0_373 = arith.constant 0 : index
    %640 = vector.load %arg5[%c3_371, %c0_372, %c0_373] : memref<4x32x32xf32, #tpu.memory_space<vmem>>, vector<1x32x32xf32>
    %641 = vector.shape_cast %640 : vector<1x32x32xf32> to vector<32x32xf32>
    %cst_374 = arith.constant dense<0.000000e+00> : vector<8x32xf32>
    %642 = tpu.matmul %604, %641, %cst_374 {dimension_numbers = #tpu.dot_dimension_numbers<[1], [0], [0], [1], [0, 0, 1, 1], [], []>} : vector<8x32xf32>, vector<32x32xf32>, vector<8x32xf32> -> vector<8x32xf32>
    %643 = arith.addf %639, %642 : vector<8x32xf32>
    %644 = arith.negf %643 : vector<8x32xf32>
    %645 = math.exp %644 : vector<8x32xf32>
    %cst_375 = arith.constant 1.000000e+00 : f32
    %646 = vector.broadcast %cst_375 : f32 to vector<8x32xf32>
    %647 = arith.addf %646, %645 : vector<8x32xf32>
    %648 = arith.divf %646, %647 : vector<8x32xf32>
    %649 = arith.mulf %630, %602 : vector<8x32xf32>
    %650 = arith.mulf %619, %637 : vector<8x32xf32>
    %651 = arith.addf %649, %650 : vector<8x32xf32>
    %652 = math.tanh %651 : vector<8x32xf32>
    %653 = arith.mulf %648, %652 : vector<8x32xf32>
    %654 = arith.index_cast %608 : i32 to index
    %c0_376 = arith.constant 0 : index
    %655 = vector.load %arg10[%654, %c0_376] : memref<64x32xf32, #tpu.memory_space<vmem>>, vector<8x32xf32>
    tpu.vector_store %arg10[%654, %c0_376], %653 {strides = array<i32>} : memref<64x32xf32, #tpu.memory_space<vmem>>, vector<8x32xf32>,
    %c4_i32_377 = arith.constant 4 : i32
    %c8_i32_378 = arith.constant 8 : i32
    %656 = arith.muli %c4_i32_377, %c8_i32_378 : i32
    %657 = tpu.assume_multiple %656, 8 : i32
    %658 = arith.index_cast %657 : i32 to index
    %c0_379 = arith.constant 0 : index
    %659 = vector.load %arg11[%658, %c0_379] : memref<64x32xf32, #tpu.memory_space<vmem>>, vector<8x32xf32>
    %c0_380 = arith.constant 0 : index
    %c0_381 = arith.constant 0 : index
    %c0_382 = arith.constant 0 : index
    %660 = vector.load %arg5[%c0_380, %c0_381, %c0_382] : memref<4x32x32xf32, #tpu.memory_space<vmem>>, vector<1x32x32xf32>
    %661 = vector.shape_cast %660 : vector<1x32x32xf32> to vector<32x32xf32>
    %cst_383 = arith.constant dense<0.000000e+00> : vector<8x32xf32>
    %662 = tpu.matmul %653, %661, %cst_383 {dimension_numbers = #tpu.dot_dimension_numbers<[1], [0], [0], [1], [0, 0, 1, 1], [], []>} : vector<8x32xf32>, vector<32x32xf32>, vector<8x32xf32> -> vector<8x32xf32>
    %663 = arith.addf %659, %662 : vector<8x32xf32>
    %664 = arith.negf %663 : vector<8x32xf32>
    %665 = math.exp %664 : vector<8x32xf32>
    %cst_384 = arith.constant 1.000000e+00 : f32
    %666 = vector.broadcast %cst_384 : f32 to vector<8x32xf32>
    %667 = arith.addf %666, %665 : vector<8x32xf32>
    %668 = arith.divf %666, %667 : vector<8x32xf32>
    %669 = arith.index_cast %657 : i32 to index
    %c0_385 = arith.constant 0 : index
    %670 = vector.load %arg12[%669, %c0_385] : memref<64x32xf32, #tpu.memory_space<vmem>>, vector<8x32xf32>
    %c1_386 = arith.constant 1 : index
    %c0_387 = arith.constant 0 : index
    %c0_388 = arith.constant 0 : index
    %671 = vector.load %arg5[%c1_386, %c0_387, %c0_388] : memref<4x32x32xf32, #tpu.memory_space<vmem>>, vector<1x32x32xf32>
    %672 = vector.shape_cast %671 : vector<1x32x32xf32> to vector<32x32xf32>
    %cst_389 = arith.constant dense<0.000000e+00> : vector<8x32xf32>
    %673 = tpu.matmul %653, %672, %cst_389 {dimension_numbers = #tpu.dot_dimension_numbers<[1], [0], [0], [1], [0, 0, 1, 1], [], []>} : vector<8x32xf32>, vector<32x32xf32>, vector<8x32xf32> -> vector<8x32xf32>
    %674 = arith.addf %670, %673 : vector<8x32xf32>
    %675 = arith.negf %674 : vector<8x32xf32>
    %676 = math.exp %675 : vector<8x32xf32>
    %cst_390 = arith.constant 1.000000e+00 : f32
    %677 = vector.broadcast %cst_390 : f32 to vector<8x32xf32>
    %678 = arith.addf %677, %676 : vector<8x32xf32>
    %679 = arith.divf %677, %678 : vector<8x32xf32>
    %680 = arith.index_cast %657 : i32 to index
    %c0_391 = arith.constant 0 : index
    %681 = vector.load %arg13[%680, %c0_391] : memref<64x32xf32, #tpu.memory_space<vmem>>, vector<8x32xf32>
    %c2_392 = arith.constant 2 : index
    %c0_393 = arith.constant 0 : index
    %c0_394 = arith.constant 0 : index
    %682 = vector.load %arg5[%c2_392, %c0_393, %c0_394] : memref<4x32x32xf32, #tpu.memory_space<vmem>>, vector<1x32x32xf32>
    %683 = vector.shape_cast %682 : vector<1x32x32xf32> to vector<32x32xf32>
    %cst_395 = arith.constant dense<0.000000e+00> : vector<8x32xf32>
    %684 = tpu.matmul %653, %683, %cst_395 {dimension_numbers = #tpu.dot_dimension_numbers<[1], [0], [0], [1], [0, 0, 1, 1], [], []>} : vector<8x32xf32>, vector<32x32xf32>, vector<8x32xf32> -> vector<8x32xf32>
    %685 = arith.addf %681, %684 : vector<8x32xf32>
    %686 = math.tanh %685 : vector<8x32xf32>
    %687 = arith.index_cast %657 : i32 to index
    %c0_396 = arith.constant 0 : index
    %688 = vector.load %arg14[%687, %c0_396] : memref<64x32xf32, #tpu.memory_space<vmem>>, vector<8x32xf32>
    %c3_397 = arith.constant 3 : index
    %c0_398 = arith.constant 0 : index
    %c0_399 = arith.constant 0 : index
    %689 = vector.load %arg5[%c3_397, %c0_398, %c0_399] : memref<4x32x32xf32, #tpu.memory_space<vmem>>, vector<1x32x32xf32>
    %690 = vector.shape_cast %689 : vector<1x32x32xf32> to vector<32x32xf32>
    %cst_400 = arith.constant dense<0.000000e+00> : vector<8x32xf32>
    %691 = tpu.matmul %653, %690, %cst_400 {dimension_numbers = #tpu.dot_dimension_numbers<[1], [0], [0], [1], [0, 0, 1, 1], [], []>} : vector<8x32xf32>, vector<32x32xf32>, vector<8x32xf32> -> vector<8x32xf32>
    %692 = arith.addf %688, %691 : vector<8x32xf32>
    %693 = arith.negf %692 : vector<8x32xf32>
    %694 = math.exp %693 : vector<8x32xf32>
    %cst_401 = arith.constant 1.000000e+00 : f32
    %695 = vector.broadcast %cst_401 : f32 to vector<8x32xf32>
    %696 = arith.addf %695, %694 : vector<8x32xf32>
    %697 = arith.divf %695, %696 : vector<8x32xf32>
    %698 = arith.mulf %679, %651 : vector<8x32xf32>
    %699 = arith.mulf %668, %686 : vector<8x32xf32>
    %700 = arith.addf %698, %699 : vector<8x32xf32>
    %701 = math.tanh %700 : vector<8x32xf32>
    %702 = arith.mulf %697, %701 : vector<8x32xf32>
    %703 = arith.index_cast %657 : i32 to index
    %c0_402 = arith.constant 0 : index
    %704 = vector.load %arg10[%703, %c0_402] : memref<64x32xf32, #tpu.memory_space<vmem>>, vector<8x32xf32>
    tpu.vector_store %arg10[%703, %c0_402], %702 {strides = array<i32>} : memref<64x32xf32, #tpu.memory_space<vmem>>, vector<8x32xf32>,
    %c5_i32_403 = arith.constant 5 : i32
    %c8_i32_404 = arith.constant 8 : i32
    %705 = arith.muli %c5_i32_403, %c8_i32_404 : i32
    %706 = tpu.assume_multiple %705, 8 : i32
    %707 = arith.index_cast %706 : i32 to index
    %c0_405 = arith.constant 0 : index
    %708 = vector.load %arg11[%707, %c0_405] : memref<64x32xf32, #tpu.memory_space<vmem>>, vector<8x32xf32>
    %c0_406 = arith.constant 0 : index
    %c0_407 = arith.constant 0 : index
    %c0_408 = arith.constant 0 : index
    %709 = vector.load %arg5[%c0_406, %c0_407, %c0_408] : memref<4x32x32xf32, #tpu.memory_space<vmem>>, vector<1x32x32xf32>
    %710 = vector.shape_cast %709 : vector<1x32x32xf32> to vector<32x32xf32>
    %cst_409 = arith.constant dense<0.000000e+00> : vector<8x32xf32>
    %711 = tpu.matmul %702, %710, %cst_409 {dimension_numbers = #tpu.dot_dimension_numbers<[1], [0], [0], [1], [0, 0, 1, 1], [], []>} : vector<8x32xf32>, vector<32x32xf32>, vector<8x32xf32> -> vector<8x32xf32>
    %712 = arith.addf %708, %711 : vector<8x32xf32>
    %713 = arith.negf %712 : vector<8x32xf32>
    %714 = math.exp %713 : vector<8x32xf32>
    %cst_410 = arith.constant 1.000000e+00 : f32
    %715 = vector.broadcast %cst_410 : f32 to vector<8x32xf32>
    %716 = arith.addf %715, %714 : vector<8x32xf32>
    %717 = arith.divf %715, %716 : vector<8x32xf32>
    %718 = arith.index_cast %706 : i32 to index
    %c0_411 = arith.constant 0 : index
    %719 = vector.load %arg12[%718, %c0_411] : memref<64x32xf32, #tpu.memory_space<vmem>>, vector<8x32xf32>
    %c1_412 = arith.constant 1 : index
    %c0_413 = arith.constant 0 : index
    %c0_414 = arith.constant 0 : index
    %720 = vector.load %arg5[%c1_412, %c0_413, %c0_414] : memref<4x32x32xf32, #tpu.memory_space<vmem>>, vector<1x32x32xf32>
    %721 = vector.shape_cast %720 : vector<1x32x32xf32> to vector<32x32xf32>
    %cst_415 = arith.constant dense<0.000000e+00> : vector<8x32xf32>
    %722 = tpu.matmul %702, %721, %cst_415 {dimension_numbers = #tpu.dot_dimension_numbers<[1], [0], [0], [1], [0, 0, 1, 1], [], []>} : vector<8x32xf32>, vector<32x32xf32>, vector<8x32xf32> -> vector<8x32xf32>
    %723 = arith.addf %719, %722 : vector<8x32xf32>
    %724 = arith.negf %723 : vector<8x32xf32>
    %725 = math.exp %724 : vector<8x32xf32>
    %cst_416 = arith.constant 1.000000e+00 : f32
    %726 = vector.broadcast %cst_416 : f32 to vector<8x32xf32>
    %727 = arith.addf %726, %725 : vector<8x32xf32>
    %728 = arith.divf %726, %727 : vector<8x32xf32>
    %729 = arith.index_cast %706 : i32 to index
    %c0_417 = arith.constant 0 : index
    %730 = vector.load %arg13[%729, %c0_417] : memref<64x32xf32, #tpu.memory_space<vmem>>, vector<8x32xf32>
    %c2_418 = arith.constant 2 : index
    %c0_419 = arith.constant 0 : index
    %c0_420 = arith.constant 0 : index
    %731 = vector.load %arg5[%c2_418, %c0_419, %c0_420] : memref<4x32x32xf32, #tpu.memory_space<vmem>>, vector<1x32x32xf32>
    %732 = vector.shape_cast %731 : vector<1x32x32xf32> to vector<32x32xf32>
    %cst_421 = arith.constant dense<0.000000e+00> : vector<8x32xf32>
    %733 = tpu.matmul %702, %732, %cst_421 {dimension_numbers = #tpu.dot_dimension_numbers<[1], [0], [0], [1], [0, 0, 1, 1], [], []>} : vector<8x32xf32>, vector<32x32xf32>, vector<8x32xf32> -> vector<8x32xf32>
    %734 = arith.addf %730, %733 : vector<8x32xf32>
    %735 = math.tanh %734 : vector<8x32xf32>
    %736 = arith.index_cast %706 : i32 to index
    %c0_422 = arith.constant 0 : index
    %737 = vector.load %arg14[%736, %c0_422] : memref<64x32xf32, #tpu.memory_space<vmem>>, vector<8x32xf32>
    %c3_423 = arith.constant 3 : index
    %c0_424 = arith.constant 0 : index
    %c0_425 = arith.constant 0 : index
    %738 = vector.load %arg5[%c3_423, %c0_424, %c0_425] : memref<4x32x32xf32, #tpu.memory_space<vmem>>, vector<1x32x32xf32>
    %739 = vector.shape_cast %738 : vector<1x32x32xf32> to vector<32x32xf32>
    %cst_426 = arith.constant dense<0.000000e+00> : vector<8x32xf32>
    %740 = tpu.matmul %702, %739, %cst_426 {dimension_numbers = #tpu.dot_dimension_numbers<[1], [0], [0], [1], [0, 0, 1, 1], [], []>} : vector<8x32xf32>, vector<32x32xf32>, vector<8x32xf32> -> vector<8x32xf32>
    %741 = arith.addf %737, %740 : vector<8x32xf32>
    %742 = arith.negf %741 : vector<8x32xf32>
    %743 = math.exp %742 : vector<8x32xf32>
    %cst_427 = arith.constant 1.000000e+00 : f32
    %744 = vector.broadcast %cst_427 : f32 to vector<8x32xf32>
    %745 = arith.addf %744, %743 : vector<8x32xf32>
    %746 = arith.divf %744, %745 : vector<8x32xf32>
    %747 = arith.mulf %728, %700 : vector<8x32xf32>
    %748 = arith.mulf %717, %735 : vector<8x32xf32>
    %749 = arith.addf %747, %748 : vector<8x32xf32>
    %750 = math.tanh %749 : vector<8x32xf32>
    %751 = arith.mulf %746, %750 : vector<8x32xf32>
    %752 = arith.index_cast %706 : i32 to index
    %c0_428 = arith.constant 0 : index
    %753 = vector.load %arg10[%752, %c0_428] : memref<64x32xf32, #tpu.memory_space<vmem>>, vector<8x32xf32>
    tpu.vector_store %arg10[%752, %c0_428], %751 {strides = array<i32>} : memref<64x32xf32, #tpu.memory_space<vmem>>, vector<8x32xf32>,
    %c6_i32_429 = arith.constant 6 : i32
    %c8_i32_430 = arith.constant 8 : i32
    %754 = arith.muli %c6_i32_429, %c8_i32_430 : i32
    %755 = tpu.assume_multiple %754, 8 : i32
    %756 = arith.index_cast %755 : i32 to index
    %c0_431 = arith.constant 0 : index
    %757 = vector.load %arg11[%756, %c0_431] : memref<64x32xf32, #tpu.memory_space<vmem>>, vector<8x32xf32>
    %c0_432 = arith.constant 0 : index
    %c0_433 = arith.constant 0 : index
    %c0_434 = arith.constant 0 : index
    %758 = vector.load %arg5[%c0_432, %c0_433, %c0_434] : memref<4x32x32xf32, #tpu.memory_space<vmem>>, vector<1x32x32xf32>
    %759 = vector.shape_cast %758 : vector<1x32x32xf32> to vector<32x32xf32>
    %cst_435 = arith.constant dense<0.000000e+00> : vector<8x32xf32>
    %760 = tpu.matmul %751, %759, %cst_435 {dimension_numbers = #tpu.dot_dimension_numbers<[1], [0], [0], [1], [0, 0, 1, 1], [], []>} : vector<8x32xf32>, vector<32x32xf32>, vector<8x32xf32> -> vector<8x32xf32>
    %761 = arith.addf %757, %760 : vector<8x32xf32>
    %762 = arith.negf %761 : vector<8x32xf32>
    %763 = math.exp %762 : vector<8x32xf32>
    %cst_436 = arith.constant 1.000000e+00 : f32
    %764 = vector.broadcast %cst_436 : f32 to vector<8x32xf32>
    %765 = arith.addf %764, %763 : vector<8x32xf32>
    %766 = arith.divf %764, %765 : vector<8x32xf32>
    %767 = arith.index_cast %755 : i32 to index
    %c0_437 = arith.constant 0 : index
    %768 = vector.load %arg12[%767, %c0_437] : memref<64x32xf32, #tpu.memory_space<vmem>>, vector<8x32xf32>
    %c1_438 = arith.constant 1 : index
    %c0_439 = arith.constant 0 : index
    %c0_440 = arith.constant 0 : index
    %769 = vector.load %arg5[%c1_438, %c0_439, %c0_440] : memref<4x32x32xf32, #tpu.memory_space<vmem>>, vector<1x32x32xf32>
    %770 = vector.shape_cast %769 : vector<1x32x32xf32> to vector<32x32xf32>
    %cst_441 = arith.constant dense<0.000000e+00> : vector<8x32xf32>
    %771 = tpu.matmul %751, %770, %cst_441 {dimension_numbers = #tpu.dot_dimension_numbers<[1], [0], [0], [1], [0, 0, 1, 1], [], []>} : vector<8x32xf32>, vector<32x32xf32>, vector<8x32xf32> -> vector<8x32xf32>
    %772 = arith.addf %768, %771 : vector<8x32xf32>
    %773 = arith.negf %772 : vector<8x32xf32>
    %774 = math.exp %773 : vector<8x32xf32>
    %cst_442 = arith.constant 1.000000e+00 : f32
    %775 = vector.broadcast %cst_442 : f32 to vector<8x32xf32>
    %776 = arith.addf %775, %774 : vector<8x32xf32>
    %777 = arith.divf %775, %776 : vector<8x32xf32>
    %778 = arith.index_cast %755 : i32 to index
    %c0_443 = arith.constant 0 : index
    %779 = vector.load %arg13[%778, %c0_443] : memref<64x32xf32, #tpu.memory_space<vmem>>, vector<8x32xf32>
    %c2_444 = arith.constant 2 : index
    %c0_445 = arith.constant 0 : index
    %c0_446 = arith.constant 0 : index
    %780 = vector.load %arg5[%c2_444, %c0_445, %c0_446] : memref<4x32x32xf32, #tpu.memory_space<vmem>>, vector<1x32x32xf32>
    %781 = vector.shape_cast %780 : vector<1x32x32xf32> to vector<32x32xf32>
    %cst_447 = arith.constant dense<0.000000e+00> : vector<8x32xf32>
    %782 = tpu.matmul %751, %781, %cst_447 {dimension_numbers = #tpu.dot_dimension_numbers<[1], [0], [0], [1], [0, 0, 1, 1], [], []>} : vector<8x32xf32>, vector<32x32xf32>, vector<8x32xf32> -> vector<8x32xf32>
    %783 = arith.addf %779, %782 : vector<8x32xf32>
    %784 = math.tanh %783 : vector<8x32xf32>
    %785 = arith.index_cast %755 : i32 to index
    %c0_448 = arith.constant 0 : index
    %786 = vector.load %arg14[%785, %c0_448] : memref<64x32xf32, #tpu.memory_space<vmem>>, vector<8x32xf32>
    %c3_449 = arith.constant 3 : index
    %c0_450 = arith.constant 0 : index
    %c0_451 = arith.constant 0 : index
    %787 = vector.load %arg5[%c3_449, %c0_450, %c0_451] : memref<4x32x32xf32, #tpu.memory_space<vmem>>, vector<1x32x32xf32>
    %788 = vector.shape_cast %787 : vector<1x32x32xf32> to vector<32x32xf32>
    %cst_452 = arith.constant dense<0.000000e+00> : vector<8x32xf32>
    %789 = tpu.matmul %751, %788, %cst_452 {dimension_numbers = #tpu.dot_dimension_numbers<[1], [0], [0], [1], [0, 0, 1, 1], [], []>} : vector<8x32xf32>, vector<32x32xf32>, vector<8x32xf32> -> vector<8x32xf32>
    %790 = arith.addf %786, %789 : vector<8x32xf32>
    %791 = arith.negf %790 : vector<8x32xf32>
    %792 = math.exp %791 : vector<8x32xf32>
    %cst_453 = arith.constant 1.000000e+00 : f32
    %793 = vector.broadcast %cst_453 : f32 to vector<8x32xf32>
    %794 = arith.addf %793, %792 : vector<8x32xf32>
    %795 = arith.divf %793, %794 : vector<8x32xf32>
    %796 = arith.mulf %777, %749 : vector<8x32xf32>
    %797 = arith.mulf %766, %784 : vector<8x32xf32>
    %798 = arith.addf %796, %797 : vector<8x32xf32>
    %799 = math.tanh %798 : vector<8x32xf32>
    %800 = arith.mulf %795, %799 : vector<8x32xf32>
    %801 = arith.index_cast %755 : i32 to index
    %c0_454 = arith.constant 0 : index
    %802 = vector.load %arg10[%801, %c0_454] : memref<64x32xf32, #tpu.memory_space<vmem>>, vector<8x32xf32>
    tpu.vector_store %arg10[%801, %c0_454], %800 {strides = array<i32>} : memref<64x32xf32, #tpu.memory_space<vmem>>, vector<8x32xf32>,
    %c7_i32_455 = arith.constant 7 : i32
    %c8_i32_456 = arith.constant 8 : i32
    %803 = arith.muli %c7_i32_455, %c8_i32_456 : i32
    %804 = tpu.assume_multiple %803, 8 : i32
    %805 = arith.index_cast %804 : i32 to index
    %c0_457 = arith.constant 0 : index
    %806 = vector.load %arg11[%805, %c0_457] : memref<64x32xf32, #tpu.memory_space<vmem>>, vector<8x32xf32>
    %c0_458 = arith.constant 0 : index
    %c0_459 = arith.constant 0 : index
    %c0_460 = arith.constant 0 : index
    %807 = vector.load %arg5[%c0_458, %c0_459, %c0_460] : memref<4x32x32xf32, #tpu.memory_space<vmem>>, vector<1x32x32xf32>
    %808 = vector.shape_cast %807 : vector<1x32x32xf32> to vector<32x32xf32>
    %cst_461 = arith.constant dense<0.000000e+00> : vector<8x32xf32>
    %809 = tpu.matmul %800, %808, %cst_461 {dimension_numbers = #tpu.dot_dimension_numbers<[1], [0], [0], [1], [0, 0, 1, 1], [], []>} : vector<8x32xf32>, vector<32x32xf32>, vector<8x32xf32> -> vector<8x32xf32>
    %810 = arith.addf %806, %809 : vector<8x32xf32>
    %811 = arith.negf %810 : vector<8x32xf32>
    %812 = math.exp %811 : vector<8x32xf32>
    %cst_462 = arith.constant 1.000000e+00 : f32
    %813 = vector.broadcast %cst_462 : f32 to vector<8x32xf32>
    %814 = arith.addf %813, %812 : vector<8x32xf32>
    %815 = arith.divf %813, %814 : vector<8x32xf32>
    %816 = arith.index_cast %804 : i32 to index
    %c0_463 = arith.constant 0 : index
    %817 = vector.load %arg12[%816, %c0_463] : memref<64x32xf32, #tpu.memory_space<vmem>>, vector<8x32xf32>
    %c1_464 = arith.constant 1 : index
    %c0_465 = arith.constant 0 : index
    %c0_466 = arith.constant 0 : index
    %818 = vector.load %arg5[%c1_464, %c0_465, %c0_466] : memref<4x32x32xf32, #tpu.memory_space<vmem>>, vector<1x32x32xf32>
    %819 = vector.shape_cast %818 : vector<1x32x32xf32> to vector<32x32xf32>
    %cst_467 = arith.constant dense<0.000000e+00> : vector<8x32xf32>
    %820 = tpu.matmul %800, %819, %cst_467 {dimension_numbers = #tpu.dot_dimension_numbers<[1], [0], [0], [1], [0, 0, 1, 1], [], []>} : vector<8x32xf32>, vector<32x32xf32>, vector<8x32xf32> -> vector<8x32xf32>
    %821 = arith.addf %817, %820 : vector<8x32xf32>
    %822 = arith.negf %821 : vector<8x32xf32>
    %823 = math.exp %822 : vector<8x32xf32>
    %cst_468 = arith.constant 1.000000e+00 : f32
    %824 = vector.broadcast %cst_468 : f32 to vector<8x32xf32>
    %825 = arith.addf %824, %823 : vector<8x32xf32>
    %826 = arith.divf %824, %825 : vector<8x32xf32>
    %827 = arith.index_cast %804 : i32 to index
    %c0_469 = arith.constant 0 : index
    %828 = vector.load %arg13[%827, %c0_469] : memref<64x32xf32, #tpu.memory_space<vmem>>, vector<8x32xf32>
    %c2_470 = arith.constant 2 : index
    %c0_471 = arith.constant 0 : index
    %c0_472 = arith.constant 0 : index
    %829 = vector.load %arg5[%c2_470, %c0_471, %c0_472] : memref<4x32x32xf32, #tpu.memory_space<vmem>>, vector<1x32x32xf32>
    %830 = vector.shape_cast %829 : vector<1x32x32xf32> to vector<32x32xf32>
    %cst_473 = arith.constant dense<0.000000e+00> : vector<8x32xf32>
    %831 = tpu.matmul %800, %830, %cst_473 {dimension_numbers = #tpu.dot_dimension_numbers<[1], [0], [0], [1], [0, 0, 1, 1], [], []>} : vector<8x32xf32>, vector<32x32xf32>, vector<8x32xf32> -> vector<8x32xf32>
    %832 = arith.addf %828, %831 : vector<8x32xf32>
    %833 = math.tanh %832 : vector<8x32xf32>
    %834 = arith.index_cast %804 : i32 to index
    %c0_474 = arith.constant 0 : index
    %835 = vector.load %arg14[%834, %c0_474] : memref<64x32xf32, #tpu.memory_space<vmem>>, vector<8x32xf32>
    %c3_475 = arith.constant 3 : index
    %c0_476 = arith.constant 0 : index
    %c0_477 = arith.constant 0 : index
    %836 = vector.load %arg5[%c3_475, %c0_476, %c0_477] : memref<4x32x32xf32, #tpu.memory_space<vmem>>, vector<1x32x32xf32>
    %837 = vector.shape_cast %836 : vector<1x32x32xf32> to vector<32x32xf32>
    %cst_478 = arith.constant dense<0.000000e+00> : vector<8x32xf32>
    %838 = tpu.matmul %800, %837, %cst_478 {dimension_numbers = #tpu.dot_dimension_numbers<[1], [0], [0], [1], [0, 0, 1, 1], [], []>} : vector<8x32xf32>, vector<32x32xf32>, vector<8x32xf32> -> vector<8x32xf32>
    %839 = arith.addf %835, %838 : vector<8x32xf32>
    %840 = arith.negf %839 : vector<8x32xf32>
    %841 = math.exp %840 : vector<8x32xf32>
    %cst_479 = arith.constant 1.000000e+00 : f32
    %842 = vector.broadcast %cst_479 : f32 to vector<8x32xf32>
    %843 = arith.addf %842, %841 : vector<8x32xf32>
    %844 = arith.divf %842, %843 : vector<8x32xf32>
    %845 = arith.mulf %826, %798 : vector<8x32xf32>
    %846 = arith.mulf %815, %833 : vector<8x32xf32>
    %847 = arith.addf %845, %846 : vector<8x32xf32>
    %848 = math.tanh %847 : vector<8x32xf32>
    %849 = arith.mulf %844, %848 : vector<8x32xf32>
    %850 = arith.index_cast %804 : i32 to index
    %c0_480 = arith.constant 0 : index
    %851 = vector.load %arg10[%850, %c0_480] : memref<64x32xf32, #tpu.memory_space<vmem>>, vector<8x32xf32>
    tpu.vector_store %arg10[%850, %c0_480], %849 {strides = array<i32>} : memref<64x32xf32, #tpu.memory_space<vmem>>, vector<8x32xf32>,
    %c8_i32_481 = arith.constant 8 : i32
    %c0_482 = arith.constant 0 : index
    %c0_483 = arith.constant 0 : index
    %852 = vector.load %arg10[%c0_482, %c0_483] : memref<64x32xf32, #tpu.memory_space<vmem>>, vector<64x32xf32>
    %853 = arith.negf %852 : vector<64x32xf32>
    %854 = math.exp %853 : vector<64x32xf32>
    %cst_484 = arith.constant 1.000000e+00 : f32
    %855 = vector.broadcast %cst_484 : f32 to vector<64x32xf32>
    %856 = arith.addf %855, %854 : vector<64x32xf32>
    %857 = arith.divf %855, %856 : vector<64x32xf32>
    %c0_485 = arith.constant 0 : index
    %c0_486 = arith.constant 0 : index
    %858 = vector.load %arg7[%c0_485, %c0_486] : memref<32x4xf32, #tpu.memory_space<vmem>>, vector<32x4xf32>
    %cst_487 = arith.constant dense<0.000000e+00> : vector<64x4xf32>
    %859 = tpu.matmul %857, %858, %cst_487 {dimension_numbers = #tpu.dot_dimension_numbers<[1], [0], [0], [1], [0, 0, 1, 1], [], []>} : vector<64x32xf32>, vector<32x4xf32>, vector<64x4xf32> -> vector<64x4xf32>
    %c0_488 = arith.constant 0 : index
    %c0_489 = arith.constant 0 : index
    %860 = vector.load %arg8[%c0_488, %c0_489] : memref<1x4xf32, #tpu.memory_space<vmem>>, vector<1x4xf32>
    %861 = vector.broadcast %860 : vector<1x4xf32> to vector<64x4xf32>
    %862 = arith.addf %859, %861 : vector<64x4xf32>
    %c0_490 = arith.constant 0 : index
    %c0_491 = arith.constant 0 : index
    %863 = vector.load %arg9[%c0_490, %c0_491] : memref<64x4xf32, #tpu.memory_space<vmem>>, vector<64x4xf32>
    tpu.vector_store %arg9[%c0_490, %c0_491], %862 {strides = array<i32>} : memref<64x4xf32, #tpu.memory_space<vmem>>, vector<64x4xf32>,
    return
  }
}

</mosaic_0001>

<llo_original>
// kernel: lstm1_forward.1
$region0: #{lstm1_forward.1}
  #allocation0 [shape = 'u32[]', space=smem, size = 0x4, offset = 0x4, fixed_abs, tag = 'smem constant byte address 0x4 - core index']
  #allocation1 [shape = 'u32[144,128]{1,0:T(1,128)}', space=vmem, size = 0x12000, scoped, tag = 'internal scratch']
  #allocation2 [shape = 'f32[64,32]{1,0:T(8,128)}', space=vmem, size = 0x8000, scoped, tag = 'scratch operand']
  #allocation3 [shape = 'f32[64,32]{1,0:T(8,128)}', space=vmem, size = 0x8000, scoped, tag = 'scratch operand']
  #allocation4 [shape = 'f32[64,32]{1,0:T(8,128)}', space=vmem, size = 0x8000, scoped, tag = 'scratch operand']
  #allocation5 [shape = 'f32[64,32]{1,0:T(8,128)}', space=vmem, size = 0x8000, scoped, tag = 'scratch operand']
  #allocation6 [shape = 'f32[64,32]{1,0:T(8,128)}', space=vmem, size = 0x8000, scoped, tag = 'scratch operand']
  %s0 = inlined_call_operand.vmem [shape: f32[64,16], index: 0, kind: input, shape index: {}]
  %s1 = inlined_call_operand.hbm [shape: f32[4,16,32], index: 1, kind: input, shape index: {}]
  %s2 = inlined_call_operand.vmem [shape: f32[4,32,32], index: 2, kind: input, shape index: {}]
  %s3 = inlined_call_operand.vmem [shape: f32[4,1,32], index: 3, kind: input, shape index: {}]
  %s4 = inlined_call_operand.hbm [shape: f32[4,32,32], index: 4, kind: input, shape index: {}]
  %s5 = inlined_call_operand.hbm [shape: f32[4,32,32], index: 5, kind: input, shape index: {}]
  %s6 = inlined_call_operand.vmem [shape: f32[4,1,32], index: 6, kind: input, shape index: {}]
  %s7 = inlined_call_operand.vmem [shape: f32[32,4], index: 7, kind: input, shape index: {}]
  %s8 = inlined_call_operand.vmem [shape: f32[1,4], index: 8, kind: input, shape index: {}]
  %s9 = inlined_call_operand.vmem [shape: f32[64,4], index: 9, kind: output, shape index: {}]
  %s10 = sld [smem:[#allocation0]]
  $region58: #{lstm1_forward.1} parent=0
    _
  %s12 = ssub.s32 1, %s10
  %s13 = scalar_select 0, %s12, %s10
  $region1: #{lstm1_forward.1} parent=0
    #allocation7 [shape = 'u8[32768]{0}', space=vmem, size = 0x8000, scoped, tag = 'input window, operand 1, single buffered']
    #allocation8 [shape = 's32[1]{0}', space=sflag, size = 0x4, scoped, tag = 'scoped memory for lstm1_forward.1']
    #allocation9 [shape = 'u8[65536]{0}', space=vmem, size = 0x10000, scoped, tag = 'input window, operand 4, single buffered']
    #allocation10 [shape = 's32[1]{0}', space=sflag, size = 0x4, scoped, tag = 'scoped memory for lstm1_forward.1']
    #allocation11 [shape = 'u8[65536]{0}', space=vmem, size = 0x10000, scoped, tag = 'input window, operand 5, single buffered']
    %14 = vsyncpa [#allocation8], 0
    %15 = vsyncpa [#allocation10], 0
    // Predicated region
    $region2: #{lstm1_forward.1} parent=1 // pred_check
      _
    $region3: #{lstm1_forward.1} parent=1 // pred_check_branch
      %17 = sbr.rel (0) target = $region5
    $region4: #{lstm1_forward.1} parent=1 // pred_region
      _
    $region5: #{lstm1_forward.1} parent=1 // pred_fallthru
      _
    // Predicated region
    $region6: #{lstm1_forward.1} parent=1 // pred_check
      _
    $region7: #{lstm1_forward.1} parent=1 // pred_check_branch
      %19 = sbr.rel (0) target = $region9
    $region8: #{lstm1_forward.1} parent=1 // pred_region
      %s21 = ssub.s32 1024, 1024
      %22 = vsyncadd [#allocation8], %s21
      %s23 = sshll.u32 [#allocation7], 4
      %s24 = int_to_ptr.vmem [resolvable:$true] %s23
      %29 = dma.hbm_to_vmem [thread:$0]  %s1, 1024, %s24, [#allocation8], 128, 128, 8
    $region9: #{lstm1_forward.1} parent=1 // pred_fallthru
      _
    // Predicated region
    $region10: #{lstm1_forward.1} parent=1 // pred_check
      _
    $region11: #{lstm1_forward.1} parent=1 // pred_check_branch
      %31 = sbr.rel (0) target = $region13
    $region12: #{lstm1_forward.1} parent=1 // pred_region
      _
    $region13: #{lstm1_forward.1} parent=1 // pred_fallthru
      _
    // Predicated region
    $region14: #{lstm1_forward.1} parent=1 // pred_check
      _
    $region15: #{lstm1_forward.1} parent=1 // pred_check_branch
      %33 = sbr.rel (0) target = $region17
    $region16: #{lstm1_forward.1} parent=1 // pred_region
      _
    $region17: #{lstm1_forward.1} parent=1 // pred_fallthru
      _
    // Predicated region
    $region18: #{lstm1_forward.1} parent=1 // pred_check
      _
    $region19: #{lstm1_forward.1} parent=1 // pred_check_branch
      %35 = sbr.rel (0) target = $region21
    $region20: #{lstm1_forward.1} parent=1 // pred_region
      %s37 = ssub.s32 2048, 2048
      %38 = vsyncadd [#allocation10], %s37
      %s39 = sshll.u32 [#allocation9], 4
      %s40 = int_to_ptr.vmem [resolvable:$true] %s39
      %45 = dma.hbm_to_vmem [thread:$0]  %s4, 2048, %s40, [#allocation10], 128, 128, 8
    $region21: #{lstm1_forward.1} parent=1 // pred_fallthru
      _
    // Predicated region
    $region22: #{lstm1_forward.1} parent=1 // pred_check
      _
    $region23: #{lstm1_forward.1} parent=1 // pred_check_branch
      %47 = sbr.rel (0) target = $region25
    $region24: #{lstm1_forward.1} parent=1 // pred_region
      %s49 = ssub.s32 2048, 2048
      %50 = vsyncadd [#allocation10], %s49
      %s51 = sshll.u32 [#allocation11], 4
      %s52 = int_to_ptr.vmem [resolvable:$true] %s51
      %57 = dma.hbm_to_vmem [thread:$0]  %s5, 2048, %s52, [#allocation10], 128, 128, 8
    $region25: #{lstm1_forward.1} parent=1 // pred_fallthru
      _
    // Predicated region
    $region26: #{lstm1_forward.1} parent=1 // pred_check
      _
    $region27: #{lstm1_forward.1} parent=1 // pred_check_branch
      %59 = sbr.rel (0) target = $region29
    $region28: #{lstm1_forward.1} parent=1 // pred_region
      _
    $region29: #{lstm1_forward.1} parent=1 // pred_fallthru
      _
    // Predicated region
    $region30: #{lstm1_forward.1} parent=1 // pred_check
      _
    $region31: #{lstm1_forward.1} parent=1 // pred_check_branch
      %61 = sbr.rel (0) target = $region33
    $region32: #{lstm1_forward.1} parent=1 // pred_region
      _
    $region33: #{lstm1_forward.1} parent=1 // pred_fallthru
      _
    // Predicated region
    $region34: #{lstm1_forward.1} parent=1 // pred_check
      _
    $region35: #{lstm1_forward.1} parent=1 // pred_check_branch
      %63 = sbr.rel (0) target = $region37
    $region36: #{lstm1_forward.1} parent=1 // pred_region
      _
    $region37: #{lstm1_forward.1} parent=1 // pred_fallthru
      _
    // Predicated region
    $region38: #{lstm1_forward.1} parent=1 // pred_check
      _
    $region39: #{lstm1_forward.1} parent=1 // pred_check_branch
      %65 = sbr.rel (0) target = $region41
    $region40: #{lstm1_forward.1} parent=1 // pred_region
      %66 = dma.done [#allocation8], 1024
    $region41: #{lstm1_forward.1} parent=1 // pred_fallthru
      _
    // Predicated region
    $region42: #{lstm1_forward.1} parent=1 // pred_check
      _
    $region43: #{lstm1_forward.1} parent=1 // pred_check_branch
      %68 = sbr.rel (0) target = $region45
    $region44: #{lstm1_forward.1} parent=1 // pred_region
      %69 = dma.done [#allocation10], 2048
    $region45: #{lstm1_forward.1} parent=1 // pred_fallthru
      _
    // Predicated region
    $region46: #{lstm1_forward.1} parent=1 // pred_check
      _
    $region47: #{lstm1_forward.1} parent=1 // pred_check_branch
      %71 = sbr.rel (0) target = $region49
    $region48: #{lstm1_forward.1} parent=1 // pred_region
      %72 = dma.done [#allocation10], 2048
    $region49: #{lstm1_forward.1} parent=1 // pred_fallthru
      _
    %v73 = vld [vmem:[%s0] sm:$0xff]
    %v74 = vld [vmem:[%s0 + $0x8] sm:$0xff]
    %v75 = vld [vmem:[%s0 + $0x10] sm:$0xff]
    %v76 = vld [vmem:[%s0 + $0x18] sm:$0xff]
    %v77 = vld [vmem:[%s0 + $0x20] sm:$0xff]
    %v78 = vld [vmem:[%s0 + $0x28] sm:$0xff]
    %v79 = vld [vmem:[%s0 + $0x30] sm:$0xff]
    %v80 = vld [vmem:[%s0 + $0x38] sm:$0xff]
    %v81 = vld [vmem:[#allocation7] sm:$0xff]
    %v82 = vld [vmem:[#allocation7 + $0x8] sm:$0xff]
    %v83 = vld [vmem:[%s3] sm:$0x1]
    %v85 = vlaneseq
    %v86 = vshrl.u32 %v85, 7
    %v87 = vsub.s32 0, %v86
    %v88 = vrot.slane %v83, %v87
    %vm90 = vcmask 130048
    %v92 = vsel %vm90, %v73, 0
    %v95 = vsel %vm90, %v74, 0
    %v98 = vsel %vm90, %v75, 0
    %v101 = vsel %vm90, %v76, 0
    %v104 = vsel %vm90, %v77, 0
    %v107 = vsel %vm90, %v78, 0
    %v110 = vsel %vm90, %v79, 0
    %v113 = vsel %vm90, %v80, 0
    %115 = vmatprep.subr.mxu0 0.0
    %116 = vmatpush1.msra.mxu0 0.0
    %117 = vmatprep.subr.mxu0 0.0
    %118 = vmatpush1.msra.mxu0 0.0
    %119 = vmatprep.subr.mxu0 0.0
    %120 = vmatpush1.msra.mxu0 0.0
    %121 = vmatprep.subr.mxu0 0.0
    %122 = vmatpush1.msra.mxu0 0.0
    %123 = vmatprep.subr.mxu0 0.0
    %124 = vmatpush1.msra.mxu0 0.0
    %125 = vmatprep.subr.mxu0 0.0
    %126 = vmatpush1.msra.mxu0 0.0
    %127 = vmatprep.subr.mxu0 0.0
    %128 = vmatpush1.msra.mxu0 0.0
    %129 = vmatprep.subr.mxu0 0.0
    %130 = vmatpush1.msra.mxu0 0.0
    %131 = vmatprep.subr.mxu0 0.0
    %132 = vmatpush1.msra.mxu0 0.0
    %133 = vmatprep.subr.mxu0 0.0
    %134 = vmatpush1.msra.mxu0 0.0
    %135 = vmatprep.subr.mxu0 0.0
    %136 = vmatpush1.msra.mxu0 0.0
    %137 = vmatprep.subr.mxu0 0.0
    %138 = vmatpush1.msra.mxu0 0.0
    %139 = vmatprep.subr.mxu0 0.0
    %140 = vmatpush1.msra.mxu0 0.0
    %141 = vmatprep.subr.mxu0 0.0
    %142 = vmatpush1.msra.mxu0 0.0
    %143 = vmatprep.subr.mxu0 0.0
    %144 = vmatpush1.msra.mxu0 %v82
    %145 = vmatprep.subr.mxu0 0.0
    %146 = vmatpush1.msra.mxu0 %v81
    %147 = vmatprep.subr.mxu0 0.0
    %148 = vmatpush2.msra.mxu0 0.0
    %149 = vmatprep.subr.mxu0 0.0
    %150 = vmatpush2.msra.mxu0 0.0
    %151 = vmatprep.subr.mxu0 0.0
    %152 = vmatpush2.msra.mxu0 0.0
    %153 = vmatprep.subr.mxu0 0.0
    %154 = vmatpush2.msra.mxu0 0.0
    %155 = vmatprep.subr.mxu0 0.0
    %156 = vmatpush2.msra.mxu0 0.0
    %157 = vmatprep.subr.mxu0 0.0
    %158 = vmatpush2.msra.mxu0 0.0
    %159 = vmatprep.subr.mxu0 0.0
    %160 = vmatpush2.msra.mxu0 0.0
    %161 = vmatprep.subr.mxu0 0.0
    %162 = vmatpush2.msra.mxu0 0.0
    %163 = vmatprep.subr.mxu0 0.0
    %164 = vmatpush2.msra.mxu0 0.0
    %165 = vmatprep.subr.mxu0 0.0
    %166 = vmatpush2.msra.mxu0 0.0
    %167 = vmatprep.subr.mxu0 0.0
    %168 = vmatpush2.msra.mxu0 0.0
    %169 = vmatprep.subr.mxu0 0.0
    %170 = vmatpush2.msra.mxu0 0.0
    %171 = vmatprep.subr.mxu0 0.0
    %172 = vmatpush2.msra.mxu0 0.0
    %173 = vmatprep.subr.mxu0 0.0
    %174 = vmatpush2.msra.mxu0 0.0
    %175 = vmatprep.subr.mxu0 0.0
    %176 = vmatpush2.msra.mxu0 0.0
    %177 = vmatprep.subr.mxu0 0.0
    %178 = vmatpush2.msra.mxu0 0.0
    %179 = vmatprep.mubr.f32.mxu0 0.0
    %180 = vmatmul.mubr.f32.gmra.mxu0 %v92
    %v181 = vpop.f32.mrf.mxu0
    %v182 = vadd.f32 %v88, %v181
    %v183 = vpop.f32.mrf.mxu0
    %184 = vmatprep.mubr.f32.mxu0 0.0
    %185 = vmatmul.mubr.f32.gmra.mxu0 %v95
    %v186 = vpop.f32.mrf.mxu0
    %v187 = vadd.f32 %v88, %v186
    %v188 = vpop.f32.mrf.mxu0
    %189 = vmatprep.mubr.f32.mxu0 0.0
    %190 = vmatmul.mubr.f32.gmra.mxu0 %v98
    %v191 = vpop.f32.mrf.mxu0
    %v192 = vadd.f32 %v88, %v191
    %v193 = vpop.f32.mrf.mxu0
    %194 = vmatprep.mubr.f32.mxu0 0.0
    %195 = vmatmul.mubr.f32.gmra.mxu0 %v101
    %v196 = vpop.f32.mrf.mxu0
    %v197 = vadd.f32 %v88, %v196
    %v198 = vpop.f32.mrf.mxu0
    %199 = vmatprep.mubr.f32.mxu0 0.0
    %200 = vmatmul.mubr.f32.gmra.mxu0 %v104
    %v201 = vpop.f32.mrf.mxu0
    %v202 = vadd.f32 %v88, %v201
    %v203 = vpop.f32.mrf.mxu0
    %204 = vmatprep.mubr.f32.mxu0 0.0
    %205 = vmatmul.mubr.f32.gmra.mxu0 %v107
    %v206 = vpop.f32.mrf.mxu0
    %v207 = vadd.f32 %v88, %v206
    %v208 = vpop.f32.mrf.mxu0
    %209 = vmatprep.mubr.f32.mxu0 0.0
    %210 = vmatmul.mubr.f32.gmra.mxu0 %v110
    %v211 = vpop.f32.mrf.mxu0
    %v212 = vadd.f32 %v88, %v211
    %v213 = vpop.f32.mrf.mxu0
    %214 = vmatprep.mubr.f32.mxu0 0.0
    %215 = vmatmul.mubr.f32.gmra.mxu0 %v113
    %v216 = vpop.f32.mrf.mxu0
    %v217 = vadd.f32 %v88, %v216
    %v218 = vpop.f32.mrf.mxu0
    %219 = vdwg.mxu0
    %vm220 = vcmask 261120
    %221 = vst.msk [vmem:[#allocation3] sm:$0xff] %vm220, %v182
    %222 = vst.msk [vmem:[#allocation3 + $0x8] sm:$0xff] %vm220, %v187
    %223 = vst.msk [vmem:[#allocation3 + $0x10] sm:$0xff] %vm220, %v192
    %224 = vst.msk [vmem:[#allocation3 + $0x18] sm:$0xff] %vm220, %v197
    %225 = vst.msk [vmem:[#allocation3 + $0x20] sm:$0xff] %vm220, %v202
    %226 = vst.msk [vmem:[#allocation3 + $0x28] sm:$0xff] %vm220, %v207
    %227 = vst.msk [vmem:[#allocation3 + $0x30] sm:$0xff] %vm220, %v212
    %228 = vst.msk [vmem:[#allocation3 + $0x38] sm:$0xff] %vm220, %v217
    %s229 = scalar_lea.vmem [#allocation7], 16
    %v230 = vld [vmem:[%s229] sm:$0xff]
    %v231 = vld [vmem:[%s229 + $0x8] sm:$0xff]
    %s232 = scalar_lea.vmem %s3, 1
    %v233 = vld [vmem:[%s232] sm:$0x1]
    %v235 = vlaneseq
    %v236 = vshrl.u32 %v235, 7
    %v237 = vsub.s32 0, %v236
    %v238 = vrot.slane %v233, %v237
    %240 = vmatprep.subr.mxu0 0.0
    %241 = vmatpush1.msra.mxu0 0.0
    %242 = vmatprep.subr.mxu0 0.0
    %243 = vmatpush1.msra.mxu0 0.0
    %244 = vmatprep.subr.mxu0 0.0
    %245 = vmatpush1.msra.mxu0 0.0
    %246 = vmatprep.subr.mxu0 0.0
    %247 = vmatpush1.msra.mxu0 0.0
    %248 = vmatprep.subr.mxu0 0.0
    %249 = vmatpush1.msra.mxu0 0.0
    %250 = vmatprep.subr.mxu0 0.0
    %251 = vmatpush1.msra.mxu0 0.0
    %252 = vmatprep.subr.mxu0 0.0
    %253 = vmatpush1.msra.mxu0 0.0
    %254 = vmatprep.subr.mxu0 0.0
    %255 = vmatpush1.msra.mxu0 0.0
    %256 = vmatprep.subr.mxu0 0.0
    %257 = vmatpush1.msra.mxu0 0.0
    %258 = vmatprep.subr.mxu0 0.0
    %259 = vmatpush1.msra.mxu0 0.0
    %260 = vmatprep.subr.mxu0 0.0
    %261 = vmatpush1.msra.mxu0 0.0
    %262 = vmatprep.subr.mxu0 0.0
    %263 = vmatpush1.msra.mxu0 0.0
    %264 = vmatprep.subr.mxu0 0.0
    %265 = vmatpush1.msra.mxu0 0.0
    %266 = vmatprep.subr.mxu0 0.0
    %267 = vmatpush1.msra.mxu0 0.0
    %268 = vmatprep.subr.mxu0 0.0
    %269 = vmatpush1.msra.mxu0 %v231
    %270 = vmatprep.subr.mxu0 0.0
    %271 = vmatpush1.msra.mxu0 %v230
    %272 = vmatprep.subr.mxu0 0.0
    %273 = vmatpush2.msra.mxu0 0.0
    %274 = vmatprep.subr.mxu0 0.0
    %275 = vmatpush2.msra.mxu0 0.0
    %276 = vmatprep.subr.mxu0 0.0
    %277 = vmatpush2.msra.mxu0 0.0
    %278 = vmatprep.subr.mxu0 0.0
    %279 = vmatpush2.msra.mxu0 0.0
    %280 = vmatprep.subr.mxu0 0.0
    %281 = vmatpush2.msra.mxu0 0.0
    %282 = vmatprep.subr.mxu0 0.0
    %283 = vmatpush2.msra.mxu0 0.0
    %284 = vmatprep.subr.mxu0 0.0
    %285 = vmatpush2.msra.mxu0 0.0
    %286 = vmatprep.subr.mxu0 0.0
    %287 = vmatpush2.msra.mxu0 0.0
    %288 = vmatprep.subr.mxu0 0.0
    %289 = vmatpush2.msra.mxu0 0.0
    %290 = vmatprep.subr.mxu0 0.0
    %291 = vmatpush2.msra.mxu0 0.0
    %292 = vmatprep.subr.mxu0 0.0
    %293 = vmatpush2.msra.mxu0 0.0
    %294 = vmatprep.subr.mxu0 0.0
    %295 = vmatpush2.msra.mxu0 0.0
    %296 = vmatprep.subr.mxu0 0.0
    %297 = vmatpush2.msra.mxu0 0.0
    %298 = vmatprep.subr.mxu0 0.0
    %299 = vmatpush2.msra.mxu0 0.0
    %300 = vmatprep.subr.mxu0 0.0
    %301 = vmatpush2.msra.mxu0 0.0
    %302 = vmatprep.subr.mxu0 0.0
    %303 = vmatpush2.msra.mxu0 0.0
    %304 = vmatprep.mubr.f32.mxu0 0.0
    %305 = vmatmul.mubr.f32.gmra.mxu0 %v92
    %v306 = vpop.f32.mrf.mxu0
    %v307 = vadd.f32 %v238, %v306
    %v308 = vpop.f32.mrf.mxu0
    %309 = vmatprep.mubr.f32.mxu0 0.0
    %310 = vmatmul.mubr.f32.gmra.mxu0 %v95
    %v311 = vpop.f32.mrf.mxu0
    %v312 = vadd.f32 %v238, %v311
    %v313 = vpop.f32.mrf.mxu0
    %314 = vmatprep.mubr.f32.mxu0 0.0
    %315 = vmatmul.mubr.f32.gmra.mxu0 %v98
    %v316 = vpop.f32.mrf.mxu0
    %v317 = vadd.f32 %v238, %v316
    %v318 = vpop.f32.mrf.mxu0
    %319 = vmatprep.mubr.f32.mxu0 0.0
    %320 = vmatmul.mubr.f32.gmra.mxu0 %v101
    %v321 = vpop.f32.mrf.mxu0
    %v322 = vadd.f32 %v238, %v321
    %v323 = vpop.f32.mrf.mxu0
    %324 = vmatprep.mubr.f32.mxu0 0.0
    %325 = vmatmul.mubr.f32.gmra.mxu0 %v104
    %v326 = vpop.f32.mrf.mxu0
    %v327 = vadd.f32 %v238, %v326
    %v328 = vpop.f32.mrf.mxu0
    %329 = vmatprep.mubr.f32.mxu0 0.0
    %330 = vmatmul.mubr.f32.gmra.mxu0 %v107
    %v331 = vpop.f32.mrf.mxu0
    %v332 = vadd.f32 %v238, %v331
    %v333 = vpop.f32.mrf.mxu0
    %334 = vmatprep.mubr.f32.mxu0 0.0
    %335 = vmatmul.mubr.f32.gmra.mxu0 %v110
    %v336 = vpop.f32.mrf.mxu0
    %v337 = vadd.f32 %v238, %v336
    %v338 = vpop.f32.mrf.mxu0
    %339 = vmatprep.mubr.f32.mxu0 0.0
    %340 = vmatmul.mubr.f32.gmra.mxu0 %v113
    %v341 = vpop.f32.mrf.mxu0
    %v342 = vadd.f32 %v238, %v341
    %v343 = vpop.f32.mrf.mxu0
    %344 = vdwg.mxu0
    %345 = vst.msk [vmem:[#allocation4] sm:$0xff] %vm220, %v307
    %346 = vst.msk [vmem:[#allocation4 + $0x8] sm:$0xff] %vm220, %v312
    %347 = vst.msk [vmem:[#allocation4 + $0x10] sm:$0xff] %vm220, %v317
    %348 = vst.msk [vmem:[#allocation4 + $0x18] sm:$0xff] %vm220, %v322
    %349 = vst.msk [vmem:[#allocation4 + $0x20] sm:$0xff] %vm220, %v327
    %350 = vst.msk [vmem:[#allocation4 + $0x28] sm:$0xff] %vm220, %v332
    %351 = vst.msk [vmem:[#allocation4 + $0x30] sm:$0xff] %vm220, %v337
    %352 = vst.msk [vmem:[#allocation4 + $0x38] sm:$0xff] %vm220, %v342
    %s353 = scalar_lea.vmem [#allocation7], 32
    %v354 = vld [vmem:[%s353] sm:$0xff]
    %v355 = vld [vmem:[%s353 + $0x8] sm:$0xff]
    %s356 = scalar_lea.vmem %s3, 2
    %v357 = vld [vmem:[%s356] sm:$0x1]
    %v359 = vlaneseq
    %v360 = vshrl.u32 %v359, 7
    %v361 = vsub.s32 0, %v360
    %v362 = vrot.slane %v357, %v361
    %364 = vmatprep.subr.mxu0 0.0
    %365 = vmatpush1.msra.mxu0 0.0
    %366 = vmatprep.subr.mxu0 0.0
    %367 = vmatpush1.msra.mxu0 0.0
    %368 = vmatprep.subr.mxu0 0.0
    %369 = vmatpush1.msra.mxu0 0.0
    %370 = vmatprep.subr.mxu0 0.0
    %371 = vmatpush1.msra.mxu0 0.0
    %372 = vmatprep.subr.mxu0 0.0
    %373 = vmatpush1.msra.mxu0 0.0
    %374 = vmatprep.subr.mxu0 0.0
    %375 = vmatpush1.msra.mxu0 0.0
    %376 = vmatprep.subr.mxu0 0.0
    %377 = vmatpush1.msra.mxu0 0.0
    %378 = vmatprep.subr.mxu0 0.0
    %379 = vmatpush1.msra.mxu0 0.0
    %380 = vmatprep.subr.mxu0 0.0
    %381 = vmatpush1.msra.mxu0 0.0
    %382 = vmatprep.subr.mxu0 0.0
    %383 = vmatpush1.msra.mxu0 0.0
    %384 = vmatprep.subr.mxu0 0.0
    %385 = vmatpush1.msra.mxu0 0.0
    %386 = vmatprep.subr.mxu0 0.0
    %387 = vmatpush1.msra.mxu0 0.0
    %388 = vmatprep.subr.mxu0 0.0
    %389 = vmatpush1.msra.mxu0 0.0
    %390 = vmatprep.subr.mxu0 0.0
    %391 = vmatpush1.msra.mxu0 0.0
    %392 = vmatprep.subr.mxu0 0.0
    %393 = vmatpush1.msra.mxu0 %v355
    %394 = vmatprep.subr.mxu0 0.0
    %395 = vmatpush1.msra.mxu0 %v354
    %396 = vmatprep.subr.mxu0 0.0
    %397 = vmatpush2.msra.mxu0 0.0
    %398 = vmatprep.subr.mxu0 0.0
    %399 = vmatpush2.msra.mxu0 0.0
    %400 = vmatprep.subr.mxu0 0.0
    %401 = vmatpush2.msra.mxu0 0.0
    %402 = vmatprep.subr.mxu0 0.0
    %403 = vmatpush2.msra.mxu0 0.0
    %404 = vmatprep.subr.mxu0 0.0
    %405 = vmatpush2.msra.mxu0 0.0
    %406 = vmatprep.subr.mxu0 0.0
    %407 = vmatpush2.msra.mxu0 0.0
    %408 = vmatprep.subr.mxu0 0.0
    %409 = vmatpush2.msra.mxu0 0.0
    %410 = vmatprep.subr.mxu0 0.0
    %411 = vmatpush2.msra.mxu0 0.0
    %412 = vmatprep.subr.mxu0 0.0
    %413 = vmatpush2.msra.mxu0 0.0
    %414 = vmatprep.subr.mxu0 0.0
    %415 = vmatpush2.msra.mxu0 0.0
    %416 = vmatprep.subr.mxu0 0.0
    %417 = vmatpush2.msra.mxu0 0.0
    %418 = vmatprep.subr.mxu0 0.0
    %419 = vmatpush2.msra.mxu0 0.0
    %420 = vmatprep.subr.mxu0 0.0
    %421 = vmatpush2.msra.mxu0 0.0
    %422 = vmatprep.subr.mxu0 0.0
    %423 = vmatpush2.msra.mxu0 0.0
    %424 = vmatprep.subr.mxu0 0.0
    %425 = vmatpush2.msra.mxu0 0.0
    %426 = vmatprep.subr.mxu0 0.0
    %427 = vmatpush2.msra.mxu0 0.0
    %428 = vmatprep.mubr.f32.mxu0 0.0
    %429 = vmatmul.mubr.f32.gmra.mxu0 %v92
    %v430 = vpop.f32.mrf.mxu0
    %v431 = vadd.f32 %v362, %v430
    %v432 = vpop.f32.mrf.mxu0
    %433 = vmatprep.mubr.f32.mxu0 0.0
    %434 = vmatmul.mubr.f32.gmra.mxu0 %v95
    %v435 = vpop.f32.mrf.mxu0
    %v436 = vadd.f32 %v362, %v435
    %v437 = vpop.f32.mrf.mxu0
    %438 = vmatprep.mubr.f32.mxu0 0.0
    %439 = vmatmul.mubr.f32.gmra.mxu0 %v98
    %v440 = vpop.f32.mrf.mxu0
    %v441 = vadd.f32 %v362, %v440
    %v442 = vpop.f32.mrf.mxu0
    %443 = vmatprep.mubr.f32.mxu0 0.0
    %444 = vmatmul.mubr.f32.gmra.mxu0 %v101
    %v445 = vpop.f32.mrf.mxu0
    %v446 = vadd.f32 %v362, %v445
    %v447 = vpop.f32.mrf.mxu0
    %448 = vmatprep.mubr.f32.mxu0 0.0
    %449 = vmatmul.mubr.f32.gmra.mxu0 %v104
    %v450 = vpop.f32.mrf.mxu0
    %v451 = vadd.f32 %v362, %v450
    %v452 = vpop.f32.mrf.mxu0
    %453 = vmatprep.mubr.f32.mxu0 0.0
    %454 = vmatmul.mubr.f32.gmra.mxu0 %v107
    %v455 = vpop.f32.mrf.mxu0
    %v456 = vadd.f32 %v362, %v455
    %v457 = vpop.f32.mrf.mxu0
    %458 = vmatprep.mubr.f32.mxu0 0.0
    %459 = vmatmul.mubr.f32.gmra.mxu0 %v110
    %v460 = vpop.f32.mrf.mxu0
    %v461 = vadd.f32 %v362, %v460
    %v462 = vpop.f32.mrf.mxu0
    %463 = vmatprep.mubr.f32.mxu0 0.0
    %464 = vmatmul.mubr.f32.gmra.mxu0 %v113
    %v465 = vpop.f32.mrf.mxu0
    %v466 = vadd.f32 %v362, %v465
    %v467 = vpop.f32.mrf.mxu0
    %468 = vdwg.mxu0
    %469 = vst.msk [vmem:[#allocation5] sm:$0xff] %vm220, %v431
    %470 = vst.msk [vmem:[#allocation5 + $0x8] sm:$0xff] %vm220, %v436
    %471 = vst.msk [vmem:[#allocation5 + $0x10] sm:$0xff] %vm220, %v441
    %472 = vst.msk [vmem:[#allocation5 + $0x18] sm:$0xff] %vm220, %v446
    %473 = vst.msk [vmem:[#allocation5 + $0x20] sm:$0xff] %vm220, %v451
    %474 = vst.msk [vmem:[#allocation5 + $0x28] sm:$0xff] %vm220, %v456
    %475 = vst.msk [vmem:[#allocation5 + $0x30] sm:$0xff] %vm220, %v461
    %476 = vst.msk [vmem:[#allocation5 + $0x38] sm:$0xff] %vm220, %v466
    %s477 = scalar_lea.vmem [#allocation7], 48
    %v478 = vld [vmem:[%s477] sm:$0xff]
    %v479 = vld [vmem:[%s477 + $0x8] sm:$0xff]
    %s480 = scalar_lea.vmem %s3, 3
    %v481 = vld [vmem:[%s480] sm:$0x1]
    %v483 = vlaneseq
    %v484 = vshrl.u32 %v483, 7
    %v485 = vsub.s32 0, %v484
    %v486 = vrot.slane %v481, %v485
    %488 = vmatprep.subr.mxu0 0.0
    %489 = vmatpush1.msra.mxu0 0.0
    %490 = vmatprep.subr.mxu0 0.0
    %491 = vmatpush1.msra.mxu0 0.0
    %492 = vmatprep.subr.mxu0 0.0
    %493 = vmatpush1.msra.mxu0 0.0
    %494 = vmatprep.subr.mxu0 0.0
    %495 = vmatpush1.msra.mxu0 0.0
    %496 = vmatprep.subr.mxu0 0.0
    %497 = vmatpush1.msra.mxu0 0.0
    %498 = vmatprep.subr.mxu0 0.0
    %499 = vmatpush1.msra.mxu0 0.0
    %500 = vmatprep.subr.mxu0 0.0
    %501 = vmatpush1.msra.mxu0 0.0
    %502 = vmatprep.subr.mxu0 0.0
    %503 = vmatpush1.msra.mxu0 0.0
    %504 = vmatprep.subr.mxu0 0.0
    %505 = vmatpush1.msra.mxu0 0.0
    %506 = vmatprep.subr.mxu0 0.0
    %507 = vmatpush1.msra.mxu0 0.0
    %508 = vmatprep.subr.mxu0 0.0
    %509 = vmatpush1.msra.mxu0 0.0
    %510 = vmatprep.subr.mxu0 0.0
    %511 = vmatpush1.msra.mxu0 0.0
    %512 = vmatprep.subr.mxu0 0.0
    %513 = vmatpush1.msra.mxu0 0.0
    %514 = vmatprep.subr.mxu0 0.0
    %515 = vmatpush1.msra.mxu0 0.0
    %516 = vmatprep.subr.mxu0 0.0
    %517 = vmatpush1.msra.mxu0 %v479
    %518 = vmatprep.subr.mxu0 0.0
    %519 = vmatpush1.msra.mxu0 %v478
    %520 = vmatprep.subr.mxu0 0.0
    %521 = vmatpush2.msra.mxu0 0.0
    %522 = vmatprep.subr.mxu0 0.0
    %523 = vmatpush2.msra.mxu0 0.0
    %524 = vmatprep.subr.mxu0 0.0
    %525 = vmatpush2.msra.mxu0 0.0
    %526 = vmatprep.subr.mxu0 0.0
    %527 = vmatpush2.msra.mxu0 0.0
    %528 = vmatprep.subr.mxu0 0.0
    %529 = vmatpush2.msra.mxu0 0.0
    %530 = vmatprep.subr.mxu0 0.0
    %531 = vmatpush2.msra.mxu0 0.0
    %532 = vmatprep.subr.mxu0 0.0
    %533 = vmatpush2.msra.mxu0 0.0
    %534 = vmatprep.subr.mxu0 0.0
    %535 = vmatpush2.msra.mxu0 0.0
    %536 = vmatprep.subr.mxu0 0.0
    %537 = vmatpush2.msra.mxu0 0.0
    %538 = vmatprep.subr.mxu0 0.0
    %539 = vmatpush2.msra.mxu0 0.0
    %540 = vmatprep.subr.mxu0 0.0
    %541 = vmatpush2.msra.mxu0 0.0
    %542 = vmatprep.subr.mxu0 0.0
    %543 = vmatpush2.msra.mxu0 0.0
    %544 = vmatprep.subr.mxu0 0.0
    %545 = vmatpush2.msra.mxu0 0.0
    %546 = vmatprep.subr.mxu0 0.0
    %547 = vmatpush2.msra.mxu0 0.0
    %548 = vmatprep.subr.mxu0 0.0
    %549 = vmatpush2.msra.mxu0 0.0
    %550 = vmatprep.subr.mxu0 0.0
    %551 = vmatpush2.msra.mxu0 0.0
    %552 = vmatprep.mubr.f32.mxu0 0.0
    %553 = vmatmul.mubr.f32.gmra.mxu0 %v92
    %v554 = vpop.f32.mrf.mxu0
    %v555 = vadd.f32 %v486, %v554
    %v556 = vpop.f32.mrf.mxu0
    %557 = vmatprep.mubr.f32.mxu0 0.0
    %558 = vmatmul.mubr.f32.gmra.mxu0 %v95
    %v559 = vpop.f32.mrf.mxu0
    %v560 = vadd.f32 %v486, %v559
    %v561 = vpop.f32.mrf.mxu0
    %562 = vmatprep.mubr.f32.mxu0 0.0
    %563 = vmatmul.mubr.f32.gmra.mxu0 %v98
    %v564 = vpop.f32.mrf.mxu0
    %v565 = vadd.f32 %v486, %v564
    %v566 = vpop.f32.mrf.mxu0
    %567 = vmatprep.mubr.f32.mxu0 0.0
    %568 = vmatmul.mubr.f32.gmra.mxu0 %v101
    %v569 = vpop.f32.mrf.mxu0
    %v570 = vadd.f32 %v486, %v569
    %v571 = vpop.f32.mrf.mxu0
    %572 = vmatprep.mubr.f32.mxu0 0.0
    %573 = vmatmul.mubr.f32.gmra.mxu0 %v104
    %v574 = vpop.f32.mrf.mxu0
    %v575 = vadd.f32 %v486, %v574
    %v576 = vpop.f32.mrf.mxu0
    %577 = vmatprep.mubr.f32.mxu0 0.0
    %578 = vmatmul.mubr.f32.gmra.mxu0 %v107
    %v579 = vpop.f32.mrf.mxu0
    %v580 = vadd.f32 %v486, %v579
    %v581 = vpop.f32.mrf.mxu0
    %582 = vmatprep.mubr.f32.mxu0 0.0
    %583 = vmatmul.mubr.f32.gmra.mxu0 %v110
    %v584 = vpop.f32.mrf.mxu0
    %v585 = vadd.f32 %v486, %v584
    %v586 = vpop.f32.mrf.mxu0
    %587 = vmatprep.mubr.f32.mxu0 0.0
    %588 = vmatmul.mubr.f32.gmra.mxu0 %v113
    %v589 = vpop.f32.mrf.mxu0
    %v590 = vadd.f32 %v486, %v589
    %v591 = vpop.f32.mrf.mxu0
    %592 = vdwg.mxu0
    %593 = vst.msk [vmem:[#allocation6] sm:$0xff] %vm220, %v555
    %594 = vst.msk [vmem:[#allocation6 + $0x8] sm:$0xff] %vm220, %v560
    %595 = vst.msk [vmem:[#allocation6 + $0x10] sm:$0xff] %vm220, %v565
    %596 = vst.msk [vmem:[#allocation6 + $0x18] sm:$0xff] %vm220, %v570
    %597 = vst.msk [vmem:[#allocation6 + $0x20] sm:$0xff] %vm220, %v575
    %598 = vst.msk [vmem:[#allocation6 + $0x28] sm:$0xff] %vm220, %v580
    %599 = vst.msk [vmem:[#allocation6 + $0x30] sm:$0xff] %vm220, %v585
    %600 = vst.msk [vmem:[#allocation6 + $0x38] sm:$0xff] %vm220, %v590
    %v601 = vld [vmem:[#allocation3] sm:$0xff]
    %v602 = vld [vmem:[%s2] sm:$0xff]
    %v603 = vld [vmem:[%s2 + $0x8] sm:$0xff]
    %v604 = vld [vmem:[%s2 + $0x10] sm:$0xff]
    %v605 = vld [vmem:[%s2 + $0x18] sm:$0xff]
    %v607 = vsel %vm220, 0.0, 0
    %609 = vmatprep.subr.mxu0 0.0
    %610 = vmatpush1.msra.mxu0 0.0
    %611 = vmatprep.subr.mxu0 0.0
    %612 = vmatpush1.msra.mxu0 0.0
    %613 = vmatprep.subr.mxu0 0.0
    %614 = vmatpush1.msra.mxu0 0.0
    %615 = vmatprep.subr.mxu0 0.0
    %616 = vmatpush1.msra.mxu0 0.0
    %617 = vmatprep.subr.mxu0 0.0
    %618 = vmatpush1.msra.mxu0 0.0
    %619 = vmatprep.subr.mxu0 0.0
    %620 = vmatpush1.msra.mxu0 0.0
    %621 = vmatprep.subr.mxu0 0.0
    %622 = vmatpush1.msra.mxu0 0.0
    %623 = vmatprep.subr.mxu0 0.0
    %624 = vmatpush1.msra.mxu0 0.0
    %625 = vmatprep.subr.mxu0 0.0
    %626 = vmatpush1.msra.mxu0 0.0
    %627 = vmatprep.subr.mxu0 0.0
    %628 = vmatpush1.msra.mxu0 0.0
    %629 = vmatprep.subr.mxu0 0.0
    %630 = vmatpush1.msra.mxu0 0.0
    %631 = vmatprep.subr.mxu0 0.0
    %632 = vmatpush1.msra.mxu0 0.0
    %633 = vmatprep.subr.mxu0 0.0
    %634 = vmatpush1.msra.mxu0 %v605
    %635 = vmatprep.subr.mxu0 0.0
    %636 = vmatpush1.msra.mxu0 %v604
    %637 = vmatprep.subr.mxu0 0.0
    %638 = vmatpush1.msra.mxu0 %v603
    %639 = vmatprep.subr.mxu0 0.0
    %640 = vmatpush1.msra.mxu0 %v602
    %641 = vmatprep.subr.mxu0 0.0
    %642 = vmatpush2.msra.mxu0 0.0
    %643 = vmatprep.subr.mxu0 0.0
    %644 = vmatpush2.msra.mxu0 0.0
    %645 = vmatprep.subr.mxu0 0.0
    %646 = vmatpush2.msra.mxu0 0.0
    %647 = vmatprep.subr.mxu0 0.0
    %648 = vmatpush2.msra.mxu0 0.0
    %649 = vmatprep.subr.mxu0 0.0
    %650 = vmatpush2.msra.mxu0 0.0
    %651 = vmatprep.subr.mxu0 0.0
    %652 = vmatpush2.msra.mxu0 0.0
    %653 = vmatprep.subr.mxu0 0.0
    %654 = vmatpush2.msra.mxu0 0.0
    %655 = vmatprep.subr.mxu0 0.0
    %656 = vmatpush2.msra.mxu0 0.0
    %657 = vmatprep.subr.mxu0 0.0
    %658 = vmatpush2.msra.mxu0 0.0
    %659 = vmatprep.subr.mxu0 0.0
    %660 = vmatpush2.msra.mxu0 0.0
    %661 = vmatprep.subr.mxu0 0.0
    %662 = vmatpush2.msra.mxu0 0.0
    %663 = vmatprep.subr.mxu0 0.0
    %664 = vmatpush2.msra.mxu0 0.0
    %665 = vmatprep.subr.mxu0 0.0
    %666 = vmatpush2.msra.mxu0 0.0
    %667 = vmatprep.subr.mxu0 0.0
    %668 = vmatpush2.msra.mxu0 0.0
    %669 = vmatprep.subr.mxu0 0.0
    %670 = vmatpush2.msra.mxu0 0.0
    %671 = vmatprep.subr.mxu0 0.0
    %672 = vmatpush2.msra.mxu0 0.0
    %673 = vmatprep.mubr.f32.mxu0 0.0
    %674 = vmatmul.mubr.f32.gmra.mxu0 %v607
    %v675 = vpop.f32.mrf.mxu0
    %v676 = vadd.f32 0.0, %v675
    %v677 = vpop.f32.mrf.mxu0
    %678 = vdwg.mxu0
    %v679 = vadd.f32 %v601, %v676
    %v680 = vxor.u32 %v679, 2147483648
    %v681 = vmul.f32 %v680, 1.442695
    %v682 = vpow.pop %v681
    %v683 = vadd.f32 %v682, 1.0
    %v684 = vrcp.pop %v683
    %v685 = vmul.f32 1.0, %v684
    %v686 = vld [vmem:[#allocation4] sm:$0xff]
    %s687 = scalar_lea.vmem %s2, 32
    %v688 = vld [vmem:[%s687] sm:$0xff]
    %v689 = vld [vmem:[%s687 + $0x8] sm:$0xff]
    %v690 = vld [vmem:[%s687 + $0x10] sm:$0xff]
    %v691 = vld [vmem:[%s687 + $0x18] sm:$0xff]
    %692 = vmatprep.subr.mxu0 0.0
    %693 = vmatpush1.msra.mxu0 0.0
    %694 = vmatprep.subr.mxu0 0.0
    %695 = vmatpush1.msra.mxu0 0.0
    %696 = vmatprep.subr.mxu0 0.0
    %697 = vmatpush1.msra.mxu0 0.0
    %698 = vmatprep.subr.mxu0 0.0
    %699 = vmatpush1.msra.mxu0 0.0
    %700 = vmatprep.subr.mxu0 0.0
    %701 = vmatpush1.msra.mxu0 0.0
    %702 = vmatprep.subr.mxu0 0.0
    %703 = vmatpush1.msra.mxu0 0.0
    %704 = vmatprep.subr.mxu0 0.0
    %705 = vmatpush1.msra.mxu0 0.0
    %706 = vmatprep.subr.mxu0 0.0
    %707 = vmatpush1.msra.mxu0 0.0
    %708 = vmatprep.subr.mxu0 0.0
    %709 = vmatpush1.msra.mxu0 0.0
    %710 = vmatprep.subr.mxu0 0.0
    %711 = vmatpush1.msra.mxu0 0.0
    %712 = vmatprep.subr.mxu0 0.0
    %713 = vmatpush1.msra.mxu0 0.0
    %714 = vmatprep.subr.mxu0 0.0
    %715 = vmatpush1.msra.mxu0 0.0
    %716 = vmatprep.subr.mxu0 0.0
    %717 = vmatpush1.msra.mxu0 %v691
    %718 = vmatprep.subr.mxu0 0.0
    %719 = vmatpush1.msra.mxu0 %v690
    %720 = vmatprep.subr.mxu0 0.0
    %721 = vmatpush1.msra.mxu0 %v689
    %722 = vmatprep.subr.mxu0 0.0
    %723 = vmatpush1.msra.mxu0 %v688
    %724 = vmatprep.subr.mxu0 0.0
    %725 = vmatpush2.msra.mxu0 0.0
    %726 = vmatprep.subr.mxu0 0.0
    %727 = vmatpush2.msra.mxu0 0.0
    %728 = vmatprep.subr.mxu0 0.0
    %729 = vmatpush2.msra.mxu0 0.0
    %730 = vmatprep.subr.mxu0 0.0
    %731 = vmatpush2.msra.mxu0 0.0
    %732 = vmatprep.subr.mxu0 0.0
    %733 = vmatpush2.msra.mxu0 0.0
    %734 = vmatprep.subr.mxu0 0.0
    %735 = vmatpush2.msra.mxu0 0.0
    %736 = vmatprep.subr.mxu0 0.0
    %737 = vmatpush2.msra.mxu0 0.0
    %738 = vmatprep.subr.mxu0 0.0
    %739 = vmatpush2.msra.mxu0 0.0
    %740 = vmatprep.subr.mxu0 0.0
    %741 = vmatpush2.msra.mxu0 0.0
    %742 = vmatprep.subr.mxu0 0.0
    %743 = vmatpush2.msra.mxu0 0.0
    %744 = vmatprep.subr.mxu0 0.0
    %745 = vmatpush2.msra.mxu0 0.0
    %746 = vmatprep.subr.mxu0 0.0
    %747 = vmatpush2.msra.mxu0 0.0
    %748 = vmatprep.subr.mxu0 0.0
    %749 = vmatpush2.msra.mxu0 0.0
    %750 = vmatprep.subr.mxu0 0.0
    %751 = vmatpush2.msra.mxu0 0.0
    %752 = vmatprep.subr.mxu0 0.0
    %753 = vmatpush2.msra.mxu0 0.0
    %754 = vmatprep.subr.mxu0 0.0
    %755 = vmatpush2.msra.mxu0 0.0
    %756 = vmatprep.mubr.f32.mxu0 0.0
    %757 = vmatmul.mubr.f32.gmra.mxu0 %v607
    %v758 = vpop.f32.mrf.mxu0
    %v759 = vadd.f32 0.0, %v758
    %v760 = vpop.f32.mrf.mxu0
    %761 = vdwg.mxu0
    %v762 = vadd.f32 %v686, %v759
    %v763 = vxor.u32 %v762, 2147483648
    %v764 = vmul.f32 %v763, 1.442695
    %v765 = vpow.pop %v764
    %v766 = vadd.f32 %v765, 1.0
    %v767 = vrcp.pop %v766
    %v768 = vmul.f32 1.0, %v767
    %v769 = vld [vmem:[#allocation5] sm:$0xff]
    %s770 = scalar_lea.vmem %s2, 64
    %v771 = vld [vmem:[%s770] sm:$0xff]
    %v772 = vld [vmem:[%s770 + $0x8] sm:$0xff]
    %v773 = vld [vmem:[%s770 + $0x10] sm:$0xff]
    %v774 = vld [vmem:[%s770 + $0x18] sm:$0xff]
    %775 = vmatprep.subr.mxu0 0.0
    %776 = vmatpush1.msra.mxu0 0.0
    %777 = vmatprep.subr.mxu0 0.0
    %778 = vmatpush1.msra.mxu0 0.0
    %779 = vmatprep.subr.mxu0 0.0
    %780 = vmatpush1.msra.mxu0 0.0
    %781 = vmatprep.subr.mxu0 0.0
    %782 = vmatpush1.msra.mxu0 0.0
    %783 = vmatprep.subr.mxu0 0.0
    %784 = vmatpush1.msra.mxu0 0.0
    %785 = vmatprep.subr.mxu0 0.0
    %786 = vmatpush1.msra.mxu0 0.0
    %787 = vmatprep.subr.mxu0 0.0
    %788 = vmatpush1.msra.mxu0 0.0
    %789 = vmatprep.subr.mxu0 0.0
    %790 = vmatpush1.msra.mxu0 0.0
    %791 = vmatprep.subr.mxu0 0.0
    %792 = vmatpush1.msra.mxu0 0.0
    %793 = vmatprep.subr.mxu0 0.0
    %794 = vmatpush1.msra.mxu0 0.0
    %795 = vmatprep.subr.mxu0 0.0
    %796 = vmatpush1.msra.mxu0 0.0
    %797 = vmatprep.subr.mxu0 0.0
    %798 = vmatpush1.msra.mxu0 0.0
    %799 = vmatprep.subr.mxu0 0.0
    %800 = vmatpush1.msra.mxu0 %v774
    %801 = vmatprep.subr.mxu0 0.0
    %802 = vmatpush1.msra.mxu0 %v773
    %803 = vmatprep.subr.mxu0 0.0
    %804 = vmatpush1.msra.mxu0 %v772
    %805 = vmatprep.subr.mxu0 0.0
    %806 = vmatpush1.msra.mxu0 %v771
    %807 = vmatprep.subr.mxu0 0.0
    %808 = vmatpush2.msra.mxu0 0.0
    %809 = vmatprep.subr.mxu0 0.0
    %810 = vmatpush2.msra.mxu0 0.0
    %811 = vmatprep.subr.mxu0 0.0
    %812 = vmatpush2.msra.mxu0 0.0
    %813 = vmatprep.subr.mxu0 0.0
    %814 = vmatpush2.msra.mxu0 0.0
    %815 = vmatprep.subr.mxu0 0.0
    %816 = vmatpush2.msra.mxu0 0.0
    %817 = vmatprep.subr.mxu0 0.0
    %818 = vmatpush2.msra.mxu0 0.0
    %819 = vmatprep.subr.mxu0 0.0
    %820 = vmatpush2.msra.mxu0 0.0
    %821 = vmatprep.subr.mxu0 0.0
    %822 = vmatpush2.msra.mxu0 0.0
    %823 = vmatprep.subr.mxu0 0.0
    %824 = vmatpush2.msra.mxu0 0.0
    %825 = vmatprep.subr.mxu0 0.0
    %826 = vmatpush2.msra.mxu0 0.0
    %827 = vmatprep.subr.mxu0 0.0
    %828 = vmatpush2.msra.mxu0 0.0
    %829 = vmatprep.subr.mxu0 0.0
    %830 = vmatpush2.msra.mxu0 0.0
    %831 = vmatprep.subr.mxu0 0.0
    %832 = vmatpush2.msra.mxu0 0.0
    %833 = vmatprep.subr.mxu0 0.0
    %834 = vmatpush2.msra.mxu0 0.0
    %835 = vmatprep.subr.mxu0 0.0
    %836 = vmatpush2.msra.mxu0 0.0
    %837 = vmatprep.subr.mxu0 0.0
    %838 = vmatpush2.msra.mxu0 0.0
    %839 = vmatprep.mubr.f32.mxu0 0.0
    %840 = vmatmul.mubr.f32.gmra.mxu0 %v607
    %v841 = vpop.f32.mrf.mxu0
    %v842 = vadd.f32 0.0, %v841
    %v843 = vpop.f32.mrf.mxu0
    %844 = vdwg.mxu0
    %v845 = vadd.f32 %v769, %v842
    %v846 = vtanh.pop %v845
    %v847 = vld [vmem:[#allocation6] sm:$0xff]
    %s848 = scalar_lea.vmem %s2, 96
    %v849 = vld [vmem:[%s848] sm:$0xff]
    %v850 = vld [vmem:[%s848 + $0x8] sm:$0xff]
    %v851 = vld [vmem:[%s848 + $0x10] sm:$0xff]
    %v852 = vld [vmem:[%s848 + $0x18] sm:$0xff]
    %853 = vmatprep.subr.mxu0 0.0
    %854 = vmatpush1.msra.mxu0 0.0
    %855 = vmatprep.subr.mxu0 0.0
    %856 = vmatpush1.msra.mxu0 0.0
    %857 = vmatprep.subr.mxu0 0.0
    %858 = vmatpush1.msra.mxu0 0.0
    %859 = vmatprep.subr.mxu0 0.0
    %860 = vmatpush1.msra.mxu0 0.0
    %861 = vmatprep.subr.mxu0 0.0
    %862 = vmatpush1.msra.mxu0 0.0
    %863 = vmatprep.subr.mxu0 0.0
    %864 = vmatpush1.msra.mxu0 0.0
    %865 = vmatprep.subr.mxu0 0.0
    %866 = vmatpush1.msra.mxu0 0.0
    %867 = vmatprep.subr.mxu0 0.0
    %868 = vmatpush1.msra.mxu0 0.0
    %869 = vmatprep.subr.mxu0 0.0
    %870 = vmatpush1.msra.mxu0 0.0
    %871 = vmatprep.subr.mxu0 0.0
    %872 = vmatpush1.msra.mxu0 0.0
    %873 = vmatprep.subr.mxu0 0.0
    %874 = vmatpush1.msra.mxu0 0.0
    %875 = vmatprep.subr.mxu0 0.0
    %876 = vmatpush1.msra.mxu0 0.0
    %877 = vmatprep.subr.mxu0 0.0
    %878 = vmatpush1.msra.mxu0 %v852
    %879 = vmatprep.subr.mxu0 0.0
    %880 = vmatpush1.msra.mxu0 %v851
    %881 = vmatprep.subr.mxu0 0.0
    %882 = vmatpush1.msra.mxu0 %v850
    %883 = vmatprep.subr.mxu0 0.0
    %884 = vmatpush1.msra.mxu0 %v849
    %885 = vmatprep.subr.mxu0 0.0
    %886 = vmatpush2.msra.mxu0 0.0
    %887 = vmatprep.subr.mxu0 0.0
    %888 = vmatpush2.msra.mxu0 0.0
    %889 = vmatprep.subr.mxu0 0.0
    %890 = vmatpush2.msra.mxu0 0.0
    %891 = vmatprep.subr.mxu0 0.0
    %892 = vmatpush2.msra.mxu0 0.0
    %893 = vmatprep.subr.mxu0 0.0
    %894 = vmatpush2.msra.mxu0 0.0
    %895 = vmatprep.subr.mxu0 0.0
    %896 = vmatpush2.msra.mxu0 0.0
    %897 = vmatprep.subr.mxu0 0.0
    %898 = vmatpush2.msra.mxu0 0.0
    %899 = vmatprep.subr.mxu0 0.0
    %900 = vmatpush2.msra.mxu0 0.0
    %901 = vmatprep.subr.mxu0 0.0
    %902 = vmatpush2.msra.mxu0 0.0
    %903 = vmatprep.subr.mxu0 0.0
    %904 = vmatpush2.msra.mxu0 0.0
    %905 = vmatprep.subr.mxu0 0.0
    %906 = vmatpush2.msra.mxu0 0.0
    %907 = vmatprep.subr.mxu0 0.0
    %908 = vmatpush2.msra.mxu0 0.0
    %909 = vmatprep.subr.mxu0 0.0
    %910 = vmatpush2.msra.mxu0 0.0
    %911 = vmatprep.subr.mxu0 0.0
    %912 = vmatpush2.msra.mxu0 0.0
    %913 = vmatprep.subr.mxu0 0.0
    %914 = vmatpush2.msra.mxu0 0.0
    %915 = vmatprep.subr.mxu0 0.0
    %916 = vmatpush2.msra.mxu0 0.0
    %917 = vmatprep.mubr.f32.mxu0 0.0
    %918 = vmatmul.mubr.f32.gmra.mxu0 %v607
    %v919 = vpop.f32.mrf.mxu0
    %v920 = vadd.f32 0.0, %v919
    %v921 = vpop.f32.mrf.mxu0
    %922 = vdwg.mxu0
    %v923 = vadd.f32 %v847, %v920
    %v924 = vxor.u32 %v923, 2147483648
    %v925 = vmul.f32 %v924, 1.442695
    %v926 = vpow.pop %v925
    %v927 = vadd.f32 %v926, 1.0
    %v928 = vrcp.pop %v927
    %v929 = vmul.f32 1.0, %v928
    %v930 = vmul.f32 %v768, 0.0
    %v931 = vmul.f32 %v685, %v846
    %v932 = vadd.f32 %v930, %v931
    %v933 = vtanh.pop %v932
    %v934 = vmul.f32 %v929, %v933
    %935 = vst.msk [vmem:[#allocation2] sm:$0xff] %vm220, %v934
    %s936 = scalar_lea.vmem [#allocation3], 8
    %v937 = vld [vmem:[%s936] sm:$0xff]
    %v938 = vld [vmem:[%s2] sm:$0xff]
    %v939 = vld [vmem:[%s2 + $0x8] sm:$0xff]
    %v940 = vld [vmem:[%s2 + $0x10] sm:$0xff]
    %v941 = vld [vmem:[%s2 + $0x18] sm:$0xff]
    %v943 = vsel %vm220, %v934, 0
    %945 = vmatprep.subr.mxu0 0.0
    %946 = vmatpush1.msra.mxu0 0.0
    %947 = vmatprep.subr.mxu0 0.0
    %948 = vmatpush1.msra.mxu0 0.0
    %949 = vmatprep.subr.mxu0 0.0
    %950 = vmatpush1.msra.mxu0 0.0
    %951 = vmatprep.subr.mxu0 0.0
    %952 = vmatpush1.msra.mxu0 0.0
    %953 = vmatprep.subr.mxu0 0.0
    %954 = vmatpush1.msra.mxu0 0.0
    %955 = vmatprep.subr.mxu0 0.0
    %956 = vmatpush1.msra.mxu0 0.0
    %957 = vmatprep.subr.mxu0 0.0
    %958 = vmatpush1.msra.mxu0 0.0
    %959 = vmatprep.subr.mxu0 0.0
    %960 = vmatpush1.msra.mxu0 0.0
    %961 = vmatprep.subr.mxu0 0.0
    %962 = vmatpush1.msra.mxu0 0.0
    %963 = vmatprep.subr.mxu0 0.0
    %964 = vmatpush1.msra.mxu0 0.0
    %965 = vmatprep.subr.mxu0 0.0
    %966 = vmatpush1.msra.mxu0 0.0
    %967 = vmatprep.subr.mxu0 0.0
    %968 = vmatpush1.msra.mxu0 0.0
    %969 = vmatprep.subr.mxu0 0.0
    %970 = vmatpush1.msra.mxu0 %v941
    %971 = vmatprep.subr.mxu0 0.0
    %972 = vmatpush1.msra.mxu0 %v940
    %973 = vmatprep.subr.mxu0 0.0
    %974 = vmatpush1.msra.mxu0 %v939
    %975 = vmatprep.subr.mxu0 0.0
    %976 = vmatpush1.msra.mxu0 %v938
    %977 = vmatprep.subr.mxu0 0.0
    %978 = vmatpush2.msra.mxu0 0.0
    %979 = vmatprep.subr.mxu0 0.0
    %980 = vmatpush2.msra.mxu0 0.0
    %981 = vmatprep.subr.mxu0 0.0
    %982 = vmatpush2.msra.mxu0 0.0
    %983 = vmatprep.subr.mxu0 0.0
    %984 = vmatpush2.msra.mxu0 0.0
    %985 = vmatprep.subr.mxu0 0.0
    %986 = vmatpush2.msra.mxu0 0.0
    %987 = vmatprep.subr.mxu0 0.0
    %988 = vmatpush2.msra.mxu0 0.0
    %989 = vmatprep.subr.mxu0 0.0
    %990 = vmatpush2.msra.mxu0 0.0
    %991 = vmatprep.subr.mxu0 0.0
    %992 = vmatpush2.msra.mxu0 0.0
    %993 = vmatprep.subr.mxu0 0.0
    %994 = vmatpush2.msra.mxu0 0.0
    %995 = vmatprep.subr.mxu0 0.0
    %996 = vmatpush2.msra.mxu0 0.0
    %997 = vmatprep.subr.mxu0 0.0
    %998 = vmatpush2.msra.mxu0 0.0
    %999 = vmatprep.subr.mxu0 0.0
    %1000 = vmatpush2.msra.mxu0 0.0
    %1001 = vmatprep.subr.mxu0 0.0
    %1002 = vmatpush2.msra.mxu0 0.0
    %1003 = vmatprep.subr.mxu0 0.0
    %1004 = vmatpush2.msra.mxu0 0.0
    %1005 = vmatprep.subr.mxu0 0.0
    %1006 = vmatpush2.msra.mxu0 0.0
    %1007 = vmatprep.subr.mxu0 0.0
    %1008 = vmatpush2.msra.mxu0 0.0
    %1009 = vmatprep.mubr.f32.mxu0 0.0
    %1010 = vmatmul.mubr.f32.gmra.mxu0 %v943
    %v1011 = vpop.f32.mrf.mxu0
    %v1012 = vadd.f32 0.0, %v1011
    %v1013 = vpop.f32.mrf.mxu0
    %1014 = vdwg.mxu0
    %v1015 = vadd.f32 %v937, %v1012
    %v1016 = vxor.u32 %v1015, 2147483648
    %v1017 = vmul.f32 %v1016, 1.442695
    %v1018 = vpow.pop %v1017
    %v1019 = vadd.f32 %v1018, 1.0
    %v1020 = vrcp.pop %v1019
    %v1021 = vmul.f32 1.0, %v1020
    %s1022 = scalar_lea.vmem [#allocation4], 8
    %v1023 = vld [vmem:[%s1022] sm:$0xff]
    %v1024 = vld [vmem:[%s687] sm:$0xff]
    %v1025 = vld [vmem:[%s687 + $0x8] sm:$0xff]
    %v1026 = vld [vmem:[%s687 + $0x10] sm:$0xff]
    %v1027 = vld [vmem:[%s687 + $0x18] sm:$0xff]
    %1028 = vmatprep.subr.mxu0 0.0
    %1029 = vmatpush1.msra.mxu0 0.0
    %1030 = vmatprep.subr.mxu0 0.0
    %1031 = vmatpush1.msra.mxu0 0.0
    %1032 = vmatprep.subr.mxu0 0.0
    %1033 = vmatpush1.msra.mxu0 0.0
    %1034 = vmatprep.subr.mxu0 0.0
    %1035 = vmatpush1.msra.mxu0 0.0
    %1036 = vmatprep.subr.mxu0 0.0
    %1037 = vmatpush1.msra.mxu0 0.0
    %1038 = vmatprep.subr.mxu0 0.0
    %1039 = vmatpush1.msra.mxu0 0.0
    %1040 = vmatprep.subr.mxu0 0.0
    %1041 = vmatpush1.msra.mxu0 0.0
    %1042 = vmatprep.subr.mxu0 0.0
    %1043 = vmatpush1.msra.mxu0 0.0
    %1044 = vmatprep.subr.mxu0 0.0
    %1045 = vmatpush1.msra.mxu0 0.0
    %1046 = vmatprep.subr.mxu0 0.0
    %1047 = vmatpush1.msra.mxu0 0.0
    %1048 = vmatprep.subr.mxu0 0.0
    %1049 = vmatpush1.msra.mxu0 0.0
    %1050 = vmatprep.subr.mxu0 0.0
    %1051 = vmatpush1.msra.mxu0 0.0
    %1052 = vmatprep.subr.mxu0 0.0
    %1053 = vmatpush1.msra.mxu0 %v1027
    %1054 = vmatprep.subr.mxu0 0.0
    %1055 = vmatpush1.msra.mxu0 %v1026
    %1056 = vmatprep.subr.mxu0 0.0
    %1057 = vmatpush1.msra.mxu0 %v1025
    %1058 = vmatprep.subr.mxu0 0.0
    %1059 = vmatpush1.msra.mxu0 %v1024
    %1060 = vmatprep.subr.mxu0 0.0
    %1061 = vmatpush2.msra.mxu0 0.0
    %1062 = vmatprep.subr.mxu0 0.0
    %1063 = vmatpush2.msra.mxu0 0.0
    %1064 = vmatprep.subr.mxu0 0.0
    %1065 = vmatpush2.msra.mxu0 0.0
    %1066 = vmatprep.subr.mxu0 0.0
    %1067 = vmatpush2.msra.mxu0 0.0
    %1068 = vmatprep.subr.mxu0 0.0
    %1069 = vmatpush2.msra.mxu0 0.0
    %1070 = vmatprep.subr.mxu0 0.0
    %1071 = vmatpush2.msra.mxu0 0.0
    %1072 = vmatprep.subr.mxu0 0.0
    %1073 = vmatpush2.msra.mxu0 0.0
    %1074 = vmatprep.subr.mxu0 0.0
    %1075 = vmatpush2.msra.mxu0 0.0
    %1076 = vmatprep.subr.mxu0 0.0
    %1077 = vmatpush2.msra.mxu0 0.0
    %1078 = vmatprep.subr.mxu0 0.0
    %1079 = vmatpush2.msra.mxu0 0.0
    %1080 = vmatprep.subr.mxu0 0.0
    %1081 = vmatpush2.msra.mxu0 0.0
    %1082 = vmatprep.subr.mxu0 0.0
    %1083 = vmatpush2.msra.mxu0 0.0
    %1084 = vmatprep.subr.mxu0 0.0
    %1085 = vmatpush2.msra.mxu0 0.0
    %1086 = vmatprep.subr.mxu0 0.0
    %1087 = vmatpush2.msra.mxu0 0.0
    %1088 = vmatprep.subr.mxu0 0.0
    %1089 = vmatpush2.msra.mxu0 0.0
    %1090 = vmatprep.subr.mxu0 0.0
    %1091 = vmatpush2.msra.mxu0 0.0
    %1092 = vmatprep.mubr.f32.mxu0 0.0
    %1093 = vmatmul.mubr.f32.gmra.mxu0 %v943
    %v1094 = vpop.f32.mrf.mxu0
    %v1095 = vadd.f32 0.0, %v1094
    %v1096 = vpop.f32.mrf.mxu0
    %1097 = vdwg.mxu0
    %v1098 = vadd.f32 %v1023, %v1095
    %v1099 = vxor.u32 %v1098, 2147483648
    %v1100 = vmul.f32 %v1099, 1.442695
    %v1101 = vpow.pop %v1100
    %v1102 = vadd.f32 %v1101, 1.0
    %v1103 = vrcp.pop %v1102
    %v1104 = vmul.f32 1.0, %v1103
    %s1105 = scalar_lea.vmem [#allocation5], 8
    %v1106 = vld [vmem:[%s1105] sm:$0xff]
    %v1107 = vld [vmem:[%s770] sm:$0xff]
    %v1108 = vld [vmem:[%s770 + $0x8] sm:$0xff]
    %v1109 = vld [vmem:[%s770 + $0x10] sm:$0xff]
    %v1110 = vld [vmem:[%s770 + $0x18] sm:$0xff]
    %1111 = vmatprep.subr.mxu0 0.0
    %1112 = vmatpush1.msra.mxu0 0.0
    %1113 = vmatprep.subr.mxu0 0.0
    %1114 = vmatpush1.msra.mxu0 0.0
    %1115 = vmatprep.subr.mxu0 0.0
    %1116 = vmatpush1.msra.mxu0 0.0
    %1117 = vmatprep.subr.mxu0 0.0
    %1118 = vmatpush1.msra.mxu0 0.0
    %1119 = vmatprep.subr.mxu0 0.0
    %1120 = vmatpush1.msra.mxu0 0.0
    %1121 = vmatprep.subr.mxu0 0.0
    %1122 = vmatpush1.msra.mxu0 0.0
    %1123 = vmatprep.subr.mxu0 0.0
    %1124 = vmatpush1.msra.mxu0 0.0
    %1125 = vmatprep.subr.mxu0 0.0
    %1126 = vmatpush1.msra.mxu0 0.0
    %1127 = vmatprep.subr.mxu0 0.0
    %1128 = vmatpush1.msra.mxu0 0.0
    %1129 = vmatprep.subr.mxu0 0.0
    %1130 = vmatpush1.msra.mxu0 0.0
    %1131 = vmatprep.subr.mxu0 0.0
    %1132 = vmatpush1.msra.mxu0 0.0
    %1133 = vmatprep.subr.mxu0 0.0
    %1134 = vmatpush1.msra.mxu0 0.0
    %1135 = vmatprep.subr.mxu0 0.0
    %1136 = vmatpush1.msra.mxu0 %v1110
    %1137 = vmatprep.subr.mxu0 0.0
    %1138 = vmatpush1.msra.mxu0 %v1109
    %1139 = vmatprep.subr.mxu0 0.0
    %1140 = vmatpush1.msra.mxu0 %v1108
    %1141 = vmatprep.subr.mxu0 0.0
    %1142 = vmatpush1.msra.mxu0 %v1107
    %1143 = vmatprep.subr.mxu0 0.0
    %1144 = vmatpush2.msra.mxu0 0.0
    %1145 = vmatprep.subr.mxu0 0.0
    %1146 = vmatpush2.msra.mxu0 0.0
    %1147 = vmatprep.subr.mxu0 0.0
    %1148 = vmatpush2.msra.mxu0 0.0
    %1149 = vmatprep.subr.mxu0 0.0
    %1150 = vmatpush2.msra.mxu0 0.0
    %1151 = vmatprep.subr.mxu0 0.0
    %1152 = vmatpush2.msra.mxu0 0.0
    %1153 = vmatprep.subr.mxu0 0.0
    %1154 = vmatpush2.msra.mxu0 0.0
    %1155 = vmatprep.subr.mxu0 0.0
    %1156 = vmatpush2.msra.mxu0 0.0
    %1157 = vmatprep.subr.mxu0 0.0
    %1158 = vmatpush2.msra.mxu0 0.0
    %1159 = vmatprep.subr.mxu0 0.0
    %1160 = vmatpush2.msra.mxu0 0.0
    %1161 = vmatprep.subr.mxu0 0.0
    %1162 = vmatpush2.msra.mxu0 0.0
    %1163 = vmatprep.subr.mxu0 0.0
    %1164 = vmatpush2.msra.mxu0 0.0
    %1165 = vmatprep.subr.mxu0 0.0
    %1166 = vmatpush2.msra.mxu0 0.0
    %1167 = vmatprep.subr.mxu0 0.0
    %1168 = vmatpush2.msra.mxu0 0.0
    %1169 = vmatprep.subr.mxu0 0.0
    %1170 = vmatpush2.msra.mxu0 0.0
    %1171 = vmatprep.subr.mxu0 0.0
    %1172 = vmatpush2.msra.mxu0 0.0
    %1173 = vmatprep.subr.mxu0 0.0
    %1174 = vmatpush2.msra.mxu0 0.0
    %1175 = vmatprep.mubr.f32.mxu0 0.0
    %1176 = vmatmul.mubr.f32.gmra.mxu0 %v943
    %v1177 = vpop.f32.mrf.mxu0
    %v1178 = vadd.f32 0.0, %v1177
    %v1179 = vpop.f32.mrf.mxu0
    %1180 = vdwg.mxu0
    %v1181 = vadd.f32 %v1106, %v1178
    %v1182 = vtanh.pop %v1181
    %s1183 = scalar_lea.vmem [#allocation6], 8
    %v1184 = vld [vmem:[%s1183] sm:$0xff]
    %v1185 = vld [vmem:[%s848] sm:$0xff]
    %v1186 = vld [vmem:[%s848 + $0x8] sm:$0xff]
    %v1187 = vld [vmem:[%s848 + $0x10] sm:$0xff]
    %v1188 = vld [vmem:[%s848 + $0x18] sm:$0xff]
    %1189 = vmatprep.subr.mxu0 0.0
    %1190 = vmatpush1.msra.mxu0 0.0
    %1191 = vmatprep.subr.mxu0 0.0
    %1192 = vmatpush1.msra.mxu0 0.0
    %1193 = vmatprep.subr.mxu0 0.0
    %1194 = vmatpush1.msra.mxu0 0.0
    %1195 = vmatprep.subr.mxu0 0.0
    %1196 = vmatpush1.msra.mxu0 0.0
    %1197 = vmatprep.subr.mxu0 0.0
    %1198 = vmatpush1.msra.mxu0 0.0
    %1199 = vmatprep.subr.mxu0 0.0
    %1200 = vmatpush1.msra.mxu0 0.0
    %1201 = vmatprep.subr.mxu0 0.0
    %1202 = vmatpush1.msra.mxu0 0.0
    %1203 = vmatprep.subr.mxu0 0.0
    %1204 = vmatpush1.msra.mxu0 0.0
    %1205 = vmatprep.subr.mxu0 0.0
    %1206 = vmatpush1.msra.mxu0 0.0
    %1207 = vmatprep.subr.mxu0 0.0
    %1208 = vmatpush1.msra.mxu0 0.0
    %1209 = vmatprep.subr.mxu0 0.0
    %1210 = vmatpush1.msra.mxu0 0.0
    %1211 = vmatprep.subr.mxu0 0.0
    %1212 = vmatpush1.msra.mxu0 0.0
    %1213 = vmatprep.subr.mxu0 0.0
    %1214 = vmatpush1.msra.mxu0 %v1188
    %1215 = vmatprep.subr.mxu0 0.0
    %1216 = vmatpush1.msra.mxu0 %v1187
    %1217 = vmatprep.subr.mxu0 0.0
    %1218 = vmatpush1.msra.mxu0 %v1186
    %1219 = vmatprep.subr.mxu0 0.0
    %1220 = vmatpush1.msra.mxu0 %v1185
    %1221 = vmatprep.subr.mxu0 0.0
    %1222 = vmatpush2.msra.mxu0 0.0
    %1223 = vmatprep.subr.mxu0 0.0
    %1224 = vmatpush2.msra.mxu0 0.0
    %1225 = vmatprep.subr.mxu0 0.0
    %1226 = vmatpush2.msra.mxu0 0.0
    %1227 = vmatprep.subr.mxu0 0.0
    %1228 = vmatpush2.msra.mxu0 0.0
    %1229 = vmatprep.subr.mxu0 0.0
    %1230 = vmatpush2.msra.mxu0 0.0
    %1231 = vmatprep.subr.mxu0 0.0
    %1232 = vmatpush2.msra.mxu0 0.0
    %1233 = vmatprep.subr.mxu0 0.0
    %1234 = vmatpush2.msra.mxu0 0.0
    %1235 = vmatprep.subr.mxu0 0.0
    %1236 = vmatpush2.msra.mxu0 0.0
    %1237 = vmatprep.subr.mxu0 0.0
    %1238 = vmatpush2.msra.mxu0 0.0
    %1239 = vmatprep.subr.mxu0 0.0
    %1240 = vmatpush2.msra.mxu0 0.0
    %1241 = vmatprep.subr.mxu0 0.0
    %1242 = vmatpush2.msra.mxu0 0.0
    %1243 = vmatprep.subr.mxu0 0.0
    %1244 = vmatpush2.msra.mxu0 0.0
    %1245 = vmatprep.subr.mxu0 0.0
    %1246 = vmatpush2.msra.mxu0 0.0
    %1247 = vmatprep.subr.mxu0 0.0
    %1248 = vmatpush2.msra.mxu0 0.0
    %1249 = vmatprep.subr.mxu0 0.0
    %1250 = vmatpush2.msra.mxu0 0.0
    %1251 = vmatprep.subr.mxu0 0.0
    %1252 = vmatpush2.msra.mxu0 0.0
    %1253 = vmatprep.mubr.f32.mxu0 0.0
    %1254 = vmatmul.mubr.f32.gmra.mxu0 %v943
    %v1255 = vpop.f32.mrf.mxu0
    %v1256 = vadd.f32 0.0, %v1255
    %v1257 = vpop.f32.mrf.mxu0
    %1258 = vdwg.mxu0
    %v1259 = vadd.f32 %v1184, %v1256
    %v1260 = vxor.u32 %v1259, 2147483648
    %v1261 = vmul.f32 %v1260, 1.442695
    %v1262 = vpow.pop %v1261
    %v1263 = vadd.f32 %v1262, 1.0
    %v1264 = vrcp.pop %v1263
    %v1265 = vmul.f32 1.0, %v1264
    %v1266 = vmul.f32 %v1104, %v932
    %v1267 = vmul.f32 %v1021, %v1182
    %v1268 = vadd.f32 %v1266, %v1267
    %v1269 = vtanh.pop %v1268
    %v1270 = vmul.f32 %v1265, %v1269
    %s1271 = scalar_lea.vmem [#allocation2], 8
    %1272 = vst.msk [vmem:[%s1271] sm:$0xff] %vm220, %v1270
    %s1273 = scalar_lea.vmem [#allocation3], 16
    %v1274 = vld [vmem:[%s1273] sm:$0xff]
    %v1275 = vld [vmem:[%s2] sm:$0xff]
    %v1276 = vld [vmem:[%s2 + $0x8] sm:$0xff]
    %v1277 = vld [vmem:[%s2 + $0x10] sm:$0xff]
    %v1278 = vld [vmem:[%s2 + $0x18] sm:$0xff]
    %v1280 = vsel %vm220, %v1270, 0
    %1282 = vmatprep.subr.mxu0 0.0
    %1283 = vmatpush1.msra.mxu0 0.0
    %1284 = vmatprep.subr.mxu0 0.0
    %1285 = vmatpush1.msra.mxu0 0.0
    %1286 = vmatprep.subr.mxu0 0.0
    %1287 = vmatpush1.msra.mxu0 0.0
    %1288 = vmatprep.subr.mxu0 0.0
    %1289 = vmatpush1.msra.mxu0 0.0
    %1290 = vmatprep.subr.mxu0 0.0
    %1291 = vmatpush1.msra.mxu0 0.0
    %1292 = vmatprep.subr.mxu0 0.0
    %1293 = vmatpush1.msra.mxu0 0.0
    %1294 = vmatprep.subr.mxu0 0.0
    %1295 = vmatpush1.msra.mxu0 0.0
    %1296 = vmatprep.subr.mxu0 0.0
    %1297 = vmatpush1.msra.mxu0 0.0
    %1298 = vmatprep.subr.mxu0 0.0
    %1299 = vmatpush1.msra.mxu0 0.0
    %1300 = vmatprep.subr.mxu0 0.0
    %1301 = vmatpush1.msra.mxu0 0.0
    %1302 = vmatprep.subr.mxu0 0.0
    %1303 = vmatpush1.msra.mxu0 0.0
    %1304 = vmatprep.subr.mxu0 0.0
    %1305 = vmatpush1.msra.mxu0 0.0
    %1306 = vmatprep.subr.mxu0 0.0
    %1307 = vmatpush1.msra.mxu0 %v1278
    %1308 = vmatprep.subr.mxu0 0.0
    %1309 = vmatpush1.msra.mxu0 %v1277
    %1310 = vmatprep.subr.mxu0 0.0
    %1311 = vmatpush1.msra.mxu0 %v1276
    %1312 = vmatprep.subr.mxu0 0.0
    %1313 = vmatpush1.msra.mxu0 %v1275
    %1314 = vmatprep.subr.mxu0 0.0
    %1315 = vmatpush2.msra.mxu0 0.0
    %1316 = vmatprep.subr.mxu0 0.0
    %1317 = vmatpush2.msra.mxu0 0.0
    %1318 = vmatprep.subr.mxu0 0.0
    %1319 = vmatpush2.msra.mxu0 0.0
    %1320 = vmatprep.subr.mxu0 0.0
    %1321 = vmatpush2.msra.mxu0 0.0
    %1322 = vmatprep.subr.mxu0 0.0
    %1323 = vmatpush2.msra.mxu0 0.0
    %1324 = vmatprep.subr.mxu0 0.0
    %1325 = vmatpush2.msra.mxu0 0.0
    %1326 = vmatprep.subr.mxu0 0.0
    %1327 = vmatpush2.msra.mxu0 0.0
    %1328 = vmatprep.subr.mxu0 0.0
    %1329 = vmatpush2.msra.mxu0 0.0
    %1330 = vmatprep.subr.mxu0 0.0
    %1331 = vmatpush2.msra.mxu0 0.0
    %1332 = vmatprep.subr.mxu0 0.0
    %1333 = vmatpush2.msra.mxu0 0.0
    %1334 = vmatprep.subr.mxu0 0.0
    %1335 = vmatpush2.msra.mxu0 0.0
    %1336 = vmatprep.subr.mxu0 0.0
    %1337 = vmatpush2.msra.mxu0 0.0
    %1338 = vmatprep.subr.mxu0 0.0
    %1339 = vmatpush2.msra.mxu0 0.0
    %1340 = vmatprep.subr.mxu0 0.0
    %1341 = vmatpush2.msra.mxu0 0.0
    %1342 = vmatprep.subr.mxu0 0.0
    %1343 = vmatpush2.msra.mxu0 0.0
    %1344 = vmatprep.subr.mxu0 0.0
    %1345 = vmatpush2.msra.mxu0 0.0
    %1346 = vmatprep.mubr.f32.mxu0 0.0
    %1347 = vmatmul.mubr.f32.gmra.mxu0 %v1280
    %v1348 = vpop.f32.mrf.mxu0
    %v1349 = vadd.f32 0.0, %v1348
    %v1350 = vpop.f32.mrf.mxu0
    %1351 = vdwg.mxu0
    %v1352 = vadd.f32 %v1274, %v1349
    %v1353 = vxor.u32 %v1352, 2147483648
    %v1354 = vmul.f32 %v1353, 1.442695
    %v1355 = vpow.pop %v1354
    %v1356 = vadd.f32 %v1355, 1.0
    %v1357 = vrcp.pop %v1356
    %v1358 = vmul.f32 1.0, %v1357
    %s1359 = scalar_lea.vmem [#allocation4], 16
    %v1360 = vld [vmem:[%s1359] sm:$0xff]
    %v1361 = vld [vmem:[%s687] sm:$0xff]
    %v1362 = vld [vmem:[%s687 + $0x8] sm:$0xff]
    %v1363 = vld [vmem:[%s687 + $0x10] sm:$0xff]
    %v1364 = vld [vmem:[%s687 + $0x18] sm:$0xff]
    %1365 = vmatprep.subr.mxu0 0.0
    %1366 = vmatpush1.msra.mxu0 0.0
    %1367 = vmatprep.subr.mxu0 0.0
    %1368 = vmatpush1.msra.mxu0 0.0
    %1369 = vmatprep.subr.mxu0 0.0
    %1370 = vmatpush1.msra.mxu0 0.0
    %1371 = vmatprep.subr.mxu0 0.0
    %1372 = vmatpush1.msra.mxu0 0.0
    %1373 = vmatprep.subr.mxu0 0.0
    %1374 = vmatpush1.msra.mxu0 0.0
    %1375 = vmatprep.subr.mxu0 0.0
    %1376 = vmatpush1.msra.mxu0 0.0
    %1377 = vmatprep.subr.mxu0 0.0
    %1378 = vmatpush1.msra.mxu0 0.0
    %1379 = vmatprep.subr.mxu0 0.0
    %1380 = vmatpush1.msra.mxu0 0.0
    %1381 = vmatprep.subr.mxu0 0.0
    %1382 = vmatpush1.msra.mxu0 0.0
    %1383 = vmatprep.subr.mxu0 0.0
    %1384 = vmatpush1.msra.mxu0 0.0
    %1385 = vmatprep.subr.mxu0 0.0
    %1386 = vmatpush1.msra.mxu0 0.0
    %1387 = vmatprep.subr.mxu0 0.0
    %1388 = vmatpush1.msra.mxu0 0.0
    %1389 = vmatprep.subr.mxu0 0.0
    %1390 = vmatpush1.msra.mxu0 %v1364
    %1391 = vmatprep.subr.mxu0 0.0
    %1392 = vmatpush1.msra.mxu0 %v1363
    %1393 = vmatprep.subr.mxu0 0.0
    %1394 = vmatpush1.msra.mxu0 %v1362
    %1395 = vmatprep.subr.mxu0 0.0
    %1396 = vmatpush1.msra.mxu0 %v1361
    %1397 = vmatprep.subr.mxu0 0.0
    %1398 = vmatpush2.msra.mxu0 0.0
    %1399 = vmatprep.subr.mxu0 0.0
    %1400 = vmatpush2.msra.mxu0 0.0
    %1401 = vmatprep.subr.mxu0 0.0
    %1402 = vmatpush2.msra.mxu0 0.0
    %1403 = vmatprep.subr.mxu0 0.0
    %1404 = vmatpush2.msra.mxu0 0.0
    %1405 = vmatprep.subr.mxu0 0.0
    %1406 = vmatpush2.msra.mxu0 0.0
    %1407 = vmatprep.subr.mxu0 0.0
    %1408 = vmatpush2.msra.mxu0 0.0
    %1409 = vmatprep.subr.mxu0 0.0
    %1410 = vmatpush2.msra.mxu0 0.0
    %1411 = vmatprep.subr.mxu0 0.0
    %1412 = vmatpush2.msra.mxu0 0.0
    %1413 = vmatprep.subr.mxu0 0.0
    %1414 = vmatpush2.msra.mxu0 0.0
    %1415 = vmatprep.subr.mxu0 0.0
    %1416 = vmatpush2.msra.mxu0 0.0
    %1417 = vmatprep.subr.mxu0 0.0
    %1418 = vmatpush2.msra.mxu0 0.0
    %1419 = vmatprep.subr.mxu0 0.0
    %1420 = vmatpush2.msra.mxu0 0.0
    %1421 = vmatprep.subr.mxu0 0.0
    %1422 = vmatpush2.msra.mxu0 0.0
    %1423 = vmatprep.subr.mxu0 0.0
    %1424 = vmatpush2.msra.mxu0 0.0
    %1425 = vmatprep.subr.mxu0 0.0
    %1426 = vmatpush2.msra.mxu0 0.0
    %1427 = vmatprep.subr.mxu0 0.0
    %1428 = vmatpush2.msra.mxu0 0.0
    %1429 = vmatprep.mubr.f32.mxu0 0.0
    %1430 = vmatmul.mubr.f32.gmra.mxu0 %v1280
    %v1431 = vpop.f32.mrf.mxu0
    %v1432 = vadd.f32 0.0, %v1431
    %v1433 = vpop.f32.mrf.mxu0
    %1434 = vdwg.mxu0
    %v1435 = vadd.f32 %v1360, %v1432
    %v1436 = vxor.u32 %v1435, 2147483648
    %v1437 = vmul.f32 %v1436, 1.442695
    %v1438 = vpow.pop %v1437
    %v1439 = vadd.f32 %v1438, 1.0
    %v1440 = vrcp.pop %v1439
    %v1441 = vmul.f32 1.0, %v1440
    %s1442 = scalar_lea.vmem [#allocation5], 16
    %v1443 = vld [vmem:[%s1442] sm:$0xff]
    %v1444 = vld [vmem:[%s770] sm:$0xff]
    %v1445 = vld [vmem:[%s770 + $0x8] sm:$0xff]
    %v1446 = vld [vmem:[%s770 + $0x10] sm:$0xff]
    %v1447 = vld [vmem:[%s770 + $0x18] sm:$0xff]
    %1448 = vmatprep.subr.mxu0 0.0
    %1449 = vmatpush1.msra.mxu0 0.0
    %1450 = vmatprep.subr.mxu0 0.0
    %1451 = vmatpush1.msra.mxu0 0.0
    %1452 = vmatprep.subr.mxu0 0.0
    %1453 = vmatpush1.msra.mxu0 0.0
    %1454 = vmatprep.subr.mxu0 0.0
    %1455 = vmatpush1.msra.mxu0 0.0
    %1456 = vmatprep.subr.mxu0 0.0
    %1457 = vmatpush1.msra.mxu0 0.0
    %1458 = vmatprep.subr.mxu0 0.0
    %1459 = vmatpush1.msra.mxu0 0.0
    %1460 = vmatprep.subr.mxu0 0.0
    %1461 = vmatpush1.msra.mxu0 0.0
    %1462 = vmatprep.subr.mxu0 0.0
    %1463 = vmatpush1.msra.mxu0 0.0
    %1464 = vmatprep.subr.mxu0 0.0
    %1465 = vmatpush1.msra.mxu0 0.0
    %1466 = vmatprep.subr.mxu0 0.0
    %1467 = vmatpush1.msra.mxu0 0.0
    %1468 = vmatprep.subr.mxu0 0.0
    %1469 = vmatpush1.msra.mxu0 0.0
    %1470 = vmatprep.subr.mxu0 0.0
    %1471 = vmatpush1.msra.mxu0 0.0
    %1472 = vmatprep.subr.mxu0 0.0
    %1473 = vmatpush1.msra.mxu0 %v1447
    %1474 = vmatprep.subr.mxu0 0.0
    %1475 = vmatpush1.msra.mxu0 %v1446
    %1476 = vmatprep.subr.mxu0 0.0
    %1477 = vmatpush1.msra.mxu0 %v1445
    %1478 = vmatprep.subr.mxu0 0.0
    %1479 = vmatpush1.msra.mxu0 %v1444
    %1480 = vmatprep.subr.mxu0 0.0
    %1481 = vmatpush2.msra.mxu0 0.0
    %1482 = vmatprep.subr.mxu0 0.0
    %1483 = vmatpush2.msra.mxu0 0.0
    %1484 = vmatprep.subr.mxu0 0.0
    %1485 = vmatpush2.msra.mxu0 0.0
    %1486 = vmatprep.subr.mxu0 0.0
    %1487 = vmatpush2.msra.mxu0 0.0
    %1488 = vmatprep.subr.mxu0 0.0
    %1489 = vmatpush2.msra.mxu0 0.0
    %1490 = vmatprep.subr.mxu0 0.0
    %1491 = vmatpush2.msra.mxu0 0.0
    %1492 = vmatprep.subr.mxu0 0.0
    %1493 = vmatpush2.msra.mxu0 0.0
    %1494 = vmatprep.subr.mxu0 0.0
    %1495 = vmatpush2.msra.mxu0 0.0
    %1496 = vmatprep.subr.mxu0 0.0
    %1497 = vmatpush2.msra.mxu0 0.0
    %1498 = vmatprep.subr.mxu0 0.0
    %1499 = vmatpush2.msra.mxu0 0.0
    %1500 = vmatprep.subr.mxu0 0.0
    %1501 = vmatpush2.msra.mxu0 0.0
    %1502 = vmatprep.subr.mxu0 0.0
    %1503 = vmatpush2.msra.mxu0 0.0
    %1504 = vmatprep.subr.mxu0 0.0
    %1505 = vmatpush2.msra.mxu0 0.0
    %1506 = vmatprep.subr.mxu0 0.0
    %1507 = vmatpush2.msra.mxu0 0.0
    %1508 = vmatprep.subr.mxu0 0.0
    %1509 = vmatpush2.msra.mxu0 0.0
    %1510 = vmatprep.subr.mxu0 0.0
    %1511 = vmatpush2.msra.mxu0 0.0
    %1512 = vmatprep.mubr.f32.mxu0 0.0
    %1513 = vmatmul.mubr.f32.gmra.mxu0 %v1280
    %v1514 = vpop.f32.mrf.mxu0
    %v1515 = vadd.f32 0.0, %v1514
    %v1516 = vpop.f32.mrf.mxu0
    %1517 = vdwg.mxu0
    %v1518 = vadd.f32 %v1443, %v1515
    %v1519 = vtanh.pop %v1518
    %s1520 = scalar_lea.vmem [#allocation6], 16
    %v1521 = vld [vmem:[%s1520] sm:$0xff]
    %v1522 = vld [vmem:[%s848] sm:$0xff]
    %v1523 = vld [vmem:[%s848 + $0x8] sm:$0xff]
    %v1524 = vld [vmem:[%s848 + $0x10] sm:$0xff]
    %v1525 = vld [vmem:[%s848 + $0x18] sm:$0xff]
    %1526 = vmatprep.subr.mxu0 0.0
    %1527 = vmatpush1.msra.mxu0 0.0
    %1528 = vmatprep.subr.mxu0 0.0
    %1529 = vmatpush1.msra.mxu0 0.0
    %1530 = vmatprep.subr.mxu0 0.0
    %1531 = vmatpush1.msra.mxu0 0.0
    %1532 = vmatprep.subr.mxu0 0.0
    %1533 = vmatpush1.msra.mxu0 0.0
    %1534 = vmatprep.subr.mxu0 0.0
    %1535 = vmatpush1.msra.mxu0 0.0
    %1536 = vmatprep.subr.mxu0 0.0
    %1537 = vmatpush1.msra.mxu0 0.0
    %1538 = vmatprep.subr.mxu0 0.0
    %1539 = vmatpush1.msra.mxu0 0.0
    %1540 = vmatprep.subr.mxu0 0.0
    %1541 = vmatpush1.msra.mxu0 0.0
    %1542 = vmatprep.subr.mxu0 0.0
    %1543 = vmatpush1.msra.mxu0 0.0
    %1544 = vmatprep.subr.mxu0 0.0
    %1545 = vmatpush1.msra.mxu0 0.0
    %1546 = vmatprep.subr.mxu0 0.0
    %1547 = vmatpush1.msra.mxu0 0.0
    %1548 = vmatprep.subr.mxu0 0.0
    %1549 = vmatpush1.msra.mxu0 0.0
    %1550 = vmatprep.subr.mxu0 0.0
    %1551 = vmatpush1.msra.mxu0 %v1525
    %1552 = vmatprep.subr.mxu0 0.0
    %1553 = vmatpush1.msra.mxu0 %v1524
    %1554 = vmatprep.subr.mxu0 0.0
    %1555 = vmatpush1.msra.mxu0 %v1523
    %1556 = vmatprep.subr.mxu0 0.0
    %1557 = vmatpush1.msra.mxu0 %v1522
    %1558 = vmatprep.subr.mxu0 0.0
    %1559 = vmatpush2.msra.mxu0 0.0
    %1560 = vmatprep.subr.mxu0 0.0
    %1561 = vmatpush2.msra.mxu0 0.0
    %1562 = vmatprep.subr.mxu0 0.0
    %1563 = vmatpush2.msra.mxu0 0.0
    %1564 = vmatprep.subr.mxu0 0.0
    %1565 = vmatpush2.msra.mxu0 0.0
    %1566 = vmatprep.subr.mxu0 0.0
    %1567 = vmatpush2.msra.mxu0 0.0
    %1568 = vmatprep.subr.mxu0 0.0
    %1569 = vmatpush2.msra.mxu0 0.0
    %1570 = vmatprep.subr.mxu0 0.0
    %1571 = vmatpush2.msra.mxu0 0.0
    %1572 = vmatprep.subr.mxu0 0.0
    %1573 = vmatpush2.msra.mxu0 0.0
    %1574 = vmatprep.subr.mxu0 0.0
    %1575 = vmatpush2.msra.mxu0 0.0
    %1576 = vmatprep.subr.mxu0 0.0
    %1577 = vmatpush2.msra.mxu0 0.0
    %1578 = vmatprep.subr.mxu0 0.0
    %1579 = vmatpush2.msra.mxu0 0.0
    %1580 = vmatprep.subr.mxu0 0.0
    %1581 = vmatpush2.msra.mxu0 0.0
    %1582 = vmatprep.subr.mxu0 0.0
    %1583 = vmatpush2.msra.mxu0 0.0
    %1584 = vmatprep.subr.mxu0 0.0
    %1585 = vmatpush2.msra.mxu0 0.0
    %1586 = vmatprep.subr.mxu0 0.0
    %1587 = vmatpush2.msra.mxu0 0.0
    %1588 = vmatprep.subr.mxu0 0.0
    %1589 = vmatpush2.msra.mxu0 0.0
    %1590 = vmatprep.mubr.f32.mxu0 0.0
    %1591 = vmatmul.mubr.f32.gmra.mxu0 %v1280
    %v1592 = vpop.f32.mrf.mxu0
    %v1593 = vadd.f32 0.0, %v1592
    %v1594 = vpop.f32.mrf.mxu0
    %1595 = vdwg.mxu0
    %v1596 = vadd.f32 %v1521, %v1593
    %v1597 = vxor.u32 %v1596, 2147483648
    %v1598 = vmul.f32 %v1597, 1.442695
    %v1599 = vpow.pop %v1598
    %v1600 = vadd.f32 %v1599, 1.0
    %v1601 = vrcp.pop %v1600
    %v1602 = vmul.f32 1.0, %v1601
    %v1603 = vmul.f32 %v1441, %v1268
    %v1604 = vmul.f32 %v1358, %v1519
    %v1605 = vadd.f32 %v1603, %v1604
    %v1606 = vtanh.pop %v1605
    %v1607 = vmul.f32 %v1602, %v1606
    %s1608 = scalar_lea.vmem [#allocation2], 16
    %1609 = vst.msk [vmem:[%s1608] sm:$0xff] %vm220, %v1607
    %s1610 = scalar_lea.vmem [#allocation3], 24
    %v1611 = vld [vmem:[%s1610] sm:$0xff]
    %v1612 = vld [vmem:[%s2] sm:$0xff]
    %v1613 = vld [vmem:[%s2 + $0x8] sm:$0xff]
    %v1614 = vld [vmem:[%s2 + $0x10] sm:$0xff]
    %v1615 = vld [vmem:[%s2 + $0x18] sm:$0xff]
    %v1617 = vsel %vm220, %v1607, 0
    %1619 = vmatprep.subr.mxu0 0.0
    %1620 = vmatpush1.msra.mxu0 0.0
    %1621 = vmatprep.subr.mxu0 0.0
    %1622 = vmatpush1.msra.mxu0 0.0
    %1623 = vmatprep.subr.mxu0 0.0
    %1624 = vmatpush1.msra.mxu0 0.0
    %1625 = vmatprep.subr.mxu0 0.0
    %1626 = vmatpush1.msra.mxu0 0.0
    %1627 = vmatprep.subr.mxu0 0.0
    %1628 = vmatpush1.msra.mxu0 0.0
    %1629 = vmatprep.subr.mxu0 0.0
    %1630 = vmatpush1.msra.mxu0 0.0
    %1631 = vmatprep.subr.mxu0 0.0
    %1632 = vmatpush1.msra.mxu0 0.0
    %1633 = vmatprep.subr.mxu0 0.0
    %1634 = vmatpush1.msra.mxu0 0.0
    %1635 = vmatprep.subr.mxu0 0.0
    %1636 = vmatpush1.msra.mxu0 0.0
    %1637 = vmatprep.subr.mxu0 0.0
    %1638 = vmatpush1.msra.mxu0 0.0
    %1639 = vmatprep.subr.mxu0 0.0
    %1640 = vmatpush1.msra.mxu0 0.0
    %1641 = vmatprep.subr.mxu0 0.0
    %1642 = vmatpush1.msra.mxu0 0.0
    %1643 = vmatprep.subr.mxu0 0.0
    %1644 = vmatpush1.msra.mxu0 %v1615
    %1645 = vmatprep.subr.mxu0 0.0
    %1646 = vmatpush1.msra.mxu0 %v1614
    %1647 = vmatprep.subr.mxu0 0.0
    %1648 = vmatpush1.msra.mxu0 %v1613
    %1649 = vmatprep.subr.mxu0 0.0
    %1650 = vmatpush1.msra.mxu0 %v1612
    %1651 = vmatprep.subr.mxu0 0.0
    %1652 = vmatpush2.msra.mxu0 0.0
    %1653 = vmatprep.subr.mxu0 0.0
    %1654 = vmatpush2.msra.mxu0 0.0
    %1655 = vmatprep.subr.mxu0 0.0
    %1656 = vmatpush2.msra.mxu0 0.0
    %1657 = vmatprep.subr.mxu0 0.0
    %1658 = vmatpush2.msra.mxu0 0.0
    %1659 = vmatprep.subr.mxu0 0.0
    %1660 = vmatpush2.msra.mxu0 0.0
    %1661 = vmatprep.subr.mxu0 0.0
    %1662 = vmatpush2.msra.mxu0 0.0
    %1663 = vmatprep.subr.mxu0 0.0
    %1664 = vmatpush2.msra.mxu0 0.0
    %1665 = vmatprep.subr.mxu0 0.0
    %1666 = vmatpush2.msra.mxu0 0.0
    %1667 = vmatprep.subr.mxu0 0.0
    %1668 = vmatpush2.msra.mxu0 0.0
    %1669 = vmatprep.subr.mxu0 0.0
    %1670 = vmatpush2.msra.mxu0 0.0
    %1671 = vmatprep.subr.mxu0 0.0
    %1672 = vmatpush2.msra.mxu0 0.0
    %1673 = vmatprep.subr.mxu0 0.0
    %1674 = vmatpush2.msra.mxu0 0.0
    %1675 = vmatprep.subr.mxu0 0.0
    %1676 = vmatpush2.msra.mxu0 0.0
    %1677 = vmatprep.subr.mxu0 0.0
    %1678 = vmatpush2.msra.mxu0 0.0
    %1679 = vmatprep.subr.mxu0 0.0
    %1680 = vmatpush2.msra.mxu0 0.0
    %1681 = vmatprep.subr.mxu0 0.0
    %1682 = vmatpush2.msra.mxu0 0.0
    %1683 = vmatprep.mubr.f32.mxu0 0.0
    %1684 = vmatmul.mubr.f32.gmra.mxu0 %v1617
    %v1685 = vpop.f32.mrf.mxu0
    %v1686 = vadd.f32 0.0, %v1685
    %v1687 = vpop.f32.mrf.mxu0
    %1688 = vdwg.mxu0
    %v1689 = vadd.f32 %v1611, %v1686
    %v1690 = vxor.u32 %v1689, 2147483648
    %v1691 = vmul.f32 %v1690, 1.442695
    %v1692 = vpow.pop %v1691
    %v1693 = vadd.f32 %v1692, 1.0
    %v1694 = vrcp.pop %v1693
    %v1695 = vmul.f32 1.0, %v1694
    %s1696 = scalar_lea.vmem [#allocation4], 24
    %v1697 = vld [vmem:[%s1696] sm:$0xff]
    %v1698 = vld [vmem:[%s687] sm:$0xff]
    %v1699 = vld [vmem:[%s687 + $0x8] sm:$0xff]
    %v1700 = vld [vmem:[%s687 + $0x10] sm:$0xff]
    %v1701 = vld [vmem:[%s687 + $0x18] sm:$0xff]
    %1702 = vmatprep.subr.mxu0 0.0
    %1703 = vmatpush1.msra.mxu0 0.0
    %1704 = vmatprep.subr.mxu0 0.0
    %1705 = vmatpush1.msra.mxu0 0.0
    %1706 = vmatprep.subr.mxu0 0.0
    %1707 = vmatpush1.msra.mxu0 0.0
    %1708 = vmatprep.subr.mxu0 0.0
    %1709 = vmatpush1.msra.mxu0 0.0
    %1710 = vmatprep.subr.mxu0 0.0
    %1711 = vmatpush1.msra.mxu0 0.0
    %1712 = vmatprep.subr.mxu0 0.0
    %1713 = vmatpush1.msra.mxu0 0.0
    %1714 = vmatprep.subr.mxu0 0.0
    %1715 = vmatpush1.msra.mxu0 0.0
    %1716 = vmatprep.subr.mxu0 0.0
    %1717 = vmatpush1.msra.mxu0 0.0
    %1718 = vmatprep.subr.mxu0 0.0
    %1719 = vmatpush1.msra.mxu0 0.0
    %1720 = vmatprep.subr.mxu0 0.0
    %1721 = vmatpush1.msra.mxu0 0.0
    %1722 = vmatprep.subr.mxu0 0.0
    %1723 = vmatpush1.msra.mxu0 0.0
    %1724 = vmatprep.subr.mxu0 0.0
    %1725 = vmatpush1.msra.mxu0 0.0
    %1726 = vmatprep.subr.mxu0 0.0
    %1727 = vmatpush1.msra.mxu0 %v1701
    %1728 = vmatprep.subr.mxu0 0.0
    %1729 = vmatpush1.msra.mxu0 %v1700
    %1730 = vmatprep.subr.mxu0 0.0
    %1731 = vmatpush1.msra.mxu0 %v1699
    %1732 = vmatprep.subr.mxu0 0.0
    %1733 = vmatpush1.msra.mxu0 %v1698
    %1734 = vmatprep.subr.mxu0 0.0
    %1735 = vmatpush2.msra.mxu0 0.0
    %1736 = vmatprep.subr.mxu0 0.0
    %1737 = vmatpush2.msra.mxu0 0.0
    %1738 = vmatprep.subr.mxu0 0.0
    %1739 = vmatpush2.msra.mxu0 0.0
    %1740 = vmatprep.subr.mxu0 0.0
    %1741 = vmatpush2.msra.mxu0 0.0
    %1742 = vmatprep.subr.mxu0 0.0
    %1743 = vmatpush2.msra.mxu0 0.0
    %1744 = vmatprep.subr.mxu0 0.0
    %1745 = vmatpush2.msra.mxu0 0.0
    %1746 = vmatprep.subr.mxu0 0.0
    %1747 = vmatpush2.msra.mxu0 0.0
    %1748 = vmatprep.subr.mxu0 0.0
    %1749 = vmatpush2.msra.mxu0 0.0
    %1750 = vmatprep.subr.mxu0 0.0
    %1751 = vmatpush2.msra.mxu0 0.0
    %1752 = vmatprep.subr.mxu0 0.0
    %1753 = vmatpush2.msra.mxu0 0.0
    %1754 = vmatprep.subr.mxu0 0.0
    %1755 = vmatpush2.msra.mxu0 0.0
    %1756 = vmatprep.subr.mxu0 0.0
    %1757 = vmatpush2.msra.mxu0 0.0
    %1758 = vmatprep.subr.mxu0 0.0
    %1759 = vmatpush2.msra.mxu0 0.0
    %1760 = vmatprep.subr.mxu0 0.0
    %1761 = vmatpush2.msra.mxu0 0.0
    %1762 = vmatprep.subr.mxu0 0.0
    %1763 = vmatpush2.msra.mxu0 0.0
    %1764 = vmatprep.subr.mxu0 0.0
    %1765 = vmatpush2.msra.mxu0 0.0
    %1766 = vmatprep.mubr.f32.mxu0 0.0
    %1767 = vmatmul.mubr.f32.gmra.mxu0 %v1617
    %v1768 = vpop.f32.mrf.mxu0
    %v1769 = vadd.f32 0.0, %v1768
    %v1770 = vpop.f32.mrf.mxu0
    %1771 = vdwg.mxu0
    %v1772 = vadd.f32 %v1697, %v1769
    %v1773 = vxor.u32 %v1772, 2147483648
    %v1774 = vmul.f32 %v1773, 1.442695
    %v1775 = vpow.pop %v1774
    %v1776 = vadd.f32 %v1775, 1.0
    %v1777 = vrcp.pop %v1776
    %v1778 = vmul.f32 1.0, %v1777
    %s1779 = scalar_lea.vmem [#allocation5], 24
    %v1780 = vld [vmem:[%s1779] sm:$0xff]
    %v1781 = vld [vmem:[%s770] sm:$0xff]
    %v1782 = vld [vmem:[%s770 + $0x8] sm:$0xff]
    %v1783 = vld [vmem:[%s770 + $0x10] sm:$0xff]
    %v1784 = vld [vmem:[%s770 + $0x18] sm:$0xff]
    %1785 = vmatprep.subr.mxu0 0.0
    %1786 = vmatpush1.msra.mxu0 0.0
    %1787 = vmatprep.subr.mxu0 0.0
    %1788 = vmatpush1.msra.mxu0 0.0
    %1789 = vmatprep.subr.mxu0 0.0
    %1790 = vmatpush1.msra.mxu0 0.0
    %1791 = vmatprep.subr.mxu0 0.0
    %1792 = vmatpush1.msra.mxu0 0.0
    %1793 = vmatprep.subr.mxu0 0.0
    %1794 = vmatpush1.msra.mxu0 0.0
    %1795 = vmatprep.subr.mxu0 0.0
    %1796 = vmatpush1.msra.mxu0 0.0
    %1797 = vmatprep.subr.mxu0 0.0
    %1798 = vmatpush1.msra.mxu0 0.0
    %1799 = vmatprep.subr.mxu0 0.0
    %1800 = vmatpush1.msra.mxu0 0.0
    %1801 = vmatprep.subr.mxu0 0.0
    %1802 = vmatpush1.msra.mxu0 0.0
    %1803 = vmatprep.subr.mxu0 0.0
    %1804 = vmatpush1.msra.mxu0 0.0
    %1805 = vmatprep.subr.mxu0 0.0
    %1806 = vmatpush1.msra.mxu0 0.0
    %1807 = vmatprep.subr.mxu0 0.0
    %1808 = vmatpush1.msra.mxu0 0.0
    %1809 = vmatprep.subr.mxu0 0.0
    %1810 = vmatpush1.msra.mxu0 %v1784
    %1811 = vmatprep.subr.mxu0 0.0
    %1812 = vmatpush1.msra.mxu0 %v1783
    %1813 = vmatprep.subr.mxu0 0.0
    %1814 = vmatpush1.msra.mxu0 %v1782
    %1815 = vmatprep.subr.mxu0 0.0
    %1816 = vmatpush1.msra.mxu0 %v1781
    %1817 = vmatprep.subr.mxu0 0.0
    %1818 = vmatpush2.msra.mxu0 0.0
    %1819 = vmatprep.subr.mxu0 0.0
    %1820 = vmatpush2.msra.mxu0 0.0
    %1821 = vmatprep.subr.mxu0 0.0
    %1822 = vmatpush2.msra.mxu0 0.0
    %1823 = vmatprep.subr.mxu0 0.0
    %1824 = vmatpush2.msra.mxu0 0.0
    %1825 = vmatprep.subr.mxu0 0.0
    %1826 = vmatpush2.msra.mxu0 0.0
    %1827 = vmatprep.subr.mxu0 0.0
    %1828 = vmatpush2.msra.mxu0 0.0
    %1829 = vmatprep.subr.mxu0 0.0
    %1830 = vmatpush2.msra.mxu0 0.0
    %1831 = vmatprep.subr.mxu0 0.0
    %1832 = vmatpush2.msra.mxu0 0.0
    %1833 = vmatprep.subr.mxu0 0.0
    %1834 = vmatpush2.msra.mxu0 0.0
    %1835 = vmatprep.subr.mxu0 0.0
    %1836 = vmatpush2.msra.mxu0 0.0
    %1837 = vmatprep.subr.mxu0 0.0
    %1838 = vmatpush2.msra.mxu0 0.0
    %1839 = vmatprep.subr.mxu0 0.0
    %1840 = vmatpush2.msra.mxu0 0.0
    %1841 = vmatprep.subr.mxu0 0.0
    %1842 = vmatpush2.msra.mxu0 0.0
    %1843 = vmatprep.subr.mxu0 0.0
    %1844 = vmatpush2.msra.mxu0 0.0
    %1845 = vmatprep.subr.mxu0 0.0
    %1846 = vmatpush2.msra.mxu0 0.0
    %1847 = vmatprep.subr.mxu0 0.0
    %1848 = vmatpush2.msra.mxu0 0.0
    %1849 = vmatprep.mubr.f32.mxu0 0.0
    %1850 = vmatmul.mubr.f32.gmra.mxu0 %v1617
    %v1851 = vpop.f32.mrf.mxu0
    %v1852 = vadd.f32 0.0, %v1851
    %v1853 = vpop.f32.mrf.mxu0
    %1854 = vdwg.mxu0
    %v1855 = vadd.f32 %v1780, %v1852
    %v1856 = vtanh.pop %v1855
    %s1857 = scalar_lea.vmem [#allocation6], 24
    %v1858 = vld [vmem:[%s1857] sm:$0xff]
    %v1859 = vld [vmem:[%s848] sm:$0xff]
    %v1860 = vld [vmem:[%s848 + $0x8] sm:$0xff]
    %v1861 = vld [vmem:[%s848 + $0x10] sm:$0xff]
    %v1862 = vld [vmem:[%s848 + $0x18] sm:$0xff]
    %1863 = vmatprep.subr.mxu0 0.0
    %1864 = vmatpush1.msra.mxu0 0.0
    %1865 = vmatprep.subr.mxu0 0.0
    %1866 = vmatpush1.msra.mxu0 0.0
    %1867 = vmatprep.subr.mxu0 0.0
    %1868 = vmatpush1.msra.mxu0 0.0
    %1869 = vmatprep.subr.mxu0 0.0
    %1870 = vmatpush1.msra.mxu0 0.0
    %1871 = vmatprep.subr.mxu0 0.0
    %1872 = vmatpush1.msra.mxu0 0.0
    %1873 = vmatprep.subr.mxu0 0.0
    %1874 = vmatpush1.msra.mxu0 0.0
    %1875 = vmatprep.subr.mxu0 0.0
    %1876 = vmatpush1.msra.mxu0 0.0
    %1877 = vmatprep.subr.mxu0 0.0
    %1878 = vmatpush1.msra.mxu0 0.0
    %1879 = vmatprep.subr.mxu0 0.0
    %1880 = vmatpush1.msra.mxu0 0.0
    %1881 = vmatprep.subr.mxu0 0.0
    %1882 = vmatpush1.msra.mxu0 0.0
    %1883 = vmatprep.subr.mxu0 0.0
    %1884 = vmatpush1.msra.mxu0 0.0
    %1885 = vmatprep.subr.mxu0 0.0
    %1886 = vmatpush1.msra.mxu0 0.0
    %1887 = vmatprep.subr.mxu0 0.0
    %1888 = vmatpush1.msra.mxu0 %v1862
    %1889 = vmatprep.subr.mxu0 0.0
    %1890 = vmatpush1.msra.mxu0 %v1861
    %1891 = vmatprep.subr.mxu0 0.0
    %1892 = vmatpush1.msra.mxu0 %v1860
    %1893 = vmatprep.subr.mxu0 0.0
    %1894 = vmatpush1.msra.mxu0 %v1859
    %1895 = vmatprep.subr.mxu0 0.0
    %1896 = vmatpush2.msra.mxu0 0.0
    %1897 = vmatprep.subr.mxu0 0.0
    %1898 = vmatpush2.msra.mxu0 0.0
    %1899 = vmatprep.subr.mxu0 0.0
    %1900 = vmatpush2.msra.mxu0 0.0
    %1901 = vmatprep.subr.mxu0 0.0
    %1902 = vmatpush2.msra.mxu0 0.0
    %1903 = vmatprep.subr.mxu0 0.0
    %1904 = vmatpush2.msra.mxu0 0.0
    %1905 = vmatprep.subr.mxu0 0.0
    %1906 = vmatpush2.msra.mxu0 0.0
    %1907 = vmatprep.subr.mxu0 0.0
    %1908 = vmatpush2.msra.mxu0 0.0
    %1909 = vmatprep.subr.mxu0 0.0
    %1910 = vmatpush2.msra.mxu0 0.0
    %1911 = vmatprep.subr.mxu0 0.0
    %1912 = vmatpush2.msra.mxu0 0.0
    %1913 = vmatprep.subr.mxu0 0.0
    %1914 = vmatpush2.msra.mxu0 0.0
    %1915 = vmatprep.subr.mxu0 0.0
    %1916 = vmatpush2.msra.mxu0 0.0
    %1917 = vmatprep.subr.mxu0 0.0
    %1918 = vmatpush2.msra.mxu0 0.0
    %1919 = vmatprep.subr.mxu0 0.0
    %1920 = vmatpush2.msra.mxu0 0.0
    %1921 = vmatprep.subr.mxu0 0.0
    %1922 = vmatpush2.msra.mxu0 0.0
    %1923 = vmatprep.subr.mxu0 0.0
    %1924 = vmatpush2.msra.mxu0 0.0
    %1925 = vmatprep.subr.mxu0 0.0
    %1926 = vmatpush2.msra.mxu0 0.0
    %1927 = vmatprep.mubr.f32.mxu0 0.0
    %1928 = vmatmul.mubr.f32.gmra.mxu0 %v1617
    %v1929 = vpop.f32.mrf.mxu0
    %v1930 = vadd.f32 0.0, %v1929
    %v1931 = vpop.f32.mrf.mxu0
    %1932 = vdwg.mxu0
    %v1933 = vadd.f32 %v1858, %v1930
    %v1934 = vxor.u32 %v1933, 2147483648
    %v1935 = vmul.f32 %v1934, 1.442695
    %v1936 = vpow.pop %v1935
    %v1937 = vadd.f32 %v1936, 1.0
    %v1938 = vrcp.pop %v1937
    %v1939 = vmul.f32 1.0, %v1938
    %v1940 = vmul.f32 %v1778, %v1605
    %v1941 = vmul.f32 %v1695, %v1856
    %v1942 = vadd.f32 %v1940, %v1941
    %v1943 = vtanh.pop %v1942
    %v1944 = vmul.f32 %v1939, %v1943
    %s1945 = scalar_lea.vmem [#allocation2], 24
    %1946 = vst.msk [vmem:[%s1945] sm:$0xff] %vm220, %v1944
    %s1947 = scalar_lea.vmem [#allocation3], 32
    %v1948 = vld [vmem:[%s1947] sm:$0xff]
    %v1949 = vld [vmem:[%s2] sm:$0xff]
    %v1950 = vld [vmem:[%s2 + $0x8] sm:$0xff]
    %v1951 = vld [vmem:[%s2 + $0x10] sm:$0xff]
    %v1952 = vld [vmem:[%s2 + $0x18] sm:$0xff]
    %v1954 = vsel %vm220, %v1944, 0
    %1956 = vmatprep.subr.mxu0 0.0
    %1957 = vmatpush1.msra.mxu0 0.0
    %1958 = vmatprep.subr.mxu0 0.0
    %1959 = vmatpush1.msra.mxu0 0.0
    %1960 = vmatprep.subr.mxu0 0.0
    %1961 = vmatpush1.msra.mxu0 0.0
    %1962 = vmatprep.subr.mxu0 0.0
    %1963 = vmatpush1.msra.mxu0 0.0
    %1964 = vmatprep.subr.mxu0 0.0
    %1965 = vmatpush1.msra.mxu0 0.0
    %1966 = vmatprep.subr.mxu0 0.0
    %1967 = vmatpush1.msra.mxu0 0.0
    %1968 = vmatprep.subr.mxu0 0.0
    %1969 = vmatpush1.msra.mxu0 0.0
    %1970 = vmatprep.subr.mxu0 0.0
    %1971 = vmatpush1.msra.mxu0 0.0
    %1972 = vmatprep.subr.mxu0 0.0
    %1973 = vmatpush1.msra.mxu0 0.0
    %1974 = vmatprep.subr.mxu0 0.0
    %1975 = vmatpush1.msra.mxu0 0.0
    %1976 = vmatprep.subr.mxu0 0.0
    %1977 = vmatpush1.msra.mxu0 0.0
    %1978 = vmatprep.subr.mxu0 0.0
    %1979 = vmatpush1.msra.mxu0 0.0
    %1980 = vmatprep.subr.mxu0 0.0
    %1981 = vmatpush1.msra.mxu0 %v1952
    %1982 = vmatprep.subr.mxu0 0.0
    %1983 = vmatpush1.msra.mxu0 %v1951
    %1984 = vmatprep.subr.mxu0 0.0
    %1985 = vmatpush1.msra.mxu0 %v1950
    %1986 = vmatprep.subr.mxu0 0.0
    %1987 = vmatpush1.msra.mxu0 %v1949
    %1988 = vmatprep.subr.mxu0 0.0
    %1989 = vmatpush2.msra.mxu0 0.0
    %1990 = vmatprep.subr.mxu0 0.0
    %1991 = vmatpush2.msra.mxu0 0.0
    %1992 = vmatprep.subr.mxu0 0.0
    %1993 = vmatpush2.msra.mxu0 0.0
    %1994 = vmatprep.subr.mxu0 0.0
    %1995 = vmatpush2.msra.mxu0 0.0
    %1996 = vmatprep.subr.mxu0 0.0
    %1997 = vmatpush2.msra.mxu0 0.0
    %1998 = vmatprep.subr.mxu0 0.0
    %1999 = vmatpush2.msra.mxu0 0.0
    %2000 = vmatprep.subr.mxu0 0.0
    %2001 = vmatpush2.msra.mxu0 0.0
    %2002 = vmatprep.subr.mxu0 0.0
    %2003 = vmatpush2.msra.mxu0 0.0
    %2004 = vmatprep.subr.mxu0 0.0
    %2005 = vmatpush2.msra.mxu0 0.0
    %2006 = vmatprep.subr.mxu0 0.0
    %2007 = vmatpush2.msra.mxu0 0.0
    %2008 = vmatprep.subr.mxu0 0.0
    %2009 = vmatpush2.msra.mxu0 0.0
    %2010 = vmatprep.subr.mxu0 0.0
    %2011 = vmatpush2.msra.mxu0 0.0
    %2012 = vmatprep.subr.mxu0 0.0
    %2013 = vmatpush2.msra.mxu0 0.0
    %2014 = vmatprep.subr.mxu0 0.0
    %2015 = vmatpush2.msra.mxu0 0.0
    %2016 = vmatprep.subr.mxu0 0.0
    %2017 = vmatpush2.msra.mxu0 0.0
    %2018 = vmatprep.subr.mxu0 0.0
    %2019 = vmatpush2.msra.mxu0 0.0
    %2020 = vmatprep.mubr.f32.mxu0 0.0
    %2021 = vmatmul.mubr.f32.gmra.mxu0 %v1954
    %v2022 = vpop.f32.mrf.mxu0
    %v2023 = vadd.f32 0.0, %v2022
    %v2024 = vpop.f32.mrf.mxu0
    %2025 = vdwg.mxu0
    %v2026 = vadd.f32 %v1948, %v2023
    %v2027 = vxor.u32 %v2026, 2147483648
    %v2028 = vmul.f32 %v2027, 1.442695
    %v2029 = vpow.pop %v2028
    %v2030 = vadd.f32 %v2029, 1.0
    %v2031 = vrcp.pop %v2030
    %v2032 = vmul.f32 1.0, %v2031
    %s2033 = scalar_lea.vmem [#allocation4], 32
    %v2034 = vld [vmem:[%s2033] sm:$0xff]
    %v2035 = vld [vmem:[%s687] sm:$0xff]
    %v2036 = vld [vmem:[%s687 + $0x8] sm:$0xff]
    %v2037 = vld [vmem:[%s687 + $0x10] sm:$0xff]
    %v2038 = vld [vmem:[%s687 + $0x18] sm:$0xff]
    %2039 = vmatprep.subr.mxu0 0.0
    %2040 = vmatpush1.msra.mxu0 0.0
    %2041 = vmatprep.subr.mxu0 0.0
    %2042 = vmatpush1.msra.mxu0 0.0
    %2043 = vmatprep.subr.mxu0 0.0
    %2044 = vmatpush1.msra.mxu0 0.0
    %2045 = vmatprep.subr.mxu0 0.0
    %2046 = vmatpush1.msra.mxu0 0.0
    %2047 = vmatprep.subr.mxu0 0.0
    %2048 = vmatpush1.msra.mxu0 0.0
    %2049 = vmatprep.subr.mxu0 0.0
    %2050 = vmatpush1.msra.mxu0 0.0
    %2051 = vmatprep.subr.mxu0 0.0
    %2052 = vmatpush1.msra.mxu0 0.0
    %2053 = vmatprep.subr.mxu0 0.0
    %2054 = vmatpush1.msra.mxu0 0.0
    %2055 = vmatprep.subr.mxu0 0.0
    %2056 = vmatpush1.msra.mxu0 0.0
    %2057 = vmatprep.subr.mxu0 0.0
    %2058 = vmatpush1.msra.mxu0 0.0
    %2059 = vmatprep.subr.mxu0 0.0
    %2060 = vmatpush1.msra.mxu0 0.0
    %2061 = vmatprep.subr.mxu0 0.0
    %2062 = vmatpush1.msra.mxu0 0.0
    %2063 = vmatprep.subr.mxu0 0.0
    %2064 = vmatpush1.msra.mxu0 %v2038
    %2065 = vmatprep.subr.mxu0 0.0
    %2066 = vmatpush1.msra.mxu0 %v2037
    %2067 = vmatprep.subr.mxu0 0.0
    %2068 = vmatpush1.msra.mxu0 %v2036
    %2069 = vmatprep.subr.mxu0 0.0
    %2070 = vmatpush1.msra.mxu0 %v2035
    %2071 = vmatprep.subr.mxu0 0.0
    %2072 = vmatpush2.msra.mxu0 0.0
    %2073 = vmatprep.subr.mxu0 0.0
    %2074 = vmatpush2.msra.mxu0 0.0
    %2075 = vmatprep.subr.mxu0 0.0
    %2076 = vmatpush2.msra.mxu0 0.0
    %2077 = vmatprep.subr.mxu0 0.0
    %2078 = vmatpush2.msra.mxu0 0.0
    %2079 = vmatprep.subr.mxu0 0.0
    %2080 = vmatpush2.msra.mxu0 0.0
    %2081 = vmatprep.subr.mxu0 0.0
    %2082 = vmatpush2.msra.mxu0 0.0
    %2083 = vmatprep.subr.mxu0 0.0
    %2084 = vmatpush2.msra.mxu0 0.0
    %2085 = vmatprep.subr.mxu0 0.0
    %2086 = vmatpush2.msra.mxu0 0.0
    %2087 = vmatprep.subr.mxu0 0.0
    %2088 = vmatpush2.msra.mxu0 0.0
    %2089 = vmatprep.subr.mxu0 0.0
    %2090 = vmatpush2.msra.mxu0 0.0
    %2091 = vmatprep.subr.mxu0 0.0
    %2092 = vmatpush2.msra.mxu0 0.0
    %2093 = vmatprep.subr.mxu0 0.0
    %2094 = vmatpush2.msra.mxu0 0.0
    %2095 = vmatprep.subr.mxu0 0.0
    %2096 = vmatpush2.msra.mxu0 0.0
    %2097 = vmatprep.subr.mxu0 0.0
    %2098 = vmatpush2.msra.mxu0 0.0
    %2099 = vmatprep.subr.mxu0 0.0
    %2100 = vmatpush2.msra.mxu0 0.0
    %2101 = vmatprep.subr.mxu0 0.0
    %2102 = vmatpush2.msra.mxu0 0.0
    %2103 = vmatprep.mubr.f32.mxu0 0.0
    %2104 = vmatmul.mubr.f32.gmra.mxu0 %v1954
    %v2105 = vpop.f32.mrf.mxu0
    %v2106 = vadd.f32 0.0, %v2105
    %v2107 = vpop.f32.mrf.mxu0
    %2108 = vdwg.mxu0
    %v2109 = vadd.f32 %v2034, %v2106
    %v2110 = vxor.u32 %v2109, 2147483648
    %v2111 = vmul.f32 %v2110, 1.442695
    %v2112 = vpow.pop %v2111
    %v2113 = vadd.f32 %v2112, 1.0
    %v2114 = vrcp.pop %v2113
    %v2115 = vmul.f32 1.0, %v2114
    %s2116 = scalar_lea.vmem [#allocation5], 32
    %v2117 = vld [vmem:[%s2116] sm:$0xff]
    %v2118 = vld [vmem:[%s770] sm:$0xff]
    %v2119 = vld [vmem:[%s770 + $0x8] sm:$0xff]
    %v2120 = vld [vmem:[%s770 + $0x10] sm:$0xff]
    %v2121 = vld [vmem:[%s770 + $0x18] sm:$0xff]
    %2122 = vmatprep.subr.mxu0 0.0
    %2123 = vmatpush1.msra.mxu0 0.0
    %2124 = vmatprep.subr.mxu0 0.0
    %2125 = vmatpush1.msra.mxu0 0.0
    %2126 = vmatprep.subr.mxu0 0.0
    %2127 = vmatpush1.msra.mxu0 0.0
    %2128 = vmatprep.subr.mxu0 0.0
    %2129 = vmatpush1.msra.mxu0 0.0
    %2130 = vmatprep.subr.mxu0 0.0
    %2131 = vmatpush1.msra.mxu0 0.0
    %2132 = vmatprep.subr.mxu0 0.0
    %2133 = vmatpush1.msra.mxu0 0.0
    %2134 = vmatprep.subr.mxu0 0.0
    %2135 = vmatpush1.msra.mxu0 0.0
    %2136 = vmatprep.subr.mxu0 0.0
    %2137 = vmatpush1.msra.mxu0 0.0
    %2138 = vmatprep.subr.mxu0 0.0
    %2139 = vmatpush1.msra.mxu0 0.0
    %2140 = vmatprep.subr.mxu0 0.0
    %2141 = vmatpush1.msra.mxu0 0.0
    %2142 = vmatprep.subr.mxu0 0.0
    %2143 = vmatpush1.msra.mxu0 0.0
    %2144 = vmatprep.subr.mxu0 0.0
    %2145 = vmatpush1.msra.mxu0 0.0
    %2146 = vmatprep.subr.mxu0 0.0
    %2147 = vmatpush1.msra.mxu0 %v2121
    %2148 = vmatprep.subr.mxu0 0.0
    %2149 = vmatpush1.msra.mxu0 %v2120
    %2150 = vmatprep.subr.mxu0 0.0
    %2151 = vmatpush1.msra.mxu0 %v2119
    %2152 = vmatprep.subr.mxu0 0.0
    %2153 = vmatpush1.msra.mxu0 %v2118
    %2154 = vmatprep.subr.mxu0 0.0
    %2155 = vmatpush2.msra.mxu0 0.0
    %2156 = vmatprep.subr.mxu0 0.0
    %2157 = vmatpush2.msra.mxu0 0.0
    %2158 = vmatprep.subr.mxu0 0.0
    %2159 = vmatpush2.msra.mxu0 0.0
    %2160 = vmatprep.subr.mxu0 0.0
    %2161 = vmatpush2.msra.mxu0 0.0
    %2162 = vmatprep.subr.mxu0 0.0
    %2163 = vmatpush2.msra.mxu0 0.0
    %2164 = vmatprep.subr.mxu0 0.0
    %2165 = vmatpush2.msra.mxu0 0.0
    %2166 = vmatprep.subr.mxu0 0.0
    %2167 = vmatpush2.msra.mxu0 0.0
    %2168 = vmatprep.subr.mxu0 0.0
    %2169 = vmatpush2.msra.mxu0 0.0
    %2170 = vmatprep.subr.mxu0 0.0
    %2171 = vmatpush2.msra.mxu0 0.0
    %2172 = vmatprep.subr.mxu0 0.0
    %2173 = vmatpush2.msra.mxu0 0.0
    %2174 = vmatprep.subr.mxu0 0.0
    %2175 = vmatpush2.msra.mxu0 0.0
    %2176 = vmatprep.subr.mxu0 0.0
    %2177 = vmatpush2.msra.mxu0 0.0
    %2178 = vmatprep.subr.mxu0 0.0
    %2179 = vmatpush2.msra.mxu0 0.0
    %2180 = vmatprep.subr.mxu0 0.0
    %2181 = vmatpush2.msra.mxu0 0.0
    %2182 = vmatprep.subr.mxu0 0.0
    %2183 = vmatpush2.msra.mxu0 0.0
    %2184 = vmatprep.subr.mxu0 0.0
    %2185 = vmatpush2.msra.mxu0 0.0
    %2186 = vmatprep.mubr.f32.mxu0 0.0
    %2187 = vmatmul.mubr.f32.gmra.mxu0 %v1954
    %v2188 = vpop.f32.mrf.mxu0
    %v2189 = vadd.f32 0.0, %v2188
    %v2190 = vpop.f32.mrf.mxu0
    %2191 = vdwg.mxu0
    %v2192 = vadd.f32 %v2117, %v2189
    %v2193 = vtanh.pop %v2192
    %s2194 = scalar_lea.vmem [#allocation6], 32
    %v2195 = vld [vmem:[%s2194] sm:$0xff]
    %v2196 = vld [vmem:[%s848] sm:$0xff]
    %v2197 = vld [vmem:[%s848 + $0x8] sm:$0xff]
    %v2198 = vld [vmem:[%s848 + $0x10] sm:$0xff]
    %v2199 = vld [vmem:[%s848 + $0x18] sm:$0xff]
    %2200 = vmatprep.subr.mxu0 0.0
    %2201 = vmatpush1.msra.mxu0 0.0
    %2202 = vmatprep.subr.mxu0 0.0
    %2203 = vmatpush1.msra.mxu0 0.0
    %2204 = vmatprep.subr.mxu0 0.0
    %2205 = vmatpush1.msra.mxu0 0.0
    %2206 = vmatprep.subr.mxu0 0.0
    %2207 = vmatpush1.msra.mxu0 0.0
    %2208 = vmatprep.subr.mxu0 0.0
    %2209 = vmatpush1.msra.mxu0 0.0
    %2210 = vmatprep.subr.mxu0 0.0
    %2211 = vmatpush1.msra.mxu0 0.0
    %2212 = vmatprep.subr.mxu0 0.0
    %2213 = vmatpush1.msra.mxu0 0.0
    %2214 = vmatprep.subr.mxu0 0.0
    %2215 = vmatpush1.msra.mxu0 0.0
    %2216 = vmatprep.subr.mxu0 0.0
    %2217 = vmatpush1.msra.mxu0 0.0
    %2218 = vmatprep.subr.mxu0 0.0
    %2219 = vmatpush1.msra.mxu0 0.0
    %2220 = vmatprep.subr.mxu0 0.0
    %2221 = vmatpush1.msra.mxu0 0.0
    %2222 = vmatprep.subr.mxu0 0.0
    %2223 = vmatpush1.msra.mxu0 0.0
    %2224 = vmatprep.subr.mxu0 0.0
    %2225 = vmatpush1.msra.mxu0 %v2199
    %2226 = vmatprep.subr.mxu0 0.0
    %2227 = vmatpush1.msra.mxu0 %v2198
    %2228 = vmatprep.subr.mxu0 0.0
    %2229 = vmatpush1.msra.mxu0 %v2197
    %2230 = vmatprep.subr.mxu0 0.0
    %2231 = vmatpush1.msra.mxu0 %v2196
    %2232 = vmatprep.subr.mxu0 0.0
    %2233 = vmatpush2.msra.mxu0 0.0
    %2234 = vmatprep.subr.mxu0 0.0
    %2235 = vmatpush2.msra.mxu0 0.0
    %2236 = vmatprep.subr.mxu0 0.0
    %2237 = vmatpush2.msra.mxu0 0.0
    %2238 = vmatprep.subr.mxu0 0.0
    %2239 = vmatpush2.msra.mxu0 0.0
    %2240 = vmatprep.subr.mxu0 0.0
    %2241 = vmatpush2.msra.mxu0 0.0
    %2242 = vmatprep.subr.mxu0 0.0
    %2243 = vmatpush2.msra.mxu0 0.0
    %2244 = vmatprep.subr.mxu0 0.0
    %2245 = vmatpush2.msra.mxu0 0.0
    %2246 = vmatprep.subr.mxu0 0.0
    %2247 = vmatpush2.msra.mxu0 0.0
    %2248 = vmatprep.subr.mxu0 0.0
    %2249 = vmatpush2.msra.mxu0 0.0
    %2250 = vmatprep.subr.mxu0 0.0
    %2251 = vmatpush2.msra.mxu0 0.0
    %2252 = vmatprep.subr.mxu0 0.0
    %2253 = vmatpush2.msra.mxu0 0.0
    %2254 = vmatprep.subr.mxu0 0.0
    %2255 = vmatpush2.msra.mxu0 0.0
    %2256 = vmatprep.subr.mxu0 0.0
    %2257 = vmatpush2.msra.mxu0 0.0
    %2258 = vmatprep.subr.mxu0 0.0
    %2259 = vmatpush2.msra.mxu0 0.0
    %2260 = vmatprep.subr.mxu0 0.0
    %2261 = vmatpush2.msra.mxu0 0.0
    %2262 = vmatprep.subr.mxu0 0.0
    %2263 = vmatpush2.msra.mxu0 0.0
    %2264 = vmatprep.mubr.f32.mxu0 0.0
    %2265 = vmatmul.mubr.f32.gmra.mxu0 %v1954
    %v2266 = vpop.f32.mrf.mxu0
    %v2267 = vadd.f32 0.0, %v2266
    %v2268 = vpop.f32.mrf.mxu0
    %2269 = vdwg.mxu0
    %v2270 = vadd.f32 %v2195, %v2267
    %v2271 = vxor.u32 %v2270, 2147483648
    %v2272 = vmul.f32 %v2271, 1.442695
    %v2273 = vpow.pop %v2272
    %v2274 = vadd.f32 %v2273, 1.0
    %v2275 = vrcp.pop %v2274
    %v2276 = vmul.f32 1.0, %v2275
    %v2277 = vmul.f32 %v2115, %v1942
    %v2278 = vmul.f32 %v2032, %v2193
    %v2279 = vadd.f32 %v2277, %v2278
    %v2280 = vtanh.pop %v2279
    %v2281 = vmul.f32 %v2276, %v2280
    %s2282 = scalar_lea.vmem [#allocation2], 32
    %2283 = vst.msk [vmem:[%s2282] sm:$0xff] %vm220, %v2281
    %s2284 = scalar_lea.vmem [#allocation3], 40
    %v2285 = vld [vmem:[%s2284] sm:$0xff]
    %v2286 = vld [vmem:[%s2] sm:$0xff]
    %v2287 = vld [vmem:[%s2 + $0x8] sm:$0xff]
    %v2288 = vld [vmem:[%s2 + $0x10] sm:$0xff]
    %v2289 = vld [vmem:[%s2 + $0x18] sm:$0xff]
    %v2291 = vsel %vm220, %v2281, 0
    %2293 = vmatprep.subr.mxu0 0.0
    %2294 = vmatpush1.msra.mxu0 0.0
    %2295 = vmatprep.subr.mxu0 0.0
    %2296 = vmatpush1.msra.mxu0 0.0
    %2297 = vmatprep.subr.mxu0 0.0
    %2298 = vmatpush1.msra.mxu0 0.0
    %2299 = vmatprep.subr.mxu0 0.0
    %2300 = vmatpush1.msra.mxu0 0.0
    %2301 = vmatprep.subr.mxu0 0.0
    %2302 = vmatpush1.msra.mxu0 0.0
    %2303 = vmatprep.subr.mxu0 0.0
    %2304 = vmatpush1.msra.mxu0 0.0
    %2305 = vmatprep.subr.mxu0 0.0
    %2306 = vmatpush1.msra.mxu0 0.0
    %2307 = vmatprep.subr.mxu0 0.0
    %2308 = vmatpush1.msra.mxu0 0.0
    %2309 = vmatprep.subr.mxu0 0.0
    %2310 = vmatpush1.msra.mxu0 0.0
    %2311 = vmatprep.subr.mxu0 0.0
    %2312 = vmatpush1.msra.mxu0 0.0
    %2313 = vmatprep.subr.mxu0 0.0
    %2314 = vmatpush1.msra.mxu0 0.0
    %2315 = vmatprep.subr.mxu0 0.0
    %2316 = vmatpush1.msra.mxu0 0.0
    %2317 = vmatprep.subr.mxu0 0.0
    %2318 = vmatpush1.msra.mxu0 %v2289
    %2319 = vmatprep.subr.mxu0 0.0
    %2320 = vmatpush1.msra.mxu0 %v2288
    %2321 = vmatprep.subr.mxu0 0.0
    %2322 = vmatpush1.msra.mxu0 %v2287
    %2323 = vmatprep.subr.mxu0 0.0
    %2324 = vmatpush1.msra.mxu0 %v2286
    %2325 = vmatprep.subr.mxu0 0.0
    %2326 = vmatpush2.msra.mxu0 0.0
    %2327 = vmatprep.subr.mxu0 0.0
    %2328 = vmatpush2.msra.mxu0 0.0
    %2329 = vmatprep.subr.mxu0 0.0
    %2330 = vmatpush2.msra.mxu0 0.0
    %2331 = vmatprep.subr.mxu0 0.0
    %2332 = vmatpush2.msra.mxu0 0.0
    %2333 = vmatprep.subr.mxu0 0.0
    %2334 = vmatpush2.msra.mxu0 0.0
    %2335 = vmatprep.subr.mxu0 0.0
    %2336 = vmatpush2.msra.mxu0 0.0
    %2337 = vmatprep.subr.mxu0 0.0
    %2338 = vmatpush2.msra.mxu0 0.0
    %2339 = vmatprep.subr.mxu0 0.0
    %2340 = vmatpush2.msra.mxu0 0.0
    %2341 = vmatprep.subr.mxu0 0.0
    %2342 = vmatpush2.msra.mxu0 0.0
    %2343 = vmatprep.subr.mxu0 0.0
    %2344 = vmatpush2.msra.mxu0 0.0
    %2345 = vmatprep.subr.mxu0 0.0
    %2346 = vmatpush2.msra.mxu0 0.0
    %2347 = vmatprep.subr.mxu0 0.0
    %2348 = vmatpush2.msra.mxu0 0.0
    %2349 = vmatprep.subr.mxu0 0.0
    %2350 = vmatpush2.msra.mxu0 0.0
    %2351 = vmatprep.subr.mxu0 0.0
    %2352 = vmatpush2.msra.mxu0 0.0
    %2353 = vmatprep.subr.mxu0 0.0
    %2354 = vmatpush2.msra.mxu0 0.0
    %2355 = vmatprep.subr.mxu0 0.0
    %2356 = vmatpush2.msra.mxu0 0.0
    %2357 = vmatprep.mubr.f32.mxu0 0.0
    %2358 = vmatmul.mubr.f32.gmra.mxu0 %v2291
    %v2359 = vpop.f32.mrf.mxu0
    %v2360 = vadd.f32 0.0, %v2359
    %v2361 = vpop.f32.mrf.mxu0
    %2362 = vdwg.mxu0
    %v2363 = vadd.f32 %v2285, %v2360
    %v2364 = vxor.u32 %v2363, 2147483648
    %v2365 = vmul.f32 %v2364, 1.442695
    %v2366 = vpow.pop %v2365
    %v2367 = vadd.f32 %v2366, 1.0
    %v2368 = vrcp.pop %v2367
    %v2369 = vmul.f32 1.0, %v2368
    %s2370 = scalar_lea.vmem [#allocation4], 40
    %v2371 = vld [vmem:[%s2370] sm:$0xff]
    %v2372 = vld [vmem:[%s687] sm:$0xff]
    %v2373 = vld [vmem:[%s687 + $0x8] sm:$0xff]
    %v2374 = vld [vmem:[%s687 + $0x10] sm:$0xff]
    %v2375 = vld [vmem:[%s687 + $0x18] sm:$0xff]
    %2376 = vmatprep.subr.mxu0 0.0
    %2377 = vmatpush1.msra.mxu0 0.0
    %2378 = vmatprep.subr.mxu0 0.0
    %2379 = vmatpush1.msra.mxu0 0.0
    %2380 = vmatprep.subr.mxu0 0.0
    %2381 = vmatpush1.msra.mxu0 0.0
    %2382 = vmatprep.subr.mxu0 0.0
    %2383 = vmatpush1.msra.mxu0 0.0
    %2384 = vmatprep.subr.mxu0 0.0
    %2385 = vmatpush1.msra.mxu0 0.0
    %2386 = vmatprep.subr.mxu0 0.0
    %2387 = vmatpush1.msra.mxu0 0.0
    %2388 = vmatprep.subr.mxu0 0.0
    %2389 = vmatpush1.msra.mxu0 0.0
    %2390 = vmatprep.subr.mxu0 0.0
    %2391 = vmatpush1.msra.mxu0 0.0
    %2392 = vmatprep.subr.mxu0 0.0
    %2393 = vmatpush1.msra.mxu0 0.0
    %2394 = vmatprep.subr.mxu0 0.0
    %2395 = vmatpush1.msra.mxu0 0.0
    %2396 = vmatprep.subr.mxu0 0.0
    %2397 = vmatpush1.msra.mxu0 0.0
    %2398 = vmatprep.subr.mxu0 0.0
    %2399 = vmatpush1.msra.mxu0 0.0
    %2400 = vmatprep.subr.mxu0 0.0
    %2401 = vmatpush1.msra.mxu0 %v2375
    %2402 = vmatprep.subr.mxu0 0.0
    %2403 = vmatpush1.msra.mxu0 %v2374
    %2404 = vmatprep.subr.mxu0 0.0
    %2405 = vmatpush1.msra.mxu0 %v2373
    %2406 = vmatprep.subr.mxu0 0.0
    %2407 = vmatpush1.msra.mxu0 %v2372
    %2408 = vmatprep.subr.mxu0 0.0
    %2409 = vmatpush2.msra.mxu0 0.0
    %2410 = vmatprep.subr.mxu0 0.0
    %2411 = vmatpush2.msra.mxu0 0.0
    %2412 = vmatprep.subr.mxu0 0.0
    %2413 = vmatpush2.msra.mxu0 0.0
    %2414 = vmatprep.subr.mxu0 0.0
    %2415 = vmatpush2.msra.mxu0 0.0
    %2416 = vmatprep.subr.mxu0 0.0
    %2417 = vmatpush2.msra.mxu0 0.0
    %2418 = vmatprep.subr.mxu0 0.0
    %2419 = vmatpush2.msra.mxu0 0.0
    %2420 = vmatprep.subr.mxu0 0.0
    %2421 = vmatpush2.msra.mxu0 0.0
    %2422 = vmatprep.subr.mxu0 0.0
    %2423 = vmatpush2.msra.mxu0 0.0
    %2424 = vmatprep.subr.mxu0 0.0
    %2425 = vmatpush2.msra.mxu0 0.0
    %2426 = vmatprep.subr.mxu0 0.0
    %2427 = vmatpush2.msra.mxu0 0.0
    %2428 = vmatprep.subr.mxu0 0.0
    %2429 = vmatpush2.msra.mxu0 0.0
    %2430 = vmatprep.subr.mxu0 0.0
    %2431 = vmatpush2.msra.mxu0 0.0
    %2432 = vmatprep.subr.mxu0 0.0
    %2433 = vmatpush2.msra.mxu0 0.0
    %2434 = vmatprep.subr.mxu0 0.0
    %2435 = vmatpush2.msra.mxu0 0.0
    %2436 = vmatprep.subr.mxu0 0.0
    %2437 = vmatpush2.msra.mxu0 0.0
    %2438 = vmatprep.subr.mxu0 0.0
    %2439 = vmatpush2.msra.mxu0 0.0
    %2440 = vmatprep.mubr.f32.mxu0 0.0
    %2441 = vmatmul.mubr.f32.gmra.mxu0 %v2291
    %v2442 = vpop.f32.mrf.mxu0
    %v2443 = vadd.f32 0.0, %v2442
    %v2444 = vpop.f32.mrf.mxu0
    %2445 = vdwg.mxu0
    %v2446 = vadd.f32 %v2371, %v2443
    %v2447 = vxor.u32 %v2446, 2147483648
    %v2448 = vmul.f32 %v2447, 1.442695
    %v2449 = vpow.pop %v2448
    %v2450 = vadd.f32 %v2449, 1.0
    %v2451 = vrcp.pop %v2450
    %v2452 = vmul.f32 1.0, %v2451
    %s2453 = scalar_lea.vmem [#allocation5], 40
    %v2454 = vld [vmem:[%s2453] sm:$0xff]
    %v2455 = vld [vmem:[%s770] sm:$0xff]
    %v2456 = vld [vmem:[%s770 + $0x8] sm:$0xff]
    %v2457 = vld [vmem:[%s770 + $0x10] sm:$0xff]
    %v2458 = vld [vmem:[%s770 + $0x18] sm:$0xff]
    %2459 = vmatprep.subr.mxu0 0.0
    %2460 = vmatpush1.msra.mxu0 0.0
    %2461 = vmatprep.subr.mxu0 0.0
    %2462 = vmatpush1.msra.mxu0 0.0
    %2463 = vmatprep.subr.mxu0 0.0
    %2464 = vmatpush1.msra.mxu0 0.0
    %2465 = vmatprep.subr.mxu0 0.0
    %2466 = vmatpush1.msra.mxu0 0.0
    %2467 = vmatprep.subr.mxu0 0.0
    %2468 = vmatpush1.msra.mxu0 0.0
    %2469 = vmatprep.subr.mxu0 0.0
    %2470 = vmatpush1.msra.mxu0 0.0
    %2471 = vmatprep.subr.mxu0 0.0
    %2472 = vmatpush1.msra.mxu0 0.0
    %2473 = vmatprep.subr.mxu0 0.0
    %2474 = vmatpush1.msra.mxu0 0.0
    %2475 = vmatprep.subr.mxu0 0.0
    %2476 = vmatpush1.msra.mxu0 0.0
    %2477 = vmatprep.subr.mxu0 0.0
    %2478 = vmatpush1.msra.mxu0 0.0
    %2479 = vmatprep.subr.mxu0 0.0
    %2480 = vmatpush1.msra.mxu0 0.0
    %2481 = vmatprep.subr.mxu0 0.0
    %2482 = vmatpush1.msra.mxu0 0.0
    %2483 = vmatprep.subr.mxu0 0.0
    %2484 = vmatpush1.msra.mxu0 %v2458
    %2485 = vmatprep.subr.mxu0 0.0
    %2486 = vmatpush1.msra.mxu0 %v2457
    %2487 = vmatprep.subr.mxu0 0.0
    %2488 = vmatpush1.msra.mxu0 %v2456
    %2489 = vmatprep.subr.mxu0 0.0
    %2490 = vmatpush1.msra.mxu0 %v2455
    %2491 = vmatprep.subr.mxu0 0.0
    %2492 = vmatpush2.msra.mxu0 0.0
    %2493 = vmatprep.subr.mxu0 0.0
    %2494 = vmatpush2.msra.mxu0 0.0
    %2495 = vmatprep.subr.mxu0 0.0
    %2496 = vmatpush2.msra.mxu0 0.0
    %2497 = vmatprep.subr.mxu0 0.0
    %2498 = vmatpush2.msra.mxu0 0.0
    %2499 = vmatprep.subr.mxu0 0.0
    %2500 = vmatpush2.msra.mxu0 0.0
    %2501 = vmatprep.subr.mxu0 0.0
    %2502 = vmatpush2.msra.mxu0 0.0
    %2503 = vmatprep.subr.mxu0 0.0
    %2504 = vmatpush2.msra.mxu0 0.0
    %2505 = vmatprep.subr.mxu0 0.0
    %2506 = vmatpush2.msra.mxu0 0.0
    %2507 = vmatprep.subr.mxu0 0.0
    %2508 = vmatpush2.msra.mxu0 0.0
    %2509 = vmatprep.subr.mxu0 0.0
    %2510 = vmatpush2.msra.mxu0 0.0
    %2511 = vmatprep.subr.mxu0 0.0
    %2512 = vmatpush2.msra.mxu0 0.0
    %2513 = vmatprep.subr.mxu0 0.0
    %2514 = vmatpush2.msra.mxu0 0.0
    %2515 = vmatprep.subr.mxu0 0.0
    %2516 = vmatpush2.msra.mxu0 0.0
    %2517 = vmatprep.subr.mxu0 0.0
    %2518 = vmatpush2.msra.mxu0 0.0
    %2519 = vmatprep.subr.mxu0 0.0
    %2520 = vmatpush2.msra.mxu0 0.0
    %2521 = vmatprep.subr.mxu0 0.0
    %2522 = vmatpush2.msra.mxu0 0.0
    %2523 = vmatprep.mubr.f32.mxu0 0.0
    %2524 = vmatmul.mubr.f32.gmra.mxu0 %v2291
    %v2525 = vpop.f32.mrf.mxu0
    %v2526 = vadd.f32 0.0, %v2525
    %v2527 = vpop.f32.mrf.mxu0
    %2528 = vdwg.mxu0
    %v2529 = vadd.f32 %v2454, %v2526
    %v2530 = vtanh.pop %v2529
    %s2531 = scalar_lea.vmem [#allocation6], 40
    %v2532 = vld [vmem:[%s2531] sm:$0xff]
    %v2533 = vld [vmem:[%s848] sm:$0xff]
    %v2534 = vld [vmem:[%s848 + $0x8] sm:$0xff]
    %v2535 = vld [vmem:[%s848 + $0x10] sm:$0xff]
    %v2536 = vld [vmem:[%s848 + $0x18] sm:$0xff]
    %2537 = vmatprep.subr.mxu0 0.0
    %2538 = vmatpush1.msra.mxu0 0.0
    %2539 = vmatprep.subr.mxu0 0.0
    %2540 = vmatpush1.msra.mxu0 0.0
    %2541 = vmatprep.subr.mxu0 0.0
    %2542 = vmatpush1.msra.mxu0 0.0
    %2543 = vmatprep.subr.mxu0 0.0
    %2544 = vmatpush1.msra.mxu0 0.0
    %2545 = vmatprep.subr.mxu0 0.0
    %2546 = vmatpush1.msra.mxu0 0.0
    %2547 = vmatprep.subr.mxu0 0.0
    %2548 = vmatpush1.msra.mxu0 0.0
    %2549 = vmatprep.subr.mxu0 0.0
    %2550 = vmatpush1.msra.mxu0 0.0
    %2551 = vmatprep.subr.mxu0 0.0
    %2552 = vmatpush1.msra.mxu0 0.0
    %2553 = vmatprep.subr.mxu0 0.0
    %2554 = vmatpush1.msra.mxu0 0.0
    %2555 = vmatprep.subr.mxu0 0.0
    %2556 = vmatpush1.msra.mxu0 0.0
    %2557 = vmatprep.subr.mxu0 0.0
    %2558 = vmatpush1.msra.mxu0 0.0
    %2559 = vmatprep.subr.mxu0 0.0
    %2560 = vmatpush1.msra.mxu0 0.0
    %2561 = vmatprep.subr.mxu0 0.0
    %2562 = vmatpush1.msra.mxu0 %v2536
    %2563 = vmatprep.subr.mxu0 0.0
    %2564 = vmatpush1.msra.mxu0 %v2535
    %2565 = vmatprep.subr.mxu0 0.0
    %2566 = vmatpush1.msra.mxu0 %v2534
    %2567 = vmatprep.subr.mxu0 0.0
    %2568 = vmatpush1.msra.mxu0 %v2533
    %2569 = vmatprep.subr.mxu0 0.0
    %2570 = vmatpush2.msra.mxu0 0.0
    %2571 = vmatprep.subr.mxu0 0.0
    %2572 = vmatpush2.msra.mxu0 0.0
    %2573 = vmatprep.subr.mxu0 0.0
    %2574 = vmatpush2.msra.mxu0 0.0
    %2575 = vmatprep.subr.mxu0 0.0
    %2576 = vmatpush2.msra.mxu0 0.0
    %2577 = vmatprep.subr.mxu0 0.0
    %2578 = vmatpush2.msra.mxu0 0.0
    %2579 = vmatprep.subr.mxu0 0.0
    %2580 = vmatpush2.msra.mxu0 0.0
    %2581 = vmatprep.subr.mxu0 0.0
    %2582 = vmatpush2.msra.mxu0 0.0
    %2583 = vmatprep.subr.mxu0 0.0
    %2584 = vmatpush2.msra.mxu0 0.0
    %2585 = vmatprep.subr.mxu0 0.0
    %2586 = vmatpush2.msra.mxu0 0.0
    %2587 = vmatprep.subr.mxu0 0.0
    %2588 = vmatpush2.msra.mxu0 0.0
    %2589 = vmatprep.subr.mxu0 0.0
    %2590 = vmatpush2.msra.mxu0 0.0
    %2591 = vmatprep.subr.mxu0 0.0
    %2592 = vmatpush2.msra.mxu0 0.0
    %2593 = vmatprep.subr.mxu0 0.0
    %2594 = vmatpush2.msra.mxu0 0.0
    %2595 = vmatprep.subr.mxu0 0.0
    %2596 = vmatpush2.msra.mxu0 0.0
    %2597 = vmatprep.subr.mxu0 0.0
    %2598 = vmatpush2.msra.mxu0 0.0
    %2599 = vmatprep.subr.mxu0 0.0
    %2600 = vmatpush2.msra.mxu0 0.0
    %2601 = vmatprep.mubr.f32.mxu0 0.0
    %2602 = vmatmul.mubr.f32.gmra.mxu0 %v2291
    %v2603 = vpop.f32.mrf.mxu0
    %v2604 = vadd.f32 0.0, %v2603
    %v2605 = vpop.f32.mrf.mxu0
    %2606 = vdwg.mxu0
    %v2607 = vadd.f32 %v2532, %v2604
    %v2608 = vxor.u32 %v2607, 2147483648
    %v2609 = vmul.f32 %v2608, 1.442695
    %v2610 = vpow.pop %v2609
    %v2611 = vadd.f32 %v2610, 1.0
    %v2612 = vrcp.pop %v2611
    %v2613 = vmul.f32 1.0, %v2612
    %v2614 = vmul.f32 %v2452, %v2279
    %v2615 = vmul.f32 %v2369, %v2530
    %v2616 = vadd.f32 %v2614, %v2615
    %v2617 = vtanh.pop %v2616
    %v2618 = vmul.f32 %v2613, %v2617
    %s2619 = scalar_lea.vmem [#allocation2], 40
    %2620 = vst.msk [vmem:[%s2619] sm:$0xff] %vm220, %v2618
    %s2621 = scalar_lea.vmem [#allocation3], 48
    %v2622 = vld [vmem:[%s2621] sm:$0xff]
    %v2623 = vld [vmem:[%s2] sm:$0xff]
    %v2624 = vld [vmem:[%s2 + $0x8] sm:$0xff]
    %v2625 = vld [vmem:[%s2 + $0x10] sm:$0xff]
    %v2626 = vld [vmem:[%s2 + $0x18] sm:$0xff]
    %v2628 = vsel %vm220, %v2618, 0
    %2630 = vmatprep.subr.mxu0 0.0
    %2631 = vmatpush1.msra.mxu0 0.0
    %2632 = vmatprep.subr.mxu0 0.0
    %2633 = vmatpush1.msra.mxu0 0.0
    %2634 = vmatprep.subr.mxu0 0.0
    %2635 = vmatpush1.msra.mxu0 0.0
    %2636 = vmatprep.subr.mxu0 0.0
    %2637 = vmatpush1.msra.mxu0 0.0
    %2638 = vmatprep.subr.mxu0 0.0
    %2639 = vmatpush1.msra.mxu0 0.0
    %2640 = vmatprep.subr.mxu0 0.0
    %2641 = vmatpush1.msra.mxu0 0.0
    %2642 = vmatprep.subr.mxu0 0.0
    %2643 = vmatpush1.msra.mxu0 0.0
    %2644 = vmatprep.subr.mxu0 0.0
    %2645 = vmatpush1.msra.mxu0 0.0
    %2646 = vmatprep.subr.mxu0 0.0
    %2647 = vmatpush1.msra.mxu0 0.0
    %2648 = vmatprep.subr.mxu0 0.0
    %2649 = vmatpush1.msra.mxu0 0.0
    %2650 = vmatprep.subr.mxu0 0.0
    %2651 = vmatpush1.msra.mxu0 0.0
    %2652 = vmatprep.subr.mxu0 0.0
    %2653 = vmatpush1.msra.mxu0 0.0
    %2654 = vmatprep.subr.mxu0 0.0
    %2655 = vmatpush1.msra.mxu0 %v2626
    %2656 = vmatprep.subr.mxu0 0.0
    %2657 = vmatpush1.msra.mxu0 %v2625
    %2658 = vmatprep.subr.mxu0 0.0
    %2659 = vmatpush1.msra.mxu0 %v2624
    %2660 = vmatprep.subr.mxu0 0.0
    %2661 = vmatpush1.msra.mxu0 %v2623
    %2662 = vmatprep.subr.mxu0 0.0
    %2663 = vmatpush2.msra.mxu0 0.0
    %2664 = vmatprep.subr.mxu0 0.0
    %2665 = vmatpush2.msra.mxu0 0.0
    %2666 = vmatprep.subr.mxu0 0.0
    %2667 = vmatpush2.msra.mxu0 0.0
    %2668 = vmatprep.subr.mxu0 0.0
    %2669 = vmatpush2.msra.mxu0 0.0
    %2670 = vmatprep.subr.mxu0 0.0
    %2671 = vmatpush2.msra.mxu0 0.0
    %2672 = vmatprep.subr.mxu0 0.0
    %2673 = vmatpush2.msra.mxu0 0.0
    %2674 = vmatprep.subr.mxu0 0.0
    %2675 = vmatpush2.msra.mxu0 0.0
    %2676 = vmatprep.subr.mxu0 0.0
    %2677 = vmatpush2.msra.mxu0 0.0
    %2678 = vmatprep.subr.mxu0 0.0
    %2679 = vmatpush2.msra.mxu0 0.0
    %2680 = vmatprep.subr.mxu0 0.0
    %2681 = vmatpush2.msra.mxu0 0.0
    %2682 = vmatprep.subr.mxu0 0.0
    %2683 = vmatpush2.msra.mxu0 0.0
    %2684 = vmatprep.subr.mxu0 0.0
    %2685 = vmatpush2.msra.mxu0 0.0
    %2686 = vmatprep.subr.mxu0 0.0
    %2687 = vmatpush2.msra.mxu0 0.0
    %2688 = vmatprep.subr.mxu0 0.0
    %2689 = vmatpush2.msra.mxu0 0.0
    %2690 = vmatprep.subr.mxu0 0.0
    %2691 = vmatpush2.msra.mxu0 0.0
    %2692 = vmatprep.subr.mxu0 0.0
    %2693 = vmatpush2.msra.mxu0 0.0
    %2694 = vmatprep.mubr.f32.mxu0 0.0
    %2695 = vmatmul.mubr.f32.gmra.mxu0 %v2628
    %v2696 = vpop.f32.mrf.mxu0
    %v2697 = vadd.f32 0.0, %v2696
    %v2698 = vpop.f32.mrf.mxu0
    %2699 = vdwg.mxu0
    %v2700 = vadd.f32 %v2622, %v2697
    %v2701 = vxor.u32 %v2700, 2147483648
    %v2702 = vmul.f32 %v2701, 1.442695
    %v2703 = vpow.pop %v2702
    %v2704 = vadd.f32 %v2703, 1.0
    %v2705 = vrcp.pop %v2704
    %v2706 = vmul.f32 1.0, %v2705
    %s2707 = scalar_lea.vmem [#allocation4], 48
    %v2708 = vld [vmem:[%s2707] sm:$0xff]
    %v2709 = vld [vmem:[%s687] sm:$0xff]
    %v2710 = vld [vmem:[%s687 + $0x8] sm:$0xff]
    %v2711 = vld [vmem:[%s687 + $0x10] sm:$0xff]
    %v2712 = vld [vmem:[%s687 + $0x18] sm:$0xff]
    %2713 = vmatprep.subr.mxu0 0.0
    %2714 = vmatpush1.msra.mxu0 0.0
    %2715 = vmatprep.subr.mxu0 0.0
    %2716 = vmatpush1.msra.mxu0 0.0
    %2717 = vmatprep.subr.mxu0 0.0
    %2718 = vmatpush1.msra.mxu0 0.0
    %2719 = vmatprep.subr.mxu0 0.0
    %2720 = vmatpush1.msra.mxu0 0.0
    %2721 = vmatprep.subr.mxu0 0.0
    %2722 = vmatpush1.msra.mxu0 0.0
    %2723 = vmatprep.subr.mxu0 0.0
    %2724 = vmatpush1.msra.mxu0 0.0
    %2725 = vmatprep.subr.mxu0 0.0
    %2726 = vmatpush1.msra.mxu0 0.0
    %2727 = vmatprep.subr.mxu0 0.0
    %2728 = vmatpush1.msra.mxu0 0.0
    %2729 = vmatprep.subr.mxu0 0.0
    %2730 = vmatpush1.msra.mxu0 0.0
    %2731 = vmatprep.subr.mxu0 0.0
    %2732 = vmatpush1.msra.mxu0 0.0
    %2733 = vmatprep.subr.mxu0 0.0
    %2734 = vmatpush1.msra.mxu0 0.0
    %2735 = vmatprep.subr.mxu0 0.0
    %2736 = vmatpush1.msra.mxu0 0.0
    %2737 = vmatprep.subr.mxu0 0.0
    %2738 = vmatpush1.msra.mxu0 %v2712
    %2739 = vmatprep.subr.mxu0 0.0
    %2740 = vmatpush1.msra.mxu0 %v2711
    %2741 = vmatprep.subr.mxu0 0.0
    %2742 = vmatpush1.msra.mxu0 %v2710
    %2743 = vmatprep.subr.mxu0 0.0
    %2744 = vmatpush1.msra.mxu0 %v2709
    %2745 = vmatprep.subr.mxu0 0.0
    %2746 = vmatpush2.msra.mxu0 0.0
    %2747 = vmatprep.subr.mxu0 0.0
    %2748 = vmatpush2.msra.mxu0 0.0
    %2749 = vmatprep.subr.mxu0 0.0
    %2750 = vmatpush2.msra.mxu0 0.0
    %2751 = vmatprep.subr.mxu0 0.0
    %2752 = vmatpush2.msra.mxu0 0.0
    %2753 = vmatprep.subr.mxu0 0.0
    %2754 = vmatpush2.msra.mxu0 0.0
    %2755 = vmatprep.subr.mxu0 0.0
    %2756 = vmatpush2.msra.mxu0 0.0
    %2757 = vmatprep.subr.mxu0 0.0
    %2758 = vmatpush2.msra.mxu0 0.0
    %2759 = vmatprep.subr.mxu0 0.0
    %2760 = vmatpush2.msra.mxu0 0.0
    %2761 = vmatprep.subr.mxu0 0.0
    %2762 = vmatpush2.msra.mxu0 0.0
    %2763 = vmatprep.subr.mxu0 0.0
    %2764 = vmatpush2.msra.mxu0 0.0
    %2765 = vmatprep.subr.mxu0 0.0
    %2766 = vmatpush2.msra.mxu0 0.0
    %2767 = vmatprep.subr.mxu0 0.0
    %2768 = vmatpush2.msra.mxu0 0.0
    %2769 = vmatprep.subr.mxu0 0.0
    %2770 = vmatpush2.msra.mxu0 0.0
    %2771 = vmatprep.subr.mxu0 0.0
    %2772 = vmatpush2.msra.mxu0 0.0
    %2773 = vmatprep.subr.mxu0 0.0
    %2774 = vmatpush2.msra.mxu0 0.0
    %2775 = vmatprep.subr.mxu0 0.0
    %2776 = vmatpush2.msra.mxu0 0.0
    %2777 = vmatprep.mubr.f32.mxu0 0.0
    %2778 = vmatmul.mubr.f32.gmra.mxu0 %v2628
    %v2779 = vpop.f32.mrf.mxu0
    %v2780 = vadd.f32 0.0, %v2779
    %v2781 = vpop.f32.mrf.mxu0
    %2782 = vdwg.mxu0
    %v2783 = vadd.f32 %v2708, %v2780
    %v2784 = vxor.u32 %v2783, 2147483648
    %v2785 = vmul.f32 %v2784, 1.442695
    %v2786 = vpow.pop %v2785
    %v2787 = vadd.f32 %v2786, 1.0
    %v2788 = vrcp.pop %v2787
    %v2789 = vmul.f32 1.0, %v2788
    %s2790 = scalar_lea.vmem [#allocation5], 48
    %v2791 = vld [vmem:[%s2790] sm:$0xff]
    %v2792 = vld [vmem:[%s770] sm:$0xff]
    %v2793 = vld [vmem:[%s770 + $0x8] sm:$0xff]
    %v2794 = vld [vmem:[%s770 + $0x10] sm:$0xff]
    %v2795 = vld [vmem:[%s770 + $0x18] sm:$0xff]
    %2796 = vmatprep.subr.mxu0 0.0
    %2797 = vmatpush1.msra.mxu0 0.0
    %2798 = vmatprep.subr.mxu0 0.0
    %2799 = vmatpush1.msra.mxu0 0.0
    %2800 = vmatprep.subr.mxu0 0.0
    %2801 = vmatpush1.msra.mxu0 0.0
    %2802 = vmatprep.subr.mxu0 0.0
    %2803 = vmatpush1.msra.mxu0 0.0
    %2804 = vmatprep.subr.mxu0 0.0
    %2805 = vmatpush1.msra.mxu0 0.0
    %2806 = vmatprep.subr.mxu0 0.0
    %2807 = vmatpush1.msra.mxu0 0.0
    %2808 = vmatprep.subr.mxu0 0.0
    %2809 = vmatpush1.msra.mxu0 0.0
    %2810 = vmatprep.subr.mxu0 0.0
    %2811 = vmatpush1.msra.mxu0 0.0
    %2812 = vmatprep.subr.mxu0 0.0
    %2813 = vmatpush1.msra.mxu0 0.0
    %2814 = vmatprep.subr.mxu0 0.0
    %2815 = vmatpush1.msra.mxu0 0.0
    %2816 = vmatprep.subr.mxu0 0.0
    %2817 = vmatpush1.msra.mxu0 0.0
    %2818 = vmatprep.subr.mxu0 0.0
    %2819 = vmatpush1.msra.mxu0 0.0
    %2820 = vmatprep.subr.mxu0 0.0
    %2821 = vmatpush1.msra.mxu0 %v2795
    %2822 = vmatprep.subr.mxu0 0.0
    %2823 = vmatpush1.msra.mxu0 %v2794
    %2824 = vmatprep.subr.mxu0 0.0
    %2825 = vmatpush1.msra.mxu0 %v2793
    %2826 = vmatprep.subr.mxu0 0.0
    %2827 = vmatpush1.msra.mxu0 %v2792
    %2828 = vmatprep.subr.mxu0 0.0
    %2829 = vmatpush2.msra.mxu0 0.0
    %2830 = vmatprep.subr.mxu0 0.0
    %2831 = vmatpush2.msra.mxu0 0.0
    %2832 = vmatprep.subr.mxu0 0.0
    %2833 = vmatpush2.msra.mxu0 0.0
    %2834 = vmatprep.subr.mxu0 0.0
    %2835 = vmatpush2.msra.mxu0 0.0
    %2836 = vmatprep.subr.mxu0 0.0
    %2837 = vmatpush2.msra.mxu0 0.0
    %2838 = vmatprep.subr.mxu0 0.0
    %2839 = vmatpush2.msra.mxu0 0.0
    %2840 = vmatprep.subr.mxu0 0.0
    %2841 = vmatpush2.msra.mxu0 0.0
    %2842 = vmatprep.subr.mxu0 0.0
    %2843 = vmatpush2.msra.mxu0 0.0
    %2844 = vmatprep.subr.mxu0 0.0
    %2845 = vmatpush2.msra.mxu0 0.0
    %2846 = vmatprep.subr.mxu0 0.0
    %2847 = vmatpush2.msra.mxu0 0.0
    %2848 = vmatprep.subr.mxu0 0.0
    %2849 = vmatpush2.msra.mxu0 0.0
    %2850 = vmatprep.subr.mxu0 0.0
    %2851 = vmatpush2.msra.mxu0 0.0
    %2852 = vmatprep.subr.mxu0 0.0
    %2853 = vmatpush2.msra.mxu0 0.0
    %2854 = vmatprep.subr.mxu0 0.0
    %2855 = vmatpush2.msra.mxu0 0.0
    %2856 = vmatprep.subr.mxu0 0.0
    %2857 = vmatpush2.msra.mxu0 0.0
    %2858 = vmatprep.subr.mxu0 0.0
    %2859 = vmatpush2.msra.mxu0 0.0
    %2860 = vmatprep.mubr.f32.mxu0 0.0
    %2861 = vmatmul.mubr.f32.gmra.mxu0 %v2628
    %v2862 = vpop.f32.mrf.mxu0
    %v2863 = vadd.f32 0.0, %v2862
    %v2864 = vpop.f32.mrf.mxu0
    %2865 = vdwg.mxu0
    %v2866 = vadd.f32 %v2791, %v2863
    %v2867 = vtanh.pop %v2866
    %s2868 = scalar_lea.vmem [#allocation6], 48
    %v2869 = vld [vmem:[%s2868] sm:$0xff]
    %v2870 = vld [vmem:[%s848] sm:$0xff]
    %v2871 = vld [vmem:[%s848 + $0x8] sm:$0xff]
    %v2872 = vld [vmem:[%s848 + $0x10] sm:$0xff]
    %v2873 = vld [vmem:[%s848 + $0x18] sm:$0xff]
    %2874 = vmatprep.subr.mxu0 0.0
    %2875 = vmatpush1.msra.mxu0 0.0
    %2876 = vmatprep.subr.mxu0 0.0
    %2877 = vmatpush1.msra.mxu0 0.0
    %2878 = vmatprep.subr.mxu0 0.0
    %2879 = vmatpush1.msra.mxu0 0.0
    %2880 = vmatprep.subr.mxu0 0.0
    %2881 = vmatpush1.msra.mxu0 0.0
    %2882 = vmatprep.subr.mxu0 0.0
    %2883 = vmatpush1.msra.mxu0 0.0
    %2884 = vmatprep.subr.mxu0 0.0
    %2885 = vmatpush1.msra.mxu0 0.0
    %2886 = vmatprep.subr.mxu0 0.0
    %2887 = vmatpush1.msra.mxu0 0.0
    %2888 = vmatprep.subr.mxu0 0.0
    %2889 = vmatpush1.msra.mxu0 0.0
    %2890 = vmatprep.subr.mxu0 0.0
    %2891 = vmatpush1.msra.mxu0 0.0
    %2892 = vmatprep.subr.mxu0 0.0
    %2893 = vmatpush1.msra.mxu0 0.0
    %2894 = vmatprep.subr.mxu0 0.0
    %2895 = vmatpush1.msra.mxu0 0.0
    %2896 = vmatprep.subr.mxu0 0.0
    %2897 = vmatpush1.msra.mxu0 0.0
    %2898 = vmatprep.subr.mxu0 0.0
    %2899 = vmatpush1.msra.mxu0 %v2873
    %2900 = vmatprep.subr.mxu0 0.0
    %2901 = vmatpush1.msra.mxu0 %v2872
    %2902 = vmatprep.subr.mxu0 0.0
    %2903 = vmatpush1.msra.mxu0 %v2871
    %2904 = vmatprep.subr.mxu0 0.0
    %2905 = vmatpush1.msra.mxu0 %v2870
    %2906 = vmatprep.subr.mxu0 0.0
    %2907 = vmatpush2.msra.mxu0 0.0
    %2908 = vmatprep.subr.mxu0 0.0
    %2909 = vmatpush2.msra.mxu0 0.0
    %2910 = vmatprep.subr.mxu0 0.0
    %2911 = vmatpush2.msra.mxu0 0.0
    %2912 = vmatprep.subr.mxu0 0.0
    %2913 = vmatpush2.msra.mxu0 0.0
    %2914 = vmatprep.subr.mxu0 0.0
    %2915 = vmatpush2.msra.mxu0 0.0
    %2916 = vmatprep.subr.mxu0 0.0
    %2917 = vmatpush2.msra.mxu0 0.0
    %2918 = vmatprep.subr.mxu0 0.0
    %2919 = vmatpush2.msra.mxu0 0.0
    %2920 = vmatprep.subr.mxu0 0.0
    %2921 = vmatpush2.msra.mxu0 0.0
    %2922 = vmatprep.subr.mxu0 0.0
    %2923 = vmatpush2.msra.mxu0 0.0
    %2924 = vmatprep.subr.mxu0 0.0
    %2925 = vmatpush2.msra.mxu0 0.0
    %2926 = vmatprep.subr.mxu0 0.0
    %2927 = vmatpush2.msra.mxu0 0.0
    %2928 = vmatprep.subr.mxu0 0.0
    %2929 = vmatpush2.msra.mxu0 0.0
    %2930 = vmatprep.subr.mxu0 0.0
    %2931 = vmatpush2.msra.mxu0 0.0
    %2932 = vmatprep.subr.mxu0 0.0
    %2933 = vmatpush2.msra.mxu0 0.0
    %2934 = vmatprep.subr.mxu0 0.0
    %2935 = vmatpush2.msra.mxu0 0.0
    %2936 = vmatprep.subr.mxu0 0.0
    %2937 = vmatpush2.msra.mxu0 0.0
    %2938 = vmatprep.mubr.f32.mxu0 0.0
    %2939 = vmatmul.mubr.f32.gmra.mxu0 %v2628
    %v2940 = vpop.f32.mrf.mxu0
    %v2941 = vadd.f32 0.0, %v2940
    %v2942 = vpop.f32.mrf.mxu0
    %2943 = vdwg.mxu0
    %v2944 = vadd.f32 %v2869, %v2941
    %v2945 = vxor.u32 %v2944, 2147483648
    %v2946 = vmul.f32 %v2945, 1.442695
    %v2947 = vpow.pop %v2946
    %v2948 = vadd.f32 %v2947, 1.0
    %v2949 = vrcp.pop %v2948
    %v2950 = vmul.f32 1.0, %v2949
    %v2951 = vmul.f32 %v2789, %v2616
    %v2952 = vmul.f32 %v2706, %v2867
    %v2953 = vadd.f32 %v2951, %v2952
    %v2954 = vtanh.pop %v2953
    %v2955 = vmul.f32 %v2950, %v2954
    %s2956 = scalar_lea.vmem [#allocation2], 48
    %2957 = vst.msk [vmem:[%s2956] sm:$0xff] %vm220, %v2955
    %s2958 = scalar_lea.vmem [#allocation3], 56
    %v2959 = vld [vmem:[%s2958] sm:$0xff]
    %v2960 = vld [vmem:[%s2] sm:$0xff]
    %v2961 = vld [vmem:[%s2 + $0x8] sm:$0xff]
    %v2962 = vld [vmem:[%s2 + $0x10] sm:$0xff]
    %v2963 = vld [vmem:[%s2 + $0x18] sm:$0xff]
    %v2965 = vsel %vm220, %v2955, 0
    %2967 = vmatprep.subr.mxu0 0.0
    %2968 = vmatpush1.msra.mxu0 0.0
    %2969 = vmatprep.subr.mxu0 0.0
    %2970 = vmatpush1.msra.mxu0 0.0
    %2971 = vmatprep.subr.mxu0 0.0
    %2972 = vmatpush1.msra.mxu0 0.0
    %2973 = vmatprep.subr.mxu0 0.0
    %2974 = vmatpush1.msra.mxu0 0.0
    %2975 = vmatprep.subr.mxu0 0.0
    %2976 = vmatpush1.msra.mxu0 0.0
    %2977 = vmatprep.subr.mxu0 0.0
    %2978 = vmatpush1.msra.mxu0 0.0
    %2979 = vmatprep.subr.mxu0 0.0
    %2980 = vmatpush1.msra.mxu0 0.0
    %2981 = vmatprep.subr.mxu0 0.0
    %2982 = vmatpush1.msra.mxu0 0.0
    %2983 = vmatprep.subr.mxu0 0.0
    %2984 = vmatpush1.msra.mxu0 0.0
    %2985 = vmatprep.subr.mxu0 0.0
    %2986 = vmatpush1.msra.mxu0 0.0
    %2987 = vmatprep.subr.mxu0 0.0
    %2988 = vmatpush1.msra.mxu0 0.0
    %2989 = vmatprep.subr.mxu0 0.0
    %2990 = vmatpush1.msra.mxu0 0.0
    %2991 = vmatprep.subr.mxu0 0.0
    %2992 = vmatpush1.msra.mxu0 %v2963
    %2993 = vmatprep.subr.mxu0 0.0
    %2994 = vmatpush1.msra.mxu0 %v2962
    %2995 = vmatprep.subr.mxu0 0.0
    %2996 = vmatpush1.msra.mxu0 %v2961
    %2997 = vmatprep.subr.mxu0 0.0
    %2998 = vmatpush1.msra.mxu0 %v2960
    %2999 = vmatprep.subr.mxu0 0.0
    %3000 = vmatpush2.msra.mxu0 0.0
    %3001 = vmatprep.subr.mxu0 0.0
    %3002 = vmatpush2.msra.mxu0 0.0
    %3003 = vmatprep.subr.mxu0 0.0
    %3004 = vmatpush2.msra.mxu0 0.0
    %3005 = vmatprep.subr.mxu0 0.0
    %3006 = vmatpush2.msra.mxu0 0.0
    %3007 = vmatprep.subr.mxu0 0.0
    %3008 = vmatpush2.msra.mxu0 0.0
    %3009 = vmatprep.subr.mxu0 0.0
    %3010 = vmatpush2.msra.mxu0 0.0
    %3011 = vmatprep.subr.mxu0 0.0
    %3012 = vmatpush2.msra.mxu0 0.0
    %3013 = vmatprep.subr.mxu0 0.0
    %3014 = vmatpush2.msra.mxu0 0.0
    %3015 = vmatprep.subr.mxu0 0.0
    %3016 = vmatpush2.msra.mxu0 0.0
    %3017 = vmatprep.subr.mxu0 0.0
    %3018 = vmatpush2.msra.mxu0 0.0
    %3019 = vmatprep.subr.mxu0 0.0
    %3020 = vmatpush2.msra.mxu0 0.0
    %3021 = vmatprep.subr.mxu0 0.0
    %3022 = vmatpush2.msra.mxu0 0.0
    %3023 = vmatprep.subr.mxu0 0.0
    %3024 = vmatpush2.msra.mxu0 0.0
    %3025 = vmatprep.subr.mxu0 0.0
    %3026 = vmatpush2.msra.mxu0 0.0
    %3027 = vmatprep.subr.mxu0 0.0
    %3028 = vmatpush2.msra.mxu0 0.0
    %3029 = vmatprep.subr.mxu0 0.0
    %3030 = vmatpush2.msra.mxu0 0.0
    %3031 = vmatprep.mubr.f32.mxu0 0.0
    %3032 = vmatmul.mubr.f32.gmra.mxu0 %v2965
    %v3033 = vpop.f32.mrf.mxu0
    %v3034 = vadd.f32 0.0, %v3033
    %v3035 = vpop.f32.mrf.mxu0
    %3036 = vdwg.mxu0
    %v3037 = vadd.f32 %v2959, %v3034
    %v3038 = vxor.u32 %v3037, 2147483648
    %v3039 = vmul.f32 %v3038, 1.442695
    %v3040 = vpow.pop %v3039
    %v3041 = vadd.f32 %v3040, 1.0
    %v3042 = vrcp.pop %v3041
    %v3043 = vmul.f32 1.0, %v3042
    %s3044 = scalar_lea.vmem [#allocation4], 56
    %v3045 = vld [vmem:[%s3044] sm:$0xff]
    %v3046 = vld [vmem:[%s687] sm:$0xff]
    %v3047 = vld [vmem:[%s687 + $0x8] sm:$0xff]
    %v3048 = vld [vmem:[%s687 + $0x10] sm:$0xff]
    %v3049 = vld [vmem:[%s687 + $0x18] sm:$0xff]
    %3050 = vmatprep.subr.mxu0 0.0
    %3051 = vmatpush1.msra.mxu0 0.0
    %3052 = vmatprep.subr.mxu0 0.0
    %3053 = vmatpush1.msra.mxu0 0.0
    %3054 = vmatprep.subr.mxu0 0.0
    %3055 = vmatpush1.msra.mxu0 0.0
    %3056 = vmatprep.subr.mxu0 0.0
    %3057 = vmatpush1.msra.mxu0 0.0
    %3058 = vmatprep.subr.mxu0 0.0
    %3059 = vmatpush1.msra.mxu0 0.0
    %3060 = vmatprep.subr.mxu0 0.0
    %3061 = vmatpush1.msra.mxu0 0.0
    %3062 = vmatprep.subr.mxu0 0.0
    %3063 = vmatpush1.msra.mxu0 0.0
    %3064 = vmatprep.subr.mxu0 0.0
    %3065 = vmatpush1.msra.mxu0 0.0
    %3066 = vmatprep.subr.mxu0 0.0
    %3067 = vmatpush1.msra.mxu0 0.0
    %3068 = vmatprep.subr.mxu0 0.0
    %3069 = vmatpush1.msra.mxu0 0.0
    %3070 = vmatprep.subr.mxu0 0.0
    %3071 = vmatpush1.msra.mxu0 0.0
    %3072 = vmatprep.subr.mxu0 0.0
    %3073 = vmatpush1.msra.mxu0 0.0
    %3074 = vmatprep.subr.mxu0 0.0
    %3075 = vmatpush1.msra.mxu0 %v3049
    %3076 = vmatprep.subr.mxu0 0.0
    %3077 = vmatpush1.msra.mxu0 %v3048
    %3078 = vmatprep.subr.mxu0 0.0
    %3079 = vmatpush1.msra.mxu0 %v3047
    %3080 = vmatprep.subr.mxu0 0.0
    %3081 = vmatpush1.msra.mxu0 %v3046
    %3082 = vmatprep.subr.mxu0 0.0
    %3083 = vmatpush2.msra.mxu0 0.0
    %3084 = vmatprep.subr.mxu0 0.0
    %3085 = vmatpush2.msra.mxu0 0.0
    %3086 = vmatprep.subr.mxu0 0.0
    %3087 = vmatpush2.msra.mxu0 0.0
    %3088 = vmatprep.subr.mxu0 0.0
    %3089 = vmatpush2.msra.mxu0 0.0
    %3090 = vmatprep.subr.mxu0 0.0
    %3091 = vmatpush2.msra.mxu0 0.0
    %3092 = vmatprep.subr.mxu0 0.0
    %3093 = vmatpush2.msra.mxu0 0.0
    %3094 = vmatprep.subr.mxu0 0.0
    %3095 = vmatpush2.msra.mxu0 0.0
    %3096 = vmatprep.subr.mxu0 0.0
    %3097 = vmatpush2.msra.mxu0 0.0
    %3098 = vmatprep.subr.mxu0 0.0
    %3099 = vmatpush2.msra.mxu0 0.0
    %3100 = vmatprep.subr.mxu0 0.0
    %3101 = vmatpush2.msra.mxu0 0.0
    %3102 = vmatprep.subr.mxu0 0.0
    %3103 = vmatpush2.msra.mxu0 0.0
    %3104 = vmatprep.subr.mxu0 0.0
    %3105 = vmatpush2.msra.mxu0 0.0
    %3106 = vmatprep.subr.mxu0 0.0
    %3107 = vmatpush2.msra.mxu0 0.0
    %3108 = vmatprep.subr.mxu0 0.0
    %3109 = vmatpush2.msra.mxu0 0.0
    %3110 = vmatprep.subr.mxu0 0.0
    %3111 = vmatpush2.msra.mxu0 0.0
    %3112 = vmatprep.subr.mxu0 0.0
    %3113 = vmatpush2.msra.mxu0 0.0
    %3114 = vmatprep.mubr.f32.mxu0 0.0
    %3115 = vmatmul.mubr.f32.gmra.mxu0 %v2965
    %v3116 = vpop.f32.mrf.mxu0
    %v3117 = vadd.f32 0.0, %v3116
    %v3118 = vpop.f32.mrf.mxu0
    %3119 = vdwg.mxu0
    %v3120 = vadd.f32 %v3045, %v3117
    %v3121 = vxor.u32 %v3120, 2147483648
    %v3122 = vmul.f32 %v3121, 1.442695
    %v3123 = vpow.pop %v3122
    %v3124 = vadd.f32 %v3123, 1.0
    %v3125 = vrcp.pop %v3124
    %v3126 = vmul.f32 1.0, %v3125
    %s3127 = scalar_lea.vmem [#allocation5], 56
    %v3128 = vld [vmem:[%s3127] sm:$0xff]
    %v3129 = vld [vmem:[%s770] sm:$0xff]
    %v3130 = vld [vmem:[%s770 + $0x8] sm:$0xff]
    %v3131 = vld [vmem:[%s770 + $0x10] sm:$0xff]
    %v3132 = vld [vmem:[%s770 + $0x18] sm:$0xff]
    %3133 = vmatprep.subr.mxu0 0.0
    %3134 = vmatpush1.msra.mxu0 0.0
    %3135 = vmatprep.subr.mxu0 0.0
    %3136 = vmatpush1.msra.mxu0 0.0
    %3137 = vmatprep.subr.mxu0 0.0
    %3138 = vmatpush1.msra.mxu0 0.0
    %3139 = vmatprep.subr.mxu0 0.0
    %3140 = vmatpush1.msra.mxu0 0.0
    %3141 = vmatprep.subr.mxu0 0.0
    %3142 = vmatpush1.msra.mxu0 0.0
    %3143 = vmatprep.subr.mxu0 0.0
    %3144 = vmatpush1.msra.mxu0 0.0
    %3145 = vmatprep.subr.mxu0 0.0
    %3146 = vmatpush1.msra.mxu0 0.0
    %3147 = vmatprep.subr.mxu0 0.0
    %3148 = vmatpush1.msra.mxu0 0.0
    %3149 = vmatprep.subr.mxu0 0.0
    %3150 = vmatpush1.msra.mxu0 0.0
    %3151 = vmatprep.subr.mxu0 0.0
    %3152 = vmatpush1.msra.mxu0 0.0
    %3153 = vmatprep.subr.mxu0 0.0
    %3154 = vmatpush1.msra.mxu0 0.0
    %3155 = vmatprep.subr.mxu0 0.0
    %3156 = vmatpush1.msra.mxu0 0.0
    %3157 = vmatprep.subr.mxu0 0.0
    %3158 = vmatpush1.msra.mxu0 %v3132
    %3159 = vmatprep.subr.mxu0 0.0
    %3160 = vmatpush1.msra.mxu0 %v3131
    %3161 = vmatprep.subr.mxu0 0.0
    %3162 = vmatpush1.msra.mxu0 %v3130
    %3163 = vmatprep.subr.mxu0 0.0
    %3164 = vmatpush1.msra.mxu0 %v3129
    %3165 = vmatprep.subr.mxu0 0.0
    %3166 = vmatpush2.msra.mxu0 0.0
    %3167 = vmatprep.subr.mxu0 0.0
    %3168 = vmatpush2.msra.mxu0 0.0
    %3169 = vmatprep.subr.mxu0 0.0
    %3170 = vmatpush2.msra.mxu0 0.0
    %3171 = vmatprep.subr.mxu0 0.0
    %3172 = vmatpush2.msra.mxu0 0.0
    %3173 = vmatprep.subr.mxu0 0.0
    %3174 = vmatpush2.msra.mxu0 0.0
    %3175 = vmatprep.subr.mxu0 0.0
    %3176 = vmatpush2.msra.mxu0 0.0
    %3177 = vmatprep.subr.mxu0 0.0
    %3178 = vmatpush2.msra.mxu0 0.0
    %3179 = vmatprep.subr.mxu0 0.0
    %3180 = vmatpush2.msra.mxu0 0.0
    %3181 = vmatprep.subr.mxu0 0.0
    %3182 = vmatpush2.msra.mxu0 0.0
    %3183 = vmatprep.subr.mxu0 0.0
    %3184 = vmatpush2.msra.mxu0 0.0
    %3185 = vmatprep.subr.mxu0 0.0
    %3186 = vmatpush2.msra.mxu0 0.0
    %3187 = vmatprep.subr.mxu0 0.0
    %3188 = vmatpush2.msra.mxu0 0.0
    %3189 = vmatprep.subr.mxu0 0.0
    %3190 = vmatpush2.msra.mxu0 0.0
    %3191 = vmatprep.subr.mxu0 0.0
    %3192 = vmatpush2.msra.mxu0 0.0
    %3193 = vmatprep.subr.mxu0 0.0
    %3194 = vmatpush2.msra.mxu0 0.0
    %3195 = vmatprep.subr.mxu0 0.0
    %3196 = vmatpush2.msra.mxu0 0.0
    %3197 = vmatprep.mubr.f32.mxu0 0.0
    %3198 = vmatmul.mubr.f32.gmra.mxu0 %v2965
    %v3199 = vpop.f32.mrf.mxu0
    %v3200 = vadd.f32 0.0, %v3199
    %v3201 = vpop.f32.mrf.mxu0
    %3202 = vdwg.mxu0
    %v3203 = vadd.f32 %v3128, %v3200
    %v3204 = vtanh.pop %v3203
    %s3205 = scalar_lea.vmem [#allocation6], 56
    %v3206 = vld [vmem:[%s3205] sm:$0xff]
    %v3207 = vld [vmem:[%s848] sm:$0xff]
    %v3208 = vld [vmem:[%s848 + $0x8] sm:$0xff]
    %v3209 = vld [vmem:[%s848 + $0x10] sm:$0xff]
    %v3210 = vld [vmem:[%s848 + $0x18] sm:$0xff]
    %3211 = vmatprep.subr.mxu0 0.0
    %3212 = vmatpush1.msra.mxu0 0.0
    %3213 = vmatprep.subr.mxu0 0.0
    %3214 = vmatpush1.msra.mxu0 0.0
    %3215 = vmatprep.subr.mxu0 0.0
    %3216 = vmatpush1.msra.mxu0 0.0
    %3217 = vmatprep.subr.mxu0 0.0
    %3218 = vmatpush1.msra.mxu0 0.0
    %3219 = vmatprep.subr.mxu0 0.0
    %3220 = vmatpush1.msra.mxu0 0.0
    %3221 = vmatprep.subr.mxu0 0.0
    %3222 = vmatpush1.msra.mxu0 0.0
    %3223 = vmatprep.subr.mxu0 0.0
    %3224 = vmatpush1.msra.mxu0 0.0
    %3225 = vmatprep.subr.mxu0 0.0
    %3226 = vmatpush1.msra.mxu0 0.0
    %3227 = vmatprep.subr.mxu0 0.0
    %3228 = vmatpush1.msra.mxu0 0.0
    %3229 = vmatprep.subr.mxu0 0.0
    %3230 = vmatpush1.msra.mxu0 0.0
    %3231 = vmatprep.subr.mxu0 0.0
    %3232 = vmatpush1.msra.mxu0 0.0
    %3233 = vmatprep.subr.mxu0 0.0
    %3234 = vmatpush1.msra.mxu0 0.0
    %3235 = vmatprep.subr.mxu0 0.0
    %3236 = vmatpush1.msra.mxu0 %v3210
    %3237 = vmatprep.subr.mxu0 0.0
    %3238 = vmatpush1.msra.mxu0 %v3209
    %3239 = vmatprep.subr.mxu0 0.0
    %3240 = vmatpush1.msra.mxu0 %v3208
    %3241 = vmatprep.subr.mxu0 0.0
    %3242 = vmatpush1.msra.mxu0 %v3207
    %3243 = vmatprep.subr.mxu0 0.0
    %3244 = vmatpush2.msra.mxu0 0.0
    %3245 = vmatprep.subr.mxu0 0.0
    %3246 = vmatpush2.msra.mxu0 0.0
    %3247 = vmatprep.subr.mxu0 0.0
    %3248 = vmatpush2.msra.mxu0 0.0
    %3249 = vmatprep.subr.mxu0 0.0
    %3250 = vmatpush2.msra.mxu0 0.0
    %3251 = vmatprep.subr.mxu0 0.0
    %3252 = vmatpush2.msra.mxu0 0.0
    %3253 = vmatprep.subr.mxu0 0.0
    %3254 = vmatpush2.msra.mxu0 0.0
    %3255 = vmatprep.subr.mxu0 0.0
    %3256 = vmatpush2.msra.mxu0 0.0
    %3257 = vmatprep.subr.mxu0 0.0
    %3258 = vmatpush2.msra.mxu0 0.0
    %3259 = vmatprep.subr.mxu0 0.0
    %3260 = vmatpush2.msra.mxu0 0.0
    %3261 = vmatprep.subr.mxu0 0.0
    %3262 = vmatpush2.msra.mxu0 0.0
    %3263 = vmatprep.subr.mxu0 0.0
    %3264 = vmatpush2.msra.mxu0 0.0
    %3265 = vmatprep.subr.mxu0 0.0
    %3266 = vmatpush2.msra.mxu0 0.0
    %3267 = vmatprep.subr.mxu0 0.0
    %3268 = vmatpush2.msra.mxu0 0.0
    %3269 = vmatprep.subr.mxu0 0.0
    %3270 = vmatpush2.msra.mxu0 0.0
    %3271 = vmatprep.subr.mxu0 0.0
    %3272 = vmatpush2.msra.mxu0 0.0
    %3273 = vmatprep.subr.mxu0 0.0
    %3274 = vmatpush2.msra.mxu0 0.0
    %3275 = vmatprep.mubr.f32.mxu0 0.0
    %3276 = vmatmul.mubr.f32.gmra.mxu0 %v2965
    %v3277 = vpop.f32.mrf.mxu0
    %v3278 = vadd.f32 0.0, %v3277
    %v3279 = vpop.f32.mrf.mxu0
    %3280 = vdwg.mxu0
    %v3281 = vadd.f32 %v3206, %v3278
    %v3282 = vxor.u32 %v3281, 2147483648
    %v3283 = vmul.f32 %v3282, 1.442695
    %v3284 = vpow.pop %v3283
    %v3285 = vadd.f32 %v3284, 1.0
    %v3286 = vrcp.pop %v3285
    %v3287 = vmul.f32 1.0, %v3286
    %v3288 = vmul.f32 %v3126, %v2953
    %v3289 = vmul.f32 %v3043, %v3204
    %v3290 = vadd.f32 %v3288, %v3289
    %v3291 = vtanh.pop %v3290
    %v3292 = vmul.f32 %v3287, %v3291
    %s3293 = scalar_lea.vmem [#allocation2], 56
    %3294 = vst.msk [vmem:[%s3293] sm:$0xff] %vm220, %v3292
    %v3295 = vld [vmem:[#allocation2] sm:$0xff]
    %v3296 = vld [vmem:[#allocation2 + $0x8] sm:$0xff]
    %v3297 = vld [vmem:[#allocation2 + $0x10] sm:$0xff]
    %v3298 = vld [vmem:[#allocation2 + $0x18] sm:$0xff]
    %v3299 = vld [vmem:[#allocation2 + $0x20] sm:$0xff]
    %v3300 = vld [vmem:[#allocation2 + $0x28] sm:$0xff]
    %v3301 = vld [vmem:[#allocation2 + $0x30] sm:$0xff]
    %v3302 = vld [vmem:[#allocation2 + $0x38] sm:$0xff]
    %v3303 = vld [vmem:[#allocation9] sm:$0xff]
    %v3304 = vld [vmem:[#allocation9 + $0x8] sm:$0xff]
    %v3305 = vld [vmem:[#allocation9 + $0x10] sm:$0xff]
    %v3306 = vld [vmem:[#allocation9 + $0x18] sm:$0xff]
    %v3307 = vld [vmem:[%s6] sm:$0x1]
    %v3309 = vlaneseq
    %v3310 = vshrl.u32 %v3309, 7
    %v3311 = vsub.s32 0, %v3310
    %v3312 = vrot.slane %v3307, %v3311
    %v3315 = vsel %vm220, %v3295, 0
    %v3318 = vsel %vm220, %v3296, 0
    %v3321 = vsel %vm220, %v3297, 0
    %v3324 = vsel %vm220, %v3298, 0
    %v3327 = vsel %vm220, %v3299, 0
    %v3330 = vsel %vm220, %v3300, 0
    %v3333 = vsel %vm220, %v3301, 0
    %v3336 = vsel %vm220, %v3302, 0
    %3338 = vmatprep.subr.mxu0 0.0
    %3339 = vmatpush1.msra.mxu0 0.0
    %3340 = vmatprep.subr.mxu0 0.0
    %3341 = vmatpush1.msra.mxu0 0.0
    %3342 = vmatprep.subr.mxu0 0.0
    %3343 = vmatpush1.msra.mxu0 0.0
    %3344 = vmatprep.subr.mxu0 0.0
    %3345 = vmatpush1.msra.mxu0 0.0
    %3346 = vmatprep.subr.mxu0 0.0
    %3347 = vmatpush1.msra.mxu0 0.0
    %3348 = vmatprep.subr.mxu0 0.0
    %3349 = vmatpush1.msra.mxu0 0.0
    %3350 = vmatprep.subr.mxu0 0.0
    %3351 = vmatpush1.msra.mxu0 0.0
    %3352 = vmatprep.subr.mxu0 0.0
    %3353 = vmatpush1.msra.mxu0 0.0
    %3354 = vmatprep.subr.mxu0 0.0
    %3355 = vmatpush1.msra.mxu0 0.0
    %3356 = vmatprep.subr.mxu0 0.0
    %3357 = vmatpush1.msra.mxu0 0.0
    %3358 = vmatprep.subr.mxu0 0.0
    %3359 = vmatpush1.msra.mxu0 0.0
    %3360 = vmatprep.subr.mxu0 0.0
    %3361 = vmatpush1.msra.mxu0 0.0
    %3362 = vmatprep.subr.mxu0 0.0
    %3363 = vmatpush1.msra.mxu0 %v3306
    %3364 = vmatprep.subr.mxu0 0.0
    %3365 = vmatpush1.msra.mxu0 %v3305
    %3366 = vmatprep.subr.mxu0 0.0
    %3367 = vmatpush1.msra.mxu0 %v3304
    %3368 = vmatprep.subr.mxu0 0.0
    %3369 = vmatpush1.msra.mxu0 %v3303
    %3370 = vmatprep.subr.mxu0 0.0
    %3371 = vmatpush2.msra.mxu0 0.0
    %3372 = vmatprep.subr.mxu0 0.0
    %3373 = vmatpush2.msra.mxu0 0.0
    %3374 = vmatprep.subr.mxu0 0.0
    %3375 = vmatpush2.msra.mxu0 0.0
    %3376 = vmatprep.subr.mxu0 0.0
    %3377 = vmatpush2.msra.mxu0 0.0
    %3378 = vmatprep.subr.mxu0 0.0
    %3379 = vmatpush2.msra.mxu0 0.0
    %3380 = vmatprep.subr.mxu0 0.0
    %3381 = vmatpush2.msra.mxu0 0.0
    %3382 = vmatprep.subr.mxu0 0.0
    %3383 = vmatpush2.msra.mxu0 0.0
    %3384 = vmatprep.subr.mxu0 0.0
    %3385 = vmatpush2.msra.mxu0 0.0
    %3386 = vmatprep.subr.mxu0 0.0
    %3387 = vmatpush2.msra.mxu0 0.0
    %3388 = vmatprep.subr.mxu0 0.0
    %3389 = vmatpush2.msra.mxu0 0.0
    %3390 = vmatprep.subr.mxu0 0.0
    %3391 = vmatpush2.msra.mxu0 0.0
    %3392 = vmatprep.subr.mxu0 0.0
    %3393 = vmatpush2.msra.mxu0 0.0
    %3394 = vmatprep.subr.mxu0 0.0
    %3395 = vmatpush2.msra.mxu0 0.0
    %3396 = vmatprep.subr.mxu0 0.0
    %3397 = vmatpush2.msra.mxu0 0.0
    %3398 = vmatprep.subr.mxu0 0.0
    %3399 = vmatpush2.msra.mxu0 0.0
    %3400 = vmatprep.subr.mxu0 0.0
    %3401 = vmatpush2.msra.mxu0 0.0
    %3402 = vmatprep.mubr.f32.mxu0 0.0
    %3403 = vmatmul.mubr.f32.gmra.mxu0 %v3315
    %v3404 = vpop.f32.mrf.mxu0
    %v3405 = vadd.f32 %v3312, %v3404
    %v3406 = vpop.f32.mrf.mxu0
    %3407 = vmatprep.mubr.f32.mxu0 0.0
    %3408 = vmatmul.mubr.f32.gmra.mxu0 %v3318
    %v3409 = vpop.f32.mrf.mxu0
    %v3410 = vadd.f32 %v3312, %v3409
    %v3411 = vpop.f32.mrf.mxu0
    %3412 = vmatprep.mubr.f32.mxu0 0.0
    %3413 = vmatmul.mubr.f32.gmra.mxu0 %v3321
    %v3414 = vpop.f32.mrf.mxu0
    %v3415 = vadd.f32 %v3312, %v3414
    %v3416 = vpop.f32.mrf.mxu0
    %3417 = vmatprep.mubr.f32.mxu0 0.0
    %3418 = vmatmul.mubr.f32.gmra.mxu0 %v3324
    %v3419 = vpop.f32.mrf.mxu0
    %v3420 = vadd.f32 %v3312, %v3419
    %v3421 = vpop.f32.mrf.mxu0
    %3422 = vmatprep.mubr.f32.mxu0 0.0
    %3423 = vmatmul.mubr.f32.gmra.mxu0 %v3327
    %v3424 = vpop.f32.mrf.mxu0
    %v3425 = vadd.f32 %v3312, %v3424
    %v3426 = vpop.f32.mrf.mxu0
    %3427 = vmatprep.mubr.f32.mxu0 0.0
    %3428 = vmatmul.mubr.f32.gmra.mxu0 %v3330
    %v3429 = vpop.f32.mrf.mxu0
    %v3430 = vadd.f32 %v3312, %v3429
    %v3431 = vpop.f32.mrf.mxu0
    %3432 = vmatprep.mubr.f32.mxu0 0.0
    %3433 = vmatmul.mubr.f32.gmra.mxu0 %v3333
    %v3434 = vpop.f32.mrf.mxu0
    %v3435 = vadd.f32 %v3312, %v3434
    %v3436 = vpop.f32.mrf.mxu0
    %3437 = vmatprep.mubr.f32.mxu0 0.0
    %3438 = vmatmul.mubr.f32.gmra.mxu0 %v3336
    %v3439 = vpop.f32.mrf.mxu0
    %v3440 = vadd.f32 %v3312, %v3439
    %v3441 = vpop.f32.mrf.mxu0
    %3442 = vdwg.mxu0
    %3443 = vst.msk [vmem:[#allocation3] sm:$0xff] %vm220, %v3405
    %3444 = vst.msk [vmem:[#allocation3 + $0x8] sm:$0xff] %vm220, %v3410
    %3445 = vst.msk [vmem:[#allocation3 + $0x10] sm:$0xff] %vm220, %v3415
    %3446 = vst.msk [vmem:[#allocation3 + $0x18] sm:$0xff] %vm220, %v3420
    %3447 = vst.msk [vmem:[#allocation3 + $0x20] sm:$0xff] %vm220, %v3425
    %3448 = vst.msk [vmem:[#allocation3 + $0x28] sm:$0xff] %vm220, %v3430
    %3449 = vst.msk [vmem:[#allocation3 + $0x30] sm:$0xff] %vm220, %v3435
    %3450 = vst.msk [vmem:[#allocation3 + $0x38] sm:$0xff] %vm220, %v3440
    %s3451 = scalar_lea.vmem [#allocation9], 32
    %v3452 = vld [vmem:[%s3451] sm:$0xff]
    %v3453 = vld [vmem:[%s3451 + $0x8] sm:$0xff]
    %v3454 = vld [vmem:[%s3451 + $0x10] sm:$0xff]
    %v3455 = vld [vmem:[%s3451 + $0x18] sm:$0xff]
    %s3456 = scalar_lea.vmem %s6, 1
    %v3457 = vld [vmem:[%s3456] sm:$0x1]
    %v3459 = vlaneseq
    %v3460 = vshrl.u32 %v3459, 7
    %v3461 = vsub.s32 0, %v3460
    %v3462 = vrot.slane %v3457, %v3461
    %3464 = vmatprep.subr.mxu0 0.0
    %3465 = vmatpush1.msra.mxu0 0.0
    %3466 = vmatprep.subr.mxu0 0.0
    %3467 = vmatpush1.msra.mxu0 0.0
    %3468 = vmatprep.subr.mxu0 0.0
    %3469 = vmatpush1.msra.mxu0 0.0
    %3470 = vmatprep.subr.mxu0 0.0
    %3471 = vmatpush1.msra.mxu0 0.0
    %3472 = vmatprep.subr.mxu0 0.0
    %3473 = vmatpush1.msra.mxu0 0.0
    %3474 = vmatprep.subr.mxu0 0.0
    %3475 = vmatpush1.msra.mxu0 0.0
    %3476 = vmatprep.subr.mxu0 0.0
    %3477 = vmatpush1.msra.mxu0 0.0
    %3478 = vmatprep.subr.mxu0 0.0
    %3479 = vmatpush1.msra.mxu0 0.0
    %3480 = vmatprep.subr.mxu0 0.0
    %3481 = vmatpush1.msra.mxu0 0.0
    %3482 = vmatprep.subr.mxu0 0.0
    %3483 = vmatpush1.msra.mxu0 0.0
    %3484 = vmatprep.subr.mxu0 0.0
    %3485 = vmatpush1.msra.mxu0 0.0
    %3486 = vmatprep.subr.mxu0 0.0
    %3487 = vmatpush1.msra.mxu0 0.0
    %3488 = vmatprep.subr.mxu0 0.0
    %3489 = vmatpush1.msra.mxu0 %v3455
    %3490 = vmatprep.subr.mxu0 0.0
    %3491 = vmatpush1.msra.mxu0 %v3454
    %3492 = vmatprep.subr.mxu0 0.0
    %3493 = vmatpush1.msra.mxu0 %v3453
    %3494 = vmatprep.subr.mxu0 0.0
    %3495 = vmatpush1.msra.mxu0 %v3452
    %3496 = vmatprep.subr.mxu0 0.0
    %3497 = vmatpush2.msra.mxu0 0.0
    %3498 = vmatprep.subr.mxu0 0.0
    %3499 = vmatpush2.msra.mxu0 0.0
    %3500 = vmatprep.subr.mxu0 0.0
    %3501 = vmatpush2.msra.mxu0 0.0
    %3502 = vmatprep.subr.mxu0 0.0
    %3503 = vmatpush2.msra.mxu0 0.0
    %3504 = vmatprep.subr.mxu0 0.0
    %3505 = vmatpush2.msra.mxu0 0.0
    %3506 = vmatprep.subr.mxu0 0.0
    %3507 = vmatpush2.msra.mxu0 0.0
    %3508 = vmatprep.subr.mxu0 0.0
    %3509 = vmatpush2.msra.mxu0 0.0
    %3510 = vmatprep.subr.mxu0 0.0
    %3511 = vmatpush2.msra.mxu0 0.0
    %3512 = vmatprep.subr.mxu0 0.0
    %3513 = vmatpush2.msra.mxu0 0.0
    %3514 = vmatprep.subr.mxu0 0.0
    %3515 = vmatpush2.msra.mxu0 0.0
    %3516 = vmatprep.subr.mxu0 0.0
    %3517 = vmatpush2.msra.mxu0 0.0
    %3518 = vmatprep.subr.mxu0 0.0
    %3519 = vmatpush2.msra.mxu0 0.0
    %3520 = vmatprep.subr.mxu0 0.0
    %3521 = vmatpush2.msra.mxu0 0.0
    %3522 = vmatprep.subr.mxu0 0.0
    %3523 = vmatpush2.msra.mxu0 0.0
    %3524 = vmatprep.subr.mxu0 0.0
    %3525 = vmatpush2.msra.mxu0 0.0
    %3526 = vmatprep.subr.mxu0 0.0
    %3527 = vmatpush2.msra.mxu0 0.0
    %3528 = vmatprep.mubr.f32.mxu0 0.0
    %3529 = vmatmul.mubr.f32.gmra.mxu0 %v3315
    %v3530 = vpop.f32.mrf.mxu0
    %v3531 = vadd.f32 %v3462, %v3530
    %v3532 = vpop.f32.mrf.mxu0
    %3533 = vmatprep.mubr.f32.mxu0 0.0
    %3534 = vmatmul.mubr.f32.gmra.mxu0 %v3318
    %v3535 = vpop.f32.mrf.mxu0
    %v3536 = vadd.f32 %v3462, %v3535
    %v3537 = vpop.f32.mrf.mxu0
    %3538 = vmatprep.mubr.f32.mxu0 0.0
    %3539 = vmatmul.mubr.f32.gmra.mxu0 %v3321
    %v3540 = vpop.f32.mrf.mxu0
    %v3541 = vadd.f32 %v3462, %v3540
    %v3542 = vpop.f32.mrf.mxu0
    %3543 = vmatprep.mubr.f32.mxu0 0.0
    %3544 = vmatmul.mubr.f32.gmra.mxu0 %v3324
    %v3545 = vpop.f32.mrf.mxu0
    %v3546 = vadd.f32 %v3462, %v3545
    %v3547 = vpop.f32.mrf.mxu0
    %3548 = vmatprep.mubr.f32.mxu0 0.0
    %3549 = vmatmul.mubr.f32.gmra.mxu0 %v3327
    %v3550 = vpop.f32.mrf.mxu0
    %v3551 = vadd.f32 %v3462, %v3550
    %v3552 = vpop.f32.mrf.mxu0
    %3553 = vmatprep.mubr.f32.mxu0 0.0
    %3554 = vmatmul.mubr.f32.gmra.mxu0 %v3330
    %v3555 = vpop.f32.mrf.mxu0
    %v3556 = vadd.f32 %v3462, %v3555
    %v3557 = vpop.f32.mrf.mxu0
    %3558 = vmatprep.mubr.f32.mxu0 0.0
    %3559 = vmatmul.mubr.f32.gmra.mxu0 %v3333
    %v3560 = vpop.f32.mrf.mxu0
    %v3561 = vadd.f32 %v3462, %v3560
    %v3562 = vpop.f32.mrf.mxu0
    %3563 = vmatprep.mubr.f32.mxu0 0.0
    %3564 = vmatmul.mubr.f32.gmra.mxu0 %v3336
    %v3565 = vpop.f32.mrf.mxu0
    %v3566 = vadd.f32 %v3462, %v3565
    %v3567 = vpop.f32.mrf.mxu0
    %3568 = vdwg.mxu0
    %3569 = vst.msk [vmem:[#allocation4] sm:$0xff] %vm220, %v3531
    %3570 = vst.msk [vmem:[#allocation4 + $0x8] sm:$0xff] %vm220, %v3536
    %3571 = vst.msk [vmem:[#allocation4 + $0x10] sm:$0xff] %vm220, %v3541
    %3572 = vst.msk [vmem:[#allocation4 + $0x18] sm:$0xff] %vm220, %v3546
    %3573 = vst.msk [vmem:[#allocation4 + $0x20] sm:$0xff] %vm220, %v3551
    %3574 = vst.msk [vmem:[#allocation4 + $0x28] sm:$0xff] %vm220, %v3556
    %3575 = vst.msk [vmem:[#allocation4 + $0x30] sm:$0xff] %vm220, %v3561
    %3576 = vst.msk [vmem:[#allocation4 + $0x38] sm:$0xff] %vm220, %v3566
    %s3577 = scalar_lea.vmem [#allocation9], 64
    %v3578 = vld [vmem:[%s3577] sm:$0xff]
    %v3579 = vld [vmem:[%s3577 + $0x8] sm:$0xff]
    %v3580 = vld [vmem:[%s3577 + $0x10] sm:$0xff]
    %v3581 = vld [vmem:[%s3577 + $0x18] sm:$0xff]
    %s3582 = scalar_lea.vmem %s6, 2
    %v3583 = vld [vmem:[%s3582] sm:$0x1]
    %v3585 = vlaneseq
    %v3586 = vshrl.u32 %v3585, 7
    %v3587 = vsub.s32 0, %v3586
    %v3588 = vrot.slane %v3583, %v3587
    %3590 = vmatprep.subr.mxu0 0.0
    %3591 = vmatpush1.msra.mxu0 0.0
    %3592 = vmatprep.subr.mxu0 0.0
    %3593 = vmatpush1.msra.mxu0 0.0
    %3594 = vmatprep.subr.mxu0 0.0
    %3595 = vmatpush1.msra.mxu0 0.0
    %3596 = vmatprep.subr.mxu0 0.0
    %3597 = vmatpush1.msra.mxu0 0.0
    %3598 = vmatprep.subr.mxu0 0.0
    %3599 = vmatpush1.msra.mxu0 0.0
    %3600 = vmatprep.subr.mxu0 0.0
    %3601 = vmatpush1.msra.mxu0 0.0
    %3602 = vmatprep.subr.mxu0 0.0
    %3603 = vmatpush1.msra.mxu0 0.0
    %3604 = vmatprep.subr.mxu0 0.0
    %3605 = vmatpush1.msra.mxu0 0.0
    %3606 = vmatprep.subr.mxu0 0.0
    %3607 = vmatpush1.msra.mxu0 0.0
    %3608 = vmatprep.subr.mxu0 0.0
    %3609 = vmatpush1.msra.mxu0 0.0
    %3610 = vmatprep.subr.mxu0 0.0
    %3611 = vmatpush1.msra.mxu0 0.0
    %3612 = vmatprep.subr.mxu0 0.0
    %3613 = vmatpush1.msra.mxu0 0.0
    %3614 = vmatprep.subr.mxu0 0.0
    %3615 = vmatpush1.msra.mxu0 %v3581
    %3616 = vmatprep.subr.mxu0 0.0
    %3617 = vmatpush1.msra.mxu0 %v3580
    %3618 = vmatprep.subr.mxu0 0.0
    %3619 = vmatpush1.msra.mxu0 %v3579
    %3620 = vmatprep.subr.mxu0 0.0
    %3621 = vmatpush1.msra.mxu0 %v3578
    %3622 = vmatprep.subr.mxu0 0.0
    %3623 = vmatpush2.msra.mxu0 0.0
    %3624 = vmatprep.subr.mxu0 0.0
    %3625 = vmatpush2.msra.mxu0 0.0
    %3626 = vmatprep.subr.mxu0 0.0
    %3627 = vmatpush2.msra.mxu0 0.0
    %3628 = vmatprep.subr.mxu0 0.0
    %3629 = vmatpush2.msra.mxu0 0.0
    %3630 = vmatprep.subr.mxu0 0.0
    %3631 = vmatpush2.msra.mxu0 0.0
    %3632 = vmatprep.subr.mxu0 0.0
    %3633 = vmatpush2.msra.mxu0 0.0
    %3634 = vmatprep.subr.mxu0 0.0
    %3635 = vmatpush2.msra.mxu0 0.0
    %3636 = vmatprep.subr.mxu0 0.0
    %3637 = vmatpush2.msra.mxu0 0.0
    %3638 = vmatprep.subr.mxu0 0.0
    %3639 = vmatpush2.msra.mxu0 0.0
    %3640 = vmatprep.subr.mxu0 0.0
    %3641 = vmatpush2.msra.mxu0 0.0
    %3642 = vmatprep.subr.mxu0 0.0
    %3643 = vmatpush2.msra.mxu0 0.0
    %3644 = vmatprep.subr.mxu0 0.0
    %3645 = vmatpush2.msra.mxu0 0.0
    %3646 = vmatprep.subr.mxu0 0.0
    %3647 = vmatpush2.msra.mxu0 0.0
    %3648 = vmatprep.subr.mxu0 0.0
    %3649 = vmatpush2.msra.mxu0 0.0
    %3650 = vmatprep.subr.mxu0 0.0
    %3651 = vmatpush2.msra.mxu0 0.0
    %3652 = vmatprep.subr.mxu0 0.0
    %3653 = vmatpush2.msra.mxu0 0.0
    %3654 = vmatprep.mubr.f32.mxu0 0.0
    %3655 = vmatmul.mubr.f32.gmra.mxu0 %v3315
    %v3656 = vpop.f32.mrf.mxu0
    %v3657 = vadd.f32 %v3588, %v3656
    %v3658 = vpop.f32.mrf.mxu0
    %3659 = vmatprep.mubr.f32.mxu0 0.0
    %3660 = vmatmul.mubr.f32.gmra.mxu0 %v3318
    %v3661 = vpop.f32.mrf.mxu0
    %v3662 = vadd.f32 %v3588, %v3661
    %v3663 = vpop.f32.mrf.mxu0
    %3664 = vmatprep.mubr.f32.mxu0 0.0
    %3665 = vmatmul.mubr.f32.gmra.mxu0 %v3321
    %v3666 = vpop.f32.mrf.mxu0
    %v3667 = vadd.f32 %v3588, %v3666
    %v3668 = vpop.f32.mrf.mxu0
    %3669 = vmatprep.mubr.f32.mxu0 0.0
    %3670 = vmatmul.mubr.f32.gmra.mxu0 %v3324
    %v3671 = vpop.f32.mrf.mxu0
    %v3672 = vadd.f32 %v3588, %v3671
    %v3673 = vpop.f32.mrf.mxu0
    %3674 = vmatprep.mubr.f32.mxu0 0.0
    %3675 = vmatmul.mubr.f32.gmra.mxu0 %v3327
    %v3676 = vpop.f32.mrf.mxu0
    %v3677 = vadd.f32 %v3588, %v3676
    %v3678 = vpop.f32.mrf.mxu0
    %3679 = vmatprep.mubr.f32.mxu0 0.0
    %3680 = vmatmul.mubr.f32.gmra.mxu0 %v3330
    %v3681 = vpop.f32.mrf.mxu0
    %v3682 = vadd.f32 %v3588, %v3681
    %v3683 = vpop.f32.mrf.mxu0
    %3684 = vmatprep.mubr.f32.mxu0 0.0
    %3685 = vmatmul.mubr.f32.gmra.mxu0 %v3333
    %v3686 = vpop.f32.mrf.mxu0
    %v3687 = vadd.f32 %v3588, %v3686
    %v3688 = vpop.f32.mrf.mxu0
    %3689 = vmatprep.mubr.f32.mxu0 0.0
    %3690 = vmatmul.mubr.f32.gmra.mxu0 %v3336
    %v3691 = vpop.f32.mrf.mxu0
    %v3692 = vadd.f32 %v3588, %v3691
    %v3693 = vpop.f32.mrf.mxu0
    %3694 = vdwg.mxu0
    %3695 = vst.msk [vmem:[#allocation5] sm:$0xff] %vm220, %v3657
    %3696 = vst.msk [vmem:[#allocation5 + $0x8] sm:$0xff] %vm220, %v3662
    %3697 = vst.msk [vmem:[#allocation5 + $0x10] sm:$0xff] %vm220, %v3667
    %3698 = vst.msk [vmem:[#allocation5 + $0x18] sm:$0xff] %vm220, %v3672
    %3699 = vst.msk [vmem:[#allocation5 + $0x20] sm:$0xff] %vm220, %v3677
    %3700 = vst.msk [vmem:[#allocation5 + $0x28] sm:$0xff] %vm220, %v3682
    %3701 = vst.msk [vmem:[#allocation5 + $0x30] sm:$0xff] %vm220, %v3687
    %3702 = vst.msk [vmem:[#allocation5 + $0x38] sm:$0xff] %vm220, %v3692
    %s3703 = scalar_lea.vmem [#allocation9], 96
    %v3704 = vld [vmem:[%s3703] sm:$0xff]
    %v3705 = vld [vmem:[%s3703 + $0x8] sm:$0xff]
    %v3706 = vld [vmem:[%s3703 + $0x10] sm:$0xff]
    %v3707 = vld [vmem:[%s3703 + $0x18] sm:$0xff]
    %s3708 = scalar_lea.vmem %s6, 3
    %v3709 = vld [vmem:[%s3708] sm:$0x1]
    %v3711 = vlaneseq
    %v3712 = vshrl.u32 %v3711, 7
    %v3713 = vsub.s32 0, %v3712
    %v3714 = vrot.slane %v3709, %v3713
    %3716 = vmatprep.subr.mxu0 0.0
    %3717 = vmatpush1.msra.mxu0 0.0
    %3718 = vmatprep.subr.mxu0 0.0
    %3719 = vmatpush1.msra.mxu0 0.0
    %3720 = vmatprep.subr.mxu0 0.0
    %3721 = vmatpush1.msra.mxu0 0.0
    %3722 = vmatprep.subr.mxu0 0.0
    %3723 = vmatpush1.msra.mxu0 0.0
    %3724 = vmatprep.subr.mxu0 0.0
    %3725 = vmatpush1.msra.mxu0 0.0
    %3726 = vmatprep.subr.mxu0 0.0
    %3727 = vmatpush1.msra.mxu0 0.0
    %3728 = vmatprep.subr.mxu0 0.0
    %3729 = vmatpush1.msra.mxu0 0.0
    %3730 = vmatprep.subr.mxu0 0.0
    %3731 = vmatpush1.msra.mxu0 0.0
    %3732 = vmatprep.subr.mxu0 0.0
    %3733 = vmatpush1.msra.mxu0 0.0
    %3734 = vmatprep.subr.mxu0 0.0
    %3735 = vmatpush1.msra.mxu0 0.0
    %3736 = vmatprep.subr.mxu0 0.0
    %3737 = vmatpush1.msra.mxu0 0.0
    %3738 = vmatprep.subr.mxu0 0.0
    %3739 = vmatpush1.msra.mxu0 0.0
    %3740 = vmatprep.subr.mxu0 0.0
    %3741 = vmatpush1.msra.mxu0 %v3707
    %3742 = vmatprep.subr.mxu0 0.0
    %3743 = vmatpush1.msra.mxu0 %v3706
    %3744 = vmatprep.subr.mxu0 0.0
    %3745 = vmatpush1.msra.mxu0 %v3705
    %3746 = vmatprep.subr.mxu0 0.0
    %3747 = vmatpush1.msra.mxu0 %v3704
    %3748 = vmatprep.subr.mxu0 0.0
    %3749 = vmatpush2.msra.mxu0 0.0
    %3750 = vmatprep.subr.mxu0 0.0
    %3751 = vmatpush2.msra.mxu0 0.0
    %3752 = vmatprep.subr.mxu0 0.0
    %3753 = vmatpush2.msra.mxu0 0.0
    %3754 = vmatprep.subr.mxu0 0.0
    %3755 = vmatpush2.msra.mxu0 0.0
    %3756 = vmatprep.subr.mxu0 0.0
    %3757 = vmatpush2.msra.mxu0 0.0
    %3758 = vmatprep.subr.mxu0 0.0
    %3759 = vmatpush2.msra.mxu0 0.0
    %3760 = vmatprep.subr.mxu0 0.0
    %3761 = vmatpush2.msra.mxu0 0.0
    %3762 = vmatprep.subr.mxu0 0.0
    %3763 = vmatpush2.msra.mxu0 0.0
    %3764 = vmatprep.subr.mxu0 0.0
    %3765 = vmatpush2.msra.mxu0 0.0
    %3766 = vmatprep.subr.mxu0 0.0
    %3767 = vmatpush2.msra.mxu0 0.0
    %3768 = vmatprep.subr.mxu0 0.0
    %3769 = vmatpush2.msra.mxu0 0.0
    %3770 = vmatprep.subr.mxu0 0.0
    %3771 = vmatpush2.msra.mxu0 0.0
    %3772 = vmatprep.subr.mxu0 0.0
    %3773 = vmatpush2.msra.mxu0 0.0
    %3774 = vmatprep.subr.mxu0 0.0
    %3775 = vmatpush2.msra.mxu0 0.0
    %3776 = vmatprep.subr.mxu0 0.0
    %3777 = vmatpush2.msra.mxu0 0.0
    %3778 = vmatprep.subr.mxu0 0.0
    %3779 = vmatpush2.msra.mxu0 0.0
    %3780 = vmatprep.mubr.f32.mxu0 0.0
    %3781 = vmatmul.mubr.f32.gmra.mxu0 %v3315
    %v3782 = vpop.f32.mrf.mxu0
    %v3783 = vadd.f32 %v3714, %v3782
    %v3784 = vpop.f32.mrf.mxu0
    %3785 = vmatprep.mubr.f32.mxu0 0.0
    %3786 = vmatmul.mubr.f32.gmra.mxu0 %v3318
    %v3787 = vpop.f32.mrf.mxu0
    %v3788 = vadd.f32 %v3714, %v3787
    %v3789 = vpop.f32.mrf.mxu0
    %3790 = vmatprep.mubr.f32.mxu0 0.0
    %3791 = vmatmul.mubr.f32.gmra.mxu0 %v3321
    %v3792 = vpop.f32.mrf.mxu0
    %v3793 = vadd.f32 %v3714, %v3792
    %v3794 = vpop.f32.mrf.mxu0
    %3795 = vmatprep.mubr.f32.mxu0 0.0
    %3796 = vmatmul.mubr.f32.gmra.mxu0 %v3324
    %v3797 = vpop.f32.mrf.mxu0
    %v3798 = vadd.f32 %v3714, %v3797
    %v3799 = vpop.f32.mrf.mxu0
    %3800 = vmatprep.mubr.f32.mxu0 0.0
    %3801 = vmatmul.mubr.f32.gmra.mxu0 %v3327
    %v3802 = vpop.f32.mrf.mxu0
    %v3803 = vadd.f32 %v3714, %v3802
    %v3804 = vpop.f32.mrf.mxu0
    %3805 = vmatprep.mubr.f32.mxu0 0.0
    %3806 = vmatmul.mubr.f32.gmra.mxu0 %v3330
    %v3807 = vpop.f32.mrf.mxu0
    %v3808 = vadd.f32 %v3714, %v3807
    %v3809 = vpop.f32.mrf.mxu0
    %3810 = vmatprep.mubr.f32.mxu0 0.0
    %3811 = vmatmul.mubr.f32.gmra.mxu0 %v3333
    %v3812 = vpop.f32.mrf.mxu0
    %v3813 = vadd.f32 %v3714, %v3812
    %v3814 = vpop.f32.mrf.mxu0
    %3815 = vmatprep.mubr.f32.mxu0 0.0
    %3816 = vmatmul.mubr.f32.gmra.mxu0 %v3336
    %v3817 = vpop.f32.mrf.mxu0
    %v3818 = vadd.f32 %v3714, %v3817
    %v3819 = vpop.f32.mrf.mxu0
    %3820 = vdwg.mxu0
    %3821 = vst.msk [vmem:[#allocation6] sm:$0xff] %vm220, %v3783
    %3822 = vst.msk [vmem:[#allocation6 + $0x8] sm:$0xff] %vm220, %v3788
    %3823 = vst.msk [vmem:[#allocation6 + $0x10] sm:$0xff] %vm220, %v3793
    %3824 = vst.msk [vmem:[#allocation6 + $0x18] sm:$0xff] %vm220, %v3798
    %3825 = vst.msk [vmem:[#allocation6 + $0x20] sm:$0xff] %vm220, %v3803
    %3826 = vst.msk [vmem:[#allocation6 + $0x28] sm:$0xff] %vm220, %v3808
    %3827 = vst.msk [vmem:[#allocation6 + $0x30] sm:$0xff] %vm220, %v3813
    %3828 = vst.msk [vmem:[#allocation6 + $0x38] sm:$0xff] %vm220, %v3818
    %v3829 = vld [vmem:[#allocation3] sm:$0xff]
    %v3830 = vld [vmem:[#allocation11] sm:$0xff]
    %v3831 = vld [vmem:[#allocation11 + $0x8] sm:$0xff]
    %v3832 = vld [vmem:[#allocation11 + $0x10] sm:$0xff]
    %v3833 = vld [vmem:[#allocation11 + $0x18] sm:$0xff]
    %3834 = vmatprep.subr.mxu0 0.0
    %3835 = vmatpush1.msra.mxu0 0.0
    %3836 = vmatprep.subr.mxu0 0.0
    %3837 = vmatpush1.msra.mxu0 0.0
    %3838 = vmatprep.subr.mxu0 0.0
    %3839 = vmatpush1.msra.mxu0 0.0
    %3840 = vmatprep.subr.mxu0 0.0
    %3841 = vmatpush1.msra.mxu0 0.0
    %3842 = vmatprep.subr.mxu0 0.0
    %3843 = vmatpush1.msra.mxu0 0.0
    %3844 = vmatprep.subr.mxu0 0.0
    %3845 = vmatpush1.msra.mxu0 0.0
    %3846 = vmatprep.subr.mxu0 0.0
    %3847 = vmatpush1.msra.mxu0 0.0
    %3848 = vmatprep.subr.mxu0 0.0
    %3849 = vmatpush1.msra.mxu0 0.0
    %3850 = vmatprep.subr.mxu0 0.0
    %3851 = vmatpush1.msra.mxu0 0.0
    %3852 = vmatprep.subr.mxu0 0.0
    %3853 = vmatpush1.msra.mxu0 0.0
    %3854 = vmatprep.subr.mxu0 0.0
    %3855 = vmatpush1.msra.mxu0 0.0
    %3856 = vmatprep.subr.mxu0 0.0
    %3857 = vmatpush1.msra.mxu0 0.0
    %3858 = vmatprep.subr.mxu0 0.0
    %3859 = vmatpush1.msra.mxu0 %v3833
    %3860 = vmatprep.subr.mxu0 0.0
    %3861 = vmatpush1.msra.mxu0 %v3832
    %3862 = vmatprep.subr.mxu0 0.0
    %3863 = vmatpush1.msra.mxu0 %v3831
    %3864 = vmatprep.subr.mxu0 0.0
    %3865 = vmatpush1.msra.mxu0 %v3830
    %3866 = vmatprep.subr.mxu0 0.0
    %3867 = vmatpush2.msra.mxu0 0.0
    %3868 = vmatprep.subr.mxu0 0.0
    %3869 = vmatpush2.msra.mxu0 0.0
    %3870 = vmatprep.subr.mxu0 0.0
    %3871 = vmatpush2.msra.mxu0 0.0
    %3872 = vmatprep.subr.mxu0 0.0
    %3873 = vmatpush2.msra.mxu0 0.0
    %3874 = vmatprep.subr.mxu0 0.0
    %3875 = vmatpush2.msra.mxu0 0.0
    %3876 = vmatprep.subr.mxu0 0.0
    %3877 = vmatpush2.msra.mxu0 0.0
    %3878 = vmatprep.subr.mxu0 0.0
    %3879 = vmatpush2.msra.mxu0 0.0
    %3880 = vmatprep.subr.mxu0 0.0
    %3881 = vmatpush2.msra.mxu0 0.0
    %3882 = vmatprep.subr.mxu0 0.0
    %3883 = vmatpush2.msra.mxu0 0.0
    %3884 = vmatprep.subr.mxu0 0.0
    %3885 = vmatpush2.msra.mxu0 0.0
    %3886 = vmatprep.subr.mxu0 0.0
    %3887 = vmatpush2.msra.mxu0 0.0
    %3888 = vmatprep.subr.mxu0 0.0
    %3889 = vmatpush2.msra.mxu0 0.0
    %3890 = vmatprep.subr.mxu0 0.0
    %3891 = vmatpush2.msra.mxu0 0.0
    %3892 = vmatprep.subr.mxu0 0.0
    %3893 = vmatpush2.msra.mxu0 0.0
    %3894 = vmatprep.subr.mxu0 0.0
    %3895 = vmatpush2.msra.mxu0 0.0
    %3896 = vmatprep.subr.mxu0 0.0
    %3897 = vmatpush2.msra.mxu0 0.0
    %3898 = vmatprep.mubr.f32.mxu0 0.0
    %3899 = vmatmul.mubr.f32.gmra.mxu0 %v607
    %v3900 = vpop.f32.mrf.mxu0
    %v3901 = vadd.f32 0.0, %v3900
    %v3902 = vpop.f32.mrf.mxu0
    %3903 = vdwg.mxu0
    %v3904 = vadd.f32 %v3829, %v3901
    %v3905 = vxor.u32 %v3904, 2147483648
    %v3906 = vmul.f32 %v3905, 1.442695
    %v3907 = vpow.pop %v3906
    %v3908 = vadd.f32 %v3907, 1.0
    %v3909 = vrcp.pop %v3908
    %v3910 = vmul.f32 1.0, %v3909
    %v3911 = vld [vmem:[#allocation4] sm:$0xff]
    %s3912 = scalar_lea.vmem [#allocation11], 32
    %v3913 = vld [vmem:[%s3912] sm:$0xff]
    %v3914 = vld [vmem:[%s3912 + $0x8] sm:$0xff]
    %v3915 = vld [vmem:[%s3912 + $0x10] sm:$0xff]
    %v3916 = vld [vmem:[%s3912 + $0x18] sm:$0xff]
    %3917 = vmatprep.subr.mxu0 0.0
    %3918 = vmatpush1.msra.mxu0 0.0
    %3919 = vmatprep.subr.mxu0 0.0
    %3920 = vmatpush1.msra.mxu0 0.0
    %3921 = vmatprep.subr.mxu0 0.0
    %3922 = vmatpush1.msra.mxu0 0.0
    %3923 = vmatprep.subr.mxu0 0.0
    %3924 = vmatpush1.msra.mxu0 0.0
    %3925 = vmatprep.subr.mxu0 0.0
    %3926 = vmatpush1.msra.mxu0 0.0
    %3927 = vmatprep.subr.mxu0 0.0
    %3928 = vmatpush1.msra.mxu0 0.0
    %3929 = vmatprep.subr.mxu0 0.0
    %3930 = vmatpush1.msra.mxu0 0.0
    %3931 = vmatprep.subr.mxu0 0.0
    %3932 = vmatpush1.msra.mxu0 0.0
    %3933 = vmatprep.subr.mxu0 0.0
    %3934 = vmatpush1.msra.mxu0 0.0
    %3935 = vmatprep.subr.mxu0 0.0
    %3936 = vmatpush1.msra.mxu0 0.0
    %3937 = vmatprep.subr.mxu0 0.0
    %3938 = vmatpush1.msra.mxu0 0.0
    %3939 = vmatprep.subr.mxu0 0.0
    %3940 = vmatpush1.msra.mxu0 0.0
    %3941 = vmatprep.subr.mxu0 0.0
    %3942 = vmatpush1.msra.mxu0 %v3916
    %3943 = vmatprep.subr.mxu0 0.0
    %3944 = vmatpush1.msra.mxu0 %v3915
    %3945 = vmatprep.subr.mxu0 0.0
    %3946 = vmatpush1.msra.mxu0 %v3914
    %3947 = vmatprep.subr.mxu0 0.0
    %3948 = vmatpush1.msra.mxu0 %v3913
    %3949 = vmatprep.subr.mxu0 0.0
    %3950 = vmatpush2.msra.mxu0 0.0
    %3951 = vmatprep.subr.mxu0 0.0
    %3952 = vmatpush2.msra.mxu0 0.0
    %3953 = vmatprep.subr.mxu0 0.0
    %3954 = vmatpush2.msra.mxu0 0.0
    %3955 = vmatprep.subr.mxu0 0.0
    %3956 = vmatpush2.msra.mxu0 0.0
    %3957 = vmatprep.subr.mxu0 0.0
    %3958 = vmatpush2.msra.mxu0 0.0
    %3959 = vmatprep.subr.mxu0 0.0
    %3960 = vmatpush2.msra.mxu0 0.0
    %3961 = vmatprep.subr.mxu0 0.0
    %3962 = vmatpush2.msra.mxu0 0.0
    %3963 = vmatprep.subr.mxu0 0.0
    %3964 = vmatpush2.msra.mxu0 0.0
    %3965 = vmatprep.subr.mxu0 0.0
    %3966 = vmatpush2.msra.mxu0 0.0
    %3967 = vmatprep.subr.mxu0 0.0
    %3968 = vmatpush2.msra.mxu0 0.0
    %3969 = vmatprep.subr.mxu0 0.0
    %3970 = vmatpush2.msra.mxu0 0.0
    %3971 = vmatprep.subr.mxu0 0.0
    %3972 = vmatpush2.msra.mxu0 0.0
    %3973 = vmatprep.subr.mxu0 0.0
    %3974 = vmatpush2.msra.mxu0 0.0
    %3975 = vmatprep.subr.mxu0 0.0
    %3976 = vmatpush2.msra.mxu0 0.0
    %3977 = vmatprep.subr.mxu0 0.0
    %3978 = vmatpush2.msra.mxu0 0.0
    %3979 = vmatprep.subr.mxu0 0.0
    %3980 = vmatpush2.msra.mxu0 0.0
    %3981 = vmatprep.mubr.f32.mxu0 0.0
    %3982 = vmatmul.mubr.f32.gmra.mxu0 %v607
    %v3983 = vpop.f32.mrf.mxu0
    %v3984 = vadd.f32 0.0, %v3983
    %v3985 = vpop.f32.mrf.mxu0
    %3986 = vdwg.mxu0
    %v3987 = vadd.f32 %v3911, %v3984
    %v3988 = vxor.u32 %v3987, 2147483648
    %v3989 = vmul.f32 %v3988, 1.442695
    %v3990 = vpow.pop %v3989
    %v3991 = vadd.f32 %v3990, 1.0
    %v3992 = vrcp.pop %v3991
    %v3993 = vmul.f32 1.0, %v3992
    %v3994 = vld [vmem:[#allocation5] sm:$0xff]
    %s3995 = scalar_lea.vmem [#allocation11], 64
    %v3996 = vld [vmem:[%s3995] sm:$0xff]
    %v3997 = vld [vmem:[%s3995 + $0x8] sm:$0xff]
    %v3998 = vld [vmem:[%s3995 + $0x10] sm:$0xff]
    %v3999 = vld [vmem:[%s3995 + $0x18] sm:$0xff]
    %4000 = vmatprep.subr.mxu0 0.0
    %4001 = vmatpush1.msra.mxu0 0.0
    %4002 = vmatprep.subr.mxu0 0.0
    %4003 = vmatpush1.msra.mxu0 0.0
    %4004 = vmatprep.subr.mxu0 0.0
    %4005 = vmatpush1.msra.mxu0 0.0
    %4006 = vmatprep.subr.mxu0 0.0
    %4007 = vmatpush1.msra.mxu0 0.0
    %4008 = vmatprep.subr.mxu0 0.0
    %4009 = vmatpush1.msra.mxu0 0.0
    %4010 = vmatprep.subr.mxu0 0.0
    %4011 = vmatpush1.msra.mxu0 0.0
    %4012 = vmatprep.subr.mxu0 0.0
    %4013 = vmatpush1.msra.mxu0 0.0
    %4014 = vmatprep.subr.mxu0 0.0
    %4015 = vmatpush1.msra.mxu0 0.0
    %4016 = vmatprep.subr.mxu0 0.0
    %4017 = vmatpush1.msra.mxu0 0.0
    %4018 = vmatprep.subr.mxu0 0.0
    %4019 = vmatpush1.msra.mxu0 0.0
    %4020 = vmatprep.subr.mxu0 0.0
    %4021 = vmatpush1.msra.mxu0 0.0
    %4022 = vmatprep.subr.mxu0 0.0
    %4023 = vmatpush1.msra.mxu0 0.0
    %4024 = vmatprep.subr.mxu0 0.0
    %4025 = vmatpush1.msra.mxu0 %v3999
    %4026 = vmatprep.subr.mxu0 0.0
    %4027 = vmatpush1.msra.mxu0 %v3998
    %4028 = vmatprep.subr.mxu0 0.0
    %4029 = vmatpush1.msra.mxu0 %v3997
    %4030 = vmatprep.subr.mxu0 0.0
    %4031 = vmatpush1.msra.mxu0 %v3996
    %4032 = vmatprep.subr.mxu0 0.0
    %4033 = vmatpush2.msra.mxu0 0.0
    %4034 = vmatprep.subr.mxu0 0.0
    %4035 = vmatpush2.msra.mxu0 0.0
    %4036 = vmatprep.subr.mxu0 0.0
    %4037 = vmatpush2.msra.mxu0 0.0
    %4038 = vmatprep.subr.mxu0 0.0
    %4039 = vmatpush2.msra.mxu0 0.0
    %4040 = vmatprep.subr.mxu0 0.0
    %4041 = vmatpush2.msra.mxu0 0.0
    %4042 = vmatprep.subr.mxu0 0.0
    %4043 = vmatpush2.msra.mxu0 0.0
    %4044 = vmatprep.subr.mxu0 0.0
    %4045 = vmatpush2.msra.mxu0 0.0
    %4046 = vmatprep.subr.mxu0 0.0
    %4047 = vmatpush2.msra.mxu0 0.0
    %4048 = vmatprep.subr.mxu0 0.0
    %4049 = vmatpush2.msra.mxu0 0.0
    %4050 = vmatprep.subr.mxu0 0.0
    %4051 = vmatpush2.msra.mxu0 0.0
    %4052 = vmatprep.subr.mxu0 0.0
    %4053 = vmatpush2.msra.mxu0 0.0
    %4054 = vmatprep.subr.mxu0 0.0
    %4055 = vmatpush2.msra.mxu0 0.0
    %4056 = vmatprep.subr.mxu0 0.0
    %4057 = vmatpush2.msra.mxu0 0.0
    %4058 = vmatprep.subr.mxu0 0.0
    %4059 = vmatpush2.msra.mxu0 0.0
    %4060 = vmatprep.subr.mxu0 0.0
    %4061 = vmatpush2.msra.mxu0 0.0
    %4062 = vmatprep.subr.mxu0 0.0
    %4063 = vmatpush2.msra.mxu0 0.0
    %4064 = vmatprep.mubr.f32.mxu0 0.0
    %4065 = vmatmul.mubr.f32.gmra.mxu0 %v607
    %v4066 = vpop.f32.mrf.mxu0
    %v4067 = vadd.f32 0.0, %v4066
    %v4068 = vpop.f32.mrf.mxu0
    %4069 = vdwg.mxu0
    %v4070 = vadd.f32 %v3994, %v4067
    %v4071 = vtanh.pop %v4070
    %v4072 = vld [vmem:[#allocation6] sm:$0xff]
    %s4073 = scalar_lea.vmem [#allocation11], 96
    %v4074 = vld [vmem:[%s4073] sm:$0xff]
    %v4075 = vld [vmem:[%s4073 + $0x8] sm:$0xff]
    %v4076 = vld [vmem:[%s4073 + $0x10] sm:$0xff]
    %v4077 = vld [vmem:[%s4073 + $0x18] sm:$0xff]
    %4078 = vmatprep.subr.mxu0 0.0
    %4079 = vmatpush1.msra.mxu0 0.0
    %4080 = vmatprep.subr.mxu0 0.0
    %4081 = vmatpush1.msra.mxu0 0.0
    %4082 = vmatprep.subr.mxu0 0.0
    %4083 = vmatpush1.msra.mxu0 0.0
    %4084 = vmatprep.subr.mxu0 0.0
    %4085 = vmatpush1.msra.mxu0 0.0
    %4086 = vmatprep.subr.mxu0 0.0
    %4087 = vmatpush1.msra.mxu0 0.0
    %4088 = vmatprep.subr.mxu0 0.0
    %4089 = vmatpush1.msra.mxu0 0.0
    %4090 = vmatprep.subr.mxu0 0.0
    %4091 = vmatpush1.msra.mxu0 0.0
    %4092 = vmatprep.subr.mxu0 0.0
    %4093 = vmatpush1.msra.mxu0 0.0
    %4094 = vmatprep.subr.mxu0 0.0
    %4095 = vmatpush1.msra.mxu0 0.0
    %4096 = vmatprep.subr.mxu0 0.0
    %4097 = vmatpush1.msra.mxu0 0.0
    %4098 = vmatprep.subr.mxu0 0.0
    %4099 = vmatpush1.msra.mxu0 0.0
    %4100 = vmatprep.subr.mxu0 0.0
    %4101 = vmatpush1.msra.mxu0 0.0
    %4102 = vmatprep.subr.mxu0 0.0
    %4103 = vmatpush1.msra.mxu0 %v4077
    %4104 = vmatprep.subr.mxu0 0.0
    %4105 = vmatpush1.msra.mxu0 %v4076
    %4106 = vmatprep.subr.mxu0 0.0
    %4107 = vmatpush1.msra.mxu0 %v4075
    %4108 = vmatprep.subr.mxu0 0.0
    %4109 = vmatpush1.msra.mxu0 %v4074
    %4110 = vmatprep.subr.mxu0 0.0
    %4111 = vmatpush2.msra.mxu0 0.0
    %4112 = vmatprep.subr.mxu0 0.0
    %4113 = vmatpush2.msra.mxu0 0.0
    %4114 = vmatprep.subr.mxu0 0.0
    %4115 = vmatpush2.msra.mxu0 0.0
    %4116 = vmatprep.subr.mxu0 0.0
    %4117 = vmatpush2.msra.mxu0 0.0
    %4118 = vmatprep.subr.mxu0 0.0
    %4119 = vmatpush2.msra.mxu0 0.0
    %4120 = vmatprep.subr.mxu0 0.0
    %4121 = vmatpush2.msra.mxu0 0.0
    %4122 = vmatprep.subr.mxu0 0.0
    %4123 = vmatpush2.msra.mxu0 0.0
    %4124 = vmatprep.subr.mxu0 0.0
    %4125 = vmatpush2.msra.mxu0 0.0
    %4126 = vmatprep.subr.mxu0 0.0
    %4127 = vmatpush2.msra.mxu0 0.0
    %4128 = vmatprep.subr.mxu0 0.0
    %4129 = vmatpush2.msra.mxu0 0.0
    %4130 = vmatprep.subr.mxu0 0.0
    %4131 = vmatpush2.msra.mxu0 0.0
    %4132 = vmatprep.subr.mxu0 0.0
    %4133 = vmatpush2.msra.mxu0 0.0
    %4134 = vmatprep.subr.mxu0 0.0
    %4135 = vmatpush2.msra.mxu0 0.0
    %4136 = vmatprep.subr.mxu0 0.0
    %4137 = vmatpush2.msra.mxu0 0.0
    %4138 = vmatprep.subr.mxu0 0.0
    %4139 = vmatpush2.msra.mxu0 0.0
    %4140 = vmatprep.subr.mxu0 0.0
    %4141 = vmatpush2.msra.mxu0 0.0
    %4142 = vmatprep.mubr.f32.mxu0 0.0
    %4143 = vmatmul.mubr.f32.gmra.mxu0 %v607
    %v4144 = vpop.f32.mrf.mxu0
    %v4145 = vadd.f32 0.0, %v4144
    %v4146 = vpop.f32.mrf.mxu0
    %4147 = vdwg.mxu0
    %v4148 = vadd.f32 %v4072, %v4145
    %v4149 = vxor.u32 %v4148, 2147483648
    %v4150 = vmul.f32 %v4149, 1.442695
    %v4151 = vpow.pop %v4150
    %v4152 = vadd.f32 %v4151, 1.0
    %v4153 = vrcp.pop %v4152
    %v4154 = vmul.f32 1.0, %v4153
    %v4155 = vmul.f32 %v3993, 0.0
    %v4156 = vmul.f32 %v3910, %v4071
    %v4157 = vadd.f32 %v4155, %v4156
    %v4158 = vtanh.pop %v4157
    %v4159 = vmul.f32 %v4154, %v4158
    %4160 = vst.msk [vmem:[#allocation2] sm:$0xff] %vm220, %v4159
    %v4161 = vld [vmem:[%s936] sm:$0xff]
    %v4162 = vld [vmem:[#allocation11] sm:$0xff]
    %v4163 = vld [vmem:[#allocation11 + $0x8] sm:$0xff]
    %v4164 = vld [vmem:[#allocation11 + $0x10] sm:$0xff]
    %v4165 = vld [vmem:[#allocation11 + $0x18] sm:$0xff]
    %v4167 = vsel %vm220, %v4159, 0
    %4169 = vmatprep.subr.mxu0 0.0
    %4170 = vmatpush1.msra.mxu0 0.0
    %4171 = vmatprep.subr.mxu0 0.0
    %4172 = vmatpush1.msra.mxu0 0.0
    %4173 = vmatprep.subr.mxu0 0.0
    %4174 = vmatpush1.msra.mxu0 0.0
    %4175 = vmatprep.subr.mxu0 0.0
    %4176 = vmatpush1.msra.mxu0 0.0
    %4177 = vmatprep.subr.mxu0 0.0
    %4178 = vmatpush1.msra.mxu0 0.0
    %4179 = vmatprep.subr.mxu0 0.0
    %4180 = vmatpush1.msra.mxu0 0.0
    %4181 = vmatprep.subr.mxu0 0.0
    %4182 = vmatpush1.msra.mxu0 0.0
    %4183 = vmatprep.subr.mxu0 0.0
    %4184 = vmatpush1.msra.mxu0 0.0
    %4185 = vmatprep.subr.mxu0 0.0
    %4186 = vmatpush1.msra.mxu0 0.0
    %4187 = vmatprep.subr.mxu0 0.0
    %4188 = vmatpush1.msra.mxu0 0.0
    %4189 = vmatprep.subr.mxu0 0.0
    %4190 = vmatpush1.msra.mxu0 0.0
    %4191 = vmatprep.subr.mxu0 0.0
    %4192 = vmatpush1.msra.mxu0 0.0
    %4193 = vmatprep.subr.mxu0 0.0
    %4194 = vmatpush1.msra.mxu0 %v4165
    %4195 = vmatprep.subr.mxu0 0.0
    %4196 = vmatpush1.msra.mxu0 %v4164
    %4197 = vmatprep.subr.mxu0 0.0
    %4198 = vmatpush1.msra.mxu0 %v4163
    %4199 = vmatprep.subr.mxu0 0.0
    %4200 = vmatpush1.msra.mxu0 %v4162
    %4201 = vmatprep.subr.mxu0 0.0
    %4202 = vmatpush2.msra.mxu0 0.0
    %4203 = vmatprep.subr.mxu0 0.0
    %4204 = vmatpush2.msra.mxu0 0.0
    %4205 = vmatprep.subr.mxu0 0.0
    %4206 = vmatpush2.msra.mxu0 0.0
    %4207 = vmatprep.subr.mxu0 0.0
    %4208 = vmatpush2.msra.mxu0 0.0
    %4209 = vmatprep.subr.mxu0 0.0
    %4210 = vmatpush2.msra.mxu0 0.0
    %4211 = vmatprep.subr.mxu0 0.0
    %4212 = vmatpush2.msra.mxu0 0.0
    %4213 = vmatprep.subr.mxu0 0.0
    %4214 = vmatpush2.msra.mxu0 0.0
    %4215 = vmatprep.subr.mxu0 0.0
    %4216 = vmatpush2.msra.mxu0 0.0
    %4217 = vmatprep.subr.mxu0 0.0
    %4218 = vmatpush2.msra.mxu0 0.0
    %4219 = vmatprep.subr.mxu0 0.0
    %4220 = vmatpush2.msra.mxu0 0.0
    %4221 = vmatprep.subr.mxu0 0.0
    %4222 = vmatpush2.msra.mxu0 0.0
    %4223 = vmatprep.subr.mxu0 0.0
    %4224 = vmatpush2.msra.mxu0 0.0
    %4225 = vmatprep.subr.mxu0 0.0
    %4226 = vmatpush2.msra.mxu0 0.0
    %4227 = vmatprep.subr.mxu0 0.0
    %4228 = vmatpush2.msra.mxu0 0.0
    %4229 = vmatprep.subr.mxu0 0.0
    %4230 = vmatpush2.msra.mxu0 0.0
    %4231 = vmatprep.subr.mxu0 0.0
    %4232 = vmatpush2.msra.mxu0 0.0
    %4233 = vmatprep.mubr.f32.mxu0 0.0
    %4234 = vmatmul.mubr.f32.gmra.mxu0 %v4167
    %v4235 = vpop.f32.mrf.mxu0
    %v4236 = vadd.f32 0.0, %v4235
    %v4237 = vpop.f32.mrf.mxu0
    %4238 = vdwg.mxu0
    %v4239 = vadd.f32 %v4161, %v4236
    %v4240 = vxor.u32 %v4239, 2147483648
    %v4241 = vmul.f32 %v4240, 1.442695
    %v4242 = vpow.pop %v4241
    %v4243 = vadd.f32 %v4242, 1.0
    %v4244 = vrcp.pop %v4243
    %v4245 = vmul.f32 1.0, %v4244
    %v4246 = vld [vmem:[%s1022] sm:$0xff]
    %v4247 = vld [vmem:[%s3912] sm:$0xff]
    %v4248 = vld [vmem:[%s3912 + $0x8] sm:$0xff]
    %v4249 = vld [vmem:[%s3912 + $0x10] sm:$0xff]
    %v4250 = vld [vmem:[%s3912 + $0x18] sm:$0xff]
    %4251 = vmatprep.subr.mxu0 0.0
    %4252 = vmatpush1.msra.mxu0 0.0
    %4253 = vmatprep.subr.mxu0 0.0
    %4254 = vmatpush1.msra.mxu0 0.0
    %4255 = vmatprep.subr.mxu0 0.0
    %4256 = vmatpush1.msra.mxu0 0.0
    %4257 = vmatprep.subr.mxu0 0.0
    %4258 = vmatpush1.msra.mxu0 0.0
    %4259 = vmatprep.subr.mxu0 0.0
    %4260 = vmatpush1.msra.mxu0 0.0
    %4261 = vmatprep.subr.mxu0 0.0
    %4262 = vmatpush1.msra.mxu0 0.0
    %4263 = vmatprep.subr.mxu0 0.0
    %4264 = vmatpush1.msra.mxu0 0.0
    %4265 = vmatprep.subr.mxu0 0.0
    %4266 = vmatpush1.msra.mxu0 0.0
    %4267 = vmatprep.subr.mxu0 0.0
    %4268 = vmatpush1.msra.mxu0 0.0
    %4269 = vmatprep.subr.mxu0 0.0
    %4270 = vmatpush1.msra.mxu0 0.0
    %4271 = vmatprep.subr.mxu0 0.0
    %4272 = vmatpush1.msra.mxu0 0.0
    %4273 = vmatprep.subr.mxu0 0.0
    %4274 = vmatpush1.msra.mxu0 0.0
    %4275 = vmatprep.subr.mxu0 0.0
    %4276 = vmatpush1.msra.mxu0 %v4250
    %4277 = vmatprep.subr.mxu0 0.0
    %4278 = vmatpush1.msra.mxu0 %v4249
    %4279 = vmatprep.subr.mxu0 0.0
    %4280 = vmatpush1.msra.mxu0 %v4248
    %4281 = vmatprep.subr.mxu0 0.0
    %4282 = vmatpush1.msra.mxu0 %v4247
    %4283 = vmatprep.subr.mxu0 0.0
    %4284 = vmatpush2.msra.mxu0 0.0
    %4285 = vmatprep.subr.mxu0 0.0
    %4286 = vmatpush2.msra.mxu0 0.0
    %4287 = vmatprep.subr.mxu0 0.0
    %4288 = vmatpush2.msra.mxu0 0.0
    %4289 = vmatprep.subr.mxu0 0.0
    %4290 = vmatpush2.msra.mxu0 0.0
    %4291 = vmatprep.subr.mxu0 0.0
    %4292 = vmatpush2.msra.mxu0 0.0
    %4293 = vmatprep.subr.mxu0 0.0
    %4294 = vmatpush2.msra.mxu0 0.0
    %4295 = vmatprep.subr.mxu0 0.0
    %4296 = vmatpush2.msra.mxu0 0.0
    %4297 = vmatprep.subr.mxu0 0.0
    %4298 = vmatpush2.msra.mxu0 0.0
    %4299 = vmatprep.subr.mxu0 0.0
    %4300 = vmatpush2.msra.mxu0 0.0
    %4301 = vmatprep.subr.mxu0 0.0
    %4302 = vmatpush2.msra.mxu0 0.0
    %4303 = vmatprep.subr.mxu0 0.0
    %4304 = vmatpush2.msra.mxu0 0.0
    %4305 = vmatprep.subr.mxu0 0.0
    %4306 = vmatpush2.msra.mxu0 0.0
    %4307 = vmatprep.subr.mxu0 0.0
    %4308 = vmatpush2.msra.mxu0 0.0
    %4309 = vmatprep.subr.mxu0 0.0
    %4310 = vmatpush2.msra.mxu0 0.0
    %4311 = vmatprep.subr.mxu0 0.0
    %4312 = vmatpush2.msra.mxu0 0.0
    %4313 = vmatprep.subr.mxu0 0.0
    %4314 = vmatpush2.msra.mxu0 0.0
    %4315 = vmatprep.mubr.f32.mxu0 0.0
    %4316 = vmatmul.mubr.f32.gmra.mxu0 %v4167
    %v4317 = vpop.f32.mrf.mxu0
    %v4318 = vadd.f32 0.0, %v4317
    %v4319 = vpop.f32.mrf.mxu0
    %4320 = vdwg.mxu0
    %v4321 = vadd.f32 %v4246, %v4318
    %v4322 = vxor.u32 %v4321, 2147483648
    %v4323 = vmul.f32 %v4322, 1.442695
    %v4324 = vpow.pop %v4323
    %v4325 = vadd.f32 %v4324, 1.0
    %v4326 = vrcp.pop %v4325
    %v4327 = vmul.f32 1.0, %v4326
    %v4328 = vld [vmem:[%s1105] sm:$0xff]
    %v4329 = vld [vmem:[%s3995] sm:$0xff]
    %v4330 = vld [vmem:[%s3995 + $0x8] sm:$0xff]
    %v4331 = vld [vmem:[%s3995 + $0x10] sm:$0xff]
    %v4332 = vld [vmem:[%s3995 + $0x18] sm:$0xff]
    %4333 = vmatprep.subr.mxu0 0.0
    %4334 = vmatpush1.msra.mxu0 0.0
    %4335 = vmatprep.subr.mxu0 0.0
    %4336 = vmatpush1.msra.mxu0 0.0
    %4337 = vmatprep.subr.mxu0 0.0
    %4338 = vmatpush1.msra.mxu0 0.0
    %4339 = vmatprep.subr.mxu0 0.0
    %4340 = vmatpush1.msra.mxu0 0.0
    %4341 = vmatprep.subr.mxu0 0.0
    %4342 = vmatpush1.msra.mxu0 0.0
    %4343 = vmatprep.subr.mxu0 0.0
    %4344 = vmatpush1.msra.mxu0 0.0
    %4345 = vmatprep.subr.mxu0 0.0
    %4346 = vmatpush1.msra.mxu0 0.0
    %4347 = vmatprep.subr.mxu0 0.0
    %4348 = vmatpush1.msra.mxu0 0.0
    %4349 = vmatprep.subr.mxu0 0.0
    %4350 = vmatpush1.msra.mxu0 0.0
    %4351 = vmatprep.subr.mxu0 0.0
    %4352 = vmatpush1.msra.mxu0 0.0
    %4353 = vmatprep.subr.mxu0 0.0
    %4354 = vmatpush1.msra.mxu0 0.0
    %4355 = vmatprep.subr.mxu0 0.0
    %4356 = vmatpush1.msra.mxu0 0.0
    %4357 = vmatprep.subr.mxu0 0.0
    %4358 = vmatpush1.msra.mxu0 %v4332
    %4359 = vmatprep.subr.mxu0 0.0
    %4360 = vmatpush1.msra.mxu0 %v4331
    %4361 = vmatprep.subr.mxu0 0.0
    %4362 = vmatpush1.msra.mxu0 %v4330
    %4363 = vmatprep.subr.mxu0 0.0
    %4364 = vmatpush1.msra.mxu0 %v4329
    %4365 = vmatprep.subr.mxu0 0.0
    %4366 = vmatpush2.msra.mxu0 0.0
    %4367 = vmatprep.subr.mxu0 0.0
    %4368 = vmatpush2.msra.mxu0 0.0
    %4369 = vmatprep.subr.mxu0 0.0
    %4370 = vmatpush2.msra.mxu0 0.0
    %4371 = vmatprep.subr.mxu0 0.0
    %4372 = vmatpush2.msra.mxu0 0.0
    %4373 = vmatprep.subr.mxu0 0.0
    %4374 = vmatpush2.msra.mxu0 0.0
    %4375 = vmatprep.subr.mxu0 0.0
    %4376 = vmatpush2.msra.mxu0 0.0
    %4377 = vmatprep.subr.mxu0 0.0
    %4378 = vmatpush2.msra.mxu0 0.0
    %4379 = vmatprep.subr.mxu0 0.0
    %4380 = vmatpush2.msra.mxu0 0.0
    %4381 = vmatprep.subr.mxu0 0.0
    %4382 = vmatpush2.msra.mxu0 0.0
    %4383 = vmatprep.subr.mxu0 0.0
    %4384 = vmatpush2.msra.mxu0 0.0
    %4385 = vmatprep.subr.mxu0 0.0
    %4386 = vmatpush2.msra.mxu0 0.0
    %4387 = vmatprep.subr.mxu0 0.0
    %4388 = vmatpush2.msra.mxu0 0.0
    %4389 = vmatprep.subr.mxu0 0.0
    %4390 = vmatpush2.msra.mxu0 0.0
    %4391 = vmatprep.subr.mxu0 0.0
    %4392 = vmatpush2.msra.mxu0 0.0
    %4393 = vmatprep.subr.mxu0 0.0
    %4394 = vmatpush2.msra.mxu0 0.0
    %4395 = vmatprep.subr.mxu0 0.0
    %4396 = vmatpush2.msra.mxu0 0.0
    %4397 = vmatprep.mubr.f32.mxu0 0.0
    %4398 = vmatmul.mubr.f32.gmra.mxu0 %v4167
    %v4399 = vpop.f32.mrf.mxu0
    %v4400 = vadd.f32 0.0, %v4399
    %v4401 = vpop.f32.mrf.mxu0
    %4402 = vdwg.mxu0
    %v4403 = vadd.f32 %v4328, %v4400
    %v4404 = vtanh.pop %v4403
    %v4405 = vld [vmem:[%s1183] sm:$0xff]
    %v4406 = vld [vmem:[%s4073] sm:$0xff]
    %v4407 = vld [vmem:[%s4073 + $0x8] sm:$0xff]
    %v4408 = vld [vmem:[%s4073 + $0x10] sm:$0xff]
    %v4409 = vld [vmem:[%s4073 + $0x18] sm:$0xff]
    %4410 = vmatprep.subr.mxu0 0.0
    %4411 = vmatpush1.msra.mxu0 0.0
    %4412 = vmatprep.subr.mxu0 0.0
    %4413 = vmatpush1.msra.mxu0 0.0
    %4414 = vmatprep.subr.mxu0 0.0
    %4415 = vmatpush1.msra.mxu0 0.0
    %4416 = vmatprep.subr.mxu0 0.0
    %4417 = vmatpush1.msra.mxu0 0.0
    %4418 = vmatprep.subr.mxu0 0.0
    %4419 = vmatpush1.msra.mxu0 0.0
    %4420 = vmatprep.subr.mxu0 0.0
    %4421 = vmatpush1.msra.mxu0 0.0
    %4422 = vmatprep.subr.mxu0 0.0
    %4423 = vmatpush1.msra.mxu0 0.0
    %4424 = vmatprep.subr.mxu0 0.0
    %4425 = vmatpush1.msra.mxu0 0.0
    %4426 = vmatprep.subr.mxu0 0.0
    %4427 = vmatpush1.msra.mxu0 0.0
    %4428 = vmatprep.subr.mxu0 0.0
    %4429 = vmatpush1.msra.mxu0 0.0
    %4430 = vmatprep.subr.mxu0 0.0
    %4431 = vmatpush1.msra.mxu0 0.0
    %4432 = vmatprep.subr.mxu0 0.0
    %4433 = vmatpush1.msra.mxu0 0.0
    %4434 = vmatprep.subr.mxu0 0.0
    %4435 = vmatpush1.msra.mxu0 %v4409
    %4436 = vmatprep.subr.mxu0 0.0
    %4437 = vmatpush1.msra.mxu0 %v4408
    %4438 = vmatprep.subr.mxu0 0.0
    %4439 = vmatpush1.msra.mxu0 %v4407
    %4440 = vmatprep.subr.mxu0 0.0
    %4441 = vmatpush1.msra.mxu0 %v4406
    %4442 = vmatprep.subr.mxu0 0.0
    %4443 = vmatpush2.msra.mxu0 0.0
    %4444 = vmatprep.subr.mxu0 0.0
    %4445 = vmatpush2.msra.mxu0 0.0
    %4446 = vmatprep.subr.mxu0 0.0
    %4447 = vmatpush2.msra.mxu0 0.0
    %4448 = vmatprep.subr.mxu0 0.0
    %4449 = vmatpush2.msra.mxu0 0.0
    %4450 = vmatprep.subr.mxu0 0.0
    %4451 = vmatpush2.msra.mxu0 0.0
    %4452 = vmatprep.subr.mxu0 0.0
    %4453 = vmatpush2.msra.mxu0 0.0
    %4454 = vmatprep.subr.mxu0 0.0
    %4455 = vmatpush2.msra.mxu0 0.0
    %4456 = vmatprep.subr.mxu0 0.0
    %4457 = vmatpush2.msra.mxu0 0.0
    %4458 = vmatprep.subr.mxu0 0.0
    %4459 = vmatpush2.msra.mxu0 0.0
    %4460 = vmatprep.subr.mxu0 0.0
    %4461 = vmatpush2.msra.mxu0 0.0
    %4462 = vmatprep.subr.mxu0 0.0
    %4463 = vmatpush2.msra.mxu0 0.0
    %4464 = vmatprep.subr.mxu0 0.0
    %4465 = vmatpush2.msra.mxu0 0.0
    %4466 = vmatprep.subr.mxu0 0.0
    %4467 = vmatpush2.msra.mxu0 0.0
    %4468 = vmatprep.subr.mxu0 0.0
    %4469 = vmatpush2.msra.mxu0 0.0
    %4470 = vmatprep.subr.mxu0 0.0
    %4471 = vmatpush2.msra.mxu0 0.0
    %4472 = vmatprep.subr.mxu0 0.0
    %4473 = vmatpush2.msra.mxu0 0.0
    %4474 = vmatprep.mubr.f32.mxu0 0.0
    %4475 = vmatmul.mubr.f32.gmra.mxu0 %v4167
    %v4476 = vpop.f32.mrf.mxu0
    %v4477 = vadd.f32 0.0, %v4476
    %v4478 = vpop.f32.mrf.mxu0
    %4479 = vdwg.mxu0
    %v4480 = vadd.f32 %v4405, %v4477
    %v4481 = vxor.u32 %v4480, 2147483648
    %v4482 = vmul.f32 %v4481, 1.442695
    %v4483 = vpow.pop %v4482
    %v4484 = vadd.f32 %v4483, 1.0
    %v4485 = vrcp.pop %v4484
    %v4486 = vmul.f32 1.0, %v4485
    %v4487 = vmul.f32 %v4327, %v4157
    %v4488 = vmul.f32 %v4245, %v4404
    %v4489 = vadd.f32 %v4487, %v4488
    %v4490 = vtanh.pop %v4489
    %v4491 = vmul.f32 %v4486, %v4490
    %4492 = vst.msk [vmem:[%s1271] sm:$0xff] %vm220, %v4491
    %v4493 = vld [vmem:[%s1273] sm:$0xff]
    %v4494 = vld [vmem:[#allocation11] sm:$0xff]
    %v4495 = vld [vmem:[#allocation11 + $0x8] sm:$0xff]
    %v4496 = vld [vmem:[#allocation11 + $0x10] sm:$0xff]
    %v4497 = vld [vmem:[#allocation11 + $0x18] sm:$0xff]
    %v4499 = vsel %vm220, %v4491, 0
    %4501 = vmatprep.subr.mxu0 0.0
    %4502 = vmatpush1.msra.mxu0 0.0
    %4503 = vmatprep.subr.mxu0 0.0
    %4504 = vmatpush1.msra.mxu0 0.0
    %4505 = vmatprep.subr.mxu0 0.0
    %4506 = vmatpush1.msra.mxu0 0.0
    %4507 = vmatprep.subr.mxu0 0.0
    %4508 = vmatpush1.msra.mxu0 0.0
    %4509 = vmatprep.subr.mxu0 0.0
    %4510 = vmatpush1.msra.mxu0 0.0
    %4511 = vmatprep.subr.mxu0 0.0
    %4512 = vmatpush1.msra.mxu0 0.0
    %4513 = vmatprep.subr.mxu0 0.0
    %4514 = vmatpush1.msra.mxu0 0.0
    %4515 = vmatprep.subr.mxu0 0.0
    %4516 = vmatpush1.msra.mxu0 0.0
    %4517 = vmatprep.subr.mxu0 0.0
    %4518 = vmatpush1.msra.mxu0 0.0
    %4519 = vmatprep.subr.mxu0 0.0
    %4520 = vmatpush1.msra.mxu0 0.0
    %4521 = vmatprep.subr.mxu0 0.0
    %4522 = vmatpush1.msra.mxu0 0.0
    %4523 = vmatprep.subr.mxu0 0.0
    %4524 = vmatpush1.msra.mxu0 0.0
    %4525 = vmatprep.subr.mxu0 0.0
    %4526 = vmatpush1.msra.mxu0 %v4497
    %4527 = vmatprep.subr.mxu0 0.0
    %4528 = vmatpush1.msra.mxu0 %v4496
    %4529 = vmatprep.subr.mxu0 0.0
    %4530 = vmatpush1.msra.mxu0 %v4495
    %4531 = vmatprep.subr.mxu0 0.0
    %4532 = vmatpush1.msra.mxu0 %v4494
    %4533 = vmatprep.subr.mxu0 0.0
    %4534 = vmatpush2.msra.mxu0 0.0
    %4535 = vmatprep.subr.mxu0 0.0
    %4536 = vmatpush2.msra.mxu0 0.0
    %4537 = vmatprep.subr.mxu0 0.0
    %4538 = vmatpush2.msra.mxu0 0.0
    %4539 = vmatprep.subr.mxu0 0.0
    %4540 = vmatpush2.msra.mxu0 0.0
    %4541 = vmatprep.subr.mxu0 0.0
    %4542 = vmatpush2.msra.mxu0 0.0
    %4543 = vmatprep.subr.mxu0 0.0
    %4544 = vmatpush2.msra.mxu0 0.0
    %4545 = vmatprep.subr.mxu0 0.0
    %4546 = vmatpush2.msra.mxu0 0.0
    %4547 = vmatprep.subr.mxu0 0.0
    %4548 = vmatpush2.msra.mxu0 0.0
    %4549 = vmatprep.subr.mxu0 0.0
    %4550 = vmatpush2.msra.mxu0 0.0
    %4551 = vmatprep.subr.mxu0 0.0
    %4552 = vmatpush2.msra.mxu0 0.0
    %4553 = vmatprep.subr.mxu0 0.0
    %4554 = vmatpush2.msra.mxu0 0.0
    %4555 = vmatprep.subr.mxu0 0.0
    %4556 = vmatpush2.msra.mxu0 0.0
    %4557 = vmatprep.subr.mxu0 0.0
    %4558 = vmatpush2.msra.mxu0 0.0
    %4559 = vmatprep.subr.mxu0 0.0
    %4560 = vmatpush2.msra.mxu0 0.0
    %4561 = vmatprep.subr.mxu0 0.0
    %4562 = vmatpush2.msra.mxu0 0.0
    %4563 = vmatprep.subr.mxu0 0.0
    %4564 = vmatpush2.msra.mxu0 0.0
    %4565 = vmatprep.mubr.f32.mxu0 0.0
    %4566 = vmatmul.mubr.f32.gmra.mxu0 %v4499
    %v4567 = vpop.f32.mrf.mxu0
    %v4568 = vadd.f32 0.0, %v4567
    %v4569 = vpop.f32.mrf.mxu0
    %4570 = vdwg.mxu0
    %v4571 = vadd.f32 %v4493, %v4568
    %v4572 = vxor.u32 %v4571, 2147483648
    %v4573 = vmul.f32 %v4572, 1.442695
    %v4574 = vpow.pop %v4573
    %v4575 = vadd.f32 %v4574, 1.0
    %v4576 = vrcp.pop %v4575
    %v4577 = vmul.f32 1.0, %v4576
    %v4578 = vld [vmem:[%s1359] sm:$0xff]
    %v4579 = vld [vmem:[%s3912] sm:$0xff]
    %v4580 = vld [vmem:[%s3912 + $0x8] sm:$0xff]
    %v4581 = vld [vmem:[%s3912 + $0x10] sm:$0xff]
    %v4582 = vld [vmem:[%s3912 + $0x18] sm:$0xff]
    %4583 = vmatprep.subr.mxu0 0.0
    %4584 = vmatpush1.msra.mxu0 0.0
    %4585 = vmatprep.subr.mxu0 0.0
    %4586 = vmatpush1.msra.mxu0 0.0
    %4587 = vmatprep.subr.mxu0 0.0
    %4588 = vmatpush1.msra.mxu0 0.0
    %4589 = vmatprep.subr.mxu0 0.0
    %4590 = vmatpush1.msra.mxu0 0.0
    %4591 = vmatprep.subr.mxu0 0.0
    %4592 = vmatpush1.msra.mxu0 0.0
    %4593 = vmatprep.subr.mxu0 0.0
    %4594 = vmatpush1.msra.mxu0 0.0
    %4595 = vmatprep.subr.mxu0 0.0
    %4596 = vmatpush1.msra.mxu0 0.0
    %4597 = vmatprep.subr.mxu0 0.0
    %4598 = vmatpush1.msra.mxu0 0.0
    %4599 = vmatprep.subr.mxu0 0.0
    %4600 = vmatpush1.msra.mxu0 0.0
    %4601 = vmatprep.subr.mxu0 0.0
    %4602 = vmatpush1.msra.mxu0 0.0
    %4603 = vmatprep.subr.mxu0 0.0
    %4604 = vmatpush1.msra.mxu0 0.0
    %4605 = vmatprep.subr.mxu0 0.0
    %4606 = vmatpush1.msra.mxu0 0.0
    %4607 = vmatprep.subr.mxu0 0.0
    %4608 = vmatpush1.msra.mxu0 %v4582
    %4609 = vmatprep.subr.mxu0 0.0
    %4610 = vmatpush1.msra.mxu0 %v4581
    %4611 = vmatprep.subr.mxu0 0.0
    %4612 = vmatpush1.msra.mxu0 %v4580
    %4613 = vmatprep.subr.mxu0 0.0
    %4614 = vmatpush1.msra.mxu0 %v4579
    %4615 = vmatprep.subr.mxu0 0.0
    %4616 = vmatpush2.msra.mxu0 0.0
    %4617 = vmatprep.subr.mxu0 0.0
    %4618 = vmatpush2.msra.mxu0 0.0
    %4619 = vmatprep.subr.mxu0 0.0
    %4620 = vmatpush2.msra.mxu0 0.0
    %4621 = vmatprep.subr.mxu0 0.0
    %4622 = vmatpush2.msra.mxu0 0.0
    %4623 = vmatprep.subr.mxu0 0.0
    %4624 = vmatpush2.msra.mxu0 0.0
    %4625 = vmatprep.subr.mxu0 0.0
    %4626 = vmatpush2.msra.mxu0 0.0
    %4627 = vmatprep.subr.mxu0 0.0
    %4628 = vmatpush2.msra.mxu0 0.0
    %4629 = vmatprep.subr.mxu0 0.0
    %4630 = vmatpush2.msra.mxu0 0.0
    %4631 = vmatprep.subr.mxu0 0.0
    %4632 = vmatpush2.msra.mxu0 0.0
    %4633 = vmatprep.subr.mxu0 0.0
    %4634 = vmatpush2.msra.mxu0 0.0
    %4635 = vmatprep.subr.mxu0 0.0
    %4636 = vmatpush2.msra.mxu0 0.0
    %4637 = vmatprep.subr.mxu0 0.0
    %4638 = vmatpush2.msra.mxu0 0.0
    %4639 = vmatprep.subr.mxu0 0.0
    %4640 = vmatpush2.msra.mxu0 0.0
    %4641 = vmatprep.subr.mxu0 0.0
    %4642 = vmatpush2.msra.mxu0 0.0
    %4643 = vmatprep.subr.mxu0 0.0
    %4644 = vmatpush2.msra.mxu0 0.0
    %4645 = vmatprep.subr.mxu0 0.0
    %4646 = vmatpush2.msra.mxu0 0.0
    %4647 = vmatprep.mubr.f32.mxu0 0.0
    %4648 = vmatmul.mubr.f32.gmra.mxu0 %v4499
    %v4649 = vpop.f32.mrf.mxu0
    %v4650 = vadd.f32 0.0, %v4649
    %v4651 = vpop.f32.mrf.mxu0
    %4652 = vdwg.mxu0
    %v4653 = vadd.f32 %v4578, %v4650
    %v4654 = vxor.u32 %v4653, 2147483648
    %v4655 = vmul.f32 %v4654, 1.442695
    %v4656 = vpow.pop %v4655
    %v4657 = vadd.f32 %v4656, 1.0
    %v4658 = vrcp.pop %v4657
    %v4659 = vmul.f32 1.0, %v4658
    %v4660 = vld [vmem:[%s1442] sm:$0xff]
    %v4661 = vld [vmem:[%s3995] sm:$0xff]
    %v4662 = vld [vmem:[%s3995 + $0x8] sm:$0xff]
    %v4663 = vld [vmem:[%s3995 + $0x10] sm:$0xff]
    %v4664 = vld [vmem:[%s3995 + $0x18] sm:$0xff]
    %4665 = vmatprep.subr.mxu0 0.0
    %4666 = vmatpush1.msra.mxu0 0.0
    %4667 = vmatprep.subr.mxu0 0.0
    %4668 = vmatpush1.msra.mxu0 0.0
    %4669 = vmatprep.subr.mxu0 0.0
    %4670 = vmatpush1.msra.mxu0 0.0
    %4671 = vmatprep.subr.mxu0 0.0
    %4672 = vmatpush1.msra.mxu0 0.0
    %4673 = vmatprep.subr.mxu0 0.0
    %4674 = vmatpush1.msra.mxu0 0.0
    %4675 = vmatprep.subr.mxu0 0.0
    %4676 = vmatpush1.msra.mxu0 0.0
    %4677 = vmatprep.subr.mxu0 0.0
    %4678 = vmatpush1.msra.mxu0 0.0
    %4679 = vmatprep.subr.mxu0 0.0
    %4680 = vmatpush1.msra.mxu0 0.0
    %4681 = vmatprep.subr.mxu0 0.0
    %4682 = vmatpush1.msra.mxu0 0.0
    %4683 = vmatprep.subr.mxu0 0.0
    %4684 = vmatpush1.msra.mxu0 0.0
    %4685 = vmatprep.subr.mxu0 0.0
    %4686 = vmatpush1.msra.mxu0 0.0
    %4687 = vmatprep.subr.mxu0 0.0
    %4688 = vmatpush1.msra.mxu0 0.0
    %4689 = vmatprep.subr.mxu0 0.0
    %4690 = vmatpush1.msra.mxu0 %v4664
    %4691 = vmatprep.subr.mxu0 0.0
    %4692 = vmatpush1.msra.mxu0 %v4663
    %4693 = vmatprep.subr.mxu0 0.0
    %4694 = vmatpush1.msra.mxu0 %v4662
    %4695 = vmatprep.subr.mxu0 0.0
    %4696 = vmatpush1.msra.mxu0 %v4661
    %4697 = vmatprep.subr.mxu0 0.0
    %4698 = vmatpush2.msra.mxu0 0.0
    %4699 = vmatprep.subr.mxu0 0.0
    %4700 = vmatpush2.msra.mxu0 0.0
    %4701 = vmatprep.subr.mxu0 0.0
    %4702 = vmatpush2.msra.mxu0 0.0
    %4703 = vmatprep.subr.mxu0 0.0
    %4704 = vmatpush2.msra.mxu0 0.0
    %4705 = vmatprep.subr.mxu0 0.0
    %4706 = vmatpush2.msra.mxu0 0.0
    %4707 = vmatprep.subr.mxu0 0.0
    %4708 = vmatpush2.msra.mxu0 0.0
    %4709 = vmatprep.subr.mxu0 0.0
    %4710 = vmatpush2.msra.mxu0 0.0
    %4711 = vmatprep.subr.mxu0 0.0
    %4712 = vmatpush2.msra.mxu0 0.0
    %4713 = vmatprep.subr.mxu0 0.0
    %4714 = vmatpush2.msra.mxu0 0.0
    %4715 = vmatprep.subr.mxu0 0.0
    %4716 = vmatpush2.msra.mxu0 0.0
    %4717 = vmatprep.subr.mxu0 0.0
    %4718 = vmatpush2.msra.mxu0 0.0
    %4719 = vmatprep.subr.mxu0 0.0
    %4720 = vmatpush2.msra.mxu0 0.0
    %4721 = vmatprep.subr.mxu0 0.0
    %4722 = vmatpush2.msra.mxu0 0.0
    %4723 = vmatprep.subr.mxu0 0.0
    %4724 = vmatpush2.msra.mxu0 0.0
    %4725 = vmatprep.subr.mxu0 0.0
    %4726 = vmatpush2.msra.mxu0 0.0
    %4727 = vmatprep.subr.mxu0 0.0
    %4728 = vmatpush2.msra.mxu0 0.0
    %4729 = vmatprep.mubr.f32.mxu0 0.0
    %4730 = vmatmul.mubr.f32.gmra.mxu0 %v4499
    %v4731 = vpop.f32.mrf.mxu0
    %v4732 = vadd.f32 0.0, %v4731
    %v4733 = vpop.f32.mrf.mxu0
    %4734 = vdwg.mxu0
    %v4735 = vadd.f32 %v4660, %v4732
    %v4736 = vtanh.pop %v4735
    %v4737 = vld [vmem:[%s1520] sm:$0xff]
    %v4738 = vld [vmem:[%s4073] sm:$0xff]
    %v4739 = vld [vmem:[%s4073 + $0x8] sm:$0xff]
    %v4740 = vld [vmem:[%s4073 + $0x10] sm:$0xff]
    %v4741 = vld [vmem:[%s4073 + $0x18] sm:$0xff]
    %4742 = vmatprep.subr.mxu0 0.0
    %4743 = vmatpush1.msra.mxu0 0.0
    %4744 = vmatprep.subr.mxu0 0.0
    %4745 = vmatpush1.msra.mxu0 0.0
    %4746 = vmatprep.subr.mxu0 0.0
    %4747 = vmatpush1.msra.mxu0 0.0
    %4748 = vmatprep.subr.mxu0 0.0
    %4749 = vmatpush1.msra.mxu0 0.0
    %4750 = vmatprep.subr.mxu0 0.0
    %4751 = vmatpush1.msra.mxu0 0.0
    %4752 = vmatprep.subr.mxu0 0.0
    %4753 = vmatpush1.msra.mxu0 0.0
    %4754 = vmatprep.subr.mxu0 0.0
    %4755 = vmatpush1.msra.mxu0 0.0
    %4756 = vmatprep.subr.mxu0 0.0
    %4757 = vmatpush1.msra.mxu0 0.0
    %4758 = vmatprep.subr.mxu0 0.0
    %4759 = vmatpush1.msra.mxu0 0.0
    %4760 = vmatprep.subr.mxu0 0.0
    %4761 = vmatpush1.msra.mxu0 0.0
    %4762 = vmatprep.subr.mxu0 0.0
    %4763 = vmatpush1.msra.mxu0 0.0
    %4764 = vmatprep.subr.mxu0 0.0
    %4765 = vmatpush1.msra.mxu0 0.0
    %4766 = vmatprep.subr.mxu0 0.0
    %4767 = vmatpush1.msra.mxu0 %v4741
    %4768 = vmatprep.subr.mxu0 0.0
    %4769 = vmatpush1.msra.mxu0 %v4740
    %4770 = vmatprep.subr.mxu0 0.0
    %4771 = vmatpush1.msra.mxu0 %v4739
    %4772 = vmatprep.subr.mxu0 0.0
    %4773 = vmatpush1.msra.mxu0 %v4738
    %4774 = vmatprep.subr.mxu0 0.0
    %4775 = vmatpush2.msra.mxu0 0.0
    %4776 = vmatprep.subr.mxu0 0.0
    %4777 = vmatpush2.msra.mxu0 0.0
    %4778 = vmatprep.subr.mxu0 0.0
    %4779 = vmatpush2.msra.mxu0 0.0
    %4780 = vmatprep.subr.mxu0 0.0
    %4781 = vmatpush2.msra.mxu0 0.0
    %4782 = vmatprep.subr.mxu0 0.0
    %4783 = vmatpush2.msra.mxu0 0.0
    %4784 = vmatprep.subr.mxu0 0.0
    %4785 = vmatpush2.msra.mxu0 0.0
    %4786 = vmatprep.subr.mxu0 0.0
    %4787 = vmatpush2.msra.mxu0 0.0
    %4788 = vmatprep.subr.mxu0 0.0
    %4789 = vmatpush2.msra.mxu0 0.0
    %4790 = vmatprep.subr.mxu0 0.0
    %4791 = vmatpush2.msra.mxu0 0.0
    %4792 = vmatprep.subr.mxu0 0.0
    %4793 = vmatpush2.msra.mxu0 0.0
    %4794 = vmatprep.subr.mxu0 0.0
    %4795 = vmatpush2.msra.mxu0 0.0
    %4796 = vmatprep.subr.mxu0 0.0
    %4797 = vmatpush2.msra.mxu0 0.0
    %4798 = vmatprep.subr.mxu0 0.0
    %4799 = vmatpush2.msra.mxu0 0.0
    %4800 = vmatprep.subr.mxu0 0.0
    %4801 = vmatpush2.msra.mxu0 0.0
    %4802 = vmatprep.subr.mxu0 0.0
    %4803 = vmatpush2.msra.mxu0 0.0
    %4804 = vmatprep.subr.mxu0 0.0
    %4805 = vmatpush2.msra.mxu0 0.0
    %4806 = vmatprep.mubr.f32.mxu0 0.0
    %4807 = vmatmul.mubr.f32.gmra.mxu0 %v4499
    %v4808 = vpop.f32.mrf.mxu0
    %v4809 = vadd.f32 0.0, %v4808
    %v4810 = vpop.f32.mrf.mxu0
    %4811 = vdwg.mxu0
    %v4812 = vadd.f32 %v4737, %v4809
    %v4813 = vxor.u32 %v4812, 2147483648
    %v4814 = vmul.f32 %v4813, 1.442695
    %v4815 = vpow.pop %v4814
    %v4816 = vadd.f32 %v4815, 1.0
    %v4817 = vrcp.pop %v4816
    %v4818 = vmul.f32 1.0, %v4817
    %v4819 = vmul.f32 %v4659, %v4489
    %v4820 = vmul.f32 %v4577, %v4736
    %v4821 = vadd.f32 %v4819, %v4820
    %v4822 = vtanh.pop %v4821
    %v4823 = vmul.f32 %v4818, %v4822
    %4824 = vst.msk [vmem:[%s1608] sm:$0xff] %vm220, %v4823
    %v4825 = vld [vmem:[%s1610] sm:$0xff]
    %v4826 = vld [vmem:[#allocation11] sm:$0xff]
    %v4827 = vld [vmem:[#allocation11 + $0x8] sm:$0xff]
    %v4828 = vld [vmem:[#allocation11 + $0x10] sm:$0xff]
    %v4829 = vld [vmem:[#allocation11 + $0x18] sm:$0xff]
    %v4831 = vsel %vm220, %v4823, 0
    %4833 = vmatprep.subr.mxu0 0.0
    %4834 = vmatpush1.msra.mxu0 0.0
    %4835 = vmatprep.subr.mxu0 0.0
    %4836 = vmatpush1.msra.mxu0 0.0
    %4837 = vmatprep.subr.mxu0 0.0
    %4838 = vmatpush1.msra.mxu0 0.0
    %4839 = vmatprep.subr.mxu0 0.0
    %4840 = vmatpush1.msra.mxu0 0.0
    %4841 = vmatprep.subr.mxu0 0.0
    %4842 = vmatpush1.msra.mxu0 0.0
    %4843 = vmatprep.subr.mxu0 0.0
    %4844 = vmatpush1.msra.mxu0 0.0
    %4845 = vmatprep.subr.mxu0 0.0
    %4846 = vmatpush1.msra.mxu0 0.0
    %4847 = vmatprep.subr.mxu0 0.0
    %4848 = vmatpush1.msra.mxu0 0.0
    %4849 = vmatprep.subr.mxu0 0.0
    %4850 = vmatpush1.msra.mxu0 0.0
    %4851 = vmatprep.subr.mxu0 0.0
    %4852 = vmatpush1.msra.mxu0 0.0
    %4853 = vmatprep.subr.mxu0 0.0
    %4854 = vmatpush1.msra.mxu0 0.0
    %4855 = vmatprep.subr.mxu0 0.0
    %4856 = vmatpush1.msra.mxu0 0.0
    %4857 = vmatprep.subr.mxu0 0.0
    %4858 = vmatpush1.msra.mxu0 %v4829
    %4859 = vmatprep.subr.mxu0 0.0
    %4860 = vmatpush1.msra.mxu0 %v4828
    %4861 = vmatprep.subr.mxu0 0.0
    %4862 = vmatpush1.msra.mxu0 %v4827
    %4863 = vmatprep.subr.mxu0 0.0
    %4864 = vmatpush1.msra.mxu0 %v4826
    %4865 = vmatprep.subr.mxu0 0.0
    %4866 = vmatpush2.msra.mxu0 0.0
    %4867 = vmatprep.subr.mxu0 0.0
    %4868 = vmatpush2.msra.mxu0 0.0
    %4869 = vmatprep.subr.mxu0 0.0
    %4870 = vmatpush2.msra.mxu0 0.0
    %4871 = vmatprep.subr.mxu0 0.0
    %4872 = vmatpush2.msra.mxu0 0.0
    %4873 = vmatprep.subr.mxu0 0.0
    %4874 = vmatpush2.msra.mxu0 0.0
    %4875 = vmatprep.subr.mxu0 0.0
    %4876 = vmatpush2.msra.mxu0 0.0
    %4877 = vmatprep.subr.mxu0 0.0
    %4878 = vmatpush2.msra.mxu0 0.0
    %4879 = vmatprep.subr.mxu0 0.0
    %4880 = vmatpush2.msra.mxu0 0.0
    %4881 = vmatprep.subr.mxu0 0.0
    %4882 = vmatpush2.msra.mxu0 0.0
    %4883 = vmatprep.subr.mxu0 0.0
    %4884 = vmatpush2.msra.mxu0 0.0
    %4885 = vmatprep.subr.mxu0 0.0
    %4886 = vmatpush2.msra.mxu0 0.0
    %4887 = vmatprep.subr.mxu0 0.0
    %4888 = vmatpush2.msra.mxu0 0.0
    %4889 = vmatprep.subr.mxu0 0.0
    %4890 = vmatpush2.msra.mxu0 0.0
    %4891 = vmatprep.subr.mxu0 0.0
    %4892 = vmatpush2.msra.mxu0 0.0
    %4893 = vmatprep.subr.mxu0 0.0
    %4894 = vmatpush2.msra.mxu0 0.0
    %4895 = vmatprep.subr.mxu0 0.0
    %4896 = vmatpush2.msra.mxu0 0.0
    %4897 = vmatprep.mubr.f32.mxu0 0.0
    %4898 = vmatmul.mubr.f32.gmra.mxu0 %v4831
    %v4899 = vpop.f32.mrf.mxu0
    %v4900 = vadd.f32 0.0, %v4899
    %v4901 = vpop.f32.mrf.mxu0
    %4902 = vdwg.mxu0
    %v4903 = vadd.f32 %v4825, %v4900
    %v4904 = vxor.u32 %v4903, 2147483648
    %v4905 = vmul.f32 %v4904, 1.442695
    %v4906 = vpow.pop %v4905
    %v4907 = vadd.f32 %v4906, 1.0
    %v4908 = vrcp.pop %v4907
    %v4909 = vmul.f32 1.0, %v4908
    %v4910 = vld [vmem:[%s1696] sm:$0xff]
    %v4911 = vld [vmem:[%s3912] sm:$0xff]
    %v4912 = vld [vmem:[%s3912 + $0x8] sm:$0xff]
    %v4913 = vld [vmem:[%s3912 + $0x10] sm:$0xff]
    %v4914 = vld [vmem:[%s3912 + $0x18] sm:$0xff]
    %4915 = vmatprep.subr.mxu0 0.0
    %4916 = vmatpush1.msra.mxu0 0.0
    %4917 = vmatprep.subr.mxu0 0.0
    %4918 = vmatpush1.msra.mxu0 0.0
    %4919 = vmatprep.subr.mxu0 0.0
    %4920 = vmatpush1.msra.mxu0 0.0
    %4921 = vmatprep.subr.mxu0 0.0
    %4922 = vmatpush1.msra.mxu0 0.0
    %4923 = vmatprep.subr.mxu0 0.0
    %4924 = vmatpush1.msra.mxu0 0.0
    %4925 = vmatprep.subr.mxu0 0.0
    %4926 = vmatpush1.msra.mxu0 0.0
    %4927 = vmatprep.subr.mxu0 0.0
    %4928 = vmatpush1.msra.mxu0 0.0
    %4929 = vmatprep.subr.mxu0 0.0
    %4930 = vmatpush1.msra.mxu0 0.0
    %4931 = vmatprep.subr.mxu0 0.0
    %4932 = vmatpush1.msra.mxu0 0.0
    %4933 = vmatprep.subr.mxu0 0.0
    %4934 = vmatpush1.msra.mxu0 0.0
    %4935 = vmatprep.subr.mxu0 0.0
    %4936 = vmatpush1.msra.mxu0 0.0
    %4937 = vmatprep.subr.mxu0 0.0
    %4938 = vmatpush1.msra.mxu0 0.0
    %4939 = vmatprep.subr.mxu0 0.0
    %4940 = vmatpush1.msra.mxu0 %v4914
    %4941 = vmatprep.subr.mxu0 0.0
    %4942 = vmatpush1.msra.mxu0 %v4913
    %4943 = vmatprep.subr.mxu0 0.0
    %4944 = vmatpush1.msra.mxu0 %v4912
    %4945 = vmatprep.subr.mxu0 0.0
    %4946 = vmatpush1.msra.mxu0 %v4911
    %4947 = vmatprep.subr.mxu0 0.0
    %4948 = vmatpush2.msra.mxu0 0.0
    %4949 = vmatprep.subr.mxu0 0.0
    %4950 = vmatpush2.msra.mxu0 0.0
    %4951 = vmatprep.subr.mxu0 0.0
    %4952 = vmatpush2.msra.mxu0 0.0
    %4953 = vmatprep.subr.mxu0 0.0
    %4954 = vmatpush2.msra.mxu0 0.0
    %4955 = vmatprep.subr.mxu0 0.0
    %4956 = vmatpush2.msra.mxu0 0.0
    %4957 = vmatprep.subr.mxu0 0.0
    %4958 = vmatpush2.msra.mxu0 0.0
    %4959 = vmatprep.subr.mxu0 0.0
    %4960 = vmatpush2.msra.mxu0 0.0
    %4961 = vmatprep.subr.mxu0 0.0
    %4962 = vmatpush2.msra.mxu0 0.0
    %4963 = vmatprep.subr.mxu0 0.0
    %4964 = vmatpush2.msra.mxu0 0.0
    %4965 = vmatprep.subr.mxu0 0.0
    %4966 = vmatpush2.msra.mxu0 0.0
    %4967 = vmatprep.subr.mxu0 0.0
    %4968 = vmatpush2.msra.mxu0 0.0
    %4969 = vmatprep.subr.mxu0 0.0
    %4970 = vmatpush2.msra.mxu0 0.0
    %4971 = vmatprep.subr.mxu0 0.0
    %4972 = vmatpush2.msra.mxu0 0.0
    %4973 = vmatprep.subr.mxu0 0.0
    %4974 = vmatpush2.msra.mxu0 0.0
    %4975 = vmatprep.subr.mxu0 0.0
    %4976 = vmatpush2.msra.mxu0 0.0
    %4977 = vmatprep.subr.mxu0 0.0
    %4978 = vmatpush2.msra.mxu0 0.0
    %4979 = vmatprep.mubr.f32.mxu0 0.0
    %4980 = vmatmul.mubr.f32.gmra.mxu0 %v4831
    %v4981 = vpop.f32.mrf.mxu0
    %v4982 = vadd.f32 0.0, %v4981
    %v4983 = vpop.f32.mrf.mxu0
    %4984 = vdwg.mxu0
    %v4985 = vadd.f32 %v4910, %v4982
    %v4986 = vxor.u32 %v4985, 2147483648
    %v4987 = vmul.f32 %v4986, 1.442695
    %v4988 = vpow.pop %v4987
    %v4989 = vadd.f32 %v4988, 1.0
    %v4990 = vrcp.pop %v4989
    %v4991 = vmul.f32 1.0, %v4990
    %v4992 = vld [vmem:[%s1779] sm:$0xff]
    %v4993 = vld [vmem:[%s3995] sm:$0xff]
    %v4994 = vld [vmem:[%s3995 + $0x8] sm:$0xff]
    %v4995 = vld [vmem:[%s3995 + $0x10] sm:$0xff]
    %v4996 = vld [vmem:[%s3995 + $0x18] sm:$0xff]
    %4997 = vmatprep.subr.mxu0 0.0
    %4998 = vmatpush1.msra.mxu0 0.0
    %4999 = vmatprep.subr.mxu0 0.0
    %5000 = vmatpush1.msra.mxu0 0.0
    %5001 = vmatprep.subr.mxu0 0.0
    %5002 = vmatpush1.msra.mxu0 0.0
    %5003 = vmatprep.subr.mxu0 0.0
    %5004 = vmatpush1.msra.mxu0 0.0
    %5005 = vmatprep.subr.mxu0 0.0
    %5006 = vmatpush1.msra.mxu0 0.0
    %5007 = vmatprep.subr.mxu0 0.0
    %5008 = vmatpush1.msra.mxu0 0.0
    %5009 = vmatprep.subr.mxu0 0.0
    %5010 = vmatpush1.msra.mxu0 0.0
    %5011 = vmatprep.subr.mxu0 0.0
    %5012 = vmatpush1.msra.mxu0 0.0
    %5013 = vmatprep.subr.mxu0 0.0
    %5014 = vmatpush1.msra.mxu0 0.0
    %5015 = vmatprep.subr.mxu0 0.0
    %5016 = vmatpush1.msra.mxu0 0.0
    %5017 = vmatprep.subr.mxu0 0.0
    %5018 = vmatpush1.msra.mxu0 0.0
    %5019 = vmatprep.subr.mxu0 0.0
    %5020 = vmatpush1.msra.mxu0 0.0
    %5021 = vmatprep.subr.mxu0 0.0
    %5022 = vmatpush1.msra.mxu0 %v4996
    %5023 = vmatprep.subr.mxu0 0.0
    %5024 = vmatpush1.msra.mxu0 %v4995
    %5025 = vmatprep.subr.mxu0 0.0
    %5026 = vmatpush1.msra.mxu0 %v4994
    %5027 = vmatprep.subr.mxu0 0.0
    %5028 = vmatpush1.msra.mxu0 %v4993
    %5029 = vmatprep.subr.mxu0 0.0
    %5030 = vmatpush2.msra.mxu0 0.0
    %5031 = vmatprep.subr.mxu0 0.0
    %5032 = vmatpush2.msra.mxu0 0.0
    %5033 = vmatprep.subr.mxu0 0.0
    %5034 = vmatpush2.msra.mxu0 0.0
    %5035 = vmatprep.subr.mxu0 0.0
    %5036 = vmatpush2.msra.mxu0 0.0
    %5037 = vmatprep.subr.mxu0 0.0
    %5038 = vmatpush2.msra.mxu0 0.0
    %5039 = vmatprep.subr.mxu0 0.0
    %5040 = vmatpush2.msra.mxu0 0.0
    %5041 = vmatprep.subr.mxu0 0.0
    %5042 = vmatpush2.msra.mxu0 0.0
    %5043 = vmatprep.subr.mxu0 0.0
    %5044 = vmatpush2.msra.mxu0 0.0
    %5045 = vmatprep.subr.mxu0 0.0
    %5046 = vmatpush2.msra.mxu0 0.0
    %5047 = vmatprep.subr.mxu0 0.0
    %5048 = vmatpush2.msra.mxu0 0.0
    %5049 = vmatprep.subr.mxu0 0.0
    %5050 = vmatpush2.msra.mxu0 0.0
    %5051 = vmatprep.subr.mxu0 0.0
    %5052 = vmatpush2.msra.mxu0 0.0
    %5053 = vmatprep.subr.mxu0 0.0
    %5054 = vmatpush2.msra.mxu0 0.0
    %5055 = vmatprep.subr.mxu0 0.0
    %5056 = vmatpush2.msra.mxu0 0.0
    %5057 = vmatprep.subr.mxu0 0.0
    %5058 = vmatpush2.msra.mxu0 0.0
    %5059 = vmatprep.subr.mxu0 0.0
    %5060 = vmatpush2.msra.mxu0 0.0
    %5061 = vmatprep.mubr.f32.mxu0 0.0
    %5062 = vmatmul.mubr.f32.gmra.mxu0 %v4831
    %v5063 = vpop.f32.mrf.mxu0
    %v5064 = vadd.f32 0.0, %v5063
    %v5065 = vpop.f32.mrf.mxu0
    %5066 = vdwg.mxu0
    %v5067 = vadd.f32 %v4992, %v5064
    %v5068 = vtanh.pop %v5067
    %v5069 = vld [vmem:[%s1857] sm:$0xff]
    %v5070 = vld [vmem:[%s4073] sm:$0xff]
    %v5071 = vld [vmem:[%s4073 + $0x8] sm:$0xff]
    %v5072 = vld [vmem:[%s4073 + $0x10] sm:$0xff]
    %v5073 = vld [vmem:[%s4073 + $0x18] sm:$0xff]
    %5074 = vmatprep.subr.mxu0 0.0
    %5075 = vmatpush1.msra.mxu0 0.0
    %5076 = vmatprep.subr.mxu0 0.0
    %5077 = vmatpush1.msra.mxu0 0.0
    %5078 = vmatprep.subr.mxu0 0.0
    %5079 = vmatpush1.msra.mxu0 0.0
    %5080 = vmatprep.subr.mxu0 0.0
    %5081 = vmatpush1.msra.mxu0 0.0
    %5082 = vmatprep.subr.mxu0 0.0
    %5083 = vmatpush1.msra.mxu0 0.0
    %5084 = vmatprep.subr.mxu0 0.0
    %5085 = vmatpush1.msra.mxu0 0.0
    %5086 = vmatprep.subr.mxu0 0.0
    %5087 = vmatpush1.msra.mxu0 0.0
    %5088 = vmatprep.subr.mxu0 0.0
    %5089 = vmatpush1.msra.mxu0 0.0
    %5090 = vmatprep.subr.mxu0 0.0
    %5091 = vmatpush1.msra.mxu0 0.0
    %5092 = vmatprep.subr.mxu0 0.0
    %5093 = vmatpush1.msra.mxu0 0.0
    %5094 = vmatprep.subr.mxu0 0.0
    %5095 = vmatpush1.msra.mxu0 0.0
    %5096 = vmatprep.subr.mxu0 0.0
    %5097 = vmatpush1.msra.mxu0 0.0
    %5098 = vmatprep.subr.mxu0 0.0
    %5099 = vmatpush1.msra.mxu0 %v5073
    %5100 = vmatprep.subr.mxu0 0.0
    %5101 = vmatpush1.msra.mxu0 %v5072
    %5102 = vmatprep.subr.mxu0 0.0
    %5103 = vmatpush1.msra.mxu0 %v5071
    %5104 = vmatprep.subr.mxu0 0.0
    %5105 = vmatpush1.msra.mxu0 %v5070
    %5106 = vmatprep.subr.mxu0 0.0
    %5107 = vmatpush2.msra.mxu0 0.0
    %5108 = vmatprep.subr.mxu0 0.0
    %5109 = vmatpush2.msra.mxu0 0.0
    %5110 = vmatprep.subr.mxu0 0.0
    %5111 = vmatpush2.msra.mxu0 0.0
    %5112 = vmatprep.subr.mxu0 0.0
    %5113 = vmatpush2.msra.mxu0 0.0
    %5114 = vmatprep.subr.mxu0 0.0
    %5115 = vmatpush2.msra.mxu0 0.0
    %5116 = vmatprep.subr.mxu0 0.0
    %5117 = vmatpush2.msra.mxu0 0.0
    %5118 = vmatprep.subr.mxu0 0.0
    %5119 = vmatpush2.msra.mxu0 0.0
    %5120 = vmatprep.subr.mxu0 0.0
    %5121 = vmatpush2.msra.mxu0 0.0
    %5122 = vmatprep.subr.mxu0 0.0
    %5123 = vmatpush2.msra.mxu0 0.0
    %5124 = vmatprep.subr.mxu0 0.0
    %5125 = vmatpush2.msra.mxu0 0.0
    %5126 = vmatprep.subr.mxu0 0.0
    %5127 = vmatpush2.msra.mxu0 0.0
    %5128 = vmatprep.subr.mxu0 0.0
    %5129 = vmatpush2.msra.mxu0 0.0
    %5130 = vmatprep.subr.mxu0 0.0
    %5131 = vmatpush2.msra.mxu0 0.0
    %5132 = vmatprep.subr.mxu0 0.0
    %5133 = vmatpush2.msra.mxu0 0.0
    %5134 = vmatprep.subr.mxu0 0.0
    %5135 = vmatpush2.msra.mxu0 0.0
    %5136 = vmatprep.subr.mxu0 0.0
    %5137 = vmatpush2.msra.mxu0 0.0
    %5138 = vmatprep.mubr.f32.mxu0 0.0
    %5139 = vmatmul.mubr.f32.gmra.mxu0 %v4831
    %v5140 = vpop.f32.mrf.mxu0
    %v5141 = vadd.f32 0.0, %v5140
    %v5142 = vpop.f32.mrf.mxu0
    %5143 = vdwg.mxu0
    %v5144 = vadd.f32 %v5069, %v5141
    %v5145 = vxor.u32 %v5144, 2147483648
    %v5146 = vmul.f32 %v5145, 1.442695
    %v5147 = vpow.pop %v5146
    %v5148 = vadd.f32 %v5147, 1.0
    %v5149 = vrcp.pop %v5148
    %v5150 = vmul.f32 1.0, %v5149
    %v5151 = vmul.f32 %v4991, %v4821
    %v5152 = vmul.f32 %v4909, %v5068
    %v5153 = vadd.f32 %v5151, %v5152
    %v5154 = vtanh.pop %v5153
    %v5155 = vmul.f32 %v5150, %v5154
    %5156 = vst.msk [vmem:[%s1945] sm:$0xff] %vm220, %v5155
    %v5157 = vld [vmem:[%s1947] sm:$0xff]
    %v5158 = vld [vmem:[#allocation11] sm:$0xff]
    %v5159 = vld [vmem:[#allocation11 + $0x8] sm:$0xff]
    %v5160 = vld [vmem:[#allocation11 + $0x10] sm:$0xff]
    %v5161 = vld [vmem:[#allocation11 + $0x18] sm:$0xff]
    %v5163 = vsel %vm220, %v5155, 0
    %5165 = vmatprep.subr.mxu0 0.0
    %5166 = vmatpush1.msra.mxu0 0.0
    %5167 = vmatprep.subr.mxu0 0.0
    %5168 = vmatpush1.msra.mxu0 0.0
    %5169 = vmatprep.subr.mxu0 0.0
    %5170 = vmatpush1.msra.mxu0 0.0
    %5171 = vmatprep.subr.mxu0 0.0
    %5172 = vmatpush1.msra.mxu0 0.0
    %5173 = vmatprep.subr.mxu0 0.0
    %5174 = vmatpush1.msra.mxu0 0.0
    %5175 = vmatprep.subr.mxu0 0.0
    %5176 = vmatpush1.msra.mxu0 0.0
    %5177 = vmatprep.subr.mxu0 0.0
    %5178 = vmatpush1.msra.mxu0 0.0
    %5179 = vmatprep.subr.mxu0 0.0
    %5180 = vmatpush1.msra.mxu0 0.0
    %5181 = vmatprep.subr.mxu0 0.0
    %5182 = vmatpush1.msra.mxu0 0.0
    %5183 = vmatprep.subr.mxu0 0.0
    %5184 = vmatpush1.msra.mxu0 0.0
    %5185 = vmatprep.subr.mxu0 0.0
    %5186 = vmatpush1.msra.mxu0 0.0
    %5187 = vmatprep.subr.mxu0 0.0
    %5188 = vmatpush1.msra.mxu0 0.0
    %5189 = vmatprep.subr.mxu0 0.0
    %5190 = vmatpush1.msra.mxu0 %v5161
    %5191 = vmatprep.subr.mxu0 0.0
    %5192 = vmatpush1.msra.mxu0 %v5160
    %5193 = vmatprep.subr.mxu0 0.0
    %5194 = vmatpush1.msra.mxu0 %v5159
    %5195 = vmatprep.subr.mxu0 0.0
    %5196 = vmatpush1.msra.mxu0 %v5158
    %5197 = vmatprep.subr.mxu0 0.0
    %5198 = vmatpush2.msra.mxu0 0.0
    %5199 = vmatprep.subr.mxu0 0.0
    %5200 = vmatpush2.msra.mxu0 0.0
    %5201 = vmatprep.subr.mxu0 0.0
    %5202 = vmatpush2.msra.mxu0 0.0
    %5203 = vmatprep.subr.mxu0 0.0
    %5204 = vmatpush2.msra.mxu0 0.0
    %5205 = vmatprep.subr.mxu0 0.0
    %5206 = vmatpush2.msra.mxu0 0.0
    %5207 = vmatprep.subr.mxu0 0.0
    %5208 = vmatpush2.msra.mxu0 0.0
    %5209 = vmatprep.subr.mxu0 0.0
    %5210 = vmatpush2.msra.mxu0 0.0
    %5211 = vmatprep.subr.mxu0 0.0
    %5212 = vmatpush2.msra.mxu0 0.0
    %5213 = vmatprep.subr.mxu0 0.0
    %5214 = vmatpush2.msra.mxu0 0.0
    %5215 = vmatprep.subr.mxu0 0.0
    %5216 = vmatpush2.msra.mxu0 0.0
    %5217 = vmatprep.subr.mxu0 0.0
    %5218 = vmatpush2.msra.mxu0 0.0
    %5219 = vmatprep.subr.mxu0 0.0
    %5220 = vmatpush2.msra.mxu0 0.0
    %5221 = vmatprep.subr.mxu0 0.0
    %5222 = vmatpush2.msra.mxu0 0.0
    %5223 = vmatprep.subr.mxu0 0.0
    %5224 = vmatpush2.msra.mxu0 0.0
    %5225 = vmatprep.subr.mxu0 0.0
    %5226 = vmatpush2.msra.mxu0 0.0
    %5227 = vmatprep.subr.mxu0 0.0
    %5228 = vmatpush2.msra.mxu0 0.0
    %5229 = vmatprep.mubr.f32.mxu0 0.0
    %5230 = vmatmul.mubr.f32.gmra.mxu0 %v5163
    %v5231 = vpop.f32.mrf.mxu0
    %v5232 = vadd.f32 0.0, %v5231
    %v5233 = vpop.f32.mrf.mxu0
    %5234 = vdwg.mxu0
    %v5235 = vadd.f32 %v5157, %v5232
    %v5236 = vxor.u32 %v5235, 2147483648
    %v5237 = vmul.f32 %v5236, 1.442695
    %v5238 = vpow.pop %v5237
    %v5239 = vadd.f32 %v5238, 1.0
    %v5240 = vrcp.pop %v5239
    %v5241 = vmul.f32 1.0, %v5240
    %v5242 = vld [vmem:[%s2033] sm:$0xff]
    %v5243 = vld [vmem:[%s3912] sm:$0xff]
    %v5244 = vld [vmem:[%s3912 + $0x8] sm:$0xff]
    %v5245 = vld [vmem:[%s3912 + $0x10] sm:$0xff]
    %v5246 = vld [vmem:[%s3912 + $0x18] sm:$0xff]
    %5247 = vmatprep.subr.mxu0 0.0
    %5248 = vmatpush1.msra.mxu0 0.0
    %5249 = vmatprep.subr.mxu0 0.0
    %5250 = vmatpush1.msra.mxu0 0.0
    %5251 = vmatprep.subr.mxu0 0.0
    %5252 = vmatpush1.msra.mxu0 0.0
    %5253 = vmatprep.subr.mxu0 0.0
    %5254 = vmatpush1.msra.mxu0 0.0
    %5255 = vmatprep.subr.mxu0 0.0
    %5256 = vmatpush1.msra.mxu0 0.0
    %5257 = vmatprep.subr.mxu0 0.0
    %5258 = vmatpush1.msra.mxu0 0.0
    %5259 = vmatprep.subr.mxu0 0.0
    %5260 = vmatpush1.msra.mxu0 0.0
    %5261 = vmatprep.subr.mxu0 0.0
    %5262 = vmatpush1.msra.mxu0 0.0
    %5263 = vmatprep.subr.mxu0 0.0
    %5264 = vmatpush1.msra.mxu0 0.0
    %5265 = vmatprep.subr.mxu0 0.0
    %5266 = vmatpush1.msra.mxu0 0.0
    %5267 = vmatprep.subr.mxu0 0.0
    %5268 = vmatpush1.msra.mxu0 0.0
    %5269 = vmatprep.subr.mxu0 0.0
    %5270 = vmatpush1.msra.mxu0 0.0
    %5271 = vmatprep.subr.mxu0 0.0
    %5272 = vmatpush1.msra.mxu0 %v5246
    %5273 = vmatprep.subr.mxu0 0.0
    %5274 = vmatpush1.msra.mxu0 %v5245
    %5275 = vmatprep.subr.mxu0 0.0
    %5276 = vmatpush1.msra.mxu0 %v5244
    %5277 = vmatprep.subr.mxu0 0.0
    %5278 = vmatpush1.msra.mxu0 %v5243
    %5279 = vmatprep.subr.mxu0 0.0
    %5280 = vmatpush2.msra.mxu0 0.0
    %5281 = vmatprep.subr.mxu0 0.0
    %5282 = vmatpush2.msra.mxu0 0.0
    %5283 = vmatprep.subr.mxu0 0.0
    %5284 = vmatpush2.msra.mxu0 0.0
    %5285 = vmatprep.subr.mxu0 0.0
    %5286 = vmatpush2.msra.mxu0 0.0
    %5287 = vmatprep.subr.mxu0 0.0
    %5288 = vmatpush2.msra.mxu0 0.0
    %5289 = vmatprep.subr.mxu0 0.0
    %5290 = vmatpush2.msra.mxu0 0.0
    %5291 = vmatprep.subr.mxu0 0.0
    %5292 = vmatpush2.msra.mxu0 0.0
    %5293 = vmatprep.subr.mxu0 0.0
    %5294 = vmatpush2.msra.mxu0 0.0
    %5295 = vmatprep.subr.mxu0 0.0
    %5296 = vmatpush2.msra.mxu0 0.0
    %5297 = vmatprep.subr.mxu0 0.0
    %5298 = vmatpush2.msra.mxu0 0.0
    %5299 = vmatprep.subr.mxu0 0.0
    %5300 = vmatpush2.msra.mxu0 0.0
    %5301 = vmatprep.subr.mxu0 0.0
    %5302 = vmatpush2.msra.mxu0 0.0
    %5303 = vmatprep.subr.mxu0 0.0
    %5304 = vmatpush2.msra.mxu0 0.0
    %5305 = vmatprep.subr.mxu0 0.0
    %5306 = vmatpush2.msra.mxu0 0.0
    %5307 = vmatprep.subr.mxu0 0.0
    %5308 = vmatpush2.msra.mxu0 0.0
    %5309 = vmatprep.subr.mxu0 0.0
    %5310 = vmatpush2.msra.mxu0 0.0
    %5311 = vmatprep.mubr.f32.mxu0 0.0
    %5312 = vmatmul.mubr.f32.gmra.mxu0 %v5163
    %v5313 = vpop.f32.mrf.mxu0
    %v5314 = vadd.f32 0.0, %v5313
    %v5315 = vpop.f32.mrf.mxu0
    %5316 = vdwg.mxu0
    %v5317 = vadd.f32 %v5242, %v5314
    %v5318 = vxor.u32 %v5317, 2147483648
    %v5319 = vmul.f32 %v5318, 1.442695
    %v5320 = vpow.pop %v5319
    %v5321 = vadd.f32 %v5320, 1.0
    %v5322 = vrcp.pop %v5321
    %v5323 = vmul.f32 1.0, %v5322
    %v5324 = vld [vmem:[%s2116] sm:$0xff]
    %v5325 = vld [vmem:[%s3995] sm:$0xff]
    %v5326 = vld [vmem:[%s3995 + $0x8] sm:$0xff]
    %v5327 = vld [vmem:[%s3995 + $0x10] sm:$0xff]
    %v5328 = vld [vmem:[%s3995 + $0x18] sm:$0xff]
    %5329 = vmatprep.subr.mxu0 0.0
    %5330 = vmatpush1.msra.mxu0 0.0
    %5331 = vmatprep.subr.mxu0 0.0
    %5332 = vmatpush1.msra.mxu0 0.0
    %5333 = vmatprep.subr.mxu0 0.0
    %5334 = vmatpush1.msra.mxu0 0.0
    %5335 = vmatprep.subr.mxu0 0.0
    %5336 = vmatpush1.msra.mxu0 0.0
    %5337 = vmatprep.subr.mxu0 0.0
    %5338 = vmatpush1.msra.mxu0 0.0
    %5339 = vmatprep.subr.mxu0 0.0
    %5340 = vmatpush1.msra.mxu0 0.0
    %5341 = vmatprep.subr.mxu0 0.0
    %5342 = vmatpush1.msra.mxu0 0.0
    %5343 = vmatprep.subr.mxu0 0.0
    %5344 = vmatpush1.msra.mxu0 0.0
    %5345 = vmatprep.subr.mxu0 0.0
    %5346 = vmatpush1.msra.mxu0 0.0
    %5347 = vmatprep.subr.mxu0 0.0
    %5348 = vmatpush1.msra.mxu0 0.0
    %5349 = vmatprep.subr.mxu0 0.0
    %5350 = vmatpush1.msra.mxu0 0.0
    %5351 = vmatprep.subr.mxu0 0.0
    %5352 = vmatpush1.msra.mxu0 0.0
    %5353 = vmatprep.subr.mxu0 0.0
    %5354 = vmatpush1.msra.mxu0 %v5328
    %5355 = vmatprep.subr.mxu0 0.0
    %5356 = vmatpush1.msra.mxu0 %v5327
    %5357 = vmatprep.subr.mxu0 0.0
    %5358 = vmatpush1.msra.mxu0 %v5326
    %5359 = vmatprep.subr.mxu0 0.0
    %5360 = vmatpush1.msra.mxu0 %v5325
    %5361 = vmatprep.subr.mxu0 0.0
    %5362 = vmatpush2.msra.mxu0 0.0
    %5363 = vmatprep.subr.mxu0 0.0
    %5364 = vmatpush2.msra.mxu0 0.0
    %5365 = vmatprep.subr.mxu0 0.0
    %5366 = vmatpush2.msra.mxu0 0.0
    %5367 = vmatprep.subr.mxu0 0.0
    %5368 = vmatpush2.msra.mxu0 0.0
    %5369 = vmatprep.subr.mxu0 0.0
    %5370 = vmatpush2.msra.mxu0 0.0
    %5371 = vmatprep.subr.mxu0 0.0
    %5372 = vmatpush2.msra.mxu0 0.0
    %5373 = vmatprep.subr.mxu0 0.0
    %5374 = vmatpush2.msra.mxu0 0.0
    %5375 = vmatprep.subr.mxu0 0.0
    %5376 = vmatpush2.msra.mxu0 0.0
    %5377 = vmatprep.subr.mxu0 0.0
    %5378 = vmatpush2.msra.mxu0 0.0
    %5379 = vmatprep.subr.mxu0 0.0
    %5380 = vmatpush2.msra.mxu0 0.0
    %5381 = vmatprep.subr.mxu0 0.0
    %5382 = vmatpush2.msra.mxu0 0.0
    %5383 = vmatprep.subr.mxu0 0.0
    %5384 = vmatpush2.msra.mxu0 0.0
    %5385 = vmatprep.subr.mxu0 0.0
    %5386 = vmatpush2.msra.mxu0 0.0
    %5387 = vmatprep.subr.mxu0 0.0
    %5388 = vmatpush2.msra.mxu0 0.0
    %5389 = vmatprep.subr.mxu0 0.0
    %5390 = vmatpush2.msra.mxu0 0.0
    %5391 = vmatprep.subr.mxu0 0.0
    %5392 = vmatpush2.msra.mxu0 0.0
    %5393 = vmatprep.mubr.f32.mxu0 0.0
    %5394 = vmatmul.mubr.f32.gmra.mxu0 %v5163
    %v5395 = vpop.f32.mrf.mxu0
    %v5396 = vadd.f32 0.0, %v5395
    %v5397 = vpop.f32.mrf.mxu0
    %5398 = vdwg.mxu0
    %v5399 = vadd.f32 %v5324, %v5396
    %v5400 = vtanh.pop %v5399
    %v5401 = vld [vmem:[%s2194] sm:$0xff]
    %v5402 = vld [vmem:[%s4073] sm:$0xff]
    %v5403 = vld [vmem:[%s4073 + $0x8] sm:$0xff]
    %v5404 = vld [vmem:[%s4073 + $0x10] sm:$0xff]
    %v5405 = vld [vmem:[%s4073 + $0x18] sm:$0xff]
    %5406 = vmatprep.subr.mxu0 0.0
    %5407 = vmatpush1.msra.mxu0 0.0
    %5408 = vmatprep.subr.mxu0 0.0
    %5409 = vmatpush1.msra.mxu0 0.0
    %5410 = vmatprep.subr.mxu0 0.0
    %5411 = vmatpush1.msra.mxu0 0.0
    %5412 = vmatprep.subr.mxu0 0.0
    %5413 = vmatpush1.msra.mxu0 0.0
    %5414 = vmatprep.subr.mxu0 0.0
    %5415 = vmatpush1.msra.mxu0 0.0
    %5416 = vmatprep.subr.mxu0 0.0
    %5417 = vmatpush1.msra.mxu0 0.0
    %5418 = vmatprep.subr.mxu0 0.0
    %5419 = vmatpush1.msra.mxu0 0.0
    %5420 = vmatprep.subr.mxu0 0.0
    %5421 = vmatpush1.msra.mxu0 0.0
    %5422 = vmatprep.subr.mxu0 0.0
    %5423 = vmatpush1.msra.mxu0 0.0
    %5424 = vmatprep.subr.mxu0 0.0
    %5425 = vmatpush1.msra.mxu0 0.0
    %5426 = vmatprep.subr.mxu0 0.0
    %5427 = vmatpush1.msra.mxu0 0.0
    %5428 = vmatprep.subr.mxu0 0.0
    %5429 = vmatpush1.msra.mxu0 0.0
    %5430 = vmatprep.subr.mxu0 0.0
    %5431 = vmatpush1.msra.mxu0 %v5405
    %5432 = vmatprep.subr.mxu0 0.0
    %5433 = vmatpush1.msra.mxu0 %v5404
    %5434 = vmatprep.subr.mxu0 0.0
    %5435 = vmatpush1.msra.mxu0 %v5403
    %5436 = vmatprep.subr.mxu0 0.0
    %5437 = vmatpush1.msra.mxu0 %v5402
    %5438 = vmatprep.subr.mxu0 0.0
    %5439 = vmatpush2.msra.mxu0 0.0
    %5440 = vmatprep.subr.mxu0 0.0
    %5441 = vmatpush2.msra.mxu0 0.0
    %5442 = vmatprep.subr.mxu0 0.0
    %5443 = vmatpush2.msra.mxu0 0.0
    %5444 = vmatprep.subr.mxu0 0.0
    %5445 = vmatpush2.msra.mxu0 0.0
    %5446 = vmatprep.subr.mxu0 0.0
    %5447 = vmatpush2.msra.mxu0 0.0
    %5448 = vmatprep.subr.mxu0 0.0
    %5449 = vmatpush2.msra.mxu0 0.0
    %5450 = vmatprep.subr.mxu0 0.0
    %5451 = vmatpush2.msra.mxu0 0.0
    %5452 = vmatprep.subr.mxu0 0.0
    %5453 = vmatpush2.msra.mxu0 0.0
    %5454 = vmatprep.subr.mxu0 0.0
    %5455 = vmatpush2.msra.mxu0 0.0
    %5456 = vmatprep.subr.mxu0 0.0
    %5457 = vmatpush2.msra.mxu0 0.0
    %5458 = vmatprep.subr.mxu0 0.0
    %5459 = vmatpush2.msra.mxu0 0.0
    %5460 = vmatprep.subr.mxu0 0.0
    %5461 = vmatpush2.msra.mxu0 0.0
    %5462 = vmatprep.subr.mxu0 0.0
    %5463 = vmatpush2.msra.mxu0 0.0
    %5464 = vmatprep.subr.mxu0 0.0
    %5465 = vmatpush2.msra.mxu0 0.0
    %5466 = vmatprep.subr.mxu0 0.0
    %5467 = vmatpush2.msra.mxu0 0.0
    %5468 = vmatprep.subr.mxu0 0.0
    %5469 = vmatpush2.msra.mxu0 0.0
    %5470 = vmatprep.mubr.f32.mxu0 0.0
    %5471 = vmatmul.mubr.f32.gmra.mxu0 %v5163
    %v5472 = vpop.f32.mrf.mxu0
    %v5473 = vadd.f32 0.0, %v5472
    %v5474 = vpop.f32.mrf.mxu0
    %5475 = vdwg.mxu0
    %v5476 = vadd.f32 %v5401, %v5473
    %v5477 = vxor.u32 %v5476, 2147483648
    %v5478 = vmul.f32 %v5477, 1.442695
    %v5479 = vpow.pop %v5478
    %v5480 = vadd.f32 %v5479, 1.0
    %v5481 = vrcp.pop %v5480
    %v5482 = vmul.f32 1.0, %v5481
    %v5483 = vmul.f32 %v5323, %v5153
    %v5484 = vmul.f32 %v5241, %v5400
    %v5485 = vadd.f32 %v5483, %v5484
    %v5486 = vtanh.pop %v5485
    %v5487 = vmul.f32 %v5482, %v5486
    %5488 = vst.msk [vmem:[%s2282] sm:$0xff] %vm220, %v5487
    %v5489 = vld [vmem:[%s2284] sm:$0xff]
    %v5490 = vld [vmem:[#allocation11] sm:$0xff]
    %v5491 = vld [vmem:[#allocation11 + $0x8] sm:$0xff]
    %v5492 = vld [vmem:[#allocation11 + $0x10] sm:$0xff]
    %v5493 = vld [vmem:[#allocation11 + $0x18] sm:$0xff]
    %v5495 = vsel %vm220, %v5487, 0
    %5497 = vmatprep.subr.mxu0 0.0
    %5498 = vmatpush1.msra.mxu0 0.0
    %5499 = vmatprep.subr.mxu0 0.0
    %5500 = vmatpush1.msra.mxu0 0.0
    %5501 = vmatprep.subr.mxu0 0.0
    %5502 = vmatpush1.msra.mxu0 0.0
    %5503 = vmatprep.subr.mxu0 0.0
    %5504 = vmatpush1.msra.mxu0 0.0
    %5505 = vmatprep.subr.mxu0 0.0
    %5506 = vmatpush1.msra.mxu0 0.0
    %5507 = vmatprep.subr.mxu0 0.0
    %5508 = vmatpush1.msra.mxu0 0.0
    %5509 = vmatprep.subr.mxu0 0.0
    %5510 = vmatpush1.msra.mxu0 0.0
    %5511 = vmatprep.subr.mxu0 0.0
    %5512 = vmatpush1.msra.mxu0 0.0
    %5513 = vmatprep.subr.mxu0 0.0
    %5514 = vmatpush1.msra.mxu0 0.0
    %5515 = vmatprep.subr.mxu0 0.0
    %5516 = vmatpush1.msra.mxu0 0.0
    %5517 = vmatprep.subr.mxu0 0.0
    %5518 = vmatpush1.msra.mxu0 0.0
    %5519 = vmatprep.subr.mxu0 0.0
    %5520 = vmatpush1.msra.mxu0 0.0
    %5521 = vmatprep.subr.mxu0 0.0
    %5522 = vmatpush1.msra.mxu0 %v5493
    %5523 = vmatprep.subr.mxu0 0.0
    %5524 = vmatpush1.msra.mxu0 %v5492
    %5525 = vmatprep.subr.mxu0 0.0
    %5526 = vmatpush1.msra.mxu0 %v5491
    %5527 = vmatprep.subr.mxu0 0.0
    %5528 = vmatpush1.msra.mxu0 %v5490
    %5529 = vmatprep.subr.mxu0 0.0
    %5530 = vmatpush2.msra.mxu0 0.0
    %5531 = vmatprep.subr.mxu0 0.0
    %5532 = vmatpush2.msra.mxu0 0.0
    %5533 = vmatprep.subr.mxu0 0.0
    %5534 = vmatpush2.msra.mxu0 0.0
    %5535 = vmatprep.subr.mxu0 0.0
    %5536 = vmatpush2.msra.mxu0 0.0
    %5537 = vmatprep.subr.mxu0 0.0
    %5538 = vmatpush2.msra.mxu0 0.0
    %5539 = vmatprep.subr.mxu0 0.0
    %5540 = vmatpush2.msra.mxu0 0.0
    %5541 = vmatprep.subr.mxu0 0.0
    %5542 = vmatpush2.msra.mxu0 0.0
    %5543 = vmatprep.subr.mxu0 0.0
    %5544 = vmatpush2.msra.mxu0 0.0
    %5545 = vmatprep.subr.mxu0 0.0
    %5546 = vmatpush2.msra.mxu0 0.0
    %5547 = vmatprep.subr.mxu0 0.0
    %5548 = vmatpush2.msra.mxu0 0.0
    %5549 = vmatprep.subr.mxu0 0.0
    %5550 = vmatpush2.msra.mxu0 0.0
    %5551 = vmatprep.subr.mxu0 0.0
    %5552 = vmatpush2.msra.mxu0 0.0
    %5553 = vmatprep.subr.mxu0 0.0
    %5554 = vmatpush2.msra.mxu0 0.0
    %5555 = vmatprep.subr.mxu0 0.0
    %5556 = vmatpush2.msra.mxu0 0.0
    %5557 = vmatprep.subr.mxu0 0.0
    %5558 = vmatpush2.msra.mxu0 0.0
    %5559 = vmatprep.subr.mxu0 0.0
    %5560 = vmatpush2.msra.mxu0 0.0
    %5561 = vmatprep.mubr.f32.mxu0 0.0
    %5562 = vmatmul.mubr.f32.gmra.mxu0 %v5495
    %v5563 = vpop.f32.mrf.mxu0
    %v5564 = vadd.f32 0.0, %v5563
    %v5565 = vpop.f32.mrf.mxu0
    %5566 = vdwg.mxu0
    %v5567 = vadd.f32 %v5489, %v5564
    %v5568 = vxor.u32 %v5567, 2147483648
    %v5569 = vmul.f32 %v5568, 1.442695
    %v5570 = vpow.pop %v5569
    %v5571 = vadd.f32 %v5570, 1.0
    %v5572 = vrcp.pop %v5571
    %v5573 = vmul.f32 1.0, %v5572
    %v5574 = vld [vmem:[%s2370] sm:$0xff]
    %v5575 = vld [vmem:[%s3912] sm:$0xff]
    %v5576 = vld [vmem:[%s3912 + $0x8] sm:$0xff]
    %v5577 = vld [vmem:[%s3912 + $0x10] sm:$0xff]
    %v5578 = vld [vmem:[%s3912 + $0x18] sm:$0xff]
    %5579 = vmatprep.subr.mxu0 0.0
    %5580 = vmatpush1.msra.mxu0 0.0
    %5581 = vmatprep.subr.mxu0 0.0
    %5582 = vmatpush1.msra.mxu0 0.0
    %5583 = vmatprep.subr.mxu0 0.0
    %5584 = vmatpush1.msra.mxu0 0.0
    %5585 = vmatprep.subr.mxu0 0.0
    %5586 = vmatpush1.msra.mxu0 0.0
    %5587 = vmatprep.subr.mxu0 0.0
    %5588 = vmatpush1.msra.mxu0 0.0
    %5589 = vmatprep.subr.mxu0 0.0
    %5590 = vmatpush1.msra.mxu0 0.0
    %5591 = vmatprep.subr.mxu0 0.0
    %5592 = vmatpush1.msra.mxu0 0.0
    %5593 = vmatprep.subr.mxu0 0.0
    %5594 = vmatpush1.msra.mxu0 0.0
    %5595 = vmatprep.subr.mxu0 0.0
    %5596 = vmatpush1.msra.mxu0 0.0
    %5597 = vmatprep.subr.mxu0 0.0
    %5598 = vmatpush1.msra.mxu0 0.0
    %5599 = vmatprep.subr.mxu0 0.0
    %5600 = vmatpush1.msra.mxu0 0.0
    %5601 = vmatprep.subr.mxu0 0.0
    %5602 = vmatpush1.msra.mxu0 0.0
    %5603 = vmatprep.subr.mxu0 0.0
    %5604 = vmatpush1.msra.mxu0 %v5578
    %5605 = vmatprep.subr.mxu0 0.0
    %5606 = vmatpush1.msra.mxu0 %v5577
    %5607 = vmatprep.subr.mxu0 0.0
    %5608 = vmatpush1.msra.mxu0 %v5576
    %5609 = vmatprep.subr.mxu0 0.0
    %5610 = vmatpush1.msra.mxu0 %v5575
    %5611 = vmatprep.subr.mxu0 0.0
    %5612 = vmatpush2.msra.mxu0 0.0
    %5613 = vmatprep.subr.mxu0 0.0
    %5614 = vmatpush2.msra.mxu0 0.0
    %5615 = vmatprep.subr.mxu0 0.0
    %5616 = vmatpush2.msra.mxu0 0.0
    %5617 = vmatprep.subr.mxu0 0.0
    %5618 = vmatpush2.msra.mxu0 0.0
    %5619 = vmatprep.subr.mxu0 0.0
    %5620 = vmatpush2.msra.mxu0 0.0
    %5621 = vmatprep.subr.mxu0 0.0
    %5622 = vmatpush2.msra.mxu0 0.0
    %5623 = vmatprep.subr.mxu0 0.0
    %5624 = vmatpush2.msra.mxu0 0.0
    %5625 = vmatprep.subr.mxu0 0.0
    %5626 = vmatpush2.msra.mxu0 0.0
    %5627 = vmatprep.subr.mxu0 0.0
    %5628 = vmatpush2.msra.mxu0 0.0
    %5629 = vmatprep.subr.mxu0 0.0
    %5630 = vmatpush2.msra.mxu0 0.0
    %5631 = vmatprep.subr.mxu0 0.0
    %5632 = vmatpush2.msra.mxu0 0.0
    %5633 = vmatprep.subr.mxu0 0.0
    %5634 = vmatpush2.msra.mxu0 0.0
    %5635 = vmatprep.subr.mxu0 0.0
    %5636 = vmatpush2.msra.mxu0 0.0
    %5637 = vmatprep.subr.mxu0 0.0
    %5638 = vmatpush2.msra.mxu0 0.0
    %5639 = vmatprep.subr.mxu0 0.0
    %5640 = vmatpush2.msra.mxu0 0.0
    %5641 = vmatprep.subr.mxu0 0.0
    %5642 = vmatpush2.msra.mxu0 0.0
    %5643 = vmatprep.mubr.f32.mxu0 0.0
    %5644 = vmatmul.mubr.f32.gmra.mxu0 %v5495
    %v5645 = vpop.f32.mrf.mxu0
    %v5646 = vadd.f32 0.0, %v5645
    %v5647 = vpop.f32.mrf.mxu0
    %5648 = vdwg.mxu0
    %v5649 = vadd.f32 %v5574, %v5646
    %v5650 = vxor.u32 %v5649, 2147483648
    %v5651 = vmul.f32 %v5650, 1.442695
    %v5652 = vpow.pop %v5651
    %v5653 = vadd.f32 %v5652, 1.0
    %v5654 = vrcp.pop %v5653
    %v5655 = vmul.f32 1.0, %v5654
    %v5656 = vld [vmem:[%s2453] sm:$0xff]
    %v5657 = vld [vmem:[%s3995] sm:$0xff]
    %v5658 = vld [vmem:[%s3995 + $0x8] sm:$0xff]
    %v5659 = vld [vmem:[%s3995 + $0x10] sm:$0xff]
    %v5660 = vld [vmem:[%s3995 + $0x18] sm:$0xff]
    %5661 = vmatprep.subr.mxu0 0.0
    %5662 = vmatpush1.msra.mxu0 0.0
    %5663 = vmatprep.subr.mxu0 0.0
    %5664 = vmatpush1.msra.mxu0 0.0
    %5665 = vmatprep.subr.mxu0 0.0
    %5666 = vmatpush1.msra.mxu0 0.0
    %5667 = vmatprep.subr.mxu0 0.0
    %5668 = vmatpush1.msra.mxu0 0.0
    %5669 = vmatprep.subr.mxu0 0.0
    %5670 = vmatpush1.msra.mxu0 0.0
    %5671 = vmatprep.subr.mxu0 0.0
    %5672 = vmatpush1.msra.mxu0 0.0
    %5673 = vmatprep.subr.mxu0 0.0
    %5674 = vmatpush1.msra.mxu0 0.0
    %5675 = vmatprep.subr.mxu0 0.0
    %5676 = vmatpush1.msra.mxu0 0.0
    %5677 = vmatprep.subr.mxu0 0.0
    %5678 = vmatpush1.msra.mxu0 0.0
    %5679 = vmatprep.subr.mxu0 0.0
    %5680 = vmatpush1.msra.mxu0 0.0
    %5681 = vmatprep.subr.mxu0 0.0
    %5682 = vmatpush1.msra.mxu0 0.0
    %5683 = vmatprep.subr.mxu0 0.0
    %5684 = vmatpush1.msra.mxu0 0.0
    %5685 = vmatprep.subr.mxu0 0.0
    %5686 = vmatpush1.msra.mxu0 %v5660
    %5687 = vmatprep.subr.mxu0 0.0
    %5688 = vmatpush1.msra.mxu0 %v5659
    %5689 = vmatprep.subr.mxu0 0.0
    %5690 = vmatpush1.msra.mxu0 %v5658
    %5691 = vmatprep.subr.mxu0 0.0
    %5692 = vmatpush1.msra.mxu0 %v5657
    %5693 = vmatprep.subr.mxu0 0.0
    %5694 = vmatpush2.msra.mxu0 0.0
    %5695 = vmatprep.subr.mxu0 0.0
    %5696 = vmatpush2.msra.mxu0 0.0
    %5697 = vmatprep.subr.mxu0 0.0
    %5698 = vmatpush2.msra.mxu0 0.0
    %5699 = vmatprep.subr.mxu0 0.0
    %5700 = vmatpush2.msra.mxu0 0.0
    %5701 = vmatprep.subr.mxu0 0.0
    %5702 = vmatpush2.msra.mxu0 0.0
    %5703 = vmatprep.subr.mxu0 0.0
    %5704 = vmatpush2.msra.mxu0 0.0
    %5705 = vmatprep.subr.mxu0 0.0
    %5706 = vmatpush2.msra.mxu0 0.0
    %5707 = vmatprep.subr.mxu0 0.0
    %5708 = vmatpush2.msra.mxu0 0.0
    %5709 = vmatprep.subr.mxu0 0.0
    %5710 = vmatpush2.msra.mxu0 0.0
    %5711 = vmatprep.subr.mxu0 0.0
    %5712 = vmatpush2.msra.mxu0 0.0
    %5713 = vmatprep.subr.mxu0 0.0
    %5714 = vmatpush2.msra.mxu0 0.0
    %5715 = vmatprep.subr.mxu0 0.0
    %5716 = vmatpush2.msra.mxu0 0.0
    %5717 = vmatprep.subr.mxu0 0.0
    %5718 = vmatpush2.msra.mxu0 0.0
    %5719 = vmatprep.subr.mxu0 0.0
    %5720 = vmatpush2.msra.mxu0 0.0
    %5721 = vmatprep.subr.mxu0 0.0
    %5722 = vmatpush2.msra.mxu0 0.0
    %5723 = vmatprep.subr.mxu0 0.0
    %5724 = vmatpush2.msra.mxu0 0.0
    %5725 = vmatprep.mubr.f32.mxu0 0.0
    %5726 = vmatmul.mubr.f32.gmra.mxu0 %v5495
    %v5727 = vpop.f32.mrf.mxu0
    %v5728 = vadd.f32 0.0, %v5727
    %v5729 = vpop.f32.mrf.mxu0
    %5730 = vdwg.mxu0
    %v5731 = vadd.f32 %v5656, %v5728
    %v5732 = vtanh.pop %v5731
    %v5733 = vld [vmem:[%s2531] sm:$0xff]
    %v5734 = vld [vmem:[%s4073] sm:$0xff]
    %v5735 = vld [vmem:[%s4073 + $0x8] sm:$0xff]
    %v5736 = vld [vmem:[%s4073 + $0x10] sm:$0xff]
    %v5737 = vld [vmem:[%s4073 + $0x18] sm:$0xff]
    %5738 = vmatprep.subr.mxu0 0.0
    %5739 = vmatpush1.msra.mxu0 0.0
    %5740 = vmatprep.subr.mxu0 0.0
    %5741 = vmatpush1.msra.mxu0 0.0
    %5742 = vmatprep.subr.mxu0 0.0
    %5743 = vmatpush1.msra.mxu0 0.0
    %5744 = vmatprep.subr.mxu0 0.0
    %5745 = vmatpush1.msra.mxu0 0.0
    %5746 = vmatprep.subr.mxu0 0.0
    %5747 = vmatpush1.msra.mxu0 0.0
    %5748 = vmatprep.subr.mxu0 0.0
    %5749 = vmatpush1.msra.mxu0 0.0
    %5750 = vmatprep.subr.mxu0 0.0
    %5751 = vmatpush1.msra.mxu0 0.0
    %5752 = vmatprep.subr.mxu0 0.0
    %5753 = vmatpush1.msra.mxu0 0.0
    %5754 = vmatprep.subr.mxu0 0.0
    %5755 = vmatpush1.msra.mxu0 0.0
    %5756 = vmatprep.subr.mxu0 0.0
    %5757 = vmatpush1.msra.mxu0 0.0
    %5758 = vmatprep.subr.mxu0 0.0
    %5759 = vmatpush1.msra.mxu0 0.0
    %5760 = vmatprep.subr.mxu0 0.0
    %5761 = vmatpush1.msra.mxu0 0.0
    %5762 = vmatprep.subr.mxu0 0.0
    %5763 = vmatpush1.msra.mxu0 %v5737
    %5764 = vmatprep.subr.mxu0 0.0
    %5765 = vmatpush1.msra.mxu0 %v5736
    %5766 = vmatprep.subr.mxu0 0.0
    %5767 = vmatpush1.msra.mxu0 %v5735
    %5768 = vmatprep.subr.mxu0 0.0
    %5769 = vmatpush1.msra.mxu0 %v5734
    %5770 = vmatprep.subr.mxu0 0.0
    %5771 = vmatpush2.msra.mxu0 0.0
    %5772 = vmatprep.subr.mxu0 0.0
    %5773 = vmatpush2.msra.mxu0 0.0
    %5774 = vmatprep.subr.mxu0 0.0
    %5775 = vmatpush2.msra.mxu0 0.0
    %5776 = vmatprep.subr.mxu0 0.0
    %5777 = vmatpush2.msra.mxu0 0.0
    %5778 = vmatprep.subr.mxu0 0.0
    %5779 = vmatpush2.msra.mxu0 0.0
    %5780 = vmatprep.subr.mxu0 0.0
    %5781 = vmatpush2.msra.mxu0 0.0
    %5782 = vmatprep.subr.mxu0 0.0
    %5783 = vmatpush2.msra.mxu0 0.0
    %5784 = vmatprep.subr.mxu0 0.0
    %5785 = vmatpush2.msra.mxu0 0.0
    %5786 = vmatprep.subr.mxu0 0.0
    %5787 = vmatpush2.msra.mxu0 0.0
    %5788 = vmatprep.subr.mxu0 0.0
    %5789 = vmatpush2.msra.mxu0 0.0
    %5790 = vmatprep.subr.mxu0 0.0
    %5791 = vmatpush2.msra.mxu0 0.0
    %5792 = vmatprep.subr.mxu0 0.0
    %5793 = vmatpush2.msra.mxu0 0.0
    %5794 = vmatprep.subr.mxu0 0.0
    %5795 = vmatpush2.msra.mxu0 0.0
    %5796 = vmatprep.subr.mxu0 0.0
    %5797 = vmatpush2.msra.mxu0 0.0
    %5798 = vmatprep.subr.mxu0 0.0
    %5799 = vmatpush2.msra.mxu0 0.0
    %5800 = vmatprep.subr.mxu0 0.0
    %5801 = vmatpush2.msra.mxu0 0.0
    %5802 = vmatprep.mubr.f32.mxu0 0.0
    %5803 = vmatmul.mubr.f32.gmra.mxu0 %v5495
    %v5804 = vpop.f32.mrf.mxu0
    %v5805 = vadd.f32 0.0, %v5804
    %v5806 = vpop.f32.mrf.mxu0
    %5807 = vdwg.mxu0
    %v5808 = vadd.f32 %v5733, %v5805
    %v5809 = vxor.u32 %v5808, 2147483648
    %v5810 = vmul.f32 %v5809, 1.442695
    %v5811 = vpow.pop %v5810
    %v5812 = vadd.f32 %v5811, 1.0
    %v5813 = vrcp.pop %v5812
    %v5814 = vmul.f32 1.0, %v5813
    %v5815 = vmul.f32 %v5655, %v5485
    %v5816 = vmul.f32 %v5573, %v5732
    %v5817 = vadd.f32 %v5815, %v5816
    %v5818 = vtanh.pop %v5817
    %v5819 = vmul.f32 %v5814, %v5818
    %5820 = vst.msk [vmem:[%s2619] sm:$0xff] %vm220, %v5819
    %v5821 = vld [vmem:[%s2621] sm:$0xff]
    %v5822 = vld [vmem:[#allocation11] sm:$0xff]
    %v5823 = vld [vmem:[#allocation11 + $0x8] sm:$0xff]
    %v5824 = vld [vmem:[#allocation11 + $0x10] sm:$0xff]
    %v5825 = vld [vmem:[#allocation11 + $0x18] sm:$0xff]
    %v5827 = vsel %vm220, %v5819, 0
    %5829 = vmatprep.subr.mxu0 0.0
    %5830 = vmatpush1.msra.mxu0 0.0
    %5831 = vmatprep.subr.mxu0 0.0
    %5832 = vmatpush1.msra.mxu0 0.0
    %5833 = vmatprep.subr.mxu0 0.0
    %5834 = vmatpush1.msra.mxu0 0.0
    %5835 = vmatprep.subr.mxu0 0.0
    %5836 = vmatpush1.msra.mxu0 0.0
    %5837 = vmatprep.subr.mxu0 0.0
    %5838 = vmatpush1.msra.mxu0 0.0
    %5839 = vmatprep.subr.mxu0 0.0
    %5840 = vmatpush1.msra.mxu0 0.0
    %5841 = vmatprep.subr.mxu0 0.0
    %5842 = vmatpush1.msra.mxu0 0.0
    %5843 = vmatprep.subr.mxu0 0.0
    %5844 = vmatpush1.msra.mxu0 0.0
    %5845 = vmatprep.subr.mxu0 0.0
    %5846 = vmatpush1.msra.mxu0 0.0
    %5847 = vmatprep.subr.mxu0 0.0
    %5848 = vmatpush1.msra.mxu0 0.0
    %5849 = vmatprep.subr.mxu0 0.0
    %5850 = vmatpush1.msra.mxu0 0.0
    %5851 = vmatprep.subr.mxu0 0.0
    %5852 = vmatpush1.msra.mxu0 0.0
    %5853 = vmatprep.subr.mxu0 0.0
    %5854 = vmatpush1.msra.mxu0 %v5825
    %5855 = vmatprep.subr.mxu0 0.0
    %5856 = vmatpush1.msra.mxu0 %v5824
    %5857 = vmatprep.subr.mxu0 0.0
    %5858 = vmatpush1.msra.mxu0 %v5823
    %5859 = vmatprep.subr.mxu0 0.0
    %5860 = vmatpush1.msra.mxu0 %v5822
    %5861 = vmatprep.subr.mxu0 0.0
    %5862 = vmatpush2.msra.mxu0 0.0
    %5863 = vmatprep.subr.mxu0 0.0
    %5864 = vmatpush2.msra.mxu0 0.0
    %5865 = vmatprep.subr.mxu0 0.0
    %5866 = vmatpush2.msra.mxu0 0.0
    %5867 = vmatprep.subr.mxu0 0.0
    %5868 = vmatpush2.msra.mxu0 0.0
    %5869 = vmatprep.subr.mxu0 0.0
    %5870 = vmatpush2.msra.mxu0 0.0
    %5871 = vmatprep.subr.mxu0 0.0
    %5872 = vmatpush2.msra.mxu0 0.0
    %5873 = vmatprep.subr.mxu0 0.0
    %5874 = vmatpush2.msra.mxu0 0.0
    %5875 = vmatprep.subr.mxu0 0.0
    %5876 = vmatpush2.msra.mxu0 0.0
    %5877 = vmatprep.subr.mxu0 0.0
    %5878 = vmatpush2.msra.mxu0 0.0
    %5879 = vmatprep.subr.mxu0 0.0
    %5880 = vmatpush2.msra.mxu0 0.0
    %5881 = vmatprep.subr.mxu0 0.0
    %5882 = vmatpush2.msra.mxu0 0.0
    %5883 = vmatprep.subr.mxu0 0.0
    %5884 = vmatpush2.msra.mxu0 0.0
    %5885 = vmatprep.subr.mxu0 0.0
    %5886 = vmatpush2.msra.mxu0 0.0
    %5887 = vmatprep.subr.mxu0 0.0
    %5888 = vmatpush2.msra.mxu0 0.0
    %5889 = vmatprep.subr.mxu0 0.0
    %5890 = vmatpush2.msra.mxu0 0.0
    %5891 = vmatprep.subr.mxu0 0.0
    %5892 = vmatpush2.msra.mxu0 0.0
    %5893 = vmatprep.mubr.f32.mxu0 0.0
    %5894 = vmatmul.mubr.f32.gmra.mxu0 %v5827
    %v5895 = vpop.f32.mrf.mxu0
    %v5896 = vadd.f32 0.0, %v5895
    %v5897 = vpop.f32.mrf.mxu0
    %5898 = vdwg.mxu0
    %v5899 = vadd.f32 %v5821, %v5896
    %v5900 = vxor.u32 %v5899, 2147483648
    %v5901 = vmul.f32 %v5900, 1.442695
    %v5902 = vpow.pop %v5901
    %v5903 = vadd.f32 %v5902, 1.0
    %v5904 = vrcp.pop %v5903
    %v5905 = vmul.f32 1.0, %v5904
    %v5906 = vld [vmem:[%s2707] sm:$0xff]
    %v5907 = vld [vmem:[%s3912] sm:$0xff]
    %v5908 = vld [vmem:[%s3912 + $0x8] sm:$0xff]
    %v5909 = vld [vmem:[%s3912 + $0x10] sm:$0xff]
    %v5910 = vld [vmem:[%s3912 + $0x18] sm:$0xff]
    %5911 = vmatprep.subr.mxu0 0.0
    %5912 = vmatpush1.msra.mxu0 0.0
    %5913 = vmatprep.subr.mxu0 0.0
    %5914 = vmatpush1.msra.mxu0 0.0
    %5915 = vmatprep.subr.mxu0 0.0
    %5916 = vmatpush1.msra.mxu0 0.0
    %5917 = vmatprep.subr.mxu0 0.0
    %5918 = vmatpush1.msra.mxu0 0.0
    %5919 = vmatprep.subr.mxu0 0.0
    %5920 = vmatpush1.msra.mxu0 0.0
    %5921 = vmatprep.subr.mxu0 0.0
    %5922 = vmatpush1.msra.mxu0 0.0
    %5923 = vmatprep.subr.mxu0 0.0
    %5924 = vmatpush1.msra.mxu0 0.0
    %5925 = vmatprep.subr.mxu0 0.0
    %5926 = vmatpush1.msra.mxu0 0.0
    %5927 = vmatprep.subr.mxu0 0.0
    %5928 = vmatpush1.msra.mxu0 0.0
    %5929 = vmatprep.subr.mxu0 0.0
    %5930 = vmatpush1.msra.mxu0 0.0
    %5931 = vmatprep.subr.mxu0 0.0
    %5932 = vmatpush1.msra.mxu0 0.0
    %5933 = vmatprep.subr.mxu0 0.0
    %5934 = vmatpush1.msra.mxu0 0.0
    %5935 = vmatprep.subr.mxu0 0.0
    %5936 = vmatpush1.msra.mxu0 %v5910
    %5937 = vmatprep.subr.mxu0 0.0
    %5938 = vmatpush1.msra.mxu0 %v5909
    %5939 = vmatprep.subr.mxu0 0.0
    %5940 = vmatpush1.msra.mxu0 %v5908
    %5941 = vmatprep.subr.mxu0 0.0
    %5942 = vmatpush1.msra.mxu0 %v5907
    %5943 = vmatprep.subr.mxu0 0.0
    %5944 = vmatpush2.msra.mxu0 0.0
    %5945 = vmatprep.subr.mxu0 0.0
    %5946 = vmatpush2.msra.mxu0 0.0
    %5947 = vmatprep.subr.mxu0 0.0
    %5948 = vmatpush2.msra.mxu0 0.0
    %5949 = vmatprep.subr.mxu0 0.0
    %5950 = vmatpush2.msra.mxu0 0.0
    %5951 = vmatprep.subr.mxu0 0.0
    %5952 = vmatpush2.msra.mxu0 0.0
    %5953 = vmatprep.subr.mxu0 0.0
    %5954 = vmatpush2.msra.mxu0 0.0
    %5955 = vmatprep.subr.mxu0 0.0
    %5956 = vmatpush2.msra.mxu0 0.0
    %5957 = vmatprep.subr.mxu0 0.0
    %5958 = vmatpush2.msra.mxu0 0.0
    %5959 = vmatprep.subr.mxu0 0.0
    %5960 = vmatpush2.msra.mxu0 0.0
    %5961 = vmatprep.subr.mxu0 0.0
    %5962 = vmatpush2.msra.mxu0 0.0
    %5963 = vmatprep.subr.mxu0 0.0
    %5964 = vmatpush2.msra.mxu0 0.0
    %5965 = vmatprep.subr.mxu0 0.0
    %5966 = vmatpush2.msra.mxu0 0.0
    %5967 = vmatprep.subr.mxu0 0.0
    %5968 = vmatpush2.msra.mxu0 0.0
    %5969 = vmatprep.subr.mxu0 0.0
    %5970 = vmatpush2.msra.mxu0 0.0
    %5971 = vmatprep.subr.mxu0 0.0
    %5972 = vmatpush2.msra.mxu0 0.0
    %5973 = vmatprep.subr.mxu0 0.0
    %5974 = vmatpush2.msra.mxu0 0.0
    %5975 = vmatprep.mubr.f32.mxu0 0.0
    %5976 = vmatmul.mubr.f32.gmra.mxu0 %v5827
    %v5977 = vpop.f32.mrf.mxu0
    %v5978 = vadd.f32 0.0, %v5977
    %v5979 = vpop.f32.mrf.mxu0
    %5980 = vdwg.mxu0
    %v5981 = vadd.f32 %v5906, %v5978
    %v5982 = vxor.u32 %v5981, 2147483648
    %v5983 = vmul.f32 %v5982, 1.442695
    %v5984 = vpow.pop %v5983
    %v5985 = vadd.f32 %v5984, 1.0
    %v5986 = vrcp.pop %v5985
    %v5987 = vmul.f32 1.0, %v5986
    %v5988 = vld [vmem:[%s2790] sm:$0xff]
    %v5989 = vld [vmem:[%s3995] sm:$0xff]
    %v5990 = vld [vmem:[%s3995 + $0x8] sm:$0xff]
    %v5991 = vld [vmem:[%s3995 + $0x10] sm:$0xff]
    %v5992 = vld [vmem:[%s3995 + $0x18] sm:$0xff]
    %5993 = vmatprep.subr.mxu0 0.0
    %5994 = vmatpush1.msra.mxu0 0.0
    %5995 = vmatprep.subr.mxu0 0.0
    %5996 = vmatpush1.msra.mxu0 0.0
    %5997 = vmatprep.subr.mxu0 0.0
    %5998 = vmatpush1.msra.mxu0 0.0
    %5999 = vmatprep.subr.mxu0 0.0
    %6000 = vmatpush1.msra.mxu0 0.0
    %6001 = vmatprep.subr.mxu0 0.0
    %6002 = vmatpush1.msra.mxu0 0.0
    %6003 = vmatprep.subr.mxu0 0.0
    %6004 = vmatpush1.msra.mxu0 0.0
    %6005 = vmatprep.subr.mxu0 0.0
    %6006 = vmatpush1.msra.mxu0 0.0
    %6007 = vmatprep.subr.mxu0 0.0
    %6008 = vmatpush1.msra.mxu0 0.0
    %6009 = vmatprep.subr.mxu0 0.0
    %6010 = vmatpush1.msra.mxu0 0.0
    %6011 = vmatprep.subr.mxu0 0.0
    %6012 = vmatpush1.msra.mxu0 0.0
    %6013 = vmatprep.subr.mxu0 0.0
    %6014 = vmatpush1.msra.mxu0 0.0
    %6015 = vmatprep.subr.mxu0 0.0
    %6016 = vmatpush1.msra.mxu0 0.0
    %6017 = vmatprep.subr.mxu0 0.0
    %6018 = vmatpush1.msra.mxu0 %v5992
    %6019 = vmatprep.subr.mxu0 0.0
    %6020 = vmatpush1.msra.mxu0 %v5991
    %6021 = vmatprep.subr.mxu0 0.0
    %6022 = vmatpush1.msra.mxu0 %v5990
    %6023 = vmatprep.subr.mxu0 0.0
    %6024 = vmatpush1.msra.mxu0 %v5989
    %6025 = vmatprep.subr.mxu0 0.0
    %6026 = vmatpush2.msra.mxu0 0.0
    %6027 = vmatprep.subr.mxu0 0.0
    %6028 = vmatpush2.msra.mxu0 0.0
    %6029 = vmatprep.subr.mxu0 0.0
    %6030 = vmatpush2.msra.mxu0 0.0
    %6031 = vmatprep.subr.mxu0 0.0
    %6032 = vmatpush2.msra.mxu0 0.0
    %6033 = vmatprep.subr.mxu0 0.0
    %6034 = vmatpush2.msra.mxu0 0.0
    %6035 = vmatprep.subr.mxu0 0.0
    %6036 = vmatpush2.msra.mxu0 0.0
    %6037 = vmatprep.subr.mxu0 0.0
    %6038 = vmatpush2.msra.mxu0 0.0
    %6039 = vmatprep.subr.mxu0 0.0
    %6040 = vmatpush2.msra.mxu0 0.0
    %6041 = vmatprep.subr.mxu0 0.0
    %6042 = vmatpush2.msra.mxu0 0.0
    %6043 = vmatprep.subr.mxu0 0.0
    %6044 = vmatpush2.msra.mxu0 0.0
    %6045 = vmatprep.subr.mxu0 0.0
    %6046 = vmatpush2.msra.mxu0 0.0
    %6047 = vmatprep.subr.mxu0 0.0
    %6048 = vmatpush2.msra.mxu0 0.0
    %6049 = vmatprep.subr.mxu0 0.0
    %6050 = vmatpush2.msra.mxu0 0.0
    %6051 = vmatprep.subr.mxu0 0.0
    %6052 = vmatpush2.msra.mxu0 0.0
    %6053 = vmatprep.subr.mxu0 0.0
    %6054 = vmatpush2.msra.mxu0 0.0
    %6055 = vmatprep.subr.mxu0 0.0
    %6056 = vmatpush2.msra.mxu0 0.0
    %6057 = vmatprep.mubr.f32.mxu0 0.0
    %6058 = vmatmul.mubr.f32.gmra.mxu0 %v5827
    %v6059 = vpop.f32.mrf.mxu0
    %v6060 = vadd.f32 0.0, %v6059
    %v6061 = vpop.f32.mrf.mxu0
    %6062 = vdwg.mxu0
    %v6063 = vadd.f32 %v5988, %v6060
    %v6064 = vtanh.pop %v6063
    %v6065 = vld [vmem:[%s2868] sm:$0xff]
    %v6066 = vld [vmem:[%s4073] sm:$0xff]
    %v6067 = vld [vmem:[%s4073 + $0x8] sm:$0xff]
    %v6068 = vld [vmem:[%s4073 + $0x10] sm:$0xff]
    %v6069 = vld [vmem:[%s4073 + $0x18] sm:$0xff]
    %6070 = vmatprep.subr.mxu0 0.0
    %6071 = vmatpush1.msra.mxu0 0.0
    %6072 = vmatprep.subr.mxu0 0.0
    %6073 = vmatpush1.msra.mxu0 0.0
    %6074 = vmatprep.subr.mxu0 0.0
    %6075 = vmatpush1.msra.mxu0 0.0
    %6076 = vmatprep.subr.mxu0 0.0
    %6077 = vmatpush1.msra.mxu0 0.0
    %6078 = vmatprep.subr.mxu0 0.0
    %6079 = vmatpush1.msra.mxu0 0.0
    %6080 = vmatprep.subr.mxu0 0.0
    %6081 = vmatpush1.msra.mxu0 0.0
    %6082 = vmatprep.subr.mxu0 0.0
    %6083 = vmatpush1.msra.mxu0 0.0
    %6084 = vmatprep.subr.mxu0 0.0
    %6085 = vmatpush1.msra.mxu0 0.0
    %6086 = vmatprep.subr.mxu0 0.0
    %6087 = vmatpush1.msra.mxu0 0.0
    %6088 = vmatprep.subr.mxu0 0.0
    %6089 = vmatpush1.msra.mxu0 0.0
    %6090 = vmatprep.subr.mxu0 0.0
    %6091 = vmatpush1.msra.mxu0 0.0
    %6092 = vmatprep.subr.mxu0 0.0
    %6093 = vmatpush1.msra.mxu0 0.0
    %6094 = vmatprep.subr.mxu0 0.0
    %6095 = vmatpush1.msra.mxu0 %v6069
    %6096 = vmatprep.subr.mxu0 0.0
    %6097 = vmatpush1.msra.mxu0 %v6068
    %6098 = vmatprep.subr.mxu0 0.0
    %6099 = vmatpush1.msra.mxu0 %v6067
    %6100 = vmatprep.subr.mxu0 0.0
    %6101 = vmatpush1.msra.mxu0 %v6066
    %6102 = vmatprep.subr.mxu0 0.0
    %6103 = vmatpush2.msra.mxu0 0.0
    %6104 = vmatprep.subr.mxu0 0.0
    %6105 = vmatpush2.msra.mxu0 0.0
    %6106 = vmatprep.subr.mxu0 0.0
    %6107 = vmatpush2.msra.mxu0 0.0
    %6108 = vmatprep.subr.mxu0 0.0
    %6109 = vmatpush2.msra.mxu0 0.0
    %6110 = vmatprep.subr.mxu0 0.0
    %6111 = vmatpush2.msra.mxu0 0.0
    %6112 = vmatprep.subr.mxu0 0.0
    %6113 = vmatpush2.msra.mxu0 0.0
    %6114 = vmatprep.subr.mxu0 0.0
    %6115 = vmatpush2.msra.mxu0 0.0
    %6116 = vmatprep.subr.mxu0 0.0
    %6117 = vmatpush2.msra.mxu0 0.0
    %6118 = vmatprep.subr.mxu0 0.0
    %6119 = vmatpush2.msra.mxu0 0.0
    %6120 = vmatprep.subr.mxu0 0.0
    %6121 = vmatpush2.msra.mxu0 0.0
    %6122 = vmatprep.subr.mxu0 0.0
    %6123 = vmatpush2.msra.mxu0 0.0
    %6124 = vmatprep.subr.mxu0 0.0
    %6125 = vmatpush2.msra.mxu0 0.0
    %6126 = vmatprep.subr.mxu0 0.0
    %6127 = vmatpush2.msra.mxu0 0.0
    %6128 = vmatprep.subr.mxu0 0.0
    %6129 = vmatpush2.msra.mxu0 0.0
    %6130 = vmatprep.subr.mxu0 0.0
    %6131 = vmatpush2.msra.mxu0 0.0
    %6132 = vmatprep.subr.mxu0 0.0
    %6133 = vmatpush2.msra.mxu0 0.0
    %6134 = vmatprep.mubr.f32.mxu0 0.0
    %6135 = vmatmul.mubr.f32.gmra.mxu0 %v5827
    %v6136 = vpop.f32.mrf.mxu0
    %v6137 = vadd.f32 0.0, %v6136
    %v6138 = vpop.f32.mrf.mxu0
    %6139 = vdwg.mxu0
    %v6140 = vadd.f32 %v6065, %v6137
    %v6141 = vxor.u32 %v6140, 2147483648
    %v6142 = vmul.f32 %v6141, 1.442695
    %v6143 = vpow.pop %v6142
    %v6144 = vadd.f32 %v6143, 1.0
    %v6145 = vrcp.pop %v6144
    %v6146 = vmul.f32 1.0, %v6145
    %v6147 = vmul.f32 %v5987, %v5817
    %v6148 = vmul.f32 %v5905, %v6064
    %v6149 = vadd.f32 %v6147, %v6148
    %v6150 = vtanh.pop %v6149
    %v6151 = vmul.f32 %v6146, %v6150
    %6152 = vst.msk [vmem:[%s2956] sm:$0xff] %vm220, %v6151
    %v6153 = vld [vmem:[%s2958] sm:$0xff]
    %v6154 = vld [vmem:[#allocation11] sm:$0xff]
    %v6155 = vld [vmem:[#allocation11 + $0x8] sm:$0xff]
    %v6156 = vld [vmem:[#allocation11 + $0x10] sm:$0xff]
    %v6157 = vld [vmem:[#allocation11 + $0x18] sm:$0xff]
    %v6159 = vsel %vm220, %v6151, 0
    %6161 = vmatprep.subr.mxu0 0.0
    %6162 = vmatpush1.msra.mxu0 0.0
    %6163 = vmatprep.subr.mxu0 0.0
    %6164 = vmatpush1.msra.mxu0 0.0
    %6165 = vmatprep.subr.mxu0 0.0
    %6166 = vmatpush1.msra.mxu0 0.0
    %6167 = vmatprep.subr.mxu0 0.0
    %6168 = vmatpush1.msra.mxu0 0.0
    %6169 = vmatprep.subr.mxu0 0.0
    %6170 = vmatpush1.msra.mxu0 0.0
    %6171 = vmatprep.subr.mxu0 0.0
    %6172 = vmatpush1.msra.mxu0 0.0
    %6173 = vmatprep.subr.mxu0 0.0
    %6174 = vmatpush1.msra.mxu0 0.0
    %6175 = vmatprep.subr.mxu0 0.0
    %6176 = vmatpush1.msra.mxu0 0.0
    %6177 = vmatprep.subr.mxu0 0.0
    %6178 = vmatpush1.msra.mxu0 0.0
    %6179 = vmatprep.subr.mxu0 0.0
    %6180 = vmatpush1.msra.mxu0 0.0
    %6181 = vmatprep.subr.mxu0 0.0
    %6182 = vmatpush1.msra.mxu0 0.0
    %6183 = vmatprep.subr.mxu0 0.0
    %6184 = vmatpush1.msra.mxu0 0.0
    %6185 = vmatprep.subr.mxu0 0.0
    %6186 = vmatpush1.msra.mxu0 %v6157
    %6187 = vmatprep.subr.mxu0 0.0
    %6188 = vmatpush1.msra.mxu0 %v6156
    %6189 = vmatprep.subr.mxu0 0.0
    %6190 = vmatpush1.msra.mxu0 %v6155
    %6191 = vmatprep.subr.mxu0 0.0
    %6192 = vmatpush1.msra.mxu0 %v6154
    %6193 = vmatprep.subr.mxu0 0.0
    %6194 = vmatpush2.msra.mxu0 0.0
    %6195 = vmatprep.subr.mxu0 0.0
    %6196 = vmatpush2.msra.mxu0 0.0
    %6197 = vmatprep.subr.mxu0 0.0
    %6198 = vmatpush2.msra.mxu0 0.0
    %6199 = vmatprep.subr.mxu0 0.0
    %6200 = vmatpush2.msra.mxu0 0.0
    %6201 = vmatprep.subr.mxu0 0.0
    %6202 = vmatpush2.msra.mxu0 0.0
    %6203 = vmatprep.subr.mxu0 0.0
    %6204 = vmatpush2.msra.mxu0 0.0
    %6205 = vmatprep.subr.mxu0 0.0
    %6206 = vmatpush2.msra.mxu0 0.0
    %6207 = vmatprep.subr.mxu0 0.0
    %6208 = vmatpush2.msra.mxu0 0.0
    %6209 = vmatprep.subr.mxu0 0.0
    %6210 = vmatpush2.msra.mxu0 0.0
    %6211 = vmatprep.subr.mxu0 0.0
    %6212 = vmatpush2.msra.mxu0 0.0
    %6213 = vmatprep.subr.mxu0 0.0
    %6214 = vmatpush2.msra.mxu0 0.0
    %6215 = vmatprep.subr.mxu0 0.0
    %6216 = vmatpush2.msra.mxu0 0.0
    %6217 = vmatprep.subr.mxu0 0.0
    %6218 = vmatpush2.msra.mxu0 0.0
    %6219 = vmatprep.subr.mxu0 0.0
    %6220 = vmatpush2.msra.mxu0 0.0
    %6221 = vmatprep.subr.mxu0 0.0
    %6222 = vmatpush2.msra.mxu0 0.0
    %6223 = vmatprep.subr.mxu0 0.0
    %6224 = vmatpush2.msra.mxu0 0.0
    %6225 = vmatprep.mubr.f32.mxu0 0.0
    %6226 = vmatmul.mubr.f32.gmra.mxu0 %v6159
    %v6227 = vpop.f32.mrf.mxu0
    %v6228 = vadd.f32 0.0, %v6227
    %v6229 = vpop.f32.mrf.mxu0
    %6230 = vdwg.mxu0
    %v6231 = vadd.f32 %v6153, %v6228
    %v6232 = vxor.u32 %v6231, 2147483648
    %v6233 = vmul.f32 %v6232, 1.442695
    %v6234 = vpow.pop %v6233
    %v6235 = vadd.f32 %v6234, 1.0
    %v6236 = vrcp.pop %v6235
    %v6237 = vmul.f32 1.0, %v6236
    %v6238 = vld [vmem:[%s3044] sm:$0xff]
    %v6239 = vld [vmem:[%s3912] sm:$0xff]
    %v6240 = vld [vmem:[%s3912 + $0x8] sm:$0xff]
    %v6241 = vld [vmem:[%s3912 + $0x10] sm:$0xff]
    %v6242 = vld [vmem:[%s3912 + $0x18] sm:$0xff]
    %6243 = vmatprep.subr.mxu0 0.0
    %6244 = vmatpush1.msra.mxu0 0.0
    %6245 = vmatprep.subr.mxu0 0.0
    %6246 = vmatpush1.msra.mxu0 0.0
    %6247 = vmatprep.subr.mxu0 0.0
    %6248 = vmatpush1.msra.mxu0 0.0
    %6249 = vmatprep.subr.mxu0 0.0
    %6250 = vmatpush1.msra.mxu0 0.0
    %6251 = vmatprep.subr.mxu0 0.0
    %6252 = vmatpush1.msra.mxu0 0.0
    %6253 = vmatprep.subr.mxu0 0.0
    %6254 = vmatpush1.msra.mxu0 0.0
    %6255 = vmatprep.subr.mxu0 0.0
    %6256 = vmatpush1.msra.mxu0 0.0
    %6257 = vmatprep.subr.mxu0 0.0
    %6258 = vmatpush1.msra.mxu0 0.0
    %6259 = vmatprep.subr.mxu0 0.0
    %6260 = vmatpush1.msra.mxu0 0.0
    %6261 = vmatprep.subr.mxu0 0.0
    %6262 = vmatpush1.msra.mxu0 0.0
    %6263 = vmatprep.subr.mxu0 0.0
    %6264 = vmatpush1.msra.mxu0 0.0
    %6265 = vmatprep.subr.mxu0 0.0
    %6266 = vmatpush1.msra.mxu0 0.0
    %6267 = vmatprep.subr.mxu0 0.0
    %6268 = vmatpush1.msra.mxu0 %v6242
    %6269 = vmatprep.subr.mxu0 0.0
    %6270 = vmatpush1.msra.mxu0 %v6241
    %6271 = vmatprep.subr.mxu0 0.0
    %6272 = vmatpush1.msra.mxu0 %v6240
    %6273 = vmatprep.subr.mxu0 0.0
    %6274 = vmatpush1.msra.mxu0 %v6239
    %6275 = vmatprep.subr.mxu0 0.0
    %6276 = vmatpush2.msra.mxu0 0.0
    %6277 = vmatprep.subr.mxu0 0.0
    %6278 = vmatpush2.msra.mxu0 0.0
    %6279 = vmatprep.subr.mxu0 0.0
    %6280 = vmatpush2.msra.mxu0 0.0
    %6281 = vmatprep.subr.mxu0 0.0
    %6282 = vmatpush2.msra.mxu0 0.0
    %6283 = vmatprep.subr.mxu0 0.0
    %6284 = vmatpush2.msra.mxu0 0.0
    %6285 = vmatprep.subr.mxu0 0.0
    %6286 = vmatpush2.msra.mxu0 0.0
    %6287 = vmatprep.subr.mxu0 0.0
    %6288 = vmatpush2.msra.mxu0 0.0
    %6289 = vmatprep.subr.mxu0 0.0
    %6290 = vmatpush2.msra.mxu0 0.0
    %6291 = vmatprep.subr.mxu0 0.0
    %6292 = vmatpush2.msra.mxu0 0.0
    %6293 = vmatprep.subr.mxu0 0.0
    %6294 = vmatpush2.msra.mxu0 0.0
    %6295 = vmatprep.subr.mxu0 0.0
    %6296 = vmatpush2.msra.mxu0 0.0
    %6297 = vmatprep.subr.mxu0 0.0
    %6298 = vmatpush2.msra.mxu0 0.0
    %6299 = vmatprep.subr.mxu0 0.0
    %6300 = vmatpush2.msra.mxu0 0.0
    %6301 = vmatprep.subr.mxu0 0.0
    %6302 = vmatpush2.msra.mxu0 0.0
    %6303 = vmatprep.subr.mxu0 0.0
    %6304 = vmatpush2.msra.mxu0 0.0
    %6305 = vmatprep.subr.mxu0 0.0
    %6306 = vmatpush2.msra.mxu0 0.0
    %6307 = vmatprep.mubr.f32.mxu0 0.0
    %6308 = vmatmul.mubr.f32.gmra.mxu0 %v6159
    %v6309 = vpop.f32.mrf.mxu0
    %v6310 = vadd.f32 0.0, %v6309
    %v6311 = vpop.f32.mrf.mxu0
    %6312 = vdwg.mxu0
    %v6313 = vadd.f32 %v6238, %v6310
    %v6314 = vxor.u32 %v6313, 2147483648
    %v6315 = vmul.f32 %v6314, 1.442695
    %v6316 = vpow.pop %v6315
    %v6317 = vadd.f32 %v6316, 1.0
    %v6318 = vrcp.pop %v6317
    %v6319 = vmul.f32 1.0, %v6318
    %v6320 = vld [vmem:[%s3127] sm:$0xff]
    %v6321 = vld [vmem:[%s3995] sm:$0xff]
    %v6322 = vld [vmem:[%s3995 + $0x8] sm:$0xff]
    %v6323 = vld [vmem:[%s3995 + $0x10] sm:$0xff]
    %v6324 = vld [vmem:[%s3995 + $0x18] sm:$0xff]
    %6325 = vmatprep.subr.mxu0 0.0
    %6326 = vmatpush1.msra.mxu0 0.0
    %6327 = vmatprep.subr.mxu0 0.0
    %6328 = vmatpush1.msra.mxu0 0.0
    %6329 = vmatprep.subr.mxu0 0.0
    %6330 = vmatpush1.msra.mxu0 0.0
    %6331 = vmatprep.subr.mxu0 0.0
    %6332 = vmatpush1.msra.mxu0 0.0
    %6333 = vmatprep.subr.mxu0 0.0
    %6334 = vmatpush1.msra.mxu0 0.0
    %6335 = vmatprep.subr.mxu0 0.0
    %6336 = vmatpush1.msra.mxu0 0.0
    %6337 = vmatprep.subr.mxu0 0.0
    %6338 = vmatpush1.msra.mxu0 0.0
    %6339 = vmatprep.subr.mxu0 0.0
    %6340 = vmatpush1.msra.mxu0 0.0
    %6341 = vmatprep.subr.mxu0 0.0
    %6342 = vmatpush1.msra.mxu0 0.0
    %6343 = vmatprep.subr.mxu0 0.0
    %6344 = vmatpush1.msra.mxu0 0.0
    %6345 = vmatprep.subr.mxu0 0.0
    %6346 = vmatpush1.msra.mxu0 0.0
    %6347 = vmatprep.subr.mxu0 0.0
    %6348 = vmatpush1.msra.mxu0 0.0
    %6349 = vmatprep.subr.mxu0 0.0
    %6350 = vmatpush1.msra.mxu0 %v6324
    %6351 = vmatprep.subr.mxu0 0.0
    %6352 = vmatpush1.msra.mxu0 %v6323
    %6353 = vmatprep.subr.mxu0 0.0
    %6354 = vmatpush1.msra.mxu0 %v6322
    %6355 = vmatprep.subr.mxu0 0.0
    %6356 = vmatpush1.msra.mxu0 %v6321
    %6357 = vmatprep.subr.mxu0 0.0
    %6358 = vmatpush2.msra.mxu0 0.0
    %6359 = vmatprep.subr.mxu0 0.0
    %6360 = vmatpush2.msra.mxu0 0.0
    %6361 = vmatprep.subr.mxu0 0.0
    %6362 = vmatpush2.msra.mxu0 0.0
    %6363 = vmatprep.subr.mxu0 0.0
    %6364 = vmatpush2.msra.mxu0 0.0
    %6365 = vmatprep.subr.mxu0 0.0
    %6366 = vmatpush2.msra.mxu0 0.0
    %6367 = vmatprep.subr.mxu0 0.0
    %6368 = vmatpush2.msra.mxu0 0.0
    %6369 = vmatprep.subr.mxu0 0.0
    %6370 = vmatpush2.msra.mxu0 0.0
    %6371 = vmatprep.subr.mxu0 0.0
    %6372 = vmatpush2.msra.mxu0 0.0
    %6373 = vmatprep.subr.mxu0 0.0
    %6374 = vmatpush2.msra.mxu0 0.0
    %6375 = vmatprep.subr.mxu0 0.0
    %6376 = vmatpush2.msra.mxu0 0.0
    %6377 = vmatprep.subr.mxu0 0.0
    %6378 = vmatpush2.msra.mxu0 0.0
    %6379 = vmatprep.subr.mxu0 0.0
    %6380 = vmatpush2.msra.mxu0 0.0
    %6381 = vmatprep.subr.mxu0 0.0
    %6382 = vmatpush2.msra.mxu0 0.0
    %6383 = vmatprep.subr.mxu0 0.0
    %6384 = vmatpush2.msra.mxu0 0.0
    %6385 = vmatprep.subr.mxu0 0.0
    %6386 = vmatpush2.msra.mxu0 0.0
    %6387 = vmatprep.subr.mxu0 0.0
    %6388 = vmatpush2.msra.mxu0 0.0
    %6389 = vmatprep.mubr.f32.mxu0 0.0
    %6390 = vmatmul.mubr.f32.gmra.mxu0 %v6159
    %v6391 = vpop.f32.mrf.mxu0
    %v6392 = vadd.f32 0.0, %v6391
    %v6393 = vpop.f32.mrf.mxu0
    %6394 = vdwg.mxu0
    %v6395 = vadd.f32 %v6320, %v6392
    %v6396 = vtanh.pop %v6395
    %v6397 = vld [vmem:[%s3205] sm:$0xff]
    %v6398 = vld [vmem:[%s4073] sm:$0xff]
    %v6399 = vld [vmem:[%s4073 + $0x8] sm:$0xff]
    %v6400 = vld [vmem:[%s4073 + $0x10] sm:$0xff]
    %v6401 = vld [vmem:[%s4073 + $0x18] sm:$0xff]
    %6402 = vmatprep.subr.mxu0 0.0
    %6403 = vmatpush1.msra.mxu0 0.0
    %6404 = vmatprep.subr.mxu0 0.0
    %6405 = vmatpush1.msra.mxu0 0.0
    %6406 = vmatprep.subr.mxu0 0.0
    %6407 = vmatpush1.msra.mxu0 0.0
    %6408 = vmatprep.subr.mxu0 0.0
    %6409 = vmatpush1.msra.mxu0 0.0
    %6410 = vmatprep.subr.mxu0 0.0
    %6411 = vmatpush1.msra.mxu0 0.0
    %6412 = vmatprep.subr.mxu0 0.0
    %6413 = vmatpush1.msra.mxu0 0.0
    %6414 = vmatprep.subr.mxu0 0.0
    %6415 = vmatpush1.msra.mxu0 0.0
    %6416 = vmatprep.subr.mxu0 0.0
    %6417 = vmatpush1.msra.mxu0 0.0
    %6418 = vmatprep.subr.mxu0 0.0
    %6419 = vmatpush1.msra.mxu0 0.0
    %6420 = vmatprep.subr.mxu0 0.0
    %6421 = vmatpush1.msra.mxu0 0.0
    %6422 = vmatprep.subr.mxu0 0.0
    %6423 = vmatpush1.msra.mxu0 0.0
    %6424 = vmatprep.subr.mxu0 0.0
    %6425 = vmatpush1.msra.mxu0 0.0
    %6426 = vmatprep.subr.mxu0 0.0
    %6427 = vmatpush1.msra.mxu0 %v6401
    %6428 = vmatprep.subr.mxu0 0.0
    %6429 = vmatpush1.msra.mxu0 %v6400
    %6430 = vmatprep.subr.mxu0 0.0
    %6431 = vmatpush1.msra.mxu0 %v6399
    %6432 = vmatprep.subr.mxu0 0.0
    %6433 = vmatpush1.msra.mxu0 %v6398
    %6434 = vmatprep.subr.mxu0 0.0
    %6435 = vmatpush2.msra.mxu0 0.0
    %6436 = vmatprep.subr.mxu0 0.0
    %6437 = vmatpush2.msra.mxu0 0.0
    %6438 = vmatprep.subr.mxu0 0.0
    %6439 = vmatpush2.msra.mxu0 0.0
    %6440 = vmatprep.subr.mxu0 0.0
    %6441 = vmatpush2.msra.mxu0 0.0
    %6442 = vmatprep.subr.mxu0 0.0
    %6443 = vmatpush2.msra.mxu0 0.0
    %6444 = vmatprep.subr.mxu0 0.0
    %6445 = vmatpush2.msra.mxu0 0.0
    %6446 = vmatprep.subr.mxu0 0.0
    %6447 = vmatpush2.msra.mxu0 0.0
    %6448 = vmatprep.subr.mxu0 0.0
    %6449 = vmatpush2.msra.mxu0 0.0
    %6450 = vmatprep.subr.mxu0 0.0
    %6451 = vmatpush2.msra.mxu0 0.0
    %6452 = vmatprep.subr.mxu0 0.0
    %6453 = vmatpush2.msra.mxu0 0.0
    %6454 = vmatprep.subr.mxu0 0.0
    %6455 = vmatpush2.msra.mxu0 0.0
    %6456 = vmatprep.subr.mxu0 0.0
    %6457 = vmatpush2.msra.mxu0 0.0
    %6458 = vmatprep.subr.mxu0 0.0
    %6459 = vmatpush2.msra.mxu0 0.0
    %6460 = vmatprep.subr.mxu0 0.0
    %6461 = vmatpush2.msra.mxu0 0.0
    %6462 = vmatprep.subr.mxu0 0.0
    %6463 = vmatpush2.msra.mxu0 0.0
    %6464 = vmatprep.subr.mxu0 0.0
    %6465 = vmatpush2.msra.mxu0 0.0
    %6466 = vmatprep.mubr.f32.mxu0 0.0
    %6467 = vmatmul.mubr.f32.gmra.mxu0 %v6159
    %v6468 = vpop.f32.mrf.mxu0
    %v6469 = vadd.f32 0.0, %v6468
    %v6470 = vpop.f32.mrf.mxu0
    %6471 = vdwg.mxu0
    %v6472 = vadd.f32 %v6397, %v6469
    %v6473 = vxor.u32 %v6472, 2147483648
    %v6474 = vmul.f32 %v6473, 1.442695
    %v6475 = vpow.pop %v6474
    %v6476 = vadd.f32 %v6475, 1.0
    %v6477 = vrcp.pop %v6476
    %v6478 = vmul.f32 1.0, %v6477
    %v6479 = vmul.f32 %v6319, %v6149
    %v6480 = vmul.f32 %v6237, %v6396
    %v6481 = vadd.f32 %v6479, %v6480
    %v6482 = vtanh.pop %v6481
    %v6483 = vmul.f32 %v6478, %v6482
    %6484 = vst.msk [vmem:[%s3293] sm:$0xff] %vm220, %v6483
    %v6485 = vld [vmem:[#allocation2] sm:$0xff]
    %v6486 = vld [vmem:[#allocation2 + $0x8] sm:$0xff]
    %v6487 = vld [vmem:[#allocation2 + $0x10] sm:$0xff]
    %v6488 = vld [vmem:[#allocation2 + $0x18] sm:$0xff]
    %v6489 = vld [vmem:[#allocation2 + $0x20] sm:$0xff]
    %v6490 = vld [vmem:[#allocation2 + $0x28] sm:$0xff]
    %v6491 = vld [vmem:[#allocation2 + $0x30] sm:$0xff]
    %v6492 = vld [vmem:[#allocation2 + $0x38] sm:$0xff]
    %v6493 = vxor.u32 %v6485, 2147483648
    %v6494 = vxor.u32 %v6486, 2147483648
    %v6495 = vxor.u32 %v6487, 2147483648
    %v6496 = vxor.u32 %v6488, 2147483648
    %v6497 = vxor.u32 %v6489, 2147483648
    %v6498 = vxor.u32 %v6490, 2147483648
    %v6499 = vxor.u32 %v6491, 2147483648
    %v6500 = vxor.u32 %v6492, 2147483648
    %v6501 = vmul.f32 %v6493, 1.442695
    %v6502 = vpow.pop %v6501
    %v6503 = vmul.f32 %v6494, 1.442695
    %v6504 = vpow.pop %v6503
    %v6505 = vmul.f32 %v6495, 1.442695
    %v6506 = vpow.pop %v6505
    %v6507 = vmul.f32 %v6496, 1.442695
    %v6508 = vpow.pop %v6507
    %v6509 = vmul.f32 %v6497, 1.442695
    %v6510 = vpow.pop %v6509
    %v6511 = vmul.f32 %v6498, 1.442695
    %v6512 = vpow.pop %v6511
    %v6513 = vmul.f32 %v6499, 1.442695
    %v6514 = vpow.pop %v6513
    %v6515 = vmul.f32 %v6500, 1.442695
    %v6516 = vpow.pop %v6515
    %v6517 = vadd.f32 %v6502, 1.0
    %v6518 = vadd.f32 %v6504, 1.0
    %v6519 = vadd.f32 %v6506, 1.0
    %v6520 = vadd.f32 %v6508, 1.0
    %v6521 = vadd.f32 %v6510, 1.0
    %v6522 = vadd.f32 %v6512, 1.0
    %v6523 = vadd.f32 %v6514, 1.0
    %v6524 = vadd.f32 %v6516, 1.0
    %v6525 = vrcp.pop %v6517
    %v6526 = vmul.f32 1.0, %v6525
    %v6527 = vrcp.pop %v6518
    %v6528 = vmul.f32 1.0, %v6527
    %v6529 = vrcp.pop %v6519
    %v6530 = vmul.f32 1.0, %v6529
    %v6531 = vrcp.pop %v6520
    %v6532 = vmul.f32 1.0, %v6531
    %v6533 = vrcp.pop %v6521
    %v6534 = vmul.f32 1.0, %v6533
    %v6535 = vrcp.pop %v6522
    %v6536 = vmul.f32 1.0, %v6535
    %v6537 = vrcp.pop %v6523
    %v6538 = vmul.f32 1.0, %v6537
    %v6539 = vrcp.pop %v6524
    %v6540 = vmul.f32 1.0, %v6539
    %v6541 = vld [vmem:[%s7] sm:$0xff]
    %v6542 = vld [vmem:[%s7 + $0x8] sm:$0xff]
    %v6543 = vld [vmem:[%s7 + $0x10] sm:$0xff]
    %v6544 = vld [vmem:[%s7 + $0x18] sm:$0xff]
    %v6545 = vld [vmem:[%s8] sm:$0x1]
    %v6547 = vlaneseq
    %v6548 = vshrl.u32 %v6547, 7
    %v6549 = vsub.s32 0, %v6548
    %v6550 = vrot.slane %v6545, %v6549
    %v6553 = vsel %vm220, %v6526, 0
    %v6556 = vsel %vm220, %v6528, 0
    %v6559 = vsel %vm220, %v6530, 0
    %v6562 = vsel %vm220, %v6532, 0
    %v6565 = vsel %vm220, %v6534, 0
    %v6568 = vsel %vm220, %v6536, 0
    %v6571 = vsel %vm220, %v6538, 0
    %v6574 = vsel %vm220, %v6540, 0
    %6576 = vmatprep.subr.mxu0 0.0
    %6577 = vmatpush1.msra.mxu0 0.0
    %6578 = vmatprep.subr.mxu0 0.0
    %6579 = vmatpush1.msra.mxu0 0.0
    %6580 = vmatprep.subr.mxu0 0.0
    %6581 = vmatpush1.msra.mxu0 0.0
    %6582 = vmatprep.subr.mxu0 0.0
    %6583 = vmatpush1.msra.mxu0 0.0
    %6584 = vmatprep.subr.mxu0 0.0
    %6585 = vmatpush1.msra.mxu0 0.0
    %6586 = vmatprep.subr.mxu0 0.0
    %6587 = vmatpush1.msra.mxu0 0.0
    %6588 = vmatprep.subr.mxu0 0.0
    %6589 = vmatpush1.msra.mxu0 0.0
    %6590 = vmatprep.subr.mxu0 0.0
    %6591 = vmatpush1.msra.mxu0 0.0
    %6592 = vmatprep.subr.mxu0 0.0
    %6593 = vmatpush1.msra.mxu0 0.0
    %6594 = vmatprep.subr.mxu0 0.0
    %6595 = vmatpush1.msra.mxu0 0.0
    %6596 = vmatprep.subr.mxu0 0.0
    %6597 = vmatpush1.msra.mxu0 0.0
    %6598 = vmatprep.subr.mxu0 0.0
    %6599 = vmatpush1.msra.mxu0 0.0
    %6600 = vmatprep.subr.mxu0 0.0
    %6601 = vmatpush1.msra.mxu0 %v6544
    %6602 = vmatprep.subr.mxu0 0.0
    %6603 = vmatpush1.msra.mxu0 %v6543
    %6604 = vmatprep.subr.mxu0 0.0
    %6605 = vmatpush1.msra.mxu0 %v6542
    %6606 = vmatprep.subr.mxu0 0.0
    %6607 = vmatpush1.msra.mxu0 %v6541
    %6608 = vmatprep.subr.mxu0 0.0
    %6609 = vmatpush2.msra.mxu0 0.0
    %6610 = vmatprep.subr.mxu0 0.0
    %6611 = vmatpush2.msra.mxu0 0.0
    %6612 = vmatprep.subr.mxu0 0.0
    %6613 = vmatpush2.msra.mxu0 0.0
    %6614 = vmatprep.subr.mxu0 0.0
    %6615 = vmatpush2.msra.mxu0 0.0
    %6616 = vmatprep.subr.mxu0 0.0
    %6617 = vmatpush2.msra.mxu0 0.0
    %6618 = vmatprep.subr.mxu0 0.0
    %6619 = vmatpush2.msra.mxu0 0.0
    %6620 = vmatprep.subr.mxu0 0.0
    %6621 = vmatpush2.msra.mxu0 0.0
    %6622 = vmatprep.subr.mxu0 0.0
    %6623 = vmatpush2.msra.mxu0 0.0
    %6624 = vmatprep.subr.mxu0 0.0
    %6625 = vmatpush2.msra.mxu0 0.0
    %6626 = vmatprep.subr.mxu0 0.0
    %6627 = vmatpush2.msra.mxu0 0.0
    %6628 = vmatprep.subr.mxu0 0.0
    %6629 = vmatpush2.msra.mxu0 0.0
    %6630 = vmatprep.subr.mxu0 0.0
    %6631 = vmatpush2.msra.mxu0 0.0
    %6632 = vmatprep.subr.mxu0 0.0
    %6633 = vmatpush2.msra.mxu0 0.0
    %6634 = vmatprep.subr.mxu0 0.0
    %6635 = vmatpush2.msra.mxu0 0.0
    %6636 = vmatprep.subr.mxu0 0.0
    %6637 = vmatpush2.msra.mxu0 0.0
    %6638 = vmatprep.subr.mxu0 0.0
    %6639 = vmatpush2.msra.mxu0 0.0
    %6640 = vmatprep.mubr.f32.mxu0 0.0
    %6641 = vmatmul.mubr.f32.gmra.mxu0 %v6553
    %v6642 = vpop.f32.mrf.mxu0
    %v6643 = vadd.f32 %v6550, %v6642
    %v6644 = vpop.f32.mrf.mxu0
    %6645 = vmatprep.mubr.f32.mxu0 0.0
    %6646 = vmatmul.mubr.f32.gmra.mxu0 %v6556
    %v6647 = vpop.f32.mrf.mxu0
    %v6648 = vadd.f32 %v6550, %v6647
    %v6649 = vpop.f32.mrf.mxu0
    %6650 = vmatprep.mubr.f32.mxu0 0.0
    %6651 = vmatmul.mubr.f32.gmra.mxu0 %v6559
    %v6652 = vpop.f32.mrf.mxu0
    %v6653 = vadd.f32 %v6550, %v6652
    %v6654 = vpop.f32.mrf.mxu0
    %6655 = vmatprep.mubr.f32.mxu0 0.0
    %6656 = vmatmul.mubr.f32.gmra.mxu0 %v6562
    %v6657 = vpop.f32.mrf.mxu0
    %v6658 = vadd.f32 %v6550, %v6657
    %v6659 = vpop.f32.mrf.mxu0
    %6660 = vmatprep.mubr.f32.mxu0 0.0
    %6661 = vmatmul.mubr.f32.gmra.mxu0 %v6565
    %v6662 = vpop.f32.mrf.mxu0
    %v6663 = vadd.f32 %v6550, %v6662
    %v6664 = vpop.f32.mrf.mxu0
    %6665 = vmatprep.mubr.f32.mxu0 0.0
    %6666 = vmatmul.mubr.f32.gmra.mxu0 %v6568
    %v6667 = vpop.f32.mrf.mxu0
    %v6668 = vadd.f32 %v6550, %v6667
    %v6669 = vpop.f32.mrf.mxu0
    %6670 = vmatprep.mubr.f32.mxu0 0.0
    %6671 = vmatmul.mubr.f32.gmra.mxu0 %v6571
    %v6672 = vpop.f32.mrf.mxu0
    %v6673 = vadd.f32 %v6550, %v6672
    %v6674 = vpop.f32.mrf.mxu0
    %6675 = vmatprep.mubr.f32.mxu0 0.0
    %6676 = vmatmul.mubr.f32.gmra.mxu0 %v6574
    %v6677 = vpop.f32.mrf.mxu0
    %v6678 = vadd.f32 %v6550, %v6677
    %v6679 = vpop.f32.mrf.mxu0
    %6680 = vdwg.mxu0
    %vm6681 = vcmask 31744
    %6682 = vst.msk [vmem:[%s9] sm:$0xff] %vm6681, %v6643
    %6683 = vst.msk [vmem:[%s9 + $0x8] sm:$0xff] %vm6681, %v6648
    %6684 = vst.msk [vmem:[%s9 + $0x10] sm:$0xff] %vm6681, %v6653
    %6685 = vst.msk [vmem:[%s9 + $0x18] sm:$0xff] %vm6681, %v6658
    %6686 = vst.msk [vmem:[%s9 + $0x20] sm:$0xff] %vm6681, %v6663
    %6687 = vst.msk [vmem:[%s9 + $0x28] sm:$0xff] %vm6681, %v6668
    %6688 = vst.msk [vmem:[%s9 + $0x30] sm:$0xff] %vm6681, %v6673
    %6689 = vst.msk [vmem:[%s9 + $0x38] sm:$0xff] %vm6681, %v6678
    // Predicated region
    $region50: #{lstm1_forward.1} parent=1 // pred_check
      _
    $region51: #{lstm1_forward.1} parent=1 // pred_check_branch
      %6691 = sbr.rel (0) target = $region53
    $region52: #{lstm1_forward.1} parent=1 // pred_region
      _
    $region53: #{lstm1_forward.1} parent=1 // pred_fallthru
      _
    // Predicated region
    $region54: #{lstm1_forward.1} parent=1 // pred_check
      _
    $region55: #{lstm1_forward.1} parent=1 // pred_check_branch
      %6693 = sbr.rel (0) target = $region57
    $region56: #{lstm1_forward.1} parent=1 // pred_region
      _
    $region57: #{lstm1_forward.1} parent=1 // pred_fallthru
      _
    %6694 = vsyncpa [#allocation8], 1
    %6695 = vsyncpa [#allocation10], 1

</llo_original>
